<compile_context>
chip_gen: v6e
topology: v6e:2x2x1
jax: 0.10.0
libtpu: 0.0.40
codegen_flags: <defaults>
</compile_context>

<pallas_src>
import functools
import math

import jax
import jax.numpy as jnp
from jax.experimental import pallas as pl
from jax.experimental.pallas import tpu as pltpu


def _round_up(x, m):
    return ((x + m - 1) // m) * m


# ------------------------------ fused kernel ------------------------------- #

def _block_kernel(*refs, H, W, HW, HWo, Cp, Hp, Op, PAD, downsample,
                  learnable_sc):
    it = iter(refs)
    x_ref = next(it)       # (HW, Cp)   bf16  flat NHWC input (channel zero-padded)
    xcol_ref = next(it)    # (HW, 1)    i32   x-coordinate of each flat pixel
    w1_ref = next(it)      # (9*Cp, Hp) bf16
    b1_ref = next(it)      # (1, Hp)    f32
    w2_ref = next(it)      # (9*Hp, Op) bf16  (pre-scaled by 1/4 when downsample)
    b2_ref = next(it)      # (1, Op)    f32   (pre-scaled by 1/4 when downsample)
    if learnable_sc:
        wsc_ref = next(it)  # (Cp, Op)  bf16  (pre-scaled by 1/4 when downsample)
        bsc_ref = next(it)  # (1, Op)   f32
    o_ref = next(it)       # (HWo, Op)  bf16
    xr_ref = next(it)      # (PAD+HW+PAD, Cp) bf16   relu(x), flat + halo rows
    h1r_ref = next(it)     # (PAD+HW+PAD, Hp) bf16   relu(h1), flat + halo rows
    slab1_ref = next(it)   # (HW, 9*Cp) bf16  conv1 patch slab
    slab2_ref = next(it)   # (HW, 9*Hp) bf16  conv2 patch slab
    if downsample:
        ph_ref = next(it)  # (HW, Op) f32  conv2 output staging for the 2x2 pool
        px_ref = next(it)  # (HW, Cp) f32  raw-x staging for the 2x2 pool

    # Column-validity masks for the horizontally shifted taps.  Vertically
    # out-of-range taps read the zeroed halo rows, so no y mask is needed.
    xcol = xcol_ref[...]
    valid_l = xcol >= 1          # reading the left  neighbour (dx = -1)
    valid_r = xcol <= W - 2      # reading the right neighbour (dx = +1)

    def build_slab(src_ref, slab_ref, C):
        # Column block k of the slab holds the (dy, dx)-shifted image so the
        # whole 3x3 conv becomes ONE big-K matmul (K = 9*C fills the MXU depth).
        for k in range(9):
            dy, dx = k // 3 - 1, k % 3 - 1
            v = src_ref[pl.ds(PAD + dy * W + dx, HW), :]
            if dx == -1:
                v = jnp.where(valid_l, v, jnp.zeros((), v.dtype))
            elif dx == 1:
                v = jnp.where(valid_r, v, jnp.zeros((), v.dtype))
            slab_ref[:, k * C:(k + 1) * C] = v     # lane-aligned dense store

    def pool2x2(src_ref, C):
        # 2x2 SUM pool on the flat (HW, C) pixel layout; the 1/4 factor is
        # folded into the conv2 / shortcut weights at pack time.
        a = src_ref[pl.ds(0, HW // 2, stride=2), :]
        b = src_ref[pl.ds(1, HW // 2, stride=2), :]
        colp = (a + b).reshape(H // 2, 2, W // 2, C)
        return (colp[:, 0] + colp[:, 1]).reshape(HWo, C)

    # Zero only the halo-row strips of the flat staging buffers (2*PAD rows
    # each).  Done every step (cheap) so correctness never depends on scratch
    # contents surviving / being initialized per core.
    zx = jnp.zeros((PAD, Cp), xr_ref.dtype)
    xr_ref[0:PAD, :] = zx
    xr_ref[PAD + HW:PAD + HW + PAD, :] = zx
    zh = jnp.zeros((PAD, Hp), h1r_ref.dtype)
    h1r_ref[0:PAD, :] = zh
    h1r_ref[PAD + HW:PAD + HW + PAD, :] = zh

    # ReLU(x) exactly once (relu commutes with zero padding); aligned store.
    xr_ref[PAD:PAD + HW, :] = jnp.maximum(x_ref[...], 0)

    # ---- residual conv1: one (HW, 9*Cp) @ (9*Cp, Hp) matmul ------------------
    build_slab(xr_ref, slab1_ref, Cp)
    h1 = jnp.dot(slab1_ref[...], w1_ref[...], preferred_element_type=jnp.float32)
    h1 = jnp.maximum(h1 + b1_ref[...], 0.0)
    h1r_ref[PAD:PAD + HW, :] = h1.astype(h1r_ref.dtype)

    # ---- residual conv2: one (HW, 9*Hp) @ (9*Hp, Op) matmul ------------------
    build_slab(h1r_ref, slab2_ref, Hp)
    h2 = jnp.dot(slab2_ref[...], w2_ref[...], preferred_element_type=jnp.float32)
    h2 = h2 + b2_ref[...]

    # ---- shortcut, optional pooling, residual add, store ---------------------
    if downsample:
        ph_ref[...] = h2
        h_out = pool2x2(ph_ref, Op)                       # pooled conv2 output
        px_ref[...] = x_ref[...].astype(jnp.float32)
        x_pool = pool2x2(px_ref, Cp)                      # pool x BEFORE the 1x1
        s = jnp.dot(x_pool.astype(jnp.bfloat16), wsc_ref[...],
                    preferred_element_type=jnp.float32) + bsc_ref[...]
        o_ref[...] = (h_out + s).astype(o_ref.dtype)
    else:
        if learnable_sc:
            s = jnp.dot(x_ref[...], wsc_ref[...],
                        preferred_element_type=jnp.float32) + bsc_ref[...]
        else:
            s = x_ref[...].astype(jnp.float32)            # Cp == Op (wrapper check)
        o_ref[...] = (h2 + s).astype(o_ref.dtype)


# ------------------------------ param packing ------------------------------ #

def _pack_conv3x3(w_oihw, in_pad, out_pad, scale=1.0):
    O, I, KH, KW = w_oihw.shape
    m = jnp.transpose(w_oihw, (2, 3, 1, 0))                       # (KH,KW,I,O)
    m = jnp.pad(m, ((0, 0), (0, 0), (0, in_pad - I), (0, out_pad - O)))
    m = (m * scale).reshape(KH * KW * in_pad, out_pad)
    return m.astype(jnp.bfloat16)


def _pack_conv1x1(w_oihw, in_pad, out_pad, scale=1.0):
    O, I = w_oihw.shape[0], w_oihw.shape[1]
    m = jnp.transpose(w_oihw[:, :, 0, 0], (1, 0)) * scale         # (I, O)
    m = jnp.pad(m, ((0, in_pad - I), (0, out_pad - O)))
    return m.astype(jnp.bfloat16)


def _pad_bias(b, n, scale=1.0):
    return (jnp.pad(b, (0, n - b.shape[0])) * scale).reshape(1, n).astype(jnp.float32)


# --------------------------------- wrapper --------------------------------- #

def block_forward(x_nchw, params, *, downsample, learnable_sc):
    """Fused Pallas implementation of Block.forward (NCHW in, NCHW out)."""
    N, Cin, H, W = x_nchw.shape
    if downsample:
        assert H % 2 == 0 and W % 2 == 0, "avg_pool2d(2) requires even H, W"
    h_ch = params["w1"].shape[0]
    out_ch = params["w2"].shape[0]
    Cp, Hp, Op = (_round_up(c, 128) for c in (Cin, h_ch, out_ch))
    HW = H * W
    Ho, Wo = (H // 2, W // 2) if downsample else (H, W)
    HWo = Ho * Wo
    PAD = _round_up(W + 1, 8)     # halo rows above/below the flat image

    # NCHW -> flat NHWC (N, HW, Cp): channel zero-padded, bf16 matmul operand.
    x = jnp.transpose(x_nchw, (0, 2, 3, 1)).reshape(N, HW, Cin)
    x = jnp.pad(x, ((0, 0), (0, 0), (0, Cp - Cin))).astype(jnp.bfloat16)
    # x-coordinate of each flat pixel (drives the left/right tap masks).
    xcol = (jnp.arange(HW, dtype=jnp.int32) % W).reshape(HW, 1)

    pool_scale = 0.25 if downsample else 1.0
    args = [
        x, xcol,
        _pack_conv3x3(params["w1"], Cp, Hp),
        _pad_bias(params["b1"], Hp),
        _pack_conv3x3(params["w2"], Hp, Op, scale=pool_scale),
        _pad_bias(params["b2"], Op, scale=pool_scale),
    ]
    in_specs = [
        pl.BlockSpec((None, HW, Cp), lambda n: (n, 0, 0)),
        pl.BlockSpec((HW, 1), lambda n: (0, 0)),
        pl.BlockSpec((9 * Cp, Hp), lambda n: (0, 0)),
        pl.BlockSpec((1, Hp), lambda n: (0, 0)),
        pl.BlockSpec((9 * Hp, Op), lambda n: (0, 0)),
        pl.BlockSpec((1, Op), lambda n: (0, 0)),
    ]
    if learnable_sc:
        args += [_pack_conv1x1(params["wsc"], Cp, Op, scale=pool_scale),
                 _pad_bias(params["bsc"], Op)]
        in_specs += [pl.BlockSpec((Cp, Op), lambda n: (0, 0)),
                     pl.BlockSpec((1, Op), lambda n: (0, 0))]
    else:
        assert Cin == out_ch and not downsample

    scratch = [
        pltpu.VMEM((PAD + HW + PAD, Cp), jnp.bfloat16),   # relu(x) flat + halo
        pltpu.VMEM((PAD + HW + PAD, Hp), jnp.bfloat16),   # relu(h1) flat + halo
        pltpu.VMEM((HW, 9 * Cp), jnp.bfloat16),           # conv1 patch slab
        pltpu.VMEM((HW, 9 * Hp), jnp.bfloat16),           # conv2 patch slab
    ]
    if downsample:
        scratch += [pltpu.VMEM((HW, Op), jnp.float32),    # conv2 pool staging
                    pltpu.VMEM((HW, Cp), jnp.float32)]    # raw-x pool staging

    out = pl.pallas_call(
        functools.partial(_block_kernel, H=H, W=W, HW=HW, HWo=HWo, Cp=Cp,
                          Hp=Hp, Op=Op, PAD=PAD, downsample=downsample,
                          learnable_sc=learnable_sc),
        out_shape=jax.ShapeDtypeStruct((N, HWo, Op), jnp.bfloat16),
        grid=(N,),
        in_specs=in_specs,
        out_specs=pl.BlockSpec((None, HWo, Op), lambda n: (n, 0, 0)),
        scratch_shapes=scratch,
        compiler_params=pltpu.CompilerParams(
            dimension_semantics=("parallel",)),
    )(*args)

    out = out.reshape(N, Ho, Wo, Op)[..., :out_ch].astype(jnp.float32)
    return jnp.transpose(out, (0, 3, 1, 2))               # back to NCHW


# --------------------------- init (matches PyTorch) ------------------------- #

def xavier_uniform(key, shape, gain):
    O, I, KH, KW = shape
    fan_in, fan_out = I * KH * KW, O * KH * KW
    bound = gain * math.sqrt(6.0 / (fan_in + fan_out))
    return jax.random.uniform(key, shape, jnp.float32, -bound, bound)


def conv_bias_init(key, out_ch, fan_in):
    bound = 1.0 / math.sqrt(fan_in)
    return jax.random.uniform(key, (out_ch,), jnp.float32, -bound, bound)


def spectral_normalize(w_oihw, key, n_power_iterations=1, eps=1e-12):
    """Emulates torch spectral_norm (first forward, 1 power iteration)."""
    O = w_oihw.shape[0]
    w_mat = w_oihw.reshape(O, -1)
    u = jax.random.normal(key, (O,), jnp.float32)
    u = u / (jnp.linalg.norm(u) + eps)
    v = None
    for _ in range(n_power_iterations):
        v = w_mat.T @ u
        v = v / (jnp.linalg.norm(v) + eps)
        u = w_mat @ v
        u = u / (jnp.linalg.norm(u) + eps)
    sigma = u @ (w_mat @ v)
    return w_oihw / sigma


def init_block_params(key, in_ch, out_ch, h_ch=None, ksize=3, downsample=False):
    learnable_sc = (in_ch != out_ch) or downsample
    # (sic) mirrors the PyTorch module: an explicitly passed h_ch becomes out_ch
    h_ch = in_ch if h_ch is None else out_ch
    ks = jax.random.split(key, 10)
    w1 = spectral_normalize(
        xavier_uniform(ks[0], (h_ch, in_ch, ksize, ksize), math.sqrt(2.0)), ks[1])
    w2 = spectral_normalize(
        xavier_uniform(ks[2], (out_ch, h_ch, ksize, ksize), math.sqrt(2.0)), ks[3])
    b1 = conv_bias_init(ks[4], h_ch, in_ch * ksize * ksize)
    b2 = conv_bias_init(ks[5], out_ch, h_ch * ksize * ksize)
    params = dict(w1=w1, b1=b1, w2=w2, b2=b2)
    if learnable_sc:
        wsc = spectral_normalize(
            xavier_uniform(ks[6], (out_ch, in_ch, 1, 1), 1.0), ks[7])
        bsc = conv_bias_init(ks[8], out_ch, in_ch)
        params.update(wsc=wsc, bsc=bsc)
    return params, learnable_sc


# ------------------------ pure-JAX reference check -------------------------- #

def block_forward_reference(x, params, *, downsample, learnable_sc):
    """Pure-JAX reference using the same bf16-operand / f32-accumulate precision."""
    dn = ("NCHW", "OIHW", "NCHW")

    def conv(x_, w, b, pad):
        y = jax.lax.conv_general_dilated(
            x_.astype(jnp.bfloat16), w.astype(jnp.bfloat16), (1, 1),
            [(pad, pad), (pad, pad)], dimension_numbers=dn,
            preferred_element_type=jnp.float32)
        return y + b.reshape(1, -1, 1, 1)

    def avg_pool(x_):
        n, c, h, w = x_.shape
        return x_.reshape(n, c, h // 2, 2, w // 2, 2).mean(axis=(3, 5))

    h = conv(jnp.maximum(x, 0.0), params["w1"], params["b1"], 1)
    h = conv(jnp.maximum(h, 0.0), params["w2"], params["b2"], 1)
    if downsample:
        h = avg_pool(h)
    if learnable_sc:
        s = conv(x, params["wsc"], params["bsc"], 0)
    else:
        s = x.astype(jnp.bfloat16).astype(jnp.float32)
    if downsample:
        s = avg_pool(s)
    return h + s


# --------------------------------- main ------------------------------------ #

if __name__ == "__main__":
    key = jax.random.PRNGKey(0)
    k_x, k_p, k_p2 = jax.random.split(key, 3)

    N, in_ch, H, W = 2, 4, 16, 16
    out_ch = 8
    downsample = True                      # exercises c_sc + avg_pool paths

    x = jax.random.normal(k_x, (N, in_ch, H, W), jnp.float32)
    params, learnable_sc = init_block_params(
        k_p, in_ch, out_ch, h_ch=None, ksize=3, downsample=downsample)

    out = block_forward(x, params, downsample=downsample,
                        learnable_sc=learnable_sc)
    out = jax.block_until_ready(out)
    ref = block_forward_reference(x, params, downsample=downsample,
                                  learnable_sc=learnable_sc)
    assert out.shape == (N, out_ch, H // 2, W // 2), out.shape
    # kernel emits bf16 outputs (perf feedback); allow one extra bf16 rounding
    err = float(jnp.max(jnp.abs(out - ref)))
    assert err < 3e-2, f"mismatch vs reference (downsample), max abs err = {err}"

    # identity-shortcut / no-downsample path
    params2, lsc2 = init_block_params(k_p2, in_ch, in_ch, h_ch=None,
                                      ksize=3, downsample=False)
    out2 = block_forward(x, params2, downsample=False, learnable_sc=lsc2)
    out2 = jax.block_until_ready(out2)
    ref2 = block_forward_reference(x, params2, downsample=False,
                                   learnable_sc=lsc2)
    assert out2.shape == x.shape, out2.shape
    err2 = float(jnp.max(jnp.abs(out2 - ref2)))
    assert err2 < 3e-2, f"mismatch vs reference (identity), max abs err = {err2}"

    print("KERNEL_OK")
</pallas_src>

<mosaic_0001>
module attributes {stable_mosaic.version = 11 : i64} {
  func.func @_block_kernel(%arg0: i32, %arg1: memref<1x256x128xbf16, #tpu.memory_space<vmem>>, %arg2: memref<256x1xi32, #tpu.memory_space<vmem>>, %arg3: memref<1152x128xbf16, #tpu.memory_space<vmem>>, %arg4: memref<1x128xf32, #tpu.memory_space<vmem>>, %arg5: memref<1152x128xbf16, #tpu.memory_space<vmem>>, %arg6: memref<1x128xf32, #tpu.memory_space<vmem>>, %arg7: memref<128x128xbf16, #tpu.memory_space<vmem>>, %arg8: memref<1x128xf32, #tpu.memory_space<vmem>>, %arg9: memref<1x64x128xbf16, #tpu.memory_space<vmem>>, %arg10: memref<304x128xbf16, #tpu.memory_space<vmem>>, %arg11: memref<304x128xbf16, #tpu.memory_space<vmem>>, %arg12: memref<256x1152xbf16, #tpu.memory_space<vmem>>, %arg13: memref<256x1152xbf16, #tpu.memory_space<vmem>>, %arg14: memref<256x128xf32, #tpu.memory_space<vmem>>, %arg15: memref<256x128xf32, #tpu.memory_space<vmem>>) attributes {dimension_semantics = [#tpu.dimension_semantics<parallel>], iteration_bounds = array<i64: 2>, scalar_prefetch = 0 : i64, scratch_operands = 6 : i64, tpu.core_type = #tpu.core_type<tc>, window_params = [{transform_indices = @transform_0, window_bounds = array<i64: 1, 256, 128>}, {pipeline_mode = #tpu.pipeline_mode<synchronous>, transform_indices = @transform_1, window_bounds = array<i64: 256, 1>}, {pipeline_mode = #tpu.pipeline_mode<synchronous>, transform_indices = @transform_2, window_bounds = array<i64: 1152, 128>}, {pipeline_mode = #tpu.pipeline_mode<synchronous>, transform_indices = @transform_3, window_bounds = array<i64: 1, 128>}, {pipeline_mode = #tpu.pipeline_mode<synchronous>, transform_indices = @transform_4, window_bounds = array<i64: 1152, 128>}, {pipeline_mode = #tpu.pipeline_mode<synchronous>, transform_indices = @transform_5, window_bounds = array<i64: 1, 128>}, {pipeline_mode = #tpu.pipeline_mode<synchronous>, transform_indices = @transform_6, window_bounds = array<i64: 128, 128>}, {pipeline_mode = #tpu.pipeline_mode<synchronous>, transform_indices = @transform_7, window_bounds = array<i64: 1, 128>}, {transform_indices = @transform_8, window_bounds = array<i64: 1, 64, 128>}]} {
    %c0 = arith.constant 0 : index
    %c0_0 = arith.constant 0 : index
    %0 = vector.load %arg2[%c0, %c0_0] : memref<256x1xi32, #tpu.memory_space<vmem>>, vector<256x1xi32>
    %c1_i32 = arith.constant 1 : i32
    %1 = vector.broadcast %c1_i32 : i32 to vector<256x1xi32>
    %2 = arith.cmpi sge, %0, %1 : vector<256x1xi32>
    %c14_i32 = arith.constant 14 : i32
    %3 = vector.broadcast %c14_i32 : i32 to vector<256x1xi32>
    %4 = arith.cmpi sle, %0, %3 : vector<256x1xi32>
    %cst = arith.constant 0.000000e+00 : bf16
    %5 = vector.broadcast %cst : bf16 to vector<24x128xbf16>
    %c0_1 = arith.constant 0 : index
    %c0_2 = arith.constant 0 : index
    %6 = vector.load %arg10[%c0_1, %c0_2] : memref<304x128xbf16, #tpu.memory_space<vmem>>, vector<24x128xbf16>
    tpu.vector_store %arg10[%c0_1, %c0_2], %5 {strides = array<i32>} : memref<304x128xbf16, #tpu.memory_space<vmem>>, vector<24x128xbf16>,
    %c280 = arith.constant 280 : index
    %c0_3 = arith.constant 0 : index
    %7 = vector.load %arg10[%c280, %c0_3] : memref<304x128xbf16, #tpu.memory_space<vmem>>, vector<24x128xbf16>
    tpu.vector_store %arg10[%c280, %c0_3], %5 {strides = array<i32>} : memref<304x128xbf16, #tpu.memory_space<vmem>>, vector<24x128xbf16>,
    %cst_4 = arith.constant 0.000000e+00 : bf16
    %8 = vector.broadcast %cst_4 : bf16 to vector<24x128xbf16>
    %c0_5 = arith.constant 0 : index
    %c0_6 = arith.constant 0 : index
    %9 = vector.load %arg11[%c0_5, %c0_6] : memref<304x128xbf16, #tpu.memory_space<vmem>>, vector<24x128xbf16>
    tpu.vector_store %arg11[%c0_5, %c0_6], %8 {strides = array<i32>} : memref<304x128xbf16, #tpu.memory_space<vmem>>, vector<24x128xbf16>,
    %c280_7 = arith.constant 280 : index
    %c0_8 = arith.constant 0 : index
    %10 = vector.load %arg11[%c280_7, %c0_8] : memref<304x128xbf16, #tpu.memory_space<vmem>>, vector<24x128xbf16>
    tpu.vector_store %arg11[%c280_7, %c0_8], %8 {strides = array<i32>} : memref<304x128xbf16, #tpu.memory_space<vmem>>, vector<24x128xbf16>,
    %c0_9 = arith.constant 0 : index
    %c0_10 = arith.constant 0 : index
    %c0_11 = arith.constant 0 : index
    %11 = vector.load %arg1[%c0_9, %c0_10, %c0_11] : memref<1x256x128xbf16, #tpu.memory_space<vmem>>, vector<1x256x128xbf16>
    %12 = vector.shape_cast %11 : vector<1x256x128xbf16> to vector<256x128xbf16>
    %cst_12 = arith.constant 0.000000e+00 : bf16
    %13 = vector.broadcast %cst_12 : bf16 to vector<256x128xbf16>
    %14 = arith.maximumf %12, %13 : vector<256x128xbf16>
    %c24 = arith.constant 24 : index
    %c0_13 = arith.constant 0 : index
    %15 = vector.load %arg10[%c24, %c0_13] : memref<304x128xbf16, #tpu.memory_space<vmem>>, vector<256x128xbf16>
    tpu.vector_store %arg10[%c24, %c0_13], %14 {strides = array<i32>} : memref<304x128xbf16, #tpu.memory_space<vmem>>, vector<256x128xbf16>,
    %c7 = arith.constant 7 : index
    %c0_14 = arith.constant 0 : index
    %16 = vector.load %arg10[%c7, %c0_14] : memref<304x128xbf16, #tpu.memory_space<vmem>>, vector<256x128xbf16>
    %cst_15 = arith.constant 0.000000e+00 : bf16
    %17 = vector.shape_cast %2 : vector<256x1xi1> to vector<256x1xi1>
    %18 = vector.broadcast %17 : vector<256x1xi1> to vector<256x128xi1>
    %19 = vector.broadcast %cst_15 : bf16 to vector<256x128xbf16>
    %20 = arith.select %18, %16, %19 : vector<256x128xi1>, vector<256x128xbf16>
    %c0_16 = arith.constant 0 : index
    %c0_17 = arith.constant 0 : index
    %21 = vector.load %arg12[%c0_16, %c0_17] : memref<256x1152xbf16, #tpu.memory_space<vmem>>, vector<256x128xbf16>
    tpu.vector_store %arg12[%c0_16, %c0_17], %20 {strides = array<i32>} : memref<256x1152xbf16, #tpu.memory_space<vmem>>, vector<256x128xbf16>,
    %c8 = arith.constant 8 : index
    %c0_18 = arith.constant 0 : index
    %22 = vector.load %arg10[%c8, %c0_18] : memref<304x128xbf16, #tpu.memory_space<vmem>>, vector<256x128xbf16>
    %c0_19 = arith.constant 0 : index
    %c128 = arith.constant 128 : index
    %23 = vector.load %arg12[%c0_19, %c128] : memref<256x1152xbf16, #tpu.memory_space<vmem>>, vector<256x128xbf16>
    tpu.vector_store %arg12[%c0_19, %c128], %22 {strides = array<i32>} : memref<256x1152xbf16, #tpu.memory_space<vmem>>, vector<256x128xbf16>,
    %c9 = arith.constant 9 : index
    %c0_20 = arith.constant 0 : index
    %24 = vector.load %arg10[%c9, %c0_20] : memref<304x128xbf16, #tpu.memory_space<vmem>>, vector<256x128xbf16>
    %cst_21 = arith.constant 0.000000e+00 : bf16
    %25 = vector.shape_cast %4 : vector<256x1xi1> to vector<256x1xi1>
    %26 = vector.broadcast %25 : vector<256x1xi1> to vector<256x128xi1>
    %27 = vector.broadcast %cst_21 : bf16 to vector<256x128xbf16>
    %28 = arith.select %26, %24, %27 : vector<256x128xi1>, vector<256x128xbf16>
    %c0_22 = arith.constant 0 : index
    %c256 = arith.constant 256 : index
    %29 = vector.load %arg12[%c0_22, %c256] : memref<256x1152xbf16, #tpu.memory_space<vmem>>, vector<256x128xbf16>
    tpu.vector_store %arg12[%c0_22, %c256], %28 {strides = array<i32>} : memref<256x1152xbf16, #tpu.memory_space<vmem>>, vector<256x128xbf16>,
    %c23 = arith.constant 23 : index
    %c0_23 = arith.constant 0 : index
    %30 = vector.load %arg10[%c23, %c0_23] : memref<304x128xbf16, #tpu.memory_space<vmem>>, vector<256x128xbf16>
    %cst_24 = arith.constant 0.000000e+00 : bf16
    %31 = vector.shape_cast %2 : vector<256x1xi1> to vector<256x1xi1>
    %32 = vector.broadcast %31 : vector<256x1xi1> to vector<256x128xi1>
    %33 = vector.broadcast %cst_24 : bf16 to vector<256x128xbf16>
    %34 = arith.select %32, %30, %33 : vector<256x128xi1>, vector<256x128xbf16>
    %c0_25 = arith.constant 0 : index
    %c384 = arith.constant 384 : index
    %35 = vector.load %arg12[%c0_25, %c384] : memref<256x1152xbf16, #tpu.memory_space<vmem>>, vector<256x128xbf16>
    tpu.vector_store %arg12[%c0_25, %c384], %34 {strides = array<i32>} : memref<256x1152xbf16, #tpu.memory_space<vmem>>, vector<256x128xbf16>,
    %c24_26 = arith.constant 24 : index
    %c0_27 = arith.constant 0 : index
    %36 = vector.load %arg10[%c24_26, %c0_27] : memref<304x128xbf16, #tpu.memory_space<vmem>>, vector<256x128xbf16>
    %c0_28 = arith.constant 0 : index
    %c512 = arith.constant 512 : index
    %37 = vector.load %arg12[%c0_28, %c512] : memref<256x1152xbf16, #tpu.memory_space<vmem>>, vector<256x128xbf16>
    tpu.vector_store %arg12[%c0_28, %c512], %36 {strides = array<i32>} : memref<256x1152xbf16, #tpu.memory_space<vmem>>, vector<256x128xbf16>,
    %c25 = arith.constant 25 : index
    %c0_29 = arith.constant 0 : index
    %38 = vector.load %arg10[%c25, %c0_29] : memref<304x128xbf16, #tpu.memory_space<vmem>>, vector<256x128xbf16>
    %cst_30 = arith.constant 0.000000e+00 : bf16
    %39 = vector.shape_cast %4 : vector<256x1xi1> to vector<256x1xi1>
    %40 = vector.broadcast %39 : vector<256x1xi1> to vector<256x128xi1>
    %41 = vector.broadcast %cst_30 : bf16 to vector<256x128xbf16>
    %42 = arith.select %40, %38, %41 : vector<256x128xi1>, vector<256x128xbf16>
    %c0_31 = arith.constant 0 : index
    %c640 = arith.constant 640 : index
    %43 = vector.load %arg12[%c0_31, %c640] : memref<256x1152xbf16, #tpu.memory_space<vmem>>, vector<256x128xbf16>
    tpu.vector_store %arg12[%c0_31, %c640], %42 {strides = array<i32>} : memref<256x1152xbf16, #tpu.memory_space<vmem>>, vector<256x128xbf16>,
    %c39 = arith.constant 39 : index
    %c0_32 = arith.constant 0 : index
    %44 = vector.load %arg10[%c39, %c0_32] : memref<304x128xbf16, #tpu.memory_space<vmem>>, vector<256x128xbf16>
    %cst_33 = arith.constant 0.000000e+00 : bf16
    %45 = vector.shape_cast %2 : vector<256x1xi1> to vector<256x1xi1>
    %46 = vector.broadcast %45 : vector<256x1xi1> to vector<256x128xi1>
    %47 = vector.broadcast %cst_33 : bf16 to vector<256x128xbf16>
    %48 = arith.select %46, %44, %47 : vector<256x128xi1>, vector<256x128xbf16>
    %c0_34 = arith.constant 0 : index
    %c768 = arith.constant 768 : index
    %49 = vector.load %arg12[%c0_34, %c768] : memref<256x1152xbf16, #tpu.memory_space<vmem>>, vector<256x128xbf16>
    tpu.vector_store %arg12[%c0_34, %c768], %48 {strides = array<i32>} : memref<256x1152xbf16, #tpu.memory_space<vmem>>, vector<256x128xbf16>,
    %c40 = arith.constant 40 : index
    %c0_35 = arith.constant 0 : index
    %50 = vector.load %arg10[%c40, %c0_35] : memref<304x128xbf16, #tpu.memory_space<vmem>>, vector<256x128xbf16>
    %c0_36 = arith.constant 0 : index
    %c896 = arith.constant 896 : index
    %51 = vector.load %arg12[%c0_36, %c896] : memref<256x1152xbf16, #tpu.memory_space<vmem>>, vector<256x128xbf16>
    tpu.vector_store %arg12[%c0_36, %c896], %50 {strides = array<i32>} : memref<256x1152xbf16, #tpu.memory_space<vmem>>, vector<256x128xbf16>,
    %c41 = arith.constant 41 : index
    %c0_37 = arith.constant 0 : index
    %52 = vector.load %arg10[%c41, %c0_37] : memref<304x128xbf16, #tpu.memory_space<vmem>>, vector<256x128xbf16>
    %cst_38 = arith.constant 0.000000e+00 : bf16
    %53 = vector.shape_cast %4 : vector<256x1xi1> to vector<256x1xi1>
    %54 = vector.broadcast %53 : vector<256x1xi1> to vector<256x128xi1>
    %55 = vector.broadcast %cst_38 : bf16 to vector<256x128xbf16>
    %56 = arith.select %54, %52, %55 : vector<256x128xi1>, vector<256x128xbf16>
    %c0_39 = arith.constant 0 : index
    %c1024 = arith.constant 1024 : index
    %57 = vector.load %arg12[%c0_39, %c1024] : memref<256x1152xbf16, #tpu.memory_space<vmem>>, vector<256x128xbf16>
    tpu.vector_store %arg12[%c0_39, %c1024], %56 {strides = array<i32>} : memref<256x1152xbf16, #tpu.memory_space<vmem>>, vector<256x128xbf16>,
    %c0_40 = arith.constant 0 : index
    %c0_41 = arith.constant 0 : index
    %58 = vector.load %arg12[%c0_40, %c0_41] : memref<256x1152xbf16, #tpu.memory_space<vmem>>, vector<256x1152xbf16>
    %c0_42 = arith.constant 0 : index
    %c0_43 = arith.constant 0 : index
    %59 = vector.load %arg3[%c0_42, %c0_43] : memref<1152x128xbf16, #tpu.memory_space<vmem>>, vector<1152x128xbf16>
    %cst_44 = arith.constant dense<0.000000e+00> : vector<256x128xf32>
    %60 = tpu.matmul %58, %59, %cst_44 {dimension_numbers = #tpu.dot_dimension_numbers<[1], [0], [0], [1], [0, 0, 1, 1], [], []>} : vector<256x1152xbf16>, vector<1152x128xbf16>, vector<256x128xf32> -> vector<256x128xf32>
    %c0_45 = arith.constant 0 : index
    %c0_46 = arith.constant 0 : index
    %61 = vector.load %arg4[%c0_45, %c0_46] : memref<1x128xf32, #tpu.memory_space<vmem>>, vector<1x128xf32>
    %62 = vector.broadcast %61 : vector<1x128xf32> to vector<256x128xf32>
    %63 = arith.addf %60, %62 : vector<256x128xf32>
    %cst_47 = arith.constant 0.000000e+00 : f32
    %64 = vector.broadcast %cst_47 : f32 to vector<256x128xf32>
    %65 = arith.maximumf %63, %64 : vector<256x128xf32>
    %66 = arith.truncf %65 : vector<256x128xf32> to vector<256x128xbf16>
    %c24_48 = arith.constant 24 : index
    %c0_49 = arith.constant 0 : index
    %67 = vector.load %arg11[%c24_48, %c0_49] : memref<304x128xbf16, #tpu.memory_space<vmem>>, vector<256x128xbf16>
    tpu.vector_store %arg11[%c24_48, %c0_49], %66 {strides = array<i32>} : memref<304x128xbf16, #tpu.memory_space<vmem>>, vector<256x128xbf16>,
    %c7_50 = arith.constant 7 : index
    %c0_51 = arith.constant 0 : index
    %68 = vector.load %arg11[%c7_50, %c0_51] : memref<304x128xbf16, #tpu.memory_space<vmem>>, vector<256x128xbf16>
    %cst_52 = arith.constant 0.000000e+00 : bf16
    %69 = vector.shape_cast %2 : vector<256x1xi1> to vector<256x1xi1>
    %70 = vector.broadcast %69 : vector<256x1xi1> to vector<256x128xi1>
    %71 = vector.broadcast %cst_52 : bf16 to vector<256x128xbf16>
    %72 = arith.select %70, %68, %71 : vector<256x128xi1>, vector<256x128xbf16>
    %c0_53 = arith.constant 0 : index
    %c0_54 = arith.constant 0 : index
    %73 = vector.load %arg13[%c0_53, %c0_54] : memref<256x1152xbf16, #tpu.memory_space<vmem>>, vector<256x128xbf16>
    tpu.vector_store %arg13[%c0_53, %c0_54], %72 {strides = array<i32>} : memref<256x1152xbf16, #tpu.memory_space<vmem>>, vector<256x128xbf16>,
    %c8_55 = arith.constant 8 : index
    %c0_56 = arith.constant 0 : index
    %74 = vector.load %arg11[%c8_55, %c0_56] : memref<304x128xbf16, #tpu.memory_space<vmem>>, vector<256x128xbf16>
    %c0_57 = arith.constant 0 : index
    %c128_58 = arith.constant 128 : index
    %75 = vector.load %arg13[%c0_57, %c128_58] : memref<256x1152xbf16, #tpu.memory_space<vmem>>, vector<256x128xbf16>
    tpu.vector_store %arg13[%c0_57, %c128_58], %74 {strides = array<i32>} : memref<256x1152xbf16, #tpu.memory_space<vmem>>, vector<256x128xbf16>,
    %c9_59 = arith.constant 9 : index
    %c0_60 = arith.constant 0 : index
    %76 = vector.load %arg11[%c9_59, %c0_60] : memref<304x128xbf16, #tpu.memory_space<vmem>>, vector<256x128xbf16>
    %cst_61 = arith.constant 0.000000e+00 : bf16
    %77 = vector.shape_cast %4 : vector<256x1xi1> to vector<256x1xi1>
    %78 = vector.broadcast %77 : vector<256x1xi1> to vector<256x128xi1>
    %79 = vector.broadcast %cst_61 : bf16 to vector<256x128xbf16>
    %80 = arith.select %78, %76, %79 : vector<256x128xi1>, vector<256x128xbf16>
    %c0_62 = arith.constant 0 : index
    %c256_63 = arith.constant 256 : index
    %81 = vector.load %arg13[%c0_62, %c256_63] : memref<256x1152xbf16, #tpu.memory_space<vmem>>, vector<256x128xbf16>
    tpu.vector_store %arg13[%c0_62, %c256_63], %80 {strides = array<i32>} : memref<256x1152xbf16, #tpu.memory_space<vmem>>, vector<256x128xbf16>,
    %c23_64 = arith.constant 23 : index
    %c0_65 = arith.constant 0 : index
    %82 = vector.load %arg11[%c23_64, %c0_65] : memref<304x128xbf16, #tpu.memory_space<vmem>>, vector<256x128xbf16>
    %cst_66 = arith.constant 0.000000e+00 : bf16
    %83 = vector.shape_cast %2 : vector<256x1xi1> to vector<256x1xi1>
    %84 = vector.broadcast %83 : vector<256x1xi1> to vector<256x128xi1>
    %85 = vector.broadcast %cst_66 : bf16 to vector<256x128xbf16>
    %86 = arith.select %84, %82, %85 : vector<256x128xi1>, vector<256x128xbf16>
    %c0_67 = arith.constant 0 : index
    %c384_68 = arith.constant 384 : index
    %87 = vector.load %arg13[%c0_67, %c384_68] : memref<256x1152xbf16, #tpu.memory_space<vmem>>, vector<256x128xbf16>
    tpu.vector_store %arg13[%c0_67, %c384_68], %86 {strides = array<i32>} : memref<256x1152xbf16, #tpu.memory_space<vmem>>, vector<256x128xbf16>,
    %c24_69 = arith.constant 24 : index
    %c0_70 = arith.constant 0 : index
    %88 = vector.load %arg11[%c24_69, %c0_70] : memref<304x128xbf16, #tpu.memory_space<vmem>>, vector<256x128xbf16>
    %c0_71 = arith.constant 0 : index
    %c512_72 = arith.constant 512 : index
    %89 = vector.load %arg13[%c0_71, %c512_72] : memref<256x1152xbf16, #tpu.memory_space<vmem>>, vector<256x128xbf16>
    tpu.vector_store %arg13[%c0_71, %c512_72], %88 {strides = array<i32>} : memref<256x1152xbf16, #tpu.memory_space<vmem>>, vector<256x128xbf16>,
    %c25_73 = arith.constant 25 : index
    %c0_74 = arith.constant 0 : index
    %90 = vector.load %arg11[%c25_73, %c0_74] : memref<304x128xbf16, #tpu.memory_space<vmem>>, vector<256x128xbf16>
    %cst_75 = arith.constant 0.000000e+00 : bf16
    %91 = vector.shape_cast %4 : vector<256x1xi1> to vector<256x1xi1>
    %92 = vector.broadcast %91 : vector<256x1xi1> to vector<256x128xi1>
    %93 = vector.broadcast %cst_75 : bf16 to vector<256x128xbf16>
    %94 = arith.select %92, %90, %93 : vector<256x128xi1>, vector<256x128xbf16>
    %c0_76 = arith.constant 0 : index
    %c640_77 = arith.constant 640 : index
    %95 = vector.load %arg13[%c0_76, %c640_77] : memref<256x1152xbf16, #tpu.memory_space<vmem>>, vector<256x128xbf16>
    tpu.vector_store %arg13[%c0_76, %c640_77], %94 {strides = array<i32>} : memref<256x1152xbf16, #tpu.memory_space<vmem>>, vector<256x128xbf16>,
    %c39_78 = arith.constant 39 : index
    %c0_79 = arith.constant 0 : index
    %96 = vector.load %arg11[%c39_78, %c0_79] : memref<304x128xbf16, #tpu.memory_space<vmem>>, vector<256x128xbf16>
    %cst_80 = arith.constant 0.000000e+00 : bf16
    %97 = vector.shape_cast %2 : vector<256x1xi1> to vector<256x1xi1>
    %98 = vector.broadcast %97 : vector<256x1xi1> to vector<256x128xi1>
    %99 = vector.broadcast %cst_80 : bf16 to vector<256x128xbf16>
    %100 = arith.select %98, %96, %99 : vector<256x128xi1>, vector<256x128xbf16>
    %c0_81 = arith.constant 0 : index
    %c768_82 = arith.constant 768 : index
    %101 = vector.load %arg13[%c0_81, %c768_82] : memref<256x1152xbf16, #tpu.memory_space<vmem>>, vector<256x128xbf16>
    tpu.vector_store %arg13[%c0_81, %c768_82], %100 {strides = array<i32>} : memref<256x1152xbf16, #tpu.memory_space<vmem>>, vector<256x128xbf16>,
    %c40_83 = arith.constant 40 : index
    %c0_84 = arith.constant 0 : index
    %102 = vector.load %arg11[%c40_83, %c0_84] : memref<304x128xbf16, #tpu.memory_space<vmem>>, vector<256x128xbf16>
    %c0_85 = arith.constant 0 : index
    %c896_86 = arith.constant 896 : index
    %103 = vector.load %arg13[%c0_85, %c896_86] : memref<256x1152xbf16, #tpu.memory_space<vmem>>, vector<256x128xbf16>
    tpu.vector_store %arg13[%c0_85, %c896_86], %102 {strides = array<i32>} : memref<256x1152xbf16, #tpu.memory_space<vmem>>, vector<256x128xbf16>,
    %c41_87 = arith.constant 41 : index
    %c0_88 = arith.constant 0 : index
    %104 = vector.load %arg11[%c41_87, %c0_88] : memref<304x128xbf16, #tpu.memory_space<vmem>>, vector<256x128xbf16>
    %cst_89 = arith.constant 0.000000e+00 : bf16
    %105 = vector.shape_cast %4 : vector<256x1xi1> to vector<256x1xi1>
    %106 = vector.broadcast %105 : vector<256x1xi1> to vector<256x128xi1>
    %107 = vector.broadcast %cst_89 : bf16 to vector<256x128xbf16>
    %108 = arith.select %106, %104, %107 : vector<256x128xi1>, vector<256x128xbf16>
    %c0_90 = arith.constant 0 : index
    %c1024_91 = arith.constant 1024 : index
    %109 = vector.load %arg13[%c0_90, %c1024_91] : memref<256x1152xbf16, #tpu.memory_space<vmem>>, vector<256x128xbf16>
    tpu.vector_store %arg13[%c0_90, %c1024_91], %108 {strides = array<i32>} : memref<256x1152xbf16, #tpu.memory_space<vmem>>, vector<256x128xbf16>,
    %c0_92 = arith.constant 0 : index
    %c0_93 = arith.constant 0 : index
    %110 = vector.load %arg13[%c0_92, %c0_93] : memref<256x1152xbf16, #tpu.memory_space<vmem>>, vector<256x1152xbf16>
    %c0_94 = arith.constant 0 : index
    %c0_95 = arith.constant 0 : index
    %111 = vector.load %arg5[%c0_94, %c0_95] : memref<1152x128xbf16, #tpu.memory_space<vmem>>, vector<1152x128xbf16>
    %cst_96 = arith.constant dense<0.000000e+00> : vector<256x128xf32>
    %112 = tpu.matmul %110, %111, %cst_96 {dimension_numbers = #tpu.dot_dimension_numbers<[1], [0], [0], [1], [0, 0, 1, 1], [], []>} : vector<256x1152xbf16>, vector<1152x128xbf16>, vector<256x128xf32> -> vector<256x128xf32>
    %c0_97 = arith.constant 0 : index
    %c0_98 = arith.constant 0 : index
    %113 = vector.load %arg6[%c0_97, %c0_98] : memref<1x128xf32, #tpu.memory_space<vmem>>, vector<1x128xf32>
    %114 = vector.broadcast %113 : vector<1x128xf32> to vector<256x128xf32>
    %115 = arith.addf %112, %114 : vector<256x128xf32>
    %c0_99 = arith.constant 0 : index
    %c0_100 = arith.constant 0 : index
    %116 = vector.load %arg14[%c0_99, %c0_100] : memref<256x128xf32, #tpu.memory_space<vmem>>, vector<256x128xf32>
    tpu.vector_store %arg14[%c0_99, %c0_100], %115 {strides = array<i32>} : memref<256x128xf32, #tpu.memory_space<vmem>>, vector<256x128xf32>,
    %c0_101 = arith.constant 0 : index
    %c0_102 = arith.constant 0 : index
    %117 = tpu.strided_load %arg14[%c0_101, %c0_102] {strides = array<i32: 2, 1>} : memref<256x128xf32, #tpu.memory_space<vmem>>, vector<128x128xf32>
    %c1 = arith.constant 1 : index
    %c0_103 = arith.constant 0 : index
    %118 = tpu.strided_load %arg14[%c1, %c0_103] {strides = array<i32: 2, 1>} : memref<256x128xf32, #tpu.memory_space<vmem>>, vector<128x128xf32>
    %119 = arith.addf %117, %118 : vector<128x128xf32>
    %120 = vector.shape_cast %119 : vector<128x128xf32> to vector<8x2x8x128xf32>
    %121 = vector.extract_strided_slice %120 {offsets = [0, 0, 0, 0], sizes = [8, 1, 8, 128], strides = [1, 1, 1, 1]} : vector<8x2x8x128xf32> to vector<8x1x8x128xf32>
    %122 = vector.shape_cast %121 : vector<8x1x8x128xf32> to vector<8x8x128xf32>
    %123 = vector.extract_strided_slice %120 {offsets = [0, 1, 0, 0], sizes = [8, 1, 8, 128], strides = [1, 1, 1, 1]} : vector<8x2x8x128xf32> to vector<8x1x8x128xf32>
    %124 = vector.shape_cast %123 : vector<8x1x8x128xf32> to vector<8x8x128xf32>
    %125 = arith.addf %122, %124 : vector<8x8x128xf32>
    %126 = vector.shape_cast %125 : vector<8x8x128xf32> to vector<64x128xf32>
    %c0_104 = arith.constant 0 : index
    %c0_105 = arith.constant 0 : index
    %c0_106 = arith.constant 0 : index
    %127 = vector.load %arg1[%c0_104, %c0_105, %c0_106] : memref<1x256x128xbf16, #tpu.memory_space<vmem>>, vector<1x256x128xbf16>
    %128 = vector.shape_cast %127 : vector<1x256x128xbf16> to vector<256x128xbf16>
    %129 = arith.extf %128 : vector<256x128xbf16> to vector<256x128xf32>
    %c0_107 = arith.constant 0 : index
    %c0_108 = arith.constant 0 : index
    %130 = vector.load %arg15[%c0_107, %c0_108] : memref<256x128xf32, #tpu.memory_space<vmem>>, vector<256x128xf32>
    tpu.vector_store %arg15[%c0_107, %c0_108], %129 {strides = array<i32>} : memref<256x128xf32, #tpu.memory_space<vmem>>, vector<256x128xf32>,
    %c0_109 = arith.constant 0 : index
    %c0_110 = arith.constant 0 : index
    %131 = tpu.strided_load %arg15[%c0_109, %c0_110] {strides = array<i32: 2, 1>} : memref<256x128xf32, #tpu.memory_space<vmem>>, vector<128x128xf32>
    %c1_111 = arith.constant 1 : index
    %c0_112 = arith.constant 0 : index
    %132 = tpu.strided_load %arg15[%c1_111, %c0_112] {strides = array<i32: 2, 1>} : memref<256x128xf32, #tpu.memory_space<vmem>>, vector<128x128xf32>
    %133 = arith.addf %131, %132 : vector<128x128xf32>
    %134 = vector.shape_cast %133 : vector<128x128xf32> to vector<8x2x8x128xf32>
    %135 = vector.extract_strided_slice %134 {offsets = [0, 0, 0, 0], sizes = [8, 1, 8, 128], strides = [1, 1, 1, 1]} : vector<8x2x8x128xf32> to vector<8x1x8x128xf32>
    %136 = vector.shape_cast %135 : vector<8x1x8x128xf32> to vector<8x8x128xf32>
    %137 = vector.extract_strided_slice %134 {offsets = [0, 1, 0, 0], sizes = [8, 1, 8, 128], strides = [1, 1, 1, 1]} : vector<8x2x8x128xf32> to vector<8x1x8x128xf32>
    %138 = vector.shape_cast %137 : vector<8x1x8x128xf32> to vector<8x8x128xf32>
    %139 = arith.addf %136, %138 : vector<8x8x128xf32>
    %140 = vector.shape_cast %139 : vector<8x8x128xf32> to vector<64x128xf32>
    %141 = arith.truncf %140 : vector<64x128xf32> to vector<64x128xbf16>
    %c0_113 = arith.constant 0 : index
    %c0_114 = arith.constant 0 : index
    %142 = vector.load %arg7[%c0_113, %c0_114] : memref<128x128xbf16, #tpu.memory_space<vmem>>, vector<128x128xbf16>
    %cst_115 = arith.constant dense<0.000000e+00> : vector<64x128xf32>
    %143 = tpu.matmul %141, %142, %cst_115 {dimension_numbers = #tpu.dot_dimension_numbers<[1], [0], [0], [1], [0, 0, 1, 1], [], []>} : vector<64x128xbf16>, vector<128x128xbf16>, vector<64x128xf32> -> vector<64x128xf32>
    %c0_116 = arith.constant 0 : index
    %c0_117 = arith.constant 0 : index
    %144 = vector.load %arg8[%c0_116, %c0_117] : memref<1x128xf32, #tpu.memory_space<vmem>>, vector<1x128xf32>
    %145 = vector.broadcast %144 : vector<1x128xf32> to vector<64x128xf32>
    %146 = arith.addf %143, %145 : vector<64x128xf32>
    %147 = arith.addf %126, %146 : vector<64x128xf32>
    %148 = arith.truncf %147 : vector<64x128xf32> to vector<64x128xbf16>
    %c0_118 = arith.constant 0 : index
    %c0_119 = arith.constant 0 : index
    %c0_120 = arith.constant 0 : index
    %149 = vector.load %arg9[%c0_118, %c0_119, %c0_120] : memref<1x64x128xbf16, #tpu.memory_space<vmem>>, vector<1x64x128xbf16>
    %150 = vector.shape_cast %149 : vector<1x64x128xbf16> to vector<64x128xbf16>
    %151 = vector.shape_cast %148 : vector<64x128xbf16> to vector<1x64x128xbf16>
    tpu.vector_store %arg9[%c0_118, %c0_119, %c0_120], %151 {strides = array<i32>} : memref<1x64x128xbf16, #tpu.memory_space<vmem>>, vector<1x64x128xbf16>,
    return
  }
  func.func @transform_0(%arg0: i32) -> (i32, i32, i32) {
    %c0_i32 = arith.constant 0 : i32
    %c0_i32_0 = arith.constant 0 : i32
    %c0_i32_1 = arith.constant 0 : i32
    return %arg0, %c0_i32, %c0_i32_0 : i32, i32, i32
  }
  func.func @transform_1(%arg0: i32) -> (i32, i32) {
    %c0_i32 = arith.constant 0 : i32
    %c0_i32_0 = arith.constant 0 : i32
    %c0_i32_1 = arith.constant 0 : i32
    return %c0_i32, %c0_i32_0 : i32, i32
  }
  func.func @transform_2(%arg0: i32) -> (i32, i32) {
    %c0_i32 = arith.constant 0 : i32
    %c0_i32_0 = arith.constant 0 : i32
    %c0_i32_1 = arith.constant 0 : i32
    return %c0_i32, %c0_i32_0 : i32, i32
  }
  func.func @transform_3(%arg0: i32) -> (i32, i32) {
    %c0_i32 = arith.constant 0 : i32
    %c0_i32_0 = arith.constant 0 : i32
    %c0_i32_1 = arith.constant 0 : i32
    return %c0_i32, %c0_i32_0 : i32, i32
  }
  func.func @transform_4(%arg0: i32) -> (i32, i32) {
    %c0_i32 = arith.constant 0 : i32
    %c0_i32_0 = arith.constant 0 : i32
    %c0_i32_1 = arith.constant 0 : i32
    return %c0_i32, %c0_i32_0 : i32, i32
  }
  func.func @transform_5(%arg0: i32) -> (i32, i32) {
    %c0_i32 = arith.constant 0 : i32
    %c0_i32_0 = arith.constant 0 : i32
    %c0_i32_1 = arith.constant 0 : i32
    return %c0_i32, %c0_i32_0 : i32, i32
  }
  func.func @transform_6(%arg0: i32) -> (i32, i32) {
    %c0_i32 = arith.constant 0 : i32
    %c0_i32_0 = arith.constant 0 : i32
    %c0_i32_1 = arith.constant 0 : i32
    return %c0_i32, %c0_i32_0 : i32, i32
  }
  func.func @transform_7(%arg0: i32) -> (i32, i32) {
    %c0_i32 = arith.constant 0 : i32
    %c0_i32_0 = arith.constant 0 : i32
    %c0_i32_1 = arith.constant 0 : i32
    return %c0_i32, %c0_i32_0 : i32, i32
  }
  func.func @transform_8(%arg0: i32) -> (i32, i32, i32) {
    %c0_i32 = arith.constant 0 : i32
    %c0_i32_0 = arith.constant 0 : i32
    %c0_i32_1 = arith.constant 0 : i32
    return %arg0, %c0_i32, %c0_i32_0 : i32, i32, i32
  }
}

</mosaic_0001>

<llo_original>
// kernel: tpu_custom_call.1
$region0: #{tpu_custom_call.1}
  #allocation0 [shape = 'u32[]', space=smem, size = 0x4, offset = 0x4, fixed_abs, tag = 'smem constant byte address 0x4 - core index']
  #allocation1 [shape = 'u32[144,128]{1,0:T(1,128)}', space=vmem, size = 0x12000, scoped, tag = 'internal scratch']
  #allocation2 [shape = 'bf16[304,128]{1,0:T(8,128)(2,1)}', space=vmem, size = 0x13000, scoped, tag = 'scratch operand']
  #allocation3 [shape = 'bf16[304,128]{1,0:T(8,128)(2,1)}', space=vmem, size = 0x13000, scoped, tag = 'scratch operand']
  #allocation4 [shape = 'bf16[256,1152]{1,0:T(8,128)(2,1)}', space=vmem, size = 0x90000, scoped, tag = 'scratch operand']
  #allocation5 [shape = 'bf16[256,1152]{1,0:T(8,128)(2,1)}', space=vmem, size = 0x90000, scoped, tag = 'scratch operand']
  #allocation6 [shape = 'f32[256,128]{1,0:T(8,128)}', space=vmem, size = 0x20000, scoped, tag = 'scratch operand']
  #allocation7 [shape = 'f32[256,128]{1,0:T(8,128)}', space=vmem, size = 0x20000, scoped, tag = 'scratch operand']
  %s0 = inlined_call_operand.vmem [shape: bf16[2,256,128], index: 0, kind: input, shape index: {}]
  %s1 = inlined_call_operand.vmem [shape: s32[256,1], index: 1, kind: input, shape index: {}]
  %s2 = inlined_call_operand.hbm [shape: bf16[1152,128], index: 2, kind: input, shape index: {}]
  %s3 = inlined_call_operand.vmem [shape: f32[1,128], index: 3, kind: input, shape index: {}]
  %s4 = inlined_call_operand.hbm [shape: bf16[1152,128], index: 4, kind: input, shape index: {}]
  %s5 = inlined_call_operand.vmem [shape: f32[1,128], index: 5, kind: input, shape index: {}]
  %s6 = inlined_call_operand.hbm [shape: bf16[128,128], index: 6, kind: input, shape index: {}]
  %s7 = inlined_call_operand.vmem [shape: f32[1,128], index: 7, kind: input, shape index: {}]
  %s8 = inlined_call_operand.hbm [shape: bf16[2,64,128], index: 8, kind: output, shape index: {}]
  %s9 = sld [smem:[#allocation0]]
  $region77: #{tpu_custom_call.1} parent=0
    _
  %s11 = ssub.s32 1, %s9
  %s12 = scalar_select 0, %s11, %s9
  $region1: #{tpu_custom_call.1} parent=0
    #allocation8 [shape = 'u8[294912]{0}', space=vmem, size = 0x48000, scoped, tag = 'input window, operand 2, single buffered']
    #allocation9 [shape = 's32[2]{0}', space=sflag, size = 0x8, scoped, tag = 'scoped memory for tpu_custom_call.1']
    #allocation10 [shape = 's32[2]{0}', space=sflag, size = 0x8, scoped, tag = 'scoped memory for tpu_custom_call.1']
    #allocation11 [shape = 'u8[294912]{0}', space=vmem, size = 0x48000, scoped, tag = 'input window, operand 4, single buffered']
    #allocation12 [shape = 's32[1]{0}', space=sflag, size = 0x4, scoped, tag = 'scoped memory for tpu_custom_call.1']
    #allocation13 [shape = 'u8[32768]{0}', space=vmem, size = 0x8000, scoped, tag = 'input window, operand 6, single buffered']
    #allocation14 [shape = 'u8[32768]{0}', space=vmem, size = 0x8000, scoped, tag = 'output window, operand 0']
    %13 = vsyncpa [#allocation9], 0
    %14 = vsyncpa [#allocation12], 0
    %15 = vsyncpa [#allocation10], 0
    %s16 = scalar_lea.sflag [#allocation10], 1
    %17 = vsyncpa %s16, 0
    loop: start=0, step=1, limit=4
    $region2: #{tpu_custom_call.1} parent=1 // loop_pre_header
      _
    $region3: #{tpu_custom_call.1} parent=1 // loop_header
      %s19 = sphi 0, %s23
      %p20 = scmp.ge.s32.totalorder %s19, 4
      %s29 = sphi 0, %s31
      %s32 = sphi 0, %s29
      %s33 = sphi 0, %s32
      %s49 = sphi 0, %s33
      %s53 = sphi 0, %s53
      %s55 = sphi 0, %s53
      %s56 = sphi 0, %s55
      %s70 = sphi 0, %s56
      %s74 = sphi 0, %s74
      %s76 = sphi 0, %s74
      %s77 = sphi 0, %s76
      %s91 = sphi 0, %s77
      %s95 = sphi 0, %s95
      %s97 = sphi 0, %s95
      %s98 = sphi 0, %s97
      %s112 = sphi 0, %s98
      %s116 = sphi 0, %s116
      %s118 = sphi 0, %s116
      %s119 = sphi 0, %s118
      %s133 = sphi 0, %s119
      %s137 = sphi 0, %s137
      %s139 = sphi 0, %s137
      %s140 = sphi 0, %s139
      %s154 = sphi 0, %s140
      %s158 = sphi 0, %s158
      %s160 = sphi 0, %s158
      %s161 = sphi 0, %s160
      %s175 = sphi 0, %s161
      %s179 = sphi 0, %s179
      %s181 = sphi 0, %s179
      %s182 = sphi 0, %s181
      %s196 = sphi 0, %s182
      %s202 = sphi 0, %s204
      %s205 = sphi 0, %s202
      %s206 = sphi 0, %s205
      %s222 = sphi 0, %s206
    $region4: #{tpu_custom_call.1} parent=1 // loop_header_branch
      %22 = sbr.rel (%p20) target = $region8
    $region5: #{tpu_custom_call.1} parent=1 // loop_body
      %s24 = ssub.s32 %s19, 1
      %s25 = ssub.s32 %s19, 2
      %s26 = sadd.s32 %s19, 1
      %s27 = ssub.s32 %s19, %s26
      %p28 = scmp.eq.s32.totalorder %s27, 0
      %s30 = sadd.s32 %s29, 1
      %s31 = scalar_select %p28, %s29, %s30
      %p34 = pneg %p28
      %p35 = scmp.eq.s32.totalorder %s19, 1
      %p36 = por %p34, %p35
      %p37 = scmp.ne.s32.totalorder %s29, %s32
      %p38 = scmp.eq.s32.totalorder %s19, 0
      %p39 = por %p37, %p38
      %p40 = scmp.ne.s32.totalorder %s29, %s32
      %p41 = scmp.eq.s32.totalorder %s24, 1
      %p42 = por %p40, %p41
      %p43 = scmp.ne.s32.totalorder %s32, %s33
      %p44 = scmp.eq.s32.totalorder %s24, 0
      %p45 = por %p43, %p44
      %p46 = scmp.ne.s32.totalorder %s32, %s33
      %p47 = scmp.eq.s32.totalorder %s25, 1
      %p48 = por %p46, %p47
      %p50 = scmp.ne.s32.totalorder %s33, %s49
      %p51 = scmp.eq.s32.totalorder %s25, 0
      %p52 = por %p50, %p51
      %s54 = sadd.s32 %s53, 1
      %p57 = scmp.eq.s32.totalorder %s19, 1
      %p58 = scmp.ne.s32.totalorder %s53, %s55
      %p59 = scmp.eq.s32.totalorder %s19, 0
      %p60 = por %p58, %p59
      %p61 = scmp.ne.s32.totalorder %s53, %s55
      %p62 = scmp.eq.s32.totalorder %s24, 1
      %p63 = por %p61, %p62
      %p64 = scmp.ne.s32.totalorder %s55, %s56
      %p65 = scmp.eq.s32.totalorder %s24, 0
      %p66 = por %p64, %p65
      %p67 = scmp.ne.s32.totalorder %s55, %s56
      %p68 = scmp.eq.s32.totalorder %s25, 1
      %p69 = por %p67, %p68
      %p71 = scmp.ne.s32.totalorder %s56, %s70
      %p72 = scmp.eq.s32.totalorder %s25, 0
      %p73 = por %p71, %p72
      %s75 = sadd.s32 %s74, 1
      %p78 = scmp.eq.s32.totalorder %s19, 1
      %p79 = scmp.ne.s32.totalorder %s74, %s76
      %p80 = scmp.eq.s32.totalorder %s19, 0
      %p81 = por %p79, %p80
      %p82 = scmp.ne.s32.totalorder %s74, %s76
      %p83 = scmp.eq.s32.totalorder %s24, 1
      %p84 = por %p82, %p83
      %p85 = scmp.ne.s32.totalorder %s76, %s77
      %p86 = scmp.eq.s32.totalorder %s24, 0
      %p87 = por %p85, %p86
      %p88 = scmp.ne.s32.totalorder %s76, %s77
      %p89 = scmp.eq.s32.totalorder %s25, 1
      %p90 = por %p88, %p89
      %p92 = scmp.ne.s32.totalorder %s77, %s91
      %p93 = scmp.eq.s32.totalorder %s25, 0
      %p94 = por %p92, %p93
      %s96 = sadd.s32 %s95, 1
      %p99 = scmp.eq.s32.totalorder %s19, 1
      %p100 = scmp.ne.s32.totalorder %s95, %s97
      %p101 = scmp.eq.s32.totalorder %s19, 0
      %p102 = por %p100, %p101
      %p103 = scmp.ne.s32.totalorder %s95, %s97
      %p104 = scmp.eq.s32.totalorder %s24, 1
      %p105 = por %p103, %p104
      %p106 = scmp.ne.s32.totalorder %s97, %s98
      %p107 = scmp.eq.s32.totalorder %s24, 0
      %p108 = por %p106, %p107
      %p109 = scmp.ne.s32.totalorder %s97, %s98
      %p110 = scmp.eq.s32.totalorder %s25, 1
      %p111 = por %p109, %p110
      %p113 = scmp.ne.s32.totalorder %s98, %s112
      %p114 = scmp.eq.s32.totalorder %s25, 0
      %p115 = por %p113, %p114
      %s117 = sadd.s32 %s116, 1
      %p120 = scmp.eq.s32.totalorder %s19, 1
      %p121 = scmp.ne.s32.totalorder %s116, %s118
      %p122 = scmp.eq.s32.totalorder %s19, 0
      %p123 = por %p121, %p122
      %p124 = scmp.ne.s32.totalorder %s116, %s118
      %p125 = scmp.eq.s32.totalorder %s24, 1
      %p126 = por %p124, %p125
      %p127 = scmp.ne.s32.totalorder %s118, %s119
      %p128 = scmp.eq.s32.totalorder %s24, 0
      %p129 = por %p127, %p128
      %p130 = scmp.ne.s32.totalorder %s118, %s119
      %p131 = scmp.eq.s32.totalorder %s25, 1
      %p132 = por %p130, %p131
      %p134 = scmp.ne.s32.totalorder %s119, %s133
      %p135 = scmp.eq.s32.totalorder %s25, 0
      %p136 = por %p134, %p135
      %s138 = sadd.s32 %s137, 1
      %p141 = scmp.eq.s32.totalorder %s19, 1
      %p142 = scmp.ne.s32.totalorder %s137, %s139
      %p143 = scmp.eq.s32.totalorder %s19, 0
      %p144 = por %p142, %p143
      %p145 = scmp.ne.s32.totalorder %s137, %s139
      %p146 = scmp.eq.s32.totalorder %s24, 1
      %p147 = por %p145, %p146
      %p148 = scmp.ne.s32.totalorder %s139, %s140
      %p149 = scmp.eq.s32.totalorder %s24, 0
      %p150 = por %p148, %p149
      %p151 = scmp.ne.s32.totalorder %s139, %s140
      %p152 = scmp.eq.s32.totalorder %s25, 1
      %p153 = por %p151, %p152
      %p155 = scmp.ne.s32.totalorder %s140, %s154
      %p156 = scmp.eq.s32.totalorder %s25, 0
      %p157 = por %p155, %p156
      %s159 = sadd.s32 %s158, 1
      %p162 = scmp.eq.s32.totalorder %s19, 1
      %p163 = scmp.ne.s32.totalorder %s158, %s160
      %p164 = scmp.eq.s32.totalorder %s19, 0
      %p165 = por %p163, %p164
      %p166 = scmp.ne.s32.totalorder %s158, %s160
      %p167 = scmp.eq.s32.totalorder %s24, 1
      %p168 = por %p166, %p167
      %p169 = scmp.ne.s32.totalorder %s160, %s161
      %p170 = scmp.eq.s32.totalorder %s24, 0
      %p171 = por %p169, %p170
      %p172 = scmp.ne.s32.totalorder %s160, %s161
      %p173 = scmp.eq.s32.totalorder %s25, 1
      %p174 = por %p172, %p173
      %p176 = scmp.ne.s32.totalorder %s161, %s175
      %p177 = scmp.eq.s32.totalorder %s25, 0
      %p178 = por %p176, %p177
      %s180 = sadd.s32 %s179, 1
      %p183 = scmp.eq.s32.totalorder %s19, 1
      %p184 = scmp.ne.s32.totalorder %s179, %s181
      %p185 = scmp.eq.s32.totalorder %s19, 0
      %p186 = por %p184, %p185
      %p187 = scmp.ne.s32.totalorder %s179, %s181
      %p188 = scmp.eq.s32.totalorder %s24, 1
      %p189 = por %p187, %p188
      %p190 = scmp.ne.s32.totalorder %s181, %s182
      %p191 = scmp.eq.s32.totalorder %s24, 0
      %p192 = por %p190, %p191
      %p193 = scmp.ne.s32.totalorder %s181, %s182
      %p194 = scmp.eq.s32.totalorder %s25, 1
      %p195 = por %p193, %p194
      %p197 = scmp.ne.s32.totalorder %s182, %s196
      %p198 = scmp.eq.s32.totalorder %s25, 0
      %p199 = por %p197, %p198
      %s200 = ssub.s32 %s19, %s26
      %p201 = scmp.eq.s32.totalorder %s200, 0
      %s203 = sadd.s32 %s202, 1
      %s204 = scalar_select %p201, %s202, %s203
      %p207 = pneg %p201
      %p208 = scmp.eq.s32.totalorder %s19, 1
      %p209 = por %p207, %p208
      %p210 = scmp.ne.s32.totalorder %s202, %s205
      %p211 = scmp.eq.s32.totalorder %s19, 0
      %p212 = por %p210, %p211
      %p213 = scmp.ne.s32.totalorder %s202, %s205
      %p214 = scmp.eq.s32.totalorder %s24, 1
      %p215 = por %p213, %p214
      %p216 = scmp.ne.s32.totalorder %s205, %s206
      %p217 = scmp.eq.s32.totalorder %s24, 0
      %p218 = por %p216, %p217
      %p219 = scmp.ne.s32.totalorder %s205, %s206
      %p220 = scmp.eq.s32.totalorder %s25, 1
      %p221 = por %p219, %p220
      %p223 = scmp.ne.s32.totalorder %s206, %s222
      %p224 = scmp.eq.s32.totalorder %s25, 0
      %p225 = por %p223, %p224
      %p226 = scmp.le.s32.totalorder 1, %s19
      %p227 = scmp.lt.s32.totalorder %s19, 3
      %p228 = pnand %p226, %p227
      %p229 = pneg %p228
      // Predicated region
      $region9: #{tpu_custom_call.1} parent=5 // pred_check
        _
      $region10: #{tpu_custom_call.1} parent=5 // pred_check_branch
        %231 = sbr.rel (%p228) target = $region12
      $region11: #{tpu_custom_call.1} parent=5 // pred_region
        %s232 = ssub.s32 %s19, 1
        // Predicated region
        $region13: #{tpu_custom_call.1} parent=11 // pred_check
          %p233 = pneg %p66
        $region14: #{tpu_custom_call.1} parent=11 // pred_check_branch
          %235 = sbr.rel (%p233) target = $region16
        $region15: #{tpu_custom_call.1} parent=11 // pred_region
          _
        $region16: #{tpu_custom_call.1} parent=11 // pred_fallthru
          _
        // Predicated region
        $region17: #{tpu_custom_call.1} parent=11 // pred_check
          %p236 = pneg %p87
        $region18: #{tpu_custom_call.1} parent=11 // pred_check_branch
          %238 = sbr.rel (%p236) target = $region20
        $region19: #{tpu_custom_call.1} parent=11 // pred_region
          %s240 = ssub.s32 9216, 9216
          %241 = vsyncadd [#allocation9], %s240
          %s242 = sshll.u32 [#allocation8], 4
          %s243 = int_to_ptr.vmem [resolvable:$true] %s242
          %248 = dma.hbm_to_vmem [thread:$0]  %s2, 9216, %s243, [#allocation9], 64, 64, 4
        $region20: #{tpu_custom_call.1} parent=11 // pred_fallthru
          _
        // Predicated region
        $region21: #{tpu_custom_call.1} parent=11 // pred_check
          %p249 = pneg %p108
        $region22: #{tpu_custom_call.1} parent=11 // pred_check_branch
          %251 = sbr.rel (%p249) target = $region24
        $region23: #{tpu_custom_call.1} parent=11 // pred_region
          _
        $region24: #{tpu_custom_call.1} parent=11 // pred_fallthru
          _
        // Predicated region
        $region25: #{tpu_custom_call.1} parent=11 // pred_check
          %p252 = pneg %p129
        $region26: #{tpu_custom_call.1} parent=11 // pred_check_branch
          %254 = sbr.rel (%p252) target = $region28
        $region27: #{tpu_custom_call.1} parent=11 // pred_region
          %s256 = ssub.s32 9216, 9216
          %257 = vsyncadd [#allocation12], %s256
          %s258 = sshll.u32 [#allocation11], 4
          %s259 = int_to_ptr.vmem [resolvable:$true] %s258
          %264 = dma.hbm_to_vmem [thread:$0]  %s4, 9216, %s259, [#allocation12], 64, 64, 4
        $region28: #{tpu_custom_call.1} parent=11 // pred_fallthru
          _
        // Predicated region
        $region29: #{tpu_custom_call.1} parent=11 // pred_check
          %p265 = pneg %p150
        $region30: #{tpu_custom_call.1} parent=11 // pred_check_branch
          %267 = sbr.rel (%p265) target = $region32
        $region31: #{tpu_custom_call.1} parent=11 // pred_region
          _
        $region32: #{tpu_custom_call.1} parent=11 // pred_fallthru
          _
        // Predicated region
        $region33: #{tpu_custom_call.1} parent=11 // pred_check
          %p268 = pneg %p171
        $region34: #{tpu_custom_call.1} parent=11 // pred_check_branch
          %270 = sbr.rel (%p268) target = $region36
        $region35: #{tpu_custom_call.1} parent=11 // pred_region
          %s272 = ssub.s32 1024, 1024
          %273 = vsyncadd [#allocation12], %s272
          %s274 = sshll.u32 [#allocation13], 4
          %s275 = int_to_ptr.vmem [resolvable:$true] %s274
          %280 = dma.hbm_to_vmem [thread:$0]  %s6, 1024, %s275, [#allocation12], 64, 64, 4
        $region36: #{tpu_custom_call.1} parent=11 // pred_fallthru
          _
        // Predicated region
        $region37: #{tpu_custom_call.1} parent=11 // pred_check
          %p281 = pneg %p192
        $region38: #{tpu_custom_call.1} parent=11 // pred_check_branch
          %283 = sbr.rel (%p281) target = $region40
        $region39: #{tpu_custom_call.1} parent=11 // pred_region
          _
        $region40: #{tpu_custom_call.1} parent=11 // pred_fallthru
          _
      $region12: #{tpu_custom_call.1} parent=5 // pred_fallthru
        _
      %p284 = scmp.lt.s32.totalorder %s19, 2
      // Predicated region
      $region41: #{tpu_custom_call.1} parent=5 // pred_check
        %p285 = pneg %p284
      $region42: #{tpu_custom_call.1} parent=5 // pred_check_branch
        %287 = sbr.rel (%p285) target = $region44
      $region43: #{tpu_custom_call.1} parent=5 // pred_region
        // Predicated region
        $region45: #{tpu_custom_call.1} parent=43 // pred_check
          %p288 = pneg %p39
        $region46: #{tpu_custom_call.1} parent=43 // pred_check_branch
          %290 = sbr.rel (%p288) target = $region48
        $region47: #{tpu_custom_call.1} parent=43 // pred_region
          %p291 = scmp.lt.s32.totalorder %s19, 1
          %s292 = scalar_select %p291, %s19, 1
          %s293 = smul.addr %s292, 32
          %s294 = smul.addr %s293, 4
          %s295 = scalar_lea.vmem %s0, %s294
        $region48: #{tpu_custom_call.1} parent=43 // pred_fallthru
          _
      $region44: #{tpu_custom_call.1} parent=5 // pred_fallthru
        _
      %p296 = scmp.le.s32.totalorder 1, %s19
      %p297 = scmp.lt.s32.totalorder %s19, 3
      %p298 = pnand %p296, %p297
      %p299 = pneg %p298
      // Predicated region
      $region49: #{tpu_custom_call.1} parent=5 // pred_check
        _
      $region50: #{tpu_custom_call.1} parent=5 // pred_check_branch
        %301 = sbr.rel (%p298) target = $region52
      $region51: #{tpu_custom_call.1} parent=5 // pred_region
        %s302 = ssub.s32 %s19, 1
        // Predicated region
        $region53: #{tpu_custom_call.1} parent=51 // pred_check
          %p303 = pneg %p87
        $region54: #{tpu_custom_call.1} parent=51 // pred_check_branch
          %305 = sbr.rel (%p303) target = $region56
        $region55: #{tpu_custom_call.1} parent=51 // pred_region
          %306 = dma.done [#allocation9], 9216
        $region56: #{tpu_custom_call.1} parent=51 // pred_fallthru
          _
        // Predicated region
        $region57: #{tpu_custom_call.1} parent=51 // pred_check
          %p307 = pneg %p129
        $region58: #{tpu_custom_call.1} parent=51 // pred_check_branch
          %309 = sbr.rel (%p307) target = $region60
        $region59: #{tpu_custom_call.1} parent=51 // pred_region
          %310 = dma.done [#allocation12], 9216
        $region60: #{tpu_custom_call.1} parent=51 // pred_fallthru
          _
        // Predicated region
        $region61: #{tpu_custom_call.1} parent=51 // pred_check
          %p311 = pneg %p171
        $region62: #{tpu_custom_call.1} parent=51 // pred_check_branch
          %313 = sbr.rel (%p311) target = $region64
        $region63: #{tpu_custom_call.1} parent=51 // pred_region
          %314 = dma.done [#allocation12], 1024
        $region64: #{tpu_custom_call.1} parent=51 // pred_fallthru
          _
        %p315 = scmp.lt.s32.totalorder %s24, 1
        %s316 = scalar_select %p315, %s24, 1
        %s317 = smul.addr %s316, 32
        %s318 = smul.addr %s317, 4
        %s319 = scalar_lea.vmem %s0, %s318
        %p320 = pneg %p45
        %p321 = pneg %p42
        %p322 = pneg %p66
        %p323 = pneg %p63
        %p324 = pneg %p87
        %p325 = pneg %p84
        %p326 = pneg %p108
        %p327 = pneg %p105
        %p328 = pneg %p129
        %p329 = pneg %p126
        %p330 = pneg %p150
        %p331 = pneg %p147
        %p332 = pneg %p171
        %p333 = pneg %p168
        %p334 = pneg %p192
        %p335 = pneg %p189
        %p336 = pneg %p218
        %p337 = pneg %p215
        %s338 = sand.u32 %s205, 1
        %s339 = scalar_lea.sflag [#allocation10], %s338
        %s340 = sand.u32 %s205, 1
        %s341 = smul.addr %s340, 32
        %s342 = scalar_lea.vmem [#allocation14], %s341
        %p343 = scmp.lt.s32.totalorder %s24, 1
        %s344 = scalar_select %p343, %s24, 1
        %s345 = smul.addr %s344, 32
        %s346 = smul.addr %s345, 4
        %s347 = scalar_lea.vmem %s0, %s346
        %v351 = vld [vmem:[%s1] sm:$0xff]
        %v352 = vld [vmem:[%s1 + $0x8] sm:$0xff]
        %v353 = vld [vmem:[%s1 + $0x10] sm:$0xff]
        %v354 = vld [vmem:[%s1 + $0x18] sm:$0xff]
        %v355 = vld [vmem:[%s1 + $0x20] sm:$0xff]
        %v356 = vld [vmem:[%s1 + $0x28] sm:$0xff]
        %v357 = vld [vmem:[%s1 + $0x30] sm:$0xff]
        %v358 = vld [vmem:[%s1 + $0x38] sm:$0xff]
        %v359 = vld [vmem:[%s1 + $0x40] sm:$0xff]
        %v360 = vld [vmem:[%s1 + $0x48] sm:$0xff]
        %v361 = vld [vmem:[%s1 + $0x50] sm:$0xff]
        %v362 = vld [vmem:[%s1 + $0x58] sm:$0xff]
        %v363 = vld [vmem:[%s1 + $0x60] sm:$0xff]
        %v364 = vld [vmem:[%s1 + $0x68] sm:$0xff]
        %v365 = vld [vmem:[%s1 + $0x70] sm:$0xff]
        %v366 = vld [vmem:[%s1 + $0x78] sm:$0xff]
        %v367 = vld [vmem:[%s1 + $0x80] sm:$0xff]
        %v368 = vld [vmem:[%s1 + $0x88] sm:$0xff]
        %v369 = vld [vmem:[%s1 + $0x90] sm:$0xff]
        %v370 = vld [vmem:[%s1 + $0x98] sm:$0xff]
        %v371 = vld [vmem:[%s1 + $0xa0] sm:$0xff]
        %v372 = vld [vmem:[%s1 + $0xa8] sm:$0xff]
        %v373 = vld [vmem:[%s1 + $0xb0] sm:$0xff]
        %v374 = vld [vmem:[%s1 + $0xb8] sm:$0xff]
        %v375 = vld [vmem:[%s1 + $0xc0] sm:$0xff]
        %v376 = vld [vmem:[%s1 + $0xc8] sm:$0xff]
        %v377 = vld [vmem:[%s1 + $0xd0] sm:$0xff]
        %v378 = vld [vmem:[%s1 + $0xd8] sm:$0xff]
        %v379 = vld [vmem:[%s1 + $0xe0] sm:$0xff]
        %v380 = vld [vmem:[%s1 + $0xe8] sm:$0xff]
        %v381 = vld [vmem:[%s1 + $0xf0] sm:$0xff]
        %v382 = vld [vmem:[%s1 + $0xf8] sm:$0xff]
        %vm383 = vcmp.ge.s32.totalorder %v351, 1
        %vm384 = vcmp.ge.s32.totalorder %v352, 1
        %vm385 = vcmp.ge.s32.totalorder %v353, 1
        %vm386 = vcmp.ge.s32.totalorder %v354, 1
        %vm387 = vcmp.ge.s32.totalorder %v355, 1
        %vm388 = vcmp.ge.s32.totalorder %v356, 1
        %vm389 = vcmp.ge.s32.totalorder %v357, 1
        %vm390 = vcmp.ge.s32.totalorder %v358, 1
        %vm391 = vcmp.ge.s32.totalorder %v359, 1
        %vm392 = vcmp.ge.s32.totalorder %v360, 1
        %vm393 = vcmp.ge.s32.totalorder %v361, 1
        %vm394 = vcmp.ge.s32.totalorder %v362, 1
        %vm395 = vcmp.ge.s32.totalorder %v363, 1
        %vm396 = vcmp.ge.s32.totalorder %v364, 1
        %vm397 = vcmp.ge.s32.totalorder %v365, 1
        %vm398 = vcmp.ge.s32.totalorder %v366, 1
        %vm399 = vcmp.ge.s32.totalorder %v367, 1
        %vm400 = vcmp.ge.s32.totalorder %v368, 1
        %vm401 = vcmp.ge.s32.totalorder %v369, 1
        %vm402 = vcmp.ge.s32.totalorder %v370, 1
        %vm403 = vcmp.ge.s32.totalorder %v371, 1
        %vm404 = vcmp.ge.s32.totalorder %v372, 1
        %vm405 = vcmp.ge.s32.totalorder %v373, 1
        %vm406 = vcmp.ge.s32.totalorder %v374, 1
        %vm407 = vcmp.ge.s32.totalorder %v375, 1
        %vm408 = vcmp.ge.s32.totalorder %v376, 1
        %vm409 = vcmp.ge.s32.totalorder %v377, 1
        %vm410 = vcmp.ge.s32.totalorder %v378, 1
        %vm411 = vcmp.ge.s32.totalorder %v379, 1
        %vm412 = vcmp.ge.s32.totalorder %v380, 1
        %vm413 = vcmp.ge.s32.totalorder %v381, 1
        %vm414 = vcmp.ge.s32.totalorder %v382, 1
        %vm415 = vcmp.le.s32.totalorder %v351, 14
        %vm416 = vcmp.le.s32.totalorder %v352, 14
        %vm417 = vcmp.le.s32.totalorder %v353, 14
        %vm418 = vcmp.le.s32.totalorder %v354, 14
        %vm419 = vcmp.le.s32.totalorder %v355, 14
        %vm420 = vcmp.le.s32.totalorder %v356, 14
        %vm421 = vcmp.le.s32.totalorder %v357, 14
        %vm422 = vcmp.le.s32.totalorder %v358, 14
        %vm423 = vcmp.le.s32.totalorder %v359, 14
        %vm424 = vcmp.le.s32.totalorder %v360, 14
        %vm425 = vcmp.le.s32.totalorder %v361, 14
        %vm426 = vcmp.le.s32.totalorder %v362, 14
        %vm427 = vcmp.le.s32.totalorder %v363, 14
        %vm428 = vcmp.le.s32.totalorder %v364, 14
        %vm429 = vcmp.le.s32.totalorder %v365, 14
        %vm430 = vcmp.le.s32.totalorder %v366, 14
        %vm431 = vcmp.le.s32.totalorder %v367, 14
        %vm432 = vcmp.le.s32.totalorder %v368, 14
        %vm433 = vcmp.le.s32.totalorder %v369, 14
        %vm434 = vcmp.le.s32.totalorder %v370, 14
        %vm435 = vcmp.le.s32.totalorder %v371, 14
        %vm436 = vcmp.le.s32.totalorder %v372, 14
        %vm437 = vcmp.le.s32.totalorder %v373, 14
        %vm438 = vcmp.le.s32.totalorder %v374, 14
        %vm439 = vcmp.le.s32.totalorder %v375, 14
        %vm440 = vcmp.le.s32.totalorder %v376, 14
        %vm441 = vcmp.le.s32.totalorder %v377, 14
        %vm442 = vcmp.le.s32.totalorder %v378, 14
        %vm443 = vcmp.le.s32.totalorder %v379, 14
        %vm444 = vcmp.le.s32.totalorder %v380, 14
        %vm445 = vcmp.le.s32.totalorder %v381, 14
        %vm446 = vcmp.le.s32.totalorder %v382, 14
        %447 = vst [vmem:[#allocation2] sm:$0xf] 0
        %448 = vst [vmem:[#allocation2 + $0x4] sm:$0xf] 0
        %449 = vst [vmem:[#allocation2 + $0x8] sm:$0xf] 0
        %450 = vst [vmem:[#allocation2 + $0x8c] sm:$0xf] 0
        %451 = vst [vmem:[#allocation2 + $0x90] sm:$0xf] 0
        %452 = vst [vmem:[#allocation2 + $0x94] sm:$0xf] 0
        %453 = vst [vmem:[#allocation3] sm:$0xf] 0
        %454 = vst [vmem:[#allocation3 + $0x4] sm:$0xf] 0
        %455 = vst [vmem:[#allocation3 + $0x8] sm:$0xf] 0
        %456 = vst [vmem:[#allocation3 + $0x8c] sm:$0xf] 0
        %457 = vst [vmem:[#allocation3 + $0x90] sm:$0xf] 0
        %458 = vst [vmem:[#allocation3 + $0x94] sm:$0xf] 0
        %v459 = vld [vmem:[%s347] sm:$0xf]
        %v460 = vld [vmem:[%s347 + $0x4] sm:$0xf]
        %v461 = vld [vmem:[%s347 + $0x8] sm:$0xf]
        %v462 = vld [vmem:[%s347 + $0xc] sm:$0xf]
        %v463 = vld [vmem:[%s347 + $0x10] sm:$0xf]
        %v464 = vld [vmem:[%s347 + $0x14] sm:$0xf]
        %v465 = vld [vmem:[%s347 + $0x18] sm:$0xf]
        %v466 = vld [vmem:[%s347 + $0x1c] sm:$0xf]
        %v467 = vld [vmem:[%s347 + $0x20] sm:$0xf]
        %v468 = vld [vmem:[%s347 + $0x24] sm:$0xf]
        %v469 = vld [vmem:[%s347 + $0x28] sm:$0xf]
        %v470 = vld [vmem:[%s347 + $0x2c] sm:$0xf]
        %v471 = vld [vmem:[%s347 + $0x30] sm:$0xf]
        %v472 = vld [vmem:[%s347 + $0x34] sm:$0xf]
        %v473 = vld [vmem:[%s347 + $0x38] sm:$0xf]
        %v474 = vld [vmem:[%s347 + $0x3c] sm:$0xf]
        %v475 = vld [vmem:[%s347 + $0x40] sm:$0xf]
        %v476 = vld [vmem:[%s347 + $0x44] sm:$0xf]
        %v477 = vld [vmem:[%s347 + $0x48] sm:$0xf]
        %v478 = vld [vmem:[%s347 + $0x4c] sm:$0xf]
        %v479 = vld [vmem:[%s347 + $0x50] sm:$0xf]
        %v480 = vld [vmem:[%s347 + $0x54] sm:$0xf]
        %v481 = vld [vmem:[%s347 + $0x58] sm:$0xf]
        %v482 = vld [vmem:[%s347 + $0x5c] sm:$0xf]
        %v483 = vld [vmem:[%s347 + $0x60] sm:$0xf]
        %v484 = vld [vmem:[%s347 + $0x64] sm:$0xf]
        %v485 = vld [vmem:[%s347 + $0x68] sm:$0xf]
        %v486 = vld [vmem:[%s347 + $0x6c] sm:$0xf]
        %v487 = vld [vmem:[%s347 + $0x70] sm:$0xf]
        %v488 = vld [vmem:[%s347 + $0x74] sm:$0xf]
        %v489 = vld [vmem:[%s347 + $0x78] sm:$0xf]
        %v490 = vld [vmem:[%s347 + $0x7c] sm:$0xf]
        %v491 = vmax.bf16 %v459, 0
        %v492 = vmax.bf16 %v460, 0
        %v493 = vmax.bf16 %v461, 0
        %v494 = vmax.bf16 %v462, 0
        %v495 = vmax.bf16 %v463, 0
        %v496 = vmax.bf16 %v464, 0
        %v497 = vmax.bf16 %v465, 0
        %v498 = vmax.bf16 %v466, 0
        %v499 = vmax.bf16 %v467, 0
        %v500 = vmax.bf16 %v468, 0
        %v501 = vmax.bf16 %v469, 0
        %v502 = vmax.bf16 %v470, 0
        %v503 = vmax.bf16 %v471, 0
        %v504 = vmax.bf16 %v472, 0
        %v505 = vmax.bf16 %v473, 0
        %v506 = vmax.bf16 %v474, 0
        %v507 = vmax.bf16 %v475, 0
        %v508 = vmax.bf16 %v476, 0
        %v509 = vmax.bf16 %v477, 0
        %v510 = vmax.bf16 %v478, 0
        %v511 = vmax.bf16 %v479, 0
        %v512 = vmax.bf16 %v480, 0
        %v513 = vmax.bf16 %v481, 0
        %v514 = vmax.bf16 %v482, 0
        %v515 = vmax.bf16 %v483, 0
        %v516 = vmax.bf16 %v484, 0
        %v517 = vmax.bf16 %v485, 0
        %v518 = vmax.bf16 %v486, 0
        %v519 = vmax.bf16 %v487, 0
        %v520 = vmax.bf16 %v488, 0
        %v521 = vmax.bf16 %v489, 0
        %v522 = vmax.bf16 %v490, 0
        %523 = vst [vmem:[#allocation2 + $0xc] sm:$0xf] %v491
        %524 = vst [vmem:[#allocation2 + $0x10] sm:$0xf] %v492
        %525 = vst [vmem:[#allocation2 + $0x14] sm:$0xf] %v493
        %526 = vst [vmem:[#allocation2 + $0x18] sm:$0xf] %v494
        %527 = vst [vmem:[#allocation2 + $0x1c] sm:$0xf] %v495
        %528 = vst [vmem:[#allocation2 + $0x20] sm:$0xf] %v496
        %529 = vst [vmem:[#allocation2 + $0x24] sm:$0xf] %v497
        %530 = vst [vmem:[#allocation2 + $0x28] sm:$0xf] %v498
        %531 = vst [vmem:[#allocation2 + $0x2c] sm:$0xf] %v499
        %532 = vst [vmem:[#allocation2 + $0x30] sm:$0xf] %v500
        %533 = vst [vmem:[#allocation2 + $0x34] sm:$0xf] %v501
        %534 = vst [vmem:[#allocation2 + $0x38] sm:$0xf] %v502
        %535 = vst [vmem:[#allocation2 + $0x3c] sm:$0xf] %v503
        %536 = vst [vmem:[#allocation2 + $0x40] sm:$0xf] %v504
        %537 = vst [vmem:[#allocation2 + $0x44] sm:$0xf] %v505
        %538 = vst [vmem:[#allocation2 + $0x48] sm:$0xf] %v506
        %539 = vst [vmem:[#allocation2 + $0x4c] sm:$0xf] %v507
        %540 = vst [vmem:[#allocation2 + $0x50] sm:$0xf] %v508
        %541 = vst [vmem:[#allocation2 + $0x54] sm:$0xf] %v509
        %542 = vst [vmem:[#allocation2 + $0x58] sm:$0xf] %v510
        %543 = vst [vmem:[#allocation2 + $0x5c] sm:$0xf] %v511
        %544 = vst [vmem:[#allocation2 + $0x60] sm:$0xf] %v512
        %545 = vst [vmem:[#allocation2 + $0x64] sm:$0xf] %v513
        %546 = vst [vmem:[#allocation2 + $0x68] sm:$0xf] %v514
        %547 = vst [vmem:[#allocation2 + $0x6c] sm:$0xf] %v515
        %548 = vst [vmem:[#allocation2 + $0x70] sm:$0xf] %v516
        %549 = vst [vmem:[#allocation2 + $0x74] sm:$0xf] %v517
        %550 = vst [vmem:[#allocation2 + $0x78] sm:$0xf] %v518
        %551 = vst [vmem:[#allocation2 + $0x7c] sm:$0xf] %v519
        %552 = vst [vmem:[#allocation2 + $0x80] sm:$0xf] %v520
        %553 = vst [vmem:[#allocation2 + $0x84] sm:$0xf] %v521
        %554 = vst [vmem:[#allocation2 + $0x88] sm:$0xf] %v522
        %v555 = vld [vmem:[#allocation2] sm:$0x8]
        %v556 = vld [vmem:[#allocation2 + $0x4] sm:$0xf]
        %v557 = vld [vmem:[#allocation2 + $0x8] sm:$0xf]
        %v558 = vld [vmem:[#allocation2 + $0xc] sm:$0xf]
        %v559 = vld [vmem:[#allocation2 + $0x10] sm:$0xf]
        %v560 = vld [vmem:[#allocation2 + $0x14] sm:$0xf]
        %v561 = vld [vmem:[#allocation2 + $0x18] sm:$0xf]
        %v562 = vld [vmem:[#allocation2 + $0x1c] sm:$0xf]
        %v563 = vld [vmem:[#allocation2 + $0x20] sm:$0xf]
        %v564 = vld [vmem:[#allocation2 + $0x24] sm:$0xf]
        %v565 = vld [vmem:[#allocation2 + $0x28] sm:$0xf]
        %v566 = vld [vmem:[#allocation2 + $0x2c] sm:$0xf]
        %v567 = vld [vmem:[#allocation2 + $0x30] sm:$0xf]
        %v568 = vld [vmem:[#allocation2 + $0x34] sm:$0xf]
        %v569 = vld [vmem:[#allocation2 + $0x38] sm:$0xf]
        %v570 = vld [vmem:[#allocation2 + $0x3c] sm:$0xf]
        %v571 = vld [vmem:[#allocation2 + $0x40] sm:$0xf]
        %v572 = vld [vmem:[#allocation2 + $0x44] sm:$0xf]
        %v573 = vld [vmem:[#allocation2 + $0x48] sm:$0xf]
        %v574 = vld [vmem:[#allocation2 + $0x4c] sm:$0xf]
        %v575 = vld [vmem:[#allocation2 + $0x50] sm:$0xf]
        %v576 = vld [vmem:[#allocation2 + $0x54] sm:$0xf]
        %v577 = vld [vmem:[#allocation2 + $0x58] sm:$0xf]
        %v578 = vld [vmem:[#allocation2 + $0x5c] sm:$0xf]
        %v579 = vld [vmem:[#allocation2 + $0x60] sm:$0xf]
        %v580 = vld [vmem:[#allocation2 + $0x64] sm:$0xf]
        %v581 = vld [vmem:[#allocation2 + $0x68] sm:$0xf]
        %v582 = vld [vmem:[#allocation2 + $0x6c] sm:$0xf]
        %v583 = vld [vmem:[#allocation2 + $0x70] sm:$0xf]
        %v584 = vld [vmem:[#allocation2 + $0x74] sm:$0xf]
        %v585 = vld [vmem:[#allocation2 + $0x78] sm:$0xf]
        %v586 = vld [vmem:[#allocation2 + $0x7c] sm:$0xf]
        %v587 = vld [vmem:[#allocation2 + $0x80] sm:$0xf]
        %v588 = vsel %vm383, 1, 0
        %v589 = vsel %vm384, 1, 0
        %v590 = vsel %vm385, 1, 0
        %v591 = vsel %vm386, 1, 0
        %v592 = vsel %vm387, 1, 0
        %v593 = vsel %vm388, 1, 0
        %v594 = vsel %vm389, 1, 0
        %v595 = vsel %vm390, 1, 0
        %v596 = vsel %vm391, 1, 0
        %v597 = vsel %vm392, 1, 0
        %v598 = vsel %vm393, 1, 0
        %v599 = vsel %vm394, 1, 0
        %v600 = vsel %vm395, 1, 0
        %v601 = vsel %vm396, 1, 0
        %v602 = vsel %vm397, 1, 0
        %v603 = vsel %vm398, 1, 0
        %v604 = vsel %vm399, 1, 0
        %v605 = vsel %vm400, 1, 0
        %v606 = vsel %vm401, 1, 0
        %v607 = vsel %vm402, 1, 0
        %v608 = vsel %vm403, 1, 0
        %v609 = vsel %vm404, 1, 0
        %v610 = vsel %vm405, 1, 0
        %v611 = vsel %vm406, 1, 0
        %v612 = vsel %vm407, 1, 0
        %v613 = vsel %vm408, 1, 0
        %v614 = vsel %vm409, 1, 0
        %v615 = vsel %vm410, 1, 0
        %v616 = vsel %vm411, 1, 0
        %v617 = vsel %vm412, 1, 0
        %v618 = vsel %vm413, 1, 0
        %v619 = vsel %vm414, 1, 0
        %620 = vset.pattern.permute.xlu0 0
        %621 = vperm.xlu0 %620, %v588
        %v622 = vpop.permute.xlu0 %621
        %623 = vset.pattern.permute.xlu0 0
        %624 = vperm.xlu0 %623, %v589
        %v625 = vpop.permute.xlu0 %624
        %626 = vset.pattern.permute.xlu0 0
        %627 = vperm.xlu0 %626, %v590
        %v628 = vpop.permute.xlu0 %627
        %629 = vset.pattern.permute.xlu0 0
        %630 = vperm.xlu0 %629, %v591
        %v631 = vpop.permute.xlu0 %630
        %632 = vset.pattern.permute.xlu0 0
        %633 = vperm.xlu0 %632, %v592
        %v634 = vpop.permute.xlu0 %633
        %635 = vset.pattern.permute.xlu0 0
        %636 = vperm.xlu0 %635, %v593
        %v637 = vpop.permute.xlu0 %636
        %638 = vset.pattern.permute.xlu0 0
        %639 = vperm.xlu0 %638, %v594
        %v640 = vpop.permute.xlu0 %639
        %641 = vset.pattern.permute.xlu0 0
        %642 = vperm.xlu0 %641, %v595
        %v643 = vpop.permute.xlu0 %642
        %644 = vset.pattern.permute.xlu0 0
        %645 = vperm.xlu0 %644, %v596
        %v646 = vpop.permute.xlu0 %645
        %647 = vset.pattern.permute.xlu0 0
        %648 = vperm.xlu0 %647, %v597
        %v649 = vpop.permute.xlu0 %648
        %650 = vset.pattern.permute.xlu0 0
        %651 = vperm.xlu0 %650, %v598
        %v652 = vpop.permute.xlu0 %651
        %653 = vset.pattern.permute.xlu0 0
        %654 = vperm.xlu0 %653, %v599
        %v655 = vpop.permute.xlu0 %654
        %656 = vset.pattern.permute.xlu0 0
        %657 = vperm.xlu0 %656, %v600
        %v658 = vpop.permute.xlu0 %657
        %659 = vset.pattern.permute.xlu0 0
        %660 = vperm.xlu0 %659, %v601
        %v661 = vpop.permute.xlu0 %660
        %662 = vset.pattern.permute.xlu0 0
        %663 = vperm.xlu0 %662, %v602
        %v664 = vpop.permute.xlu0 %663
        %665 = vset.pattern.permute.xlu0 0
        %666 = vperm.xlu0 %665, %v603
        %v667 = vpop.permute.xlu0 %666
        %668 = vset.pattern.permute.xlu0 0
        %669 = vperm.xlu0 %668, %v604
        %v670 = vpop.permute.xlu0 %669
        %671 = vset.pattern.permute.xlu0 0
        %672 = vperm.xlu0 %671, %v605
        %v673 = vpop.permute.xlu0 %672
        %674 = vset.pattern.permute.xlu0 0
        %675 = vperm.xlu0 %674, %v606
        %v676 = vpop.permute.xlu0 %675
        %677 = vset.pattern.permute.xlu0 0
        %678 = vperm.xlu0 %677, %v607
        %v679 = vpop.permute.xlu0 %678
        %680 = vset.pattern.permute.xlu0 0
        %681 = vperm.xlu0 %680, %v608
        %v682 = vpop.permute.xlu0 %681
        %683 = vset.pattern.permute.xlu0 0
        %684 = vperm.xlu0 %683, %v609
        %v685 = vpop.permute.xlu0 %684
        %686 = vset.pattern.permute.xlu0 0
        %687 = vperm.xlu0 %686, %v610
        %v688 = vpop.permute.xlu0 %687
        %689 = vset.pattern.permute.xlu0 0
        %690 = vperm.xlu0 %689, %v611
        %v691 = vpop.permute.xlu0 %690
        %692 = vset.pattern.permute.xlu0 0
        %693 = vperm.xlu0 %692, %v612
        %v694 = vpop.permute.xlu0 %693
        %695 = vset.pattern.permute.xlu0 0
        %696 = vperm.xlu0 %695, %v613
        %v697 = vpop.permute.xlu0 %696
        %698 = vset.pattern.permute.xlu0 0
        %699 = vperm.xlu0 %698, %v614
        %v700 = vpop.permute.xlu0 %699
        %701 = vset.pattern.permute.xlu0 0
        %702 = vperm.xlu0 %701, %v615
        %v703 = vpop.permute.xlu0 %702
        %704 = vset.pattern.permute.xlu0 0
        %705 = vperm.xlu0 %704, %v616
        %v706 = vpop.permute.xlu0 %705
        %707 = vset.pattern.permute.xlu0 0
        %708 = vperm.xlu0 %707, %v617
        %v709 = vpop.permute.xlu0 %708
        %710 = vset.pattern.permute.xlu0 0
        %711 = vperm.xlu0 %710, %v618
        %v712 = vpop.permute.xlu0 %711
        %713 = vset.pattern.permute.xlu0 0
        %714 = vperm.xlu0 %713, %v619
        %v715 = vpop.permute.xlu0 %714
        %vm716 = vcmp.eq.s32.totalorder %v622, 1
        %vm717 = vcmp.eq.s32.totalorder %v625, 1
        %vm718 = vcmp.eq.s32.totalorder %v628, 1
        %vm719 = vcmp.eq.s32.totalorder %v631, 1
        %vm720 = vcmp.eq.s32.totalorder %v634, 1
        %vm721 = vcmp.eq.s32.totalorder %v637, 1
        %vm722 = vcmp.eq.s32.totalorder %v640, 1
        %vm723 = vcmp.eq.s32.totalorder %v643, 1
        %vm724 = vcmp.eq.s32.totalorder %v646, 1
        %vm725 = vcmp.eq.s32.totalorder %v649, 1
        %vm726 = vcmp.eq.s32.totalorder %v652, 1
        %vm727 = vcmp.eq.s32.totalorder %v655, 1
        %vm728 = vcmp.eq.s32.totalorder %v658, 1
        %vm729 = vcmp.eq.s32.totalorder %v661, 1
        %vm730 = vcmp.eq.s32.totalorder %v664, 1
        %vm731 = vcmp.eq.s32.totalorder %v667, 1
        %vm732 = vcmp.eq.s32.totalorder %v670, 1
        %vm733 = vcmp.eq.s32.totalorder %v673, 1
        %vm734 = vcmp.eq.s32.totalorder %v676, 1
        %vm735 = vcmp.eq.s32.totalorder %v679, 1
        %vm736 = vcmp.eq.s32.totalorder %v682, 1
        %vm737 = vcmp.eq.s32.totalorder %v685, 1
        %vm738 = vcmp.eq.s32.totalorder %v688, 1
        %vm739 = vcmp.eq.s32.totalorder %v691, 1
        %vm740 = vcmp.eq.s32.totalorder %v694, 1
        %vm741 = vcmp.eq.s32.totalorder %v697, 1
        %vm742 = vcmp.eq.s32.totalorder %v700, 1
        %vm743 = vcmp.eq.s32.totalorder %v703, 1
        %vm744 = vcmp.eq.s32.totalorder %v706, 1
        %vm745 = vcmp.eq.s32.totalorder %v709, 1
        %vm746 = vcmp.eq.s32.totalorder %v712, 1
        %vm747 = vcmp.eq.s32.totalorder %v715, 1
        %vm748 = vmpackc.low %vm716, %vm716
        %vm749 = vmpackc.low %vm717, %vm717
        %vm750 = vmpackc.low %vm718, %vm718
        %vm751 = vmpackc.low %vm719, %vm719
        %vm752 = vmpackc.low %vm720, %vm720
        %vm753 = vmpackc.low %vm721, %vm721
        %vm754 = vmpackc.low %vm722, %vm722
        %vm755 = vmpackc.low %vm723, %vm723
        %vm756 = vmpackc.low %vm724, %vm724
        %vm757 = vmpackc.low %vm725, %vm725
        %vm758 = vmpackc.low %vm726, %vm726
        %vm759 = vmpackc.low %vm727, %vm727
        %vm760 = vmpackc.low %vm728, %vm728
        %vm761 = vmpackc.low %vm729, %vm729
        %vm762 = vmpackc.low %vm730, %vm730
        %vm763 = vmpackc.low %vm731, %vm731
        %vm764 = vmpackc.low %vm732, %vm732
        %vm765 = vmpackc.low %vm733, %vm733
        %vm766 = vmpackc.low %vm734, %vm734
        %vm767 = vmpackc.low %vm735, %vm735
        %vm768 = vmpackc.low %vm736, %vm736
        %vm769 = vmpackc.low %vm737, %vm737
        %vm770 = vmpackc.low %vm738, %vm738
        %vm771 = vmpackc.low %vm739, %vm739
        %vm772 = vmpackc.low %vm740, %vm740
        %vm773 = vmpackc.low %vm741, %vm741
        %vm774 = vmpackc.low %vm742, %vm742
        %vm775 = vmpackc.low %vm743, %vm743
        %vm776 = vmpackc.low %vm744, %vm744
        %vm777 = vmpackc.low %vm745, %vm745
        %vm778 = vmpackc.low %vm746, %vm746
        %vm779 = vmpackc.low %vm747, %vm747
        %v780 = vsel %vm748, 65537, 0
        %v781 = vsel %vm749, 65537, 0
        %v782 = vsel %vm750, 65537, 0
        %v783 = vsel %vm751, 65537, 0
        %v784 = vsel %vm752, 65537, 0
        %v785 = vsel %vm753, 65537, 0
        %v786 = vsel %vm754, 65537, 0
        %v787 = vsel %vm755, 65537, 0
        %v788 = vsel %vm756, 65537, 0
        %v789 = vsel %vm757, 65537, 0
        %v790 = vsel %vm758, 65537, 0
        %v791 = vsel %vm759, 65537, 0
        %v792 = vsel %vm760, 65537, 0
        %v793 = vsel %vm761, 65537, 0
        %v794 = vsel %vm762, 65537, 0
        %v795 = vsel %vm763, 65537, 0
        %v796 = vsel %vm764, 65537, 0
        %v797 = vsel %vm765, 65537, 0
        %v798 = vsel %vm766, 65537, 0
        %v799 = vsel %vm767, 65537, 0
        %v800 = vsel %vm768, 65537, 0
        %v801 = vsel %vm769, 65537, 0
        %v802 = vsel %vm770, 65537, 0
        %v803 = vsel %vm771, 65537, 0
        %v804 = vsel %vm772, 65537, 0
        %v805 = vsel %vm773, 65537, 0
        %v806 = vsel %vm774, 65537, 0
        %v807 = vsel %vm775, 65537, 0
        %v808 = vsel %vm776, 65537, 0
        %v809 = vsel %vm777, 65537, 0
        %v810 = vsel %vm778, 65537, 0
        %v811 = vsel %vm779, 65537, 0
        %vm812 = vsmask.f32 3328
        %vm813 = vsmask.f32 7440
        %vm814 = vmor %vm812, %vm813
        %v816 = vshll.u32 %v780, 16
        %v818 = vrot.slane %v816, 5
        %v819 = vshrl.u32 %v780, 16
        %v821 = vrot.slane %v819, 4
        %v822 = vor.u32 %v821, %v818
        %v823 = vrot.slane %v822, 4
        %v825 = vshll.u32 %v781, 16
        %v827 = vrot.slane %v825, 5
        %v828 = vsel %vm814, %v823, %v827
        %v829 = vshrl.u32 %v781, 16
        %v831 = vrot.slane %v829, 4
        %v832 = vor.u32 %v831, %v827
        %v833 = vrot.slane %v832, 4
        %v835 = vshll.u32 %v782, 16
        %v837 = vrot.slane %v835, 5
        %v838 = vsel %vm814, %v833, %v837
        %v839 = vshrl.u32 %v782, 16
        %v841 = vrot.slane %v839, 4
        %v842 = vor.u32 %v841, %v837
        %v843 = vrot.slane %v842, 4
        %v845 = vshll.u32 %v783, 16
        %v847 = vrot.slane %v845, 5
        %v848 = vsel %vm814, %v843, %v847
        %v849 = vshrl.u32 %v783, 16
        %v851 = vrot.slane %v849, 4
        %v852 = vor.u32 %v851, %v847
        %v853 = vrot.slane %v852, 4
        %v855 = vshll.u32 %v784, 16
        %v857 = vrot.slane %v855, 5
        %v858 = vsel %vm814, %v853, %v857
        %v859 = vshrl.u32 %v784, 16
        %v861 = vrot.slane %v859, 4
        %v862 = vor.u32 %v861, %v857
        %v863 = vrot.slane %v862, 4
        %v865 = vshll.u32 %v785, 16
        %v867 = vrot.slane %v865, 5
        %v868 = vsel %vm814, %v863, %v867
        %v869 = vshrl.u32 %v785, 16
        %v871 = vrot.slane %v869, 4
        %v872 = vor.u32 %v871, %v867
        %v873 = vrot.slane %v872, 4
        %v875 = vshll.u32 %v786, 16
        %v877 = vrot.slane %v875, 5
        %v878 = vsel %vm814, %v873, %v877
        %v879 = vshrl.u32 %v786, 16
        %v881 = vrot.slane %v879, 4
        %v882 = vor.u32 %v881, %v877
        %v883 = vrot.slane %v882, 4
        %v885 = vshll.u32 %v787, 16
        %v887 = vrot.slane %v885, 5
        %v888 = vsel %vm814, %v883, %v887
        %v889 = vshrl.u32 %v787, 16
        %v891 = vrot.slane %v889, 4
        %v892 = vor.u32 %v891, %v887
        %v893 = vrot.slane %v892, 4
        %v895 = vshll.u32 %v788, 16
        %v897 = vrot.slane %v895, 5
        %v898 = vsel %vm814, %v893, %v897
        %v899 = vshrl.u32 %v788, 16
        %v901 = vrot.slane %v899, 4
        %v902 = vor.u32 %v901, %v897
        %v903 = vrot.slane %v902, 4
        %v905 = vshll.u32 %v789, 16
        %v907 = vrot.slane %v905, 5
        %v908 = vsel %vm814, %v903, %v907
        %v909 = vshrl.u32 %v789, 16
        %v911 = vrot.slane %v909, 4
        %v912 = vor.u32 %v911, %v907
        %v913 = vrot.slane %v912, 4
        %v915 = vshll.u32 %v790, 16
        %v917 = vrot.slane %v915, 5
        %v918 = vsel %vm814, %v913, %v917
        %v919 = vshrl.u32 %v790, 16
        %v921 = vrot.slane %v919, 4
        %v922 = vor.u32 %v921, %v917
        %v923 = vrot.slane %v922, 4
        %v925 = vshll.u32 %v791, 16
        %v927 = vrot.slane %v925, 5
        %v928 = vsel %vm814, %v923, %v927
        %v929 = vshrl.u32 %v791, 16
        %v931 = vrot.slane %v929, 4
        %v932 = vor.u32 %v931, %v927
        %v933 = vrot.slane %v932, 4
        %v935 = vshll.u32 %v792, 16
        %v937 = vrot.slane %v935, 5
        %v938 = vsel %vm814, %v933, %v937
        %v939 = vshrl.u32 %v792, 16
        %v941 = vrot.slane %v939, 4
        %v942 = vor.u32 %v941, %v937
        %v943 = vrot.slane %v942, 4
        %v945 = vshll.u32 %v793, 16
        %v947 = vrot.slane %v945, 5
        %v948 = vsel %vm814, %v943, %v947
        %v949 = vshrl.u32 %v793, 16
        %v951 = vrot.slane %v949, 4
        %v952 = vor.u32 %v951, %v947
        %v953 = vrot.slane %v952, 4
        %v955 = vshll.u32 %v794, 16
        %v957 = vrot.slane %v955, 5
        %v958 = vsel %vm814, %v953, %v957
        %v959 = vshrl.u32 %v794, 16
        %v961 = vrot.slane %v959, 4
        %v962 = vor.u32 %v961, %v957
        %v963 = vrot.slane %v962, 4
        %v965 = vshll.u32 %v795, 16
        %v967 = vrot.slane %v965, 5
        %v968 = vsel %vm814, %v963, %v967
        %v969 = vshrl.u32 %v795, 16
        %v971 = vrot.slane %v969, 4
        %v972 = vor.u32 %v971, %v967
        %v973 = vrot.slane %v972, 4
        %v975 = vshll.u32 %v796, 16
        %v977 = vrot.slane %v975, 5
        %v978 = vsel %vm814, %v973, %v977
        %v979 = vshrl.u32 %v796, 16
        %v981 = vrot.slane %v979, 4
        %v982 = vor.u32 %v981, %v977
        %v983 = vrot.slane %v982, 4
        %v985 = vshll.u32 %v797, 16
        %v987 = vrot.slane %v985, 5
        %v988 = vsel %vm814, %v983, %v987
        %v989 = vshrl.u32 %v797, 16
        %v991 = vrot.slane %v989, 4
        %v992 = vor.u32 %v991, %v987
        %v993 = vrot.slane %v992, 4
        %v995 = vshll.u32 %v798, 16
        %v997 = vrot.slane %v995, 5
        %v998 = vsel %vm814, %v993, %v997
        %v999 = vshrl.u32 %v798, 16
        %v1001 = vrot.slane %v999, 4
        %v1002 = vor.u32 %v1001, %v997
        %v1003 = vrot.slane %v1002, 4
        %v1005 = vshll.u32 %v799, 16
        %v1007 = vrot.slane %v1005, 5
        %v1008 = vsel %vm814, %v1003, %v1007
        %v1009 = vshrl.u32 %v799, 16
        %v1011 = vrot.slane %v1009, 4
        %v1012 = vor.u32 %v1011, %v1007
        %v1013 = vrot.slane %v1012, 4
        %v1015 = vshll.u32 %v800, 16
        %v1017 = vrot.slane %v1015, 5
        %v1018 = vsel %vm814, %v1013, %v1017
        %v1019 = vshrl.u32 %v800, 16
        %v1021 = vrot.slane %v1019, 4
        %v1022 = vor.u32 %v1021, %v1017
        %v1023 = vrot.slane %v1022, 4
        %v1025 = vshll.u32 %v801, 16
        %v1027 = vrot.slane %v1025, 5
        %v1028 = vsel %vm814, %v1023, %v1027
        %v1029 = vshrl.u32 %v801, 16
        %v1031 = vrot.slane %v1029, 4
        %v1032 = vor.u32 %v1031, %v1027
        %v1033 = vrot.slane %v1032, 4
        %v1035 = vshll.u32 %v802, 16
        %v1037 = vrot.slane %v1035, 5
        %v1038 = vsel %vm814, %v1033, %v1037
        %v1039 = vshrl.u32 %v802, 16
        %v1041 = vrot.slane %v1039, 4
        %v1042 = vor.u32 %v1041, %v1037
        %v1043 = vrot.slane %v1042, 4
        %v1045 = vshll.u32 %v803, 16
        %v1047 = vrot.slane %v1045, 5
        %v1048 = vsel %vm814, %v1043, %v1047
        %v1049 = vshrl.u32 %v803, 16
        %v1051 = vrot.slane %v1049, 4
        %v1052 = vor.u32 %v1051, %v1047
        %v1053 = vrot.slane %v1052, 4
        %v1055 = vshll.u32 %v804, 16
        %v1057 = vrot.slane %v1055, 5
        %v1058 = vsel %vm814, %v1053, %v1057
        %v1059 = vshrl.u32 %v804, 16
        %v1061 = vrot.slane %v1059, 4
        %v1062 = vor.u32 %v1061, %v1057
        %v1063 = vrot.slane %v1062, 4
        %v1065 = vshll.u32 %v805, 16
        %v1067 = vrot.slane %v1065, 5
        %v1068 = vsel %vm814, %v1063, %v1067
        %v1069 = vshrl.u32 %v805, 16
        %v1071 = vrot.slane %v1069, 4
        %v1072 = vor.u32 %v1071, %v1067
        %v1073 = vrot.slane %v1072, 4
        %v1075 = vshll.u32 %v806, 16
        %v1077 = vrot.slane %v1075, 5
        %v1078 = vsel %vm814, %v1073, %v1077
        %v1079 = vshrl.u32 %v806, 16
        %v1081 = vrot.slane %v1079, 4
        %v1082 = vor.u32 %v1081, %v1077
        %v1083 = vrot.slane %v1082, 4
        %v1085 = vshll.u32 %v807, 16
        %v1087 = vrot.slane %v1085, 5
        %v1088 = vsel %vm814, %v1083, %v1087
        %v1089 = vshrl.u32 %v807, 16
        %v1091 = vrot.slane %v1089, 4
        %v1092 = vor.u32 %v1091, %v1087
        %v1093 = vrot.slane %v1092, 4
        %v1095 = vshll.u32 %v808, 16
        %v1097 = vrot.slane %v1095, 5
        %v1098 = vsel %vm814, %v1093, %v1097
        %v1099 = vshrl.u32 %v808, 16
        %v1101 = vrot.slane %v1099, 4
        %v1102 = vor.u32 %v1101, %v1097
        %v1103 = vrot.slane %v1102, 4
        %v1105 = vshll.u32 %v809, 16
        %v1107 = vrot.slane %v1105, 5
        %v1108 = vsel %vm814, %v1103, %v1107
        %v1109 = vshrl.u32 %v809, 16
        %v1111 = vrot.slane %v1109, 4
        %v1112 = vor.u32 %v1111, %v1107
        %v1113 = vrot.slane %v1112, 4
        %v1115 = vshll.u32 %v810, 16
        %v1117 = vrot.slane %v1115, 5
        %v1118 = vsel %vm814, %v1113, %v1117
        %v1119 = vshrl.u32 %v810, 16
        %v1121 = vrot.slane %v1119, 4
        %v1122 = vor.u32 %v1121, %v1117
        %v1123 = vrot.slane %v1122, 4
        %v1125 = vshll.u32 %v811, 16
        %v1127 = vrot.slane %v1125, 5
        %v1128 = vsel %vm814, %v1123, %v1127
        %v1129 = vshrl.u32 %v811, 16
        %v1131 = vrot.slane %v1129, 4
        %v1132 = vor.u32 %v1131, %v1127
        %v1133 = vrot.slane %v1132, 4
        %vm1134 = vcmp.ne.s16.totalorder %v818, 0
        %vm1135 = vcmp.ne.s16.totalorder %v828, 0
        %vm1136 = vcmp.ne.s16.totalorder %v838, 0
        %vm1137 = vcmp.ne.s16.totalorder %v848, 0
        %vm1138 = vcmp.ne.s16.totalorder %v858, 0
        %vm1139 = vcmp.ne.s16.totalorder %v868, 0
        %vm1140 = vcmp.ne.s16.totalorder %v878, 0
        %vm1141 = vcmp.ne.s16.totalorder %v888, 0
        %vm1142 = vcmp.ne.s16.totalorder %v898, 0
        %vm1143 = vcmp.ne.s16.totalorder %v908, 0
        %vm1144 = vcmp.ne.s16.totalorder %v918, 0
        %vm1145 = vcmp.ne.s16.totalorder %v928, 0
        %vm1146 = vcmp.ne.s16.totalorder %v938, 0
        %vm1147 = vcmp.ne.s16.totalorder %v948, 0
        %vm1148 = vcmp.ne.s16.totalorder %v958, 0
        %vm1149 = vcmp.ne.s16.totalorder %v968, 0
        %vm1150 = vcmp.ne.s16.totalorder %v978, 0
        %vm1151 = vcmp.ne.s16.totalorder %v988, 0
        %vm1152 = vcmp.ne.s16.totalorder %v998, 0
        %vm1153 = vcmp.ne.s16.totalorder %v1008, 0
        %vm1154 = vcmp.ne.s16.totalorder %v1018, 0
        %vm1155 = vcmp.ne.s16.totalorder %v1028, 0
        %vm1156 = vcmp.ne.s16.totalorder %v1038, 0
        %vm1157 = vcmp.ne.s16.totalorder %v1048, 0
        %vm1158 = vcmp.ne.s16.totalorder %v1058, 0
        %vm1159 = vcmp.ne.s16.totalorder %v1068, 0
        %vm1160 = vcmp.ne.s16.totalorder %v1078, 0
        %vm1161 = vcmp.ne.s16.totalorder %v1088, 0
        %vm1162 = vcmp.ne.s16.totalorder %v1098, 0
        %vm1163 = vcmp.ne.s16.totalorder %v1108, 0
        %vm1164 = vcmp.ne.s16.totalorder %v1118, 0
        %vm1165 = vcmp.ne.s16.totalorder %v1128, 0
        %vm1166 = vcmp.ne.s16.totalorder %v1133, 0
        %v1167 = vsel %vm1134, %v555, 0
        %v1168 = vsel %vm1135, %v556, 0
        %v1169 = vsel %vm1136, %v557, 0
        %v1170 = vsel %vm1137, %v558, 0
        %v1171 = vsel %vm1138, %v559, 0
        %v1172 = vsel %vm1139, %v560, 0
        %v1173 = vsel %vm1140, %v561, 0
        %v1174 = vsel %vm1141, %v562, 0
        %v1175 = vsel %vm1142, %v563, 0
        %v1176 = vsel %vm1143, %v564, 0
        %v1177 = vsel %vm1144, %v565, 0
        %v1178 = vsel %vm1145, %v566, 0
        %v1179 = vsel %vm1146, %v567, 0
        %v1180 = vsel %vm1147, %v568, 0
        %v1181 = vsel %vm1148, %v569, 0
        %v1182 = vsel %vm1149, %v570, 0
        %v1183 = vsel %vm1150, %v571, 0
        %v1184 = vsel %vm1151, %v572, 0
        %v1185 = vsel %vm1152, %v573, 0
        %v1186 = vsel %vm1153, %v574, 0
        %v1187 = vsel %vm1154, %v575, 0
        %v1188 = vsel %vm1155, %v576, 0
        %v1189 = vsel %vm1156, %v577, 0
        %v1190 = vsel %vm1157, %v578, 0
        %v1191 = vsel %vm1158, %v579, 0
        %v1192 = vsel %vm1159, %v580, 0
        %v1193 = vsel %vm1160, %v581, 0
        %v1194 = vsel %vm1161, %v582, 0
        %v1195 = vsel %vm1162, %v583, 0
        %v1196 = vsel %vm1163, %v584, 0
        %v1197 = vsel %vm1164, %v585, 0
        %v1198 = vsel %vm1165, %v586, 0
        %v1199 = vsel %vm1166, %v587, 0
        %vm1200 = vsmask.f32 256
        %vm1201 = vsmask.f32 4368
        %vm1202 = vmor %vm1200, %vm1201
        %v1204 = vshrl.u32 %v1167, 16
        %v1206 = vrot.slane %v1204, 7
        %v1207 = vrot.slane %v1206, 4
        %v1209 = vshrl.u32 %v1168, 16
        %v1211 = vrot.slane %v1209, 7
        %v1212 = vshll.u32 %v1168, 16
        %v1214 = vor.u32 %v1211, %v1212
        %v1215 = vsel %vm1202, %v1207, %v1214
        %v1216 = vrot.slane %v1211, 4
        %v1218 = vshrl.u32 %v1169, 16
        %v1220 = vrot.slane %v1218, 7
        %v1221 = vshll.u32 %v1169, 16
        %v1223 = vor.u32 %v1220, %v1221
        %v1224 = vsel %vm1202, %v1216, %v1223
        %v1225 = vrot.slane %v1220, 4
        %v1227 = vshrl.u32 %v1170, 16
        %v1229 = vrot.slane %v1227, 7
        %v1230 = vshll.u32 %v1170, 16
        %v1232 = vor.u32 %v1229, %v1230
        %v1233 = vsel %vm1202, %v1225, %v1232
        %v1234 = vrot.slane %v1229, 4
        %v1236 = vshrl.u32 %v1171, 16
        %v1238 = vrot.slane %v1236, 7
        %v1239 = vshll.u32 %v1171, 16
        %v1241 = vor.u32 %v1238, %v1239
        %v1242 = vsel %vm1202, %v1234, %v1241
        %v1243 = vrot.slane %v1238, 4
        %v1245 = vshrl.u32 %v1172, 16
        %v1247 = vrot.slane %v1245, 7
        %v1248 = vshll.u32 %v1172, 16
        %v1250 = vor.u32 %v1247, %v1248
        %v1251 = vsel %vm1202, %v1243, %v1250
        %v1252 = vrot.slane %v1247, 4
        %v1254 = vshrl.u32 %v1173, 16
        %v1256 = vrot.slane %v1254, 7
        %v1257 = vshll.u32 %v1173, 16
        %v1259 = vor.u32 %v1256, %v1257
        %v1260 = vsel %vm1202, %v1252, %v1259
        %v1261 = vrot.slane %v1256, 4
        %v1263 = vshrl.u32 %v1174, 16
        %v1265 = vrot.slane %v1263, 7
        %v1266 = vshll.u32 %v1174, 16
        %v1268 = vor.u32 %v1265, %v1266
        %v1269 = vsel %vm1202, %v1261, %v1268
        %v1270 = vrot.slane %v1265, 4
        %v1272 = vshrl.u32 %v1175, 16
        %v1274 = vrot.slane %v1272, 7
        %v1275 = vshll.u32 %v1175, 16
        %v1277 = vor.u32 %v1274, %v1275
        %v1278 = vsel %vm1202, %v1270, %v1277
        %v1279 = vrot.slane %v1274, 4
        %v1281 = vshrl.u32 %v1176, 16
        %v1283 = vrot.slane %v1281, 7
        %v1284 = vshll.u32 %v1176, 16
        %v1286 = vor.u32 %v1283, %v1284
        %v1287 = vsel %vm1202, %v1279, %v1286
        %v1288 = vrot.slane %v1283, 4
        %v1290 = vshrl.u32 %v1177, 16
        %v1292 = vrot.slane %v1290, 7
        %v1293 = vshll.u32 %v1177, 16
        %v1295 = vor.u32 %v1292, %v1293
        %v1296 = vsel %vm1202, %v1288, %v1295
        %v1297 = vrot.slane %v1292, 4
        %v1299 = vshrl.u32 %v1178, 16
        %v1301 = vrot.slane %v1299, 7
        %v1302 = vshll.u32 %v1178, 16
        %v1304 = vor.u32 %v1301, %v1302
        %v1305 = vsel %vm1202, %v1297, %v1304
        %v1306 = vrot.slane %v1301, 4
        %v1308 = vshrl.u32 %v1179, 16
        %v1310 = vrot.slane %v1308, 7
        %v1311 = vshll.u32 %v1179, 16
        %v1313 = vor.u32 %v1310, %v1311
        %v1314 = vsel %vm1202, %v1306, %v1313
        %v1315 = vrot.slane %v1310, 4
        %v1317 = vshrl.u32 %v1180, 16
        %v1319 = vrot.slane %v1317, 7
        %v1320 = vshll.u32 %v1180, 16
        %v1322 = vor.u32 %v1319, %v1320
        %v1323 = vsel %vm1202, %v1315, %v1322
        %v1324 = vrot.slane %v1319, 4
        %v1326 = vshrl.u32 %v1181, 16
        %v1328 = vrot.slane %v1326, 7
        %v1329 = vshll.u32 %v1181, 16
        %v1331 = vor.u32 %v1328, %v1329
        %v1332 = vsel %vm1202, %v1324, %v1331
        %v1333 = vrot.slane %v1328, 4
        %v1335 = vshrl.u32 %v1182, 16
        %v1337 = vrot.slane %v1335, 7
        %v1338 = vshll.u32 %v1182, 16
        %v1340 = vor.u32 %v1337, %v1338
        %v1341 = vsel %vm1202, %v1333, %v1340
        %v1342 = vrot.slane %v1337, 4
        %v1344 = vshrl.u32 %v1183, 16
        %v1346 = vrot.slane %v1344, 7
        %v1347 = vshll.u32 %v1183, 16
        %v1349 = vor.u32 %v1346, %v1347
        %v1350 = vsel %vm1202, %v1342, %v1349
        %v1351 = vrot.slane %v1346, 4
        %v1353 = vshrl.u32 %v1184, 16
        %v1355 = vrot.slane %v1353, 7
        %v1356 = vshll.u32 %v1184, 16
        %v1358 = vor.u32 %v1355, %v1356
        %v1359 = vsel %vm1202, %v1351, %v1358
        %v1360 = vrot.slane %v1355, 4
        %v1362 = vshrl.u32 %v1185, 16
        %v1364 = vrot.slane %v1362, 7
        %v1365 = vshll.u32 %v1185, 16
        %v1367 = vor.u32 %v1364, %v1365
        %v1368 = vsel %vm1202, %v1360, %v1367
        %v1369 = vrot.slane %v1364, 4
        %v1371 = vshrl.u32 %v1186, 16
        %v1373 = vrot.slane %v1371, 7
        %v1374 = vshll.u32 %v1186, 16
        %v1376 = vor.u32 %v1373, %v1374
        %v1377 = vsel %vm1202, %v1369, %v1376
        %v1378 = vrot.slane %v1373, 4
        %v1380 = vshrl.u32 %v1187, 16
        %v1382 = vrot.slane %v1380, 7
        %v1383 = vshll.u32 %v1187, 16
        %v1385 = vor.u32 %v1382, %v1383
        %v1386 = vsel %vm1202, %v1378, %v1385
        %v1387 = vrot.slane %v1382, 4
        %v1389 = vshrl.u32 %v1188, 16
        %v1391 = vrot.slane %v1389, 7
        %v1392 = vshll.u32 %v1188, 16
        %v1394 = vor.u32 %v1391, %v1392
        %v1395 = vsel %vm1202, %v1387, %v1394
        %v1396 = vrot.slane %v1391, 4
        %v1398 = vshrl.u32 %v1189, 16
        %v1400 = vrot.slane %v1398, 7
        %v1401 = vshll.u32 %v1189, 16
        %v1403 = vor.u32 %v1400, %v1401
        %v1404 = vsel %vm1202, %v1396, %v1403
        %v1405 = vrot.slane %v1400, 4
        %v1407 = vshrl.u32 %v1190, 16
        %v1409 = vrot.slane %v1407, 7
        %v1410 = vshll.u32 %v1190, 16
        %v1412 = vor.u32 %v1409, %v1410
        %v1413 = vsel %vm1202, %v1405, %v1412
        %v1414 = vrot.slane %v1409, 4
        %v1416 = vshrl.u32 %v1191, 16
        %v1418 = vrot.slane %v1416, 7
        %v1419 = vshll.u32 %v1191, 16
        %v1421 = vor.u32 %v1418, %v1419
        %v1422 = vsel %vm1202, %v1414, %v1421
        %v1423 = vrot.slane %v1418, 4
        %v1425 = vshrl.u32 %v1192, 16
        %v1427 = vrot.slane %v1425, 7
        %v1428 = vshll.u32 %v1192, 16
        %v1430 = vor.u32 %v1427, %v1428
        %v1431 = vsel %vm1202, %v1423, %v1430
        %v1432 = vrot.slane %v1427, 4
        %v1434 = vshrl.u32 %v1193, 16
        %v1436 = vrot.slane %v1434, 7
        %v1437 = vshll.u32 %v1193, 16
        %v1439 = vor.u32 %v1436, %v1437
        %v1440 = vsel %vm1202, %v1432, %v1439
        %v1441 = vrot.slane %v1436, 4
        %v1443 = vshrl.u32 %v1194, 16
        %v1445 = vrot.slane %v1443, 7
        %v1446 = vshll.u32 %v1194, 16
        %v1448 = vor.u32 %v1445, %v1446
        %v1449 = vsel %vm1202, %v1441, %v1448
        %v1450 = vrot.slane %v1445, 4
        %v1452 = vshrl.u32 %v1195, 16
        %v1454 = vrot.slane %v1452, 7
        %v1455 = vshll.u32 %v1195, 16
        %v1457 = vor.u32 %v1454, %v1455
        %v1458 = vsel %vm1202, %v1450, %v1457
        %v1459 = vrot.slane %v1454, 4
        %v1461 = vshrl.u32 %v1196, 16
        %v1463 = vrot.slane %v1461, 7
        %v1464 = vshll.u32 %v1196, 16
        %v1466 = vor.u32 %v1463, %v1464
        %v1467 = vsel %vm1202, %v1459, %v1466
        %v1468 = vrot.slane %v1463, 4
        %v1470 = vshrl.u32 %v1197, 16
        %v1472 = vrot.slane %v1470, 7
        %v1473 = vshll.u32 %v1197, 16
        %v1475 = vor.u32 %v1472, %v1473
        %v1476 = vsel %vm1202, %v1468, %v1475
        %v1477 = vrot.slane %v1472, 4
        %v1479 = vshrl.u32 %v1198, 16
        %v1481 = vrot.slane %v1479, 7
        %v1482 = vshll.u32 %v1198, 16
        %v1484 = vor.u32 %v1481, %v1482
        %v1485 = vsel %vm1202, %v1477, %v1484
        %v1486 = vrot.slane %v1481, 4
        %v1488 = vshrl.u32 %v1199, 16
        %v1490 = vrot.slane %v1488, 7
        %v1491 = vshll.u32 %v1199, 16
        %v1493 = vor.u32 %v1490, %v1491
        %v1494 = vsel %vm1202, %v1486, %v1493
        %1527 = vst [vmem:[#allocation4] sm:$0xf] %v1215
        %1528 = vst [vmem:[#allocation4 + $0x24] sm:$0xf] %v1224
        %1529 = vst [vmem:[#allocation4 + $0x48] sm:$0xf] %v1233
        %1530 = vst [vmem:[#allocation4 + $0x6c] sm:$0xf] %v1242
        %1531 = vst [vmem:[#allocation4 + $0x90] sm:$0xf] %v1251
        %1532 = vst [vmem:[#allocation4 + $0xb4] sm:$0xf] %v1260
        %1533 = vst [vmem:[#allocation4 + $0xd8] sm:$0xf] %v1269
        %1534 = vst [vmem:[#allocation4 + $0xfc] sm:$0xf] %v1278
        %1535 = vst [vmem:[#allocation4 + $0x120] sm:$0xf] %v1287
        %1536 = vst [vmem:[#allocation4 + $0x144] sm:$0xf] %v1296
        %1537 = vst [vmem:[#allocation4 + $0x168] sm:$0xf] %v1305
        %1538 = vst [vmem:[#allocation4 + $0x18c] sm:$0xf] %v1314
        %1539 = vst [vmem:[#allocation4 + $0x1b0] sm:$0xf] %v1323
        %1540 = vst [vmem:[#allocation4 + $0x1d4] sm:$0xf] %v1332
        %1541 = vst [vmem:[#allocation4 + $0x1f8] sm:$0xf] %v1341
        %1542 = vst [vmem:[#allocation4 + $0x21c] sm:$0xf] %v1350
        %1543 = vst [vmem:[#allocation4 + $0x240] sm:$0xf] %v1359
        %1544 = vst [vmem:[#allocation4 + $0x264] sm:$0xf] %v1368
        %1545 = vst [vmem:[#allocation4 + $0x288] sm:$0xf] %v1377
        %1546 = vst [vmem:[#allocation4 + $0x2ac] sm:$0xf] %v1386
        %1547 = vst [vmem:[#allocation4 + $0x2d0] sm:$0xf] %v1395
        %1548 = vst [vmem:[#allocation4 + $0x2f4] sm:$0xf] %v1404
        %1549 = vst [vmem:[#allocation4 + $0x318] sm:$0xf] %v1413
        %1550 = vst [vmem:[#allocation4 + $0x33c] sm:$0xf] %v1422
        %1551 = vst [vmem:[#allocation4 + $0x360] sm:$0xf] %v1431
        %1552 = vst [vmem:[#allocation4 + $0x384] sm:$0xf] %v1440
        %1553 = vst [vmem:[#allocation4 + $0x3a8] sm:$0xf] %v1449
        %1554 = vst [vmem:[#allocation4 + $0x3cc] sm:$0xf] %v1458
        %1555 = vst [vmem:[#allocation4 + $0x3f0] sm:$0xf] %v1467
        %1556 = vst [vmem:[#allocation4 + $0x414] sm:$0xf] %v1476
        %1557 = vst [vmem:[#allocation4 + $0x438] sm:$0xf] %v1485
        %1558 = vst [vmem:[#allocation4 + $0x45c] sm:$0xf] %v1494
        %v1559 = vld [vmem:[#allocation2 + $0x4] sm:$0xf]
        %v1560 = vld [vmem:[#allocation2 + $0x8] sm:$0xf]
        %v1561 = vld [vmem:[#allocation2 + $0xc] sm:$0xf]
        %v1562 = vld [vmem:[#allocation2 + $0x10] sm:$0xf]
        %v1563 = vld [vmem:[#allocation2 + $0x14] sm:$0xf]
        %v1564 = vld [vmem:[#allocation2 + $0x18] sm:$0xf]
        %v1565 = vld [vmem:[#allocation2 + $0x1c] sm:$0xf]
        %v1566 = vld [vmem:[#allocation2 + $0x20] sm:$0xf]
        %v1567 = vld [vmem:[#allocation2 + $0x24] sm:$0xf]
        %v1568 = vld [vmem:[#allocation2 + $0x28] sm:$0xf]
        %v1569 = vld [vmem:[#allocation2 + $0x2c] sm:$0xf]
        %v1570 = vld [vmem:[#allocation2 + $0x30] sm:$0xf]
        %v1571 = vld [vmem:[#allocation2 + $0x34] sm:$0xf]
        %v1572 = vld [vmem:[#allocation2 + $0x38] sm:$0xf]
        %v1573 = vld [vmem:[#allocation2 + $0x3c] sm:$0xf]
        %v1574 = vld [vmem:[#allocation2 + $0x40] sm:$0xf]
        %v1575 = vld [vmem:[#allocation2 + $0x44] sm:$0xf]
        %v1576 = vld [vmem:[#allocation2 + $0x48] sm:$0xf]
        %v1577 = vld [vmem:[#allocation2 + $0x4c] sm:$0xf]
        %v1578 = vld [vmem:[#allocation2 + $0x50] sm:$0xf]
        %v1579 = vld [vmem:[#allocation2 + $0x54] sm:$0xf]
        %v1580 = vld [vmem:[#allocation2 + $0x58] sm:$0xf]
        %v1581 = vld [vmem:[#allocation2 + $0x5c] sm:$0xf]
        %v1582 = vld [vmem:[#allocation2 + $0x60] sm:$0xf]
        %v1583 = vld [vmem:[#allocation2 + $0x64] sm:$0xf]
        %v1584 = vld [vmem:[#allocation2 + $0x68] sm:$0xf]
        %v1585 = vld [vmem:[#allocation2 + $0x6c] sm:$0xf]
        %v1586 = vld [vmem:[#allocation2 + $0x70] sm:$0xf]
        %v1587 = vld [vmem:[#allocation2 + $0x74] sm:$0xf]
        %v1588 = vld [vmem:[#allocation2 + $0x78] sm:$0xf]
        %v1589 = vld [vmem:[#allocation2 + $0x7c] sm:$0xf]
        %v1590 = vld [vmem:[#allocation2 + $0x80] sm:$0xf]
        %1591 = vst [vmem:[#allocation4 + $0x4] sm:$0xf] %v1559
        %1592 = vst [vmem:[#allocation4 + $0x28] sm:$0xf] %v1560
        %1593 = vst [vmem:[#allocation4 + $0x4c] sm:$0xf] %v1561
        %1594 = vst [vmem:[#allocation4 + $0x70] sm:$0xf] %v1562
        %1595 = vst [vmem:[#allocation4 + $0x94] sm:$0xf] %v1563
        %1596 = vst [vmem:[#allocation4 + $0xb8] sm:$0xf] %v1564
        %1597 = vst [vmem:[#allocation4 + $0xdc] sm:$0xf] %v1565
        %1598 = vst [vmem:[#allocation4 + $0x100] sm:$0xf] %v1566
        %1599 = vst [vmem:[#allocation4 + $0x124] sm:$0xf] %v1567
        %1600 = vst [vmem:[#allocation4 + $0x148] sm:$0xf] %v1568
        %1601 = vst [vmem:[#allocation4 + $0x16c] sm:$0xf] %v1569
        %1602 = vst [vmem:[#allocation4 + $0x190] sm:$0xf] %v1570
        %1603 = vst [vmem:[#allocation4 + $0x1b4] sm:$0xf] %v1571
        %1604 = vst [vmem:[#allocation4 + $0x1d8] sm:$0xf] %v1572
        %1605 = vst [vmem:[#allocation4 + $0x1fc] sm:$0xf] %v1573
        %1606 = vst [vmem:[#allocation4 + $0x220] sm:$0xf] %v1574
        %1607 = vst [vmem:[#allocation4 + $0x244] sm:$0xf] %v1575
        %1608 = vst [vmem:[#allocation4 + $0x268] sm:$0xf] %v1576
        %1609 = vst [vmem:[#allocation4 + $0x28c] sm:$0xf] %v1577
        %1610 = vst [vmem:[#allocation4 + $0x2b0] sm:$0xf] %v1578
        %1611 = vst [vmem:[#allocation4 + $0x2d4] sm:$0xf] %v1579
        %1612 = vst [vmem:[#allocation4 + $0x2f8] sm:$0xf] %v1580
        %1613 = vst [vmem:[#allocation4 + $0x31c] sm:$0xf] %v1581
        %1614 = vst [vmem:[#allocation4 + $0x340] sm:$0xf] %v1582
        %1615 = vst [vmem:[#allocation4 + $0x364] sm:$0xf] %v1583
        %1616 = vst [vmem:[#allocation4 + $0x388] sm:$0xf] %v1584
        %1617 = vst [vmem:[#allocation4 + $0x3ac] sm:$0xf] %v1585
        %1618 = vst [vmem:[#allocation4 + $0x3d0] sm:$0xf] %v1586
        %1619 = vst [vmem:[#allocation4 + $0x3f4] sm:$0xf] %v1587
        %1620 = vst [vmem:[#allocation4 + $0x418] sm:$0xf] %v1588
        %1621 = vst [vmem:[#allocation4 + $0x43c] sm:$0xf] %v1589
        %1622 = vst [vmem:[#allocation4 + $0x460] sm:$0xf] %v1590
        %v1623 = vld [vmem:[#allocation2 + $0x4] sm:$0xf]
        %v1624 = vld [vmem:[#allocation2 + $0x8] sm:$0xf]
        %v1625 = vld [vmem:[#allocation2 + $0xc] sm:$0xf]
        %v1626 = vld [vmem:[#allocation2 + $0x10] sm:$0xf]
        %v1627 = vld [vmem:[#allocation2 + $0x14] sm:$0xf]
        %v1628 = vld [vmem:[#allocation2 + $0x18] sm:$0xf]
        %v1629 = vld [vmem:[#allocation2 + $0x1c] sm:$0xf]
        %v1630 = vld [vmem:[#allocation2 + $0x20] sm:$0xf]
        %v1631 = vld [vmem:[#allocation2 + $0x24] sm:$0xf]
        %v1632 = vld [vmem:[#allocation2 + $0x28] sm:$0xf]
        %v1633 = vld [vmem:[#allocation2 + $0x2c] sm:$0xf]
        %v1634 = vld [vmem:[#allocation2 + $0x30] sm:$0xf]
        %v1635 = vld [vmem:[#allocation2 + $0x34] sm:$0xf]
        %v1636 = vld [vmem:[#allocation2 + $0x38] sm:$0xf]
        %v1637 = vld [vmem:[#allocation2 + $0x3c] sm:$0xf]
        %v1638 = vld [vmem:[#allocation2 + $0x40] sm:$0xf]
        %v1639 = vld [vmem:[#allocation2 + $0x44] sm:$0xf]
        %v1640 = vld [vmem:[#allocation2 + $0x48] sm:$0xf]
        %v1641 = vld [vmem:[#allocation2 + $0x4c] sm:$0xf]
        %v1642 = vld [vmem:[#allocation2 + $0x50] sm:$0xf]
        %v1643 = vld [vmem:[#allocation2 + $0x54] sm:$0xf]
        %v1644 = vld [vmem:[#allocation2 + $0x58] sm:$0xf]
        %v1645 = vld [vmem:[#allocation2 + $0x5c] sm:$0xf]
        %v1646 = vld [vmem:[#allocation2 + $0x60] sm:$0xf]
        %v1647 = vld [vmem:[#allocation2 + $0x64] sm:$0xf]
        %v1648 = vld [vmem:[#allocation2 + $0x68] sm:$0xf]
        %v1649 = vld [vmem:[#allocation2 + $0x6c] sm:$0xf]
        %v1650 = vld [vmem:[#allocation2 + $0x70] sm:$0xf]
        %v1651 = vld [vmem:[#allocation2 + $0x74] sm:$0xf]
        %v1652 = vld [vmem:[#allocation2 + $0x78] sm:$0xf]
        %v1653 = vld [vmem:[#allocation2 + $0x7c] sm:$0xf]
        %v1654 = vld [vmem:[#allocation2 + $0x80] sm:$0xf]
        %v1655 = vld [vmem:[#allocation2 + $0x84] sm:$0x1]
        %v1656 = vsel %vm415, 1, 0
        %v1657 = vsel %vm416, 1, 0
        %v1658 = vsel %vm417, 1, 0
        %v1659 = vsel %vm418, 1, 0
        %v1660 = vsel %vm419, 1, 0
        %v1661 = vsel %vm420, 1, 0
        %v1662 = vsel %vm421, 1, 0
        %v1663 = vsel %vm422, 1, 0
        %v1664 = vsel %vm423, 1, 0
        %v1665 = vsel %vm424, 1, 0
        %v1666 = vsel %vm425, 1, 0
        %v1667 = vsel %vm426, 1, 0
        %v1668 = vsel %vm427, 1, 0
        %v1669 = vsel %vm428, 1, 0
        %v1670 = vsel %vm429, 1, 0
        %v1671 = vsel %vm430, 1, 0
        %v1672 = vsel %vm431, 1, 0
        %v1673 = vsel %vm432, 1, 0
        %v1674 = vsel %vm433, 1, 0
        %v1675 = vsel %vm434, 1, 0
        %v1676 = vsel %vm435, 1, 0
        %v1677 = vsel %vm436, 1, 0
        %v1678 = vsel %vm437, 1, 0
        %v1679 = vsel %vm438, 1, 0
        %v1680 = vsel %vm439, 1, 0
        %v1681 = vsel %vm440, 1, 0
        %v1682 = vsel %vm441, 1, 0
        %v1683 = vsel %vm442, 1, 0
        %v1684 = vsel %vm443, 1, 0
        %v1685 = vsel %vm444, 1, 0
        %v1686 = vsel %vm445, 1, 0
        %v1687 = vsel %vm446, 1, 0
        %1688 = vset.pattern.permute.xlu0 0
        %1689 = vperm.xlu0 %1688, %v1656
        %v1690 = vpop.permute.xlu0 %1689
        %1691 = vset.pattern.permute.xlu0 0
        %1692 = vperm.xlu0 %1691, %v1657
        %v1693 = vpop.permute.xlu0 %1692
        %1694 = vset.pattern.permute.xlu0 0
        %1695 = vperm.xlu0 %1694, %v1658
        %v1696 = vpop.permute.xlu0 %1695
        %1697 = vset.pattern.permute.xlu0 0
        %1698 = vperm.xlu0 %1697, %v1659
        %v1699 = vpop.permute.xlu0 %1698
        %1700 = vset.pattern.permute.xlu0 0
        %1701 = vperm.xlu0 %1700, %v1660
        %v1702 = vpop.permute.xlu0 %1701
        %1703 = vset.pattern.permute.xlu0 0
        %1704 = vperm.xlu0 %1703, %v1661
        %v1705 = vpop.permute.xlu0 %1704
        %1706 = vset.pattern.permute.xlu0 0
        %1707 = vperm.xlu0 %1706, %v1662
        %v1708 = vpop.permute.xlu0 %1707
        %1709 = vset.pattern.permute.xlu0 0
        %1710 = vperm.xlu0 %1709, %v1663
        %v1711 = vpop.permute.xlu0 %1710
        %1712 = vset.pattern.permute.xlu0 0
        %1713 = vperm.xlu0 %1712, %v1664
        %v1714 = vpop.permute.xlu0 %1713
        %1715 = vset.pattern.permute.xlu0 0
        %1716 = vperm.xlu0 %1715, %v1665
        %v1717 = vpop.permute.xlu0 %1716
        %1718 = vset.pattern.permute.xlu0 0
        %1719 = vperm.xlu0 %1718, %v1666
        %v1720 = vpop.permute.xlu0 %1719
        %1721 = vset.pattern.permute.xlu0 0
        %1722 = vperm.xlu0 %1721, %v1667
        %v1723 = vpop.permute.xlu0 %1722
        %1724 = vset.pattern.permute.xlu0 0
        %1725 = vperm.xlu0 %1724, %v1668
        %v1726 = vpop.permute.xlu0 %1725
        %1727 = vset.pattern.permute.xlu0 0
        %1728 = vperm.xlu0 %1727, %v1669
        %v1729 = vpop.permute.xlu0 %1728
        %1730 = vset.pattern.permute.xlu0 0
        %1731 = vperm.xlu0 %1730, %v1670
        %v1732 = vpop.permute.xlu0 %1731
        %1733 = vset.pattern.permute.xlu0 0
        %1734 = vperm.xlu0 %1733, %v1671
        %v1735 = vpop.permute.xlu0 %1734
        %1736 = vset.pattern.permute.xlu0 0
        %1737 = vperm.xlu0 %1736, %v1672
        %v1738 = vpop.permute.xlu0 %1737
        %1739 = vset.pattern.permute.xlu0 0
        %1740 = vperm.xlu0 %1739, %v1673
        %v1741 = vpop.permute.xlu0 %1740
        %1742 = vset.pattern.permute.xlu0 0
        %1743 = vperm.xlu0 %1742, %v1674
        %v1744 = vpop.permute.xlu0 %1743
        %1745 = vset.pattern.permute.xlu0 0
        %1746 = vperm.xlu0 %1745, %v1675
        %v1747 = vpop.permute.xlu0 %1746
        %1748 = vset.pattern.permute.xlu0 0
        %1749 = vperm.xlu0 %1748, %v1676
        %v1750 = vpop.permute.xlu0 %1749
        %1751 = vset.pattern.permute.xlu0 0
        %1752 = vperm.xlu0 %1751, %v1677
        %v1753 = vpop.permute.xlu0 %1752
        %1754 = vset.pattern.permute.xlu0 0
        %1755 = vperm.xlu0 %1754, %v1678
        %v1756 = vpop.permute.xlu0 %1755
        %1757 = vset.pattern.permute.xlu0 0
        %1758 = vperm.xlu0 %1757, %v1679
        %v1759 = vpop.permute.xlu0 %1758
        %1760 = vset.pattern.permute.xlu0 0
        %1761 = vperm.xlu0 %1760, %v1680
        %v1762 = vpop.permute.xlu0 %1761
        %1763 = vset.pattern.permute.xlu0 0
        %1764 = vperm.xlu0 %1763, %v1681
        %v1765 = vpop.permute.xlu0 %1764
        %1766 = vset.pattern.permute.xlu0 0
        %1767 = vperm.xlu0 %1766, %v1682
        %v1768 = vpop.permute.xlu0 %1767
        %1769 = vset.pattern.permute.xlu0 0
        %1770 = vperm.xlu0 %1769, %v1683
        %v1771 = vpop.permute.xlu0 %1770
        %1772 = vset.pattern.permute.xlu0 0
        %1773 = vperm.xlu0 %1772, %v1684
        %v1774 = vpop.permute.xlu0 %1773
        %1775 = vset.pattern.permute.xlu0 0
        %1776 = vperm.xlu0 %1775, %v1685
        %v1777 = vpop.permute.xlu0 %1776
        %1778 = vset.pattern.permute.xlu0 0
        %1779 = vperm.xlu0 %1778, %v1686
        %v1780 = vpop.permute.xlu0 %1779
        %1781 = vset.pattern.permute.xlu0 0
        %1782 = vperm.xlu0 %1781, %v1687
        %v1783 = vpop.permute.xlu0 %1782
        %vm1784 = vcmp.eq.s32.totalorder %v1690, 1
        %vm1785 = vcmp.eq.s32.totalorder %v1693, 1
        %vm1786 = vcmp.eq.s32.totalorder %v1696, 1
        %vm1787 = vcmp.eq.s32.totalorder %v1699, 1
        %vm1788 = vcmp.eq.s32.totalorder %v1702, 1
        %vm1789 = vcmp.eq.s32.totalorder %v1705, 1
        %vm1790 = vcmp.eq.s32.totalorder %v1708, 1
        %vm1791 = vcmp.eq.s32.totalorder %v1711, 1
        %vm1792 = vcmp.eq.s32.totalorder %v1714, 1
        %vm1793 = vcmp.eq.s32.totalorder %v1717, 1
        %vm1794 = vcmp.eq.s32.totalorder %v1720, 1
        %vm1795 = vcmp.eq.s32.totalorder %v1723, 1
        %vm1796 = vcmp.eq.s32.totalorder %v1726, 1
        %vm1797 = vcmp.eq.s32.totalorder %v1729, 1
        %vm1798 = vcmp.eq.s32.totalorder %v1732, 1
        %vm1799 = vcmp.eq.s32.totalorder %v1735, 1
        %vm1800 = vcmp.eq.s32.totalorder %v1738, 1
        %vm1801 = vcmp.eq.s32.totalorder %v1741, 1
        %vm1802 = vcmp.eq.s32.totalorder %v1744, 1
        %vm1803 = vcmp.eq.s32.totalorder %v1747, 1
        %vm1804 = vcmp.eq.s32.totalorder %v1750, 1
        %vm1805 = vcmp.eq.s32.totalorder %v1753, 1
        %vm1806 = vcmp.eq.s32.totalorder %v1756, 1
        %vm1807 = vcmp.eq.s32.totalorder %v1759, 1
        %vm1808 = vcmp.eq.s32.totalorder %v1762, 1
        %vm1809 = vcmp.eq.s32.totalorder %v1765, 1
        %vm1810 = vcmp.eq.s32.totalorder %v1768, 1
        %vm1811 = vcmp.eq.s32.totalorder %v1771, 1
        %vm1812 = vcmp.eq.s32.totalorder %v1774, 1
        %vm1813 = vcmp.eq.s32.totalorder %v1777, 1
        %vm1814 = vcmp.eq.s32.totalorder %v1780, 1
        %vm1815 = vcmp.eq.s32.totalorder %v1783, 1
        %vm1816 = vmpackc.low %vm1784, %vm1784
        %vm1817 = vmpackc.low %vm1785, %vm1785
        %vm1818 = vmpackc.low %vm1786, %vm1786
        %vm1819 = vmpackc.low %vm1787, %vm1787
        %vm1820 = vmpackc.low %vm1788, %vm1788
        %vm1821 = vmpackc.low %vm1789, %vm1789
        %vm1822 = vmpackc.low %vm1790, %vm1790
        %vm1823 = vmpackc.low %vm1791, %vm1791
        %vm1824 = vmpackc.low %vm1792, %vm1792
        %vm1825 = vmpackc.low %vm1793, %vm1793
        %vm1826 = vmpackc.low %vm1794, %vm1794
        %vm1827 = vmpackc.low %vm1795, %vm1795
        %vm1828 = vmpackc.low %vm1796, %vm1796
        %vm1829 = vmpackc.low %vm1797, %vm1797
        %vm1830 = vmpackc.low %vm1798, %vm1798
        %vm1831 = vmpackc.low %vm1799, %vm1799
        %vm1832 = vmpackc.low %vm1800, %vm1800
        %vm1833 = vmpackc.low %vm1801, %vm1801
        %vm1834 = vmpackc.low %vm1802, %vm1802
        %vm1835 = vmpackc.low %vm1803, %vm1803
        %vm1836 = vmpackc.low %vm1804, %vm1804
        %vm1837 = vmpackc.low %vm1805, %vm1805
        %vm1838 = vmpackc.low %vm1806, %vm1806
        %vm1839 = vmpackc.low %vm1807, %vm1807
        %vm1840 = vmpackc.low %vm1808, %vm1808
        %vm1841 = vmpackc.low %vm1809, %vm1809
        %vm1842 = vmpackc.low %vm1810, %vm1810
        %vm1843 = vmpackc.low %vm1811, %vm1811
        %vm1844 = vmpackc.low %vm1812, %vm1812
        %vm1845 = vmpackc.low %vm1813, %vm1813
        %vm1846 = vmpackc.low %vm1814, %vm1814
        %vm1847 = vmpackc.low %vm1815, %vm1815
        %v1848 = vsel %vm1816, 65537, 0
        %v1849 = vsel %vm1817, 65537, 0
        %v1850 = vsel %vm1818, 65537, 0
        %v1851 = vsel %vm1819, 65537, 0
        %v1852 = vsel %vm1820, 65537, 0
        %v1853 = vsel %vm1821, 65537, 0
        %v1854 = vsel %vm1822, 65537, 0
        %v1855 = vsel %vm1823, 65537, 0
        %v1856 = vsel %vm1824, 65537, 0
        %v1857 = vsel %vm1825, 65537, 0
        %v1858 = vsel %vm1826, 65537, 0
        %v1859 = vsel %vm1827, 65537, 0
        %v1860 = vsel %vm1828, 65537, 0
        %v1861 = vsel %vm1829, 65537, 0
        %v1862 = vsel %vm1830, 65537, 0
        %v1863 = vsel %vm1831, 65537, 0
        %v1864 = vsel %vm1832, 65537, 0
        %v1865 = vsel %vm1833, 65537, 0
        %v1866 = vsel %vm1834, 65537, 0
        %v1867 = vsel %vm1835, 65537, 0
        %v1868 = vsel %vm1836, 65537, 0
        %v1869 = vsel %vm1837, 65537, 0
        %v1870 = vsel %vm1838, 65537, 0
        %v1871 = vsel %vm1839, 65537, 0
        %v1872 = vsel %vm1840, 65537, 0
        %v1873 = vsel %vm1841, 65537, 0
        %v1874 = vsel %vm1842, 65537, 0
        %v1875 = vsel %vm1843, 65537, 0
        %v1876 = vsel %vm1844, 65537, 0
        %v1877 = vsel %vm1845, 65537, 0
        %v1878 = vsel %vm1846, 65537, 0
        %v1879 = vsel %vm1847, 65537, 0
        %v1881 = vshrl.u32 %v1848, 16
        %v1883 = vrot.slane %v1881, 7
        %v1884 = vshll.u32 %v1848, 16
        %v1886 = vor.u32 %v1883, %v1884
        %v1887 = vrot.slane %v1883, 4
        %v1889 = vshrl.u32 %v1849, 16
        %v1891 = vrot.slane %v1889, 7
        %v1892 = vshll.u32 %v1849, 16
        %v1894 = vor.u32 %v1891, %v1892
        %v1895 = vsel %vm1202, %v1887, %v1894
        %v1896 = vrot.slane %v1891, 4
        %v1898 = vshrl.u32 %v1850, 16
        %v1900 = vrot.slane %v1898, 7
        %v1901 = vshll.u32 %v1850, 16
        %v1903 = vor.u32 %v1900, %v1901
        %v1904 = vsel %vm1202, %v1896, %v1903
        %v1905 = vrot.slane %v1900, 4
        %v1907 = vshrl.u32 %v1851, 16
        %v1909 = vrot.slane %v1907, 7
        %v1910 = vshll.u32 %v1851, 16
        %v1912 = vor.u32 %v1909, %v1910
        %v1913 = vsel %vm1202, %v1905, %v1912
        %v1914 = vrot.slane %v1909, 4
        %v1916 = vshrl.u32 %v1852, 16
        %v1918 = vrot.slane %v1916, 7
        %v1919 = vshll.u32 %v1852, 16
        %v1921 = vor.u32 %v1918, %v1919
        %v1922 = vsel %vm1202, %v1914, %v1921
        %v1923 = vrot.slane %v1918, 4
        %v1925 = vshrl.u32 %v1853, 16
        %v1927 = vrot.slane %v1925, 7
        %v1928 = vshll.u32 %v1853, 16
        %v1930 = vor.u32 %v1927, %v1928
        %v1931 = vsel %vm1202, %v1923, %v1930
        %v1932 = vrot.slane %v1927, 4
        %v1934 = vshrl.u32 %v1854, 16
        %v1936 = vrot.slane %v1934, 7
        %v1937 = vshll.u32 %v1854, 16
        %v1939 = vor.u32 %v1936, %v1937
        %v1940 = vsel %vm1202, %v1932, %v1939
        %v1941 = vrot.slane %v1936, 4
        %v1943 = vshrl.u32 %v1855, 16
        %v1945 = vrot.slane %v1943, 7
        %v1946 = vshll.u32 %v1855, 16
        %v1948 = vor.u32 %v1945, %v1946
        %v1949 = vsel %vm1202, %v1941, %v1948
        %v1950 = vrot.slane %v1945, 4
        %v1952 = vshrl.u32 %v1856, 16
        %v1954 = vrot.slane %v1952, 7
        %v1955 = vshll.u32 %v1856, 16
        %v1957 = vor.u32 %v1954, %v1955
        %v1958 = vsel %vm1202, %v1950, %v1957
        %v1959 = vrot.slane %v1954, 4
        %v1961 = vshrl.u32 %v1857, 16
        %v1963 = vrot.slane %v1961, 7
        %v1964 = vshll.u32 %v1857, 16
        %v1966 = vor.u32 %v1963, %v1964
        %v1967 = vsel %vm1202, %v1959, %v1966
        %v1968 = vrot.slane %v1963, 4
        %v1970 = vshrl.u32 %v1858, 16
        %v1972 = vrot.slane %v1970, 7
        %v1973 = vshll.u32 %v1858, 16
        %v1975 = vor.u32 %v1972, %v1973
        %v1976 = vsel %vm1202, %v1968, %v1975
        %v1977 = vrot.slane %v1972, 4
        %v1979 = vshrl.u32 %v1859, 16
        %v1981 = vrot.slane %v1979, 7
        %v1982 = vshll.u32 %v1859, 16
        %v1984 = vor.u32 %v1981, %v1982
        %v1985 = vsel %vm1202, %v1977, %v1984
        %v1986 = vrot.slane %v1981, 4
        %v1988 = vshrl.u32 %v1860, 16
        %v1990 = vrot.slane %v1988, 7
        %v1991 = vshll.u32 %v1860, 16
        %v1993 = vor.u32 %v1990, %v1991
        %v1994 = vsel %vm1202, %v1986, %v1993
        %v1995 = vrot.slane %v1990, 4
        %v1997 = vshrl.u32 %v1861, 16
        %v1999 = vrot.slane %v1997, 7
        %v2000 = vshll.u32 %v1861, 16
        %v2002 = vor.u32 %v1999, %v2000
        %v2003 = vsel %vm1202, %v1995, %v2002
        %v2004 = vrot.slane %v1999, 4
        %v2006 = vshrl.u32 %v1862, 16
        %v2008 = vrot.slane %v2006, 7
        %v2009 = vshll.u32 %v1862, 16
        %v2011 = vor.u32 %v2008, %v2009
        %v2012 = vsel %vm1202, %v2004, %v2011
        %v2013 = vrot.slane %v2008, 4
        %v2015 = vshrl.u32 %v1863, 16
        %v2017 = vrot.slane %v2015, 7
        %v2018 = vshll.u32 %v1863, 16
        %v2020 = vor.u32 %v2017, %v2018
        %v2021 = vsel %vm1202, %v2013, %v2020
        %v2022 = vrot.slane %v2017, 4
        %v2024 = vshrl.u32 %v1864, 16
        %v2026 = vrot.slane %v2024, 7
        %v2027 = vshll.u32 %v1864, 16
        %v2029 = vor.u32 %v2026, %v2027
        %v2030 = vsel %vm1202, %v2022, %v2029
        %v2031 = vrot.slane %v2026, 4
        %v2033 = vshrl.u32 %v1865, 16
        %v2035 = vrot.slane %v2033, 7
        %v2036 = vshll.u32 %v1865, 16
        %v2038 = vor.u32 %v2035, %v2036
        %v2039 = vsel %vm1202, %v2031, %v2038
        %v2040 = vrot.slane %v2035, 4
        %v2042 = vshrl.u32 %v1866, 16
        %v2044 = vrot.slane %v2042, 7
        %v2045 = vshll.u32 %v1866, 16
        %v2047 = vor.u32 %v2044, %v2045
        %v2048 = vsel %vm1202, %v2040, %v2047
        %v2049 = vrot.slane %v2044, 4
        %v2051 = vshrl.u32 %v1867, 16
        %v2053 = vrot.slane %v2051, 7
        %v2054 = vshll.u32 %v1867, 16
        %v2056 = vor.u32 %v2053, %v2054
        %v2057 = vsel %vm1202, %v2049, %v2056
        %v2058 = vrot.slane %v2053, 4
        %v2060 = vshrl.u32 %v1868, 16
        %v2062 = vrot.slane %v2060, 7
        %v2063 = vshll.u32 %v1868, 16
        %v2065 = vor.u32 %v2062, %v2063
        %v2066 = vsel %vm1202, %v2058, %v2065
        %v2067 = vrot.slane %v2062, 4
        %v2069 = vshrl.u32 %v1869, 16
        %v2071 = vrot.slane %v2069, 7
        %v2072 = vshll.u32 %v1869, 16
        %v2074 = vor.u32 %v2071, %v2072
        %v2075 = vsel %vm1202, %v2067, %v2074
        %v2076 = vrot.slane %v2071, 4
        %v2078 = vshrl.u32 %v1870, 16
        %v2080 = vrot.slane %v2078, 7
        %v2081 = vshll.u32 %v1870, 16
        %v2083 = vor.u32 %v2080, %v2081
        %v2084 = vsel %vm1202, %v2076, %v2083
        %v2085 = vrot.slane %v2080, 4
        %v2087 = vshrl.u32 %v1871, 16
        %v2089 = vrot.slane %v2087, 7
        %v2090 = vshll.u32 %v1871, 16
        %v2092 = vor.u32 %v2089, %v2090
        %v2093 = vsel %vm1202, %v2085, %v2092
        %v2094 = vrot.slane %v2089, 4
        %v2096 = vshrl.u32 %v1872, 16
        %v2098 = vrot.slane %v2096, 7
        %v2099 = vshll.u32 %v1872, 16
        %v2101 = vor.u32 %v2098, %v2099
        %v2102 = vsel %vm1202, %v2094, %v2101
        %v2103 = vrot.slane %v2098, 4
        %v2105 = vshrl.u32 %v1873, 16
        %v2107 = vrot.slane %v2105, 7
        %v2108 = vshll.u32 %v1873, 16
        %v2110 = vor.u32 %v2107, %v2108
        %v2111 = vsel %vm1202, %v2103, %v2110
        %v2112 = vrot.slane %v2107, 4
        %v2114 = vshrl.u32 %v1874, 16
        %v2116 = vrot.slane %v2114, 7
        %v2117 = vshll.u32 %v1874, 16
        %v2119 = vor.u32 %v2116, %v2117
        %v2120 = vsel %vm1202, %v2112, %v2119
        %v2121 = vrot.slane %v2116, 4
        %v2123 = vshrl.u32 %v1875, 16
        %v2125 = vrot.slane %v2123, 7
        %v2126 = vshll.u32 %v1875, 16
        %v2128 = vor.u32 %v2125, %v2126
        %v2129 = vsel %vm1202, %v2121, %v2128
        %v2130 = vrot.slane %v2125, 4
        %v2132 = vshrl.u32 %v1876, 16
        %v2134 = vrot.slane %v2132, 7
        %v2135 = vshll.u32 %v1876, 16
        %v2137 = vor.u32 %v2134, %v2135
        %v2138 = vsel %vm1202, %v2130, %v2137
        %v2139 = vrot.slane %v2134, 4
        %v2141 = vshrl.u32 %v1877, 16
        %v2143 = vrot.slane %v2141, 7
        %v2144 = vshll.u32 %v1877, 16
        %v2146 = vor.u32 %v2143, %v2144
        %v2147 = vsel %vm1202, %v2139, %v2146
        %v2148 = vrot.slane %v2143, 4
        %v2150 = vshrl.u32 %v1878, 16
        %v2152 = vrot.slane %v2150, 7
        %v2153 = vshll.u32 %v1878, 16
        %v2155 = vor.u32 %v2152, %v2153
        %v2156 = vsel %vm1202, %v2148, %v2155
        %v2157 = vrot.slane %v2152, 4
        %v2159 = vshrl.u32 %v1879, 16
        %v2161 = vrot.slane %v2159, 7
        %v2162 = vshll.u32 %v1879, 16
        %v2164 = vor.u32 %v2161, %v2162
        %v2165 = vsel %vm1202, %v2157, %v2164
        %v2166 = vrot.slane %v2161, 4
        %vm2167 = vcmp.ne.s16.totalorder %v1886, 0
        %vm2168 = vcmp.ne.s16.totalorder %v1895, 0
        %vm2169 = vcmp.ne.s16.totalorder %v1904, 0
        %vm2170 = vcmp.ne.s16.totalorder %v1913, 0
        %vm2171 = vcmp.ne.s16.totalorder %v1922, 0
        %vm2172 = vcmp.ne.s16.totalorder %v1931, 0
        %vm2173 = vcmp.ne.s16.totalorder %v1940, 0
        %vm2174 = vcmp.ne.s16.totalorder %v1949, 0
        %vm2175 = vcmp.ne.s16.totalorder %v1958, 0
        %vm2176 = vcmp.ne.s16.totalorder %v1967, 0
        %vm2177 = vcmp.ne.s16.totalorder %v1976, 0
        %vm2178 = vcmp.ne.s16.totalorder %v1985, 0
        %vm2179 = vcmp.ne.s16.totalorder %v1994, 0
        %vm2180 = vcmp.ne.s16.totalorder %v2003, 0
        %vm2181 = vcmp.ne.s16.totalorder %v2012, 0
        %vm2182 = vcmp.ne.s16.totalorder %v2021, 0
        %vm2183 = vcmp.ne.s16.totalorder %v2030, 0
        %vm2184 = vcmp.ne.s16.totalorder %v2039, 0
        %vm2185 = vcmp.ne.s16.totalorder %v2048, 0
        %vm2186 = vcmp.ne.s16.totalorder %v2057, 0
        %vm2187 = vcmp.ne.s16.totalorder %v2066, 0
        %vm2188 = vcmp.ne.s16.totalorder %v2075, 0
        %vm2189 = vcmp.ne.s16.totalorder %v2084, 0
        %vm2190 = vcmp.ne.s16.totalorder %v2093, 0
        %vm2191 = vcmp.ne.s16.totalorder %v2102, 0
        %vm2192 = vcmp.ne.s16.totalorder %v2111, 0
        %vm2193 = vcmp.ne.s16.totalorder %v2120, 0
        %vm2194 = vcmp.ne.s16.totalorder %v2129, 0
        %vm2195 = vcmp.ne.s16.totalorder %v2138, 0
        %vm2196 = vcmp.ne.s16.totalorder %v2147, 0
        %vm2197 = vcmp.ne.s16.totalorder %v2156, 0
        %vm2198 = vcmp.ne.s16.totalorder %v2165, 0
        %vm2199 = vcmp.ne.s16.totalorder %v2166, 0
        %v2200 = vsel %vm2167, %v1623, 0
        %v2201 = vsel %vm2168, %v1624, 0
        %v2202 = vsel %vm2169, %v1625, 0
        %v2203 = vsel %vm2170, %v1626, 0
        %v2204 = vsel %vm2171, %v1627, 0
        %v2205 = vsel %vm2172, %v1628, 0
        %v2206 = vsel %vm2173, %v1629, 0
        %v2207 = vsel %vm2174, %v1630, 0
        %v2208 = vsel %vm2175, %v1631, 0
        %v2209 = vsel %vm2176, %v1632, 0
        %v2210 = vsel %vm2177, %v1633, 0
        %v2211 = vsel %vm2178, %v1634, 0
        %v2212 = vsel %vm2179, %v1635, 0
        %v2213 = vsel %vm2180, %v1636, 0
        %v2214 = vsel %vm2181, %v1637, 0
        %v2215 = vsel %vm2182, %v1638, 0
        %v2216 = vsel %vm2183, %v1639, 0
        %v2217 = vsel %vm2184, %v1640, 0
        %v2218 = vsel %vm2185, %v1641, 0
        %v2219 = vsel %vm2186, %v1642, 0
        %v2220 = vsel %vm2187, %v1643, 0
        %v2221 = vsel %vm2188, %v1644, 0
        %v2222 = vsel %vm2189, %v1645, 0
        %v2223 = vsel %vm2190, %v1646, 0
        %v2224 = vsel %vm2191, %v1647, 0
        %v2225 = vsel %vm2192, %v1648, 0
        %v2226 = vsel %vm2193, %v1649, 0
        %v2227 = vsel %vm2194, %v1650, 0
        %v2228 = vsel %vm2195, %v1651, 0
        %v2229 = vsel %vm2196, %v1652, 0
        %v2230 = vsel %vm2197, %v1653, 0
        %v2231 = vsel %vm2198, %v1654, 0
        %v2232 = vsel %vm2199, %v1655, 0
        %v2234 = vshrl.u32 %v2200, 16
        %v2236 = vrot.slane %v2234, 4
        %v2237 = vshll.u32 %v2200, 16
        %v2239 = vrot.slane %v2237, 5
        %v2240 = vor.u32 %v2236, %v2239
        %v2241 = vrot.slane %v2240, 4
        %v2243 = vshll.u32 %v2201, 16
        %v2245 = vrot.slane %v2243, 5
        %v2246 = vsel %vm814, %v2241, %v2245
        %v2247 = vshrl.u32 %v2201, 16
        %v2249 = vrot.slane %v2247, 4
        %v2250 = vor.u32 %v2249, %v2245
        %v2251 = vrot.slane %v2250, 4
        %v2253 = vshll.u32 %v2202, 16
        %v2255 = vrot.slane %v2253, 5
        %v2256 = vsel %vm814, %v2251, %v2255
        %v2257 = vshrl.u32 %v2202, 16
        %v2259 = vrot.slane %v2257, 4
        %v2260 = vor.u32 %v2259, %v2255
        %v2261 = vrot.slane %v2260, 4
        %v2263 = vshll.u32 %v2203, 16
        %v2265 = vrot.slane %v2263, 5
        %v2266 = vsel %vm814, %v2261, %v2265
        %v2267 = vshrl.u32 %v2203, 16
        %v2269 = vrot.slane %v2267, 4
        %v2270 = vor.u32 %v2269, %v2265
        %v2271 = vrot.slane %v2270, 4
        %v2273 = vshll.u32 %v2204, 16
        %v2275 = vrot.slane %v2273, 5
        %v2276 = vsel %vm814, %v2271, %v2275
        %v2277 = vshrl.u32 %v2204, 16
        %v2279 = vrot.slane %v2277, 4
        %v2280 = vor.u32 %v2279, %v2275
        %v2281 = vrot.slane %v2280, 4
        %v2283 = vshll.u32 %v2205, 16
        %v2285 = vrot.slane %v2283, 5
        %v2286 = vsel %vm814, %v2281, %v2285
        %v2287 = vshrl.u32 %v2205, 16
        %v2289 = vrot.slane %v2287, 4
        %v2290 = vor.u32 %v2289, %v2285
        %v2291 = vrot.slane %v2290, 4
        %v2293 = vshll.u32 %v2206, 16
        %v2295 = vrot.slane %v2293, 5
        %v2296 = vsel %vm814, %v2291, %v2295
        %v2297 = vshrl.u32 %v2206, 16
        %v2299 = vrot.slane %v2297, 4
        %v2300 = vor.u32 %v2299, %v2295
        %v2301 = vrot.slane %v2300, 4
        %v2303 = vshll.u32 %v2207, 16
        %v2305 = vrot.slane %v2303, 5
        %v2306 = vsel %vm814, %v2301, %v2305
        %v2307 = vshrl.u32 %v2207, 16
        %v2309 = vrot.slane %v2307, 4
        %v2310 = vor.u32 %v2309, %v2305
        %v2311 = vrot.slane %v2310, 4
        %v2313 = vshll.u32 %v2208, 16
        %v2315 = vrot.slane %v2313, 5
        %v2316 = vsel %vm814, %v2311, %v2315
        %v2317 = vshrl.u32 %v2208, 16
        %v2319 = vrot.slane %v2317, 4
        %v2320 = vor.u32 %v2319, %v2315
        %v2321 = vrot.slane %v2320, 4
        %v2323 = vshll.u32 %v2209, 16
        %v2325 = vrot.slane %v2323, 5
        %v2326 = vsel %vm814, %v2321, %v2325
        %v2327 = vshrl.u32 %v2209, 16
        %v2329 = vrot.slane %v2327, 4
        %v2330 = vor.u32 %v2329, %v2325
        %v2331 = vrot.slane %v2330, 4
        %v2333 = vshll.u32 %v2210, 16
        %v2335 = vrot.slane %v2333, 5
        %v2336 = vsel %vm814, %v2331, %v2335
        %v2337 = vshrl.u32 %v2210, 16
        %v2339 = vrot.slane %v2337, 4
        %v2340 = vor.u32 %v2339, %v2335
        %v2341 = vrot.slane %v2340, 4
        %v2343 = vshll.u32 %v2211, 16
        %v2345 = vrot.slane %v2343, 5
        %v2346 = vsel %vm814, %v2341, %v2345
        %v2347 = vshrl.u32 %v2211, 16
        %v2349 = vrot.slane %v2347, 4
        %v2350 = vor.u32 %v2349, %v2345
        %v2351 = vrot.slane %v2350, 4
        %v2353 = vshll.u32 %v2212, 16
        %v2355 = vrot.slane %v2353, 5
        %v2356 = vsel %vm814, %v2351, %v2355
        %v2357 = vshrl.u32 %v2212, 16
        %v2359 = vrot.slane %v2357, 4
        %v2360 = vor.u32 %v2359, %v2355
        %v2361 = vrot.slane %v2360, 4
        %v2363 = vshll.u32 %v2213, 16
        %v2365 = vrot.slane %v2363, 5
        %v2366 = vsel %vm814, %v2361, %v2365
        %v2367 = vshrl.u32 %v2213, 16
        %v2369 = vrot.slane %v2367, 4
        %v2370 = vor.u32 %v2369, %v2365
        %v2371 = vrot.slane %v2370, 4
        %v2373 = vshll.u32 %v2214, 16
        %v2375 = vrot.slane %v2373, 5
        %v2376 = vsel %vm814, %v2371, %v2375
        %v2377 = vshrl.u32 %v2214, 16
        %v2379 = vrot.slane %v2377, 4
        %v2380 = vor.u32 %v2379, %v2375
        %v2381 = vrot.slane %v2380, 4
        %v2383 = vshll.u32 %v2215, 16
        %v2385 = vrot.slane %v2383, 5
        %v2386 = vsel %vm814, %v2381, %v2385
        %v2387 = vshrl.u32 %v2215, 16
        %v2389 = vrot.slane %v2387, 4
        %v2390 = vor.u32 %v2389, %v2385
        %v2391 = vrot.slane %v2390, 4
        %v2393 = vshll.u32 %v2216, 16
        %v2395 = vrot.slane %v2393, 5
        %v2396 = vsel %vm814, %v2391, %v2395
        %v2397 = vshrl.u32 %v2216, 16
        %v2399 = vrot.slane %v2397, 4
        %v2400 = vor.u32 %v2399, %v2395
        %v2401 = vrot.slane %v2400, 4
        %v2403 = vshll.u32 %v2217, 16
        %v2405 = vrot.slane %v2403, 5
        %v2406 = vsel %vm814, %v2401, %v2405
        %v2407 = vshrl.u32 %v2217, 16
        %v2409 = vrot.slane %v2407, 4
        %v2410 = vor.u32 %v2409, %v2405
        %v2411 = vrot.slane %v2410, 4
        %v2413 = vshll.u32 %v2218, 16
        %v2415 = vrot.slane %v2413, 5
        %v2416 = vsel %vm814, %v2411, %v2415
        %v2417 = vshrl.u32 %v2218, 16
        %v2419 = vrot.slane %v2417, 4
        %v2420 = vor.u32 %v2419, %v2415
        %v2421 = vrot.slane %v2420, 4
        %v2423 = vshll.u32 %v2219, 16
        %v2425 = vrot.slane %v2423, 5
        %v2426 = vsel %vm814, %v2421, %v2425
        %v2427 = vshrl.u32 %v2219, 16
        %v2429 = vrot.slane %v2427, 4
        %v2430 = vor.u32 %v2429, %v2425
        %v2431 = vrot.slane %v2430, 4
        %v2433 = vshll.u32 %v2220, 16
        %v2435 = vrot.slane %v2433, 5
        %v2436 = vsel %vm814, %v2431, %v2435
        %v2437 = vshrl.u32 %v2220, 16
        %v2439 = vrot.slane %v2437, 4
        %v2440 = vor.u32 %v2439, %v2435
        %v2441 = vrot.slane %v2440, 4
        %v2443 = vshll.u32 %v2221, 16
        %v2445 = vrot.slane %v2443, 5
        %v2446 = vsel %vm814, %v2441, %v2445
        %v2447 = vshrl.u32 %v2221, 16
        %v2449 = vrot.slane %v2447, 4
        %v2450 = vor.u32 %v2449, %v2445
        %v2451 = vrot.slane %v2450, 4
        %v2453 = vshll.u32 %v2222, 16
        %v2455 = vrot.slane %v2453, 5
        %v2456 = vsel %vm814, %v2451, %v2455
        %v2457 = vshrl.u32 %v2222, 16
        %v2459 = vrot.slane %v2457, 4
        %v2460 = vor.u32 %v2459, %v2455
        %v2461 = vrot.slane %v2460, 4
        %v2463 = vshll.u32 %v2223, 16
        %v2465 = vrot.slane %v2463, 5
        %v2466 = vsel %vm814, %v2461, %v2465
        %v2467 = vshrl.u32 %v2223, 16
        %v2469 = vrot.slane %v2467, 4
        %v2470 = vor.u32 %v2469, %v2465
        %v2471 = vrot.slane %v2470, 4
        %v2473 = vshll.u32 %v2224, 16
        %v2475 = vrot.slane %v2473, 5
        %v2476 = vsel %vm814, %v2471, %v2475
        %v2477 = vshrl.u32 %v2224, 16
        %v2479 = vrot.slane %v2477, 4
        %v2480 = vor.u32 %v2479, %v2475
        %v2481 = vrot.slane %v2480, 4
        %v2483 = vshll.u32 %v2225, 16
        %v2485 = vrot.slane %v2483, 5
        %v2486 = vsel %vm814, %v2481, %v2485
        %v2487 = vshrl.u32 %v2225, 16
        %v2489 = vrot.slane %v2487, 4
        %v2490 = vor.u32 %v2489, %v2485
        %v2491 = vrot.slane %v2490, 4
        %v2493 = vshll.u32 %v2226, 16
        %v2495 = vrot.slane %v2493, 5
        %v2496 = vsel %vm814, %v2491, %v2495
        %v2497 = vshrl.u32 %v2226, 16
        %v2499 = vrot.slane %v2497, 4
        %v2500 = vor.u32 %v2499, %v2495
        %v2501 = vrot.slane %v2500, 4
        %v2503 = vshll.u32 %v2227, 16
        %v2505 = vrot.slane %v2503, 5
        %v2506 = vsel %vm814, %v2501, %v2505
        %v2507 = vshrl.u32 %v2227, 16
        %v2509 = vrot.slane %v2507, 4
        %v2510 = vor.u32 %v2509, %v2505
        %v2511 = vrot.slane %v2510, 4
        %v2513 = vshll.u32 %v2228, 16
        %v2515 = vrot.slane %v2513, 5
        %v2516 = vsel %vm814, %v2511, %v2515
        %v2517 = vshrl.u32 %v2228, 16
        %v2519 = vrot.slane %v2517, 4
        %v2520 = vor.u32 %v2519, %v2515
        %v2521 = vrot.slane %v2520, 4
        %v2523 = vshll.u32 %v2229, 16
        %v2525 = vrot.slane %v2523, 5
        %v2526 = vsel %vm814, %v2521, %v2525
        %v2527 = vshrl.u32 %v2229, 16
        %v2529 = vrot.slane %v2527, 4
        %v2530 = vor.u32 %v2529, %v2525
        %v2531 = vrot.slane %v2530, 4
        %v2533 = vshll.u32 %v2230, 16
        %v2535 = vrot.slane %v2533, 5
        %v2536 = vsel %vm814, %v2531, %v2535
        %v2537 = vshrl.u32 %v2230, 16
        %v2539 = vrot.slane %v2537, 4
        %v2540 = vor.u32 %v2539, %v2535
        %v2541 = vrot.slane %v2540, 4
        %v2543 = vshll.u32 %v2231, 16
        %v2545 = vrot.slane %v2543, 5
        %v2546 = vsel %vm814, %v2541, %v2545
        %v2547 = vshrl.u32 %v2231, 16
        %v2549 = vrot.slane %v2547, 4
        %v2550 = vor.u32 %v2549, %v2545
        %v2551 = vrot.slane %v2550, 4
        %v2553 = vshll.u32 %v2232, 16
        %v2555 = vrot.slane %v2553, 5
        %v2556 = vsel %vm814, %v2551, %v2555
        %2589 = vst [vmem:[#allocation4 + $0x8] sm:$0xf] %v2246
        %2590 = vst [vmem:[#allocation4 + $0x2c] sm:$0xf] %v2256
        %2591 = vst [vmem:[#allocation4 + $0x50] sm:$0xf] %v2266
        %2592 = vst [vmem:[#allocation4 + $0x74] sm:$0xf] %v2276
        %2593 = vst [vmem:[#allocation4 + $0x98] sm:$0xf] %v2286
        %2594 = vst [vmem:[#allocation4 + $0xbc] sm:$0xf] %v2296
        %2595 = vst [vmem:[#allocation4 + $0xe0] sm:$0xf] %v2306
        %2596 = vst [vmem:[#allocation4 + $0x104] sm:$0xf] %v2316
        %2597 = vst [vmem:[#allocation4 + $0x128] sm:$0xf] %v2326
        %2598 = vst [vmem:[#allocation4 + $0x14c] sm:$0xf] %v2336
        %2599 = vst [vmem:[#allocation4 + $0x170] sm:$0xf] %v2346
        %2600 = vst [vmem:[#allocation4 + $0x194] sm:$0xf] %v2356
        %2601 = vst [vmem:[#allocation4 + $0x1b8] sm:$0xf] %v2366
        %2602 = vst [vmem:[#allocation4 + $0x1dc] sm:$0xf] %v2376
        %2603 = vst [vmem:[#allocation4 + $0x200] sm:$0xf] %v2386
        %2604 = vst [vmem:[#allocation4 + $0x224] sm:$0xf] %v2396
        %2605 = vst [vmem:[#allocation4 + $0x248] sm:$0xf] %v2406
        %2606 = vst [vmem:[#allocation4 + $0x26c] sm:$0xf] %v2416
        %2607 = vst [vmem:[#allocation4 + $0x290] sm:$0xf] %v2426
        %2608 = vst [vmem:[#allocation4 + $0x2b4] sm:$0xf] %v2436
        %2609 = vst [vmem:[#allocation4 + $0x2d8] sm:$0xf] %v2446
        %2610 = vst [vmem:[#allocation4 + $0x2fc] sm:$0xf] %v2456
        %2611 = vst [vmem:[#allocation4 + $0x320] sm:$0xf] %v2466
        %2612 = vst [vmem:[#allocation4 + $0x344] sm:$0xf] %v2476
        %2613 = vst [vmem:[#allocation4 + $0x368] sm:$0xf] %v2486
        %2614 = vst [vmem:[#allocation4 + $0x38c] sm:$0xf] %v2496
        %2615 = vst [vmem:[#allocation4 + $0x3b0] sm:$0xf] %v2506
        %2616 = vst [vmem:[#allocation4 + $0x3d4] sm:$0xf] %v2516
        %2617 = vst [vmem:[#allocation4 + $0x3f8] sm:$0xf] %v2526
        %2618 = vst [vmem:[#allocation4 + $0x41c] sm:$0xf] %v2536
        %2619 = vst [vmem:[#allocation4 + $0x440] sm:$0xf] %v2546
        %2620 = vst [vmem:[#allocation4 + $0x464] sm:$0xf] %v2556
        %v2621 = vld [vmem:[#allocation2 + $0x8] sm:$0x8]
        %v2622 = vld [vmem:[#allocation2 + $0xc] sm:$0xf]
        %v2623 = vld [vmem:[#allocation2 + $0x10] sm:$0xf]
        %v2624 = vld [vmem:[#allocation2 + $0x14] sm:$0xf]
        %v2625 = vld [vmem:[#allocation2 + $0x18] sm:$0xf]
        %v2626 = vld [vmem:[#allocation2 + $0x1c] sm:$0xf]
        %v2627 = vld [vmem:[#allocation2 + $0x20] sm:$0xf]
        %v2628 = vld [vmem:[#allocation2 + $0x24] sm:$0xf]
        %v2629 = vld [vmem:[#allocation2 + $0x28] sm:$0xf]
        %v2630 = vld [vmem:[#allocation2 + $0x2c] sm:$0xf]
        %v2631 = vld [vmem:[#allocation2 + $0x30] sm:$0xf]
        %v2632 = vld [vmem:[#allocation2 + $0x34] sm:$0xf]
        %v2633 = vld [vmem:[#allocation2 + $0x38] sm:$0xf]
        %v2634 = vld [vmem:[#allocation2 + $0x3c] sm:$0xf]
        %v2635 = vld [vmem:[#allocation2 + $0x40] sm:$0xf]
        %v2636 = vld [vmem:[#allocation2 + $0x44] sm:$0xf]
        %v2637 = vld [vmem:[#allocation2 + $0x48] sm:$0xf]
        %v2638 = vld [vmem:[#allocation2 + $0x4c] sm:$0xf]
        %v2639 = vld [vmem:[#allocation2 + $0x50] sm:$0xf]
        %v2640 = vld [vmem:[#allocation2 + $0x54] sm:$0xf]
        %v2641 = vld [vmem:[#allocation2 + $0x58] sm:$0xf]
        %v2642 = vld [vmem:[#allocation2 + $0x5c] sm:$0xf]
        %v2643 = vld [vmem:[#allocation2 + $0x60] sm:$0xf]
        %v2644 = vld [vmem:[#allocation2 + $0x64] sm:$0xf]
        %v2645 = vld [vmem:[#allocation2 + $0x68] sm:$0xf]
        %v2646 = vld [vmem:[#allocation2 + $0x6c] sm:$0xf]
        %v2647 = vld [vmem:[#allocation2 + $0x70] sm:$0xf]
        %v2648 = vld [vmem:[#allocation2 + $0x74] sm:$0xf]
        %v2649 = vld [vmem:[#allocation2 + $0x78] sm:$0xf]
        %v2650 = vld [vmem:[#allocation2 + $0x7c] sm:$0xf]
        %v2651 = vld [vmem:[#allocation2 + $0x80] sm:$0xf]
        %v2652 = vld [vmem:[#allocation2 + $0x84] sm:$0xf]
        %v2653 = vld [vmem:[#allocation2 + $0x88] sm:$0xf]
        %v2654 = vsel %vm1134, %v2621, 0
        %v2655 = vsel %vm1135, %v2622, 0
        %v2656 = vsel %vm1136, %v2623, 0
        %v2657 = vsel %vm1137, %v2624, 0
        %v2658 = vsel %vm1138, %v2625, 0
        %v2659 = vsel %vm1139, %v2626, 0
        %v2660 = vsel %vm1140, %v2627, 0
        %v2661 = vsel %vm1141, %v2628, 0
        %v2662 = vsel %vm1142, %v2629, 0
        %v2663 = vsel %vm1143, %v2630, 0
        %v2664 = vsel %vm1144, %v2631, 0
        %v2665 = vsel %vm1145, %v2632, 0
        %v2666 = vsel %vm1146, %v2633, 0
        %v2667 = vsel %vm1147, %v2634, 0
        %v2668 = vsel %vm1148, %v2635, 0
        %v2669 = vsel %vm1149, %v2636, 0
        %v2670 = vsel %vm1150, %v2637, 0
        %v2671 = vsel %vm1151, %v2638, 0
        %v2672 = vsel %vm1152, %v2639, 0
        %v2673 = vsel %vm1153, %v2640, 0
        %v2674 = vsel %vm1154, %v2641, 0
        %v2675 = vsel %vm1155, %v2642, 0
        %v2676 = vsel %vm1156, %v2643, 0
        %v2677 = vsel %vm1157, %v2644, 0
        %v2678 = vsel %vm1158, %v2645, 0
        %v2679 = vsel %vm1159, %v2646, 0
        %v2680 = vsel %vm1160, %v2647, 0
        %v2681 = vsel %vm1161, %v2648, 0
        %v2682 = vsel %vm1162, %v2649, 0
        %v2683 = vsel %vm1163, %v2650, 0
        %v2684 = vsel %vm1164, %v2651, 0
        %v2685 = vsel %vm1165, %v2652, 0
        %v2686 = vsel %vm1166, %v2653, 0
        %v2688 = vshrl.u32 %v2654, 16
        %v2690 = vrot.slane %v2688, 7
        %v2691 = vrot.slane %v2690, 4
        %v2693 = vshrl.u32 %v2655, 16
        %v2695 = vrot.slane %v2693, 7
        %v2696 = vshll.u32 %v2655, 16
        %v2698 = vor.u32 %v2695, %v2696
        %v2699 = vsel %vm1202, %v2691, %v2698
        %v2700 = vrot.slane %v2695, 4
        %v2702 = vshrl.u32 %v2656, 16
        %v2704 = vrot.slane %v2702, 7
        %v2705 = vshll.u32 %v2656, 16
        %v2707 = vor.u32 %v2704, %v2705
        %v2708 = vsel %vm1202, %v2700, %v2707
        %v2709 = vrot.slane %v2704, 4
        %v2711 = vshrl.u32 %v2657, 16
        %v2713 = vrot.slane %v2711, 7
        %v2714 = vshll.u32 %v2657, 16
        %v2716 = vor.u32 %v2713, %v2714
        %v2717 = vsel %vm1202, %v2709, %v2716
        %v2718 = vrot.slane %v2713, 4
        %v2720 = vshrl.u32 %v2658, 16
        %v2722 = vrot.slane %v2720, 7
        %v2723 = vshll.u32 %v2658, 16
        %v2725 = vor.u32 %v2722, %v2723
        %v2726 = vsel %vm1202, %v2718, %v2725
        %v2727 = vrot.slane %v2722, 4
        %v2729 = vshrl.u32 %v2659, 16
        %v2731 = vrot.slane %v2729, 7
        %v2732 = vshll.u32 %v2659, 16
        %v2734 = vor.u32 %v2731, %v2732
        %v2735 = vsel %vm1202, %v2727, %v2734
        %v2736 = vrot.slane %v2731, 4
        %v2738 = vshrl.u32 %v2660, 16
        %v2740 = vrot.slane %v2738, 7
        %v2741 = vshll.u32 %v2660, 16
        %v2743 = vor.u32 %v2740, %v2741
        %v2744 = vsel %vm1202, %v2736, %v2743
        %v2745 = vrot.slane %v2740, 4
        %v2747 = vshrl.u32 %v2661, 16
        %v2749 = vrot.slane %v2747, 7
        %v2750 = vshll.u32 %v2661, 16
        %v2752 = vor.u32 %v2749, %v2750
        %v2753 = vsel %vm1202, %v2745, %v2752
        %v2754 = vrot.slane %v2749, 4
        %v2756 = vshrl.u32 %v2662, 16
        %v2758 = vrot.slane %v2756, 7
        %v2759 = vshll.u32 %v2662, 16
        %v2761 = vor.u32 %v2758, %v2759
        %v2762 = vsel %vm1202, %v2754, %v2761
        %v2763 = vrot.slane %v2758, 4
        %v2765 = vshrl.u32 %v2663, 16
        %v2767 = vrot.slane %v2765, 7
        %v2768 = vshll.u32 %v2663, 16
        %v2770 = vor.u32 %v2767, %v2768
        %v2771 = vsel %vm1202, %v2763, %v2770
        %v2772 = vrot.slane %v2767, 4
        %v2774 = vshrl.u32 %v2664, 16
        %v2776 = vrot.slane %v2774, 7
        %v2777 = vshll.u32 %v2664, 16
        %v2779 = vor.u32 %v2776, %v2777
        %v2780 = vsel %vm1202, %v2772, %v2779
        %v2781 = vrot.slane %v2776, 4
        %v2783 = vshrl.u32 %v2665, 16
        %v2785 = vrot.slane %v2783, 7
        %v2786 = vshll.u32 %v2665, 16
        %v2788 = vor.u32 %v2785, %v2786
        %v2789 = vsel %vm1202, %v2781, %v2788
        %v2790 = vrot.slane %v2785, 4
        %v2792 = vshrl.u32 %v2666, 16
        %v2794 = vrot.slane %v2792, 7
        %v2795 = vshll.u32 %v2666, 16
        %v2797 = vor.u32 %v2794, %v2795
        %v2798 = vsel %vm1202, %v2790, %v2797
        %v2799 = vrot.slane %v2794, 4
        %v2801 = vshrl.u32 %v2667, 16
        %v2803 = vrot.slane %v2801, 7
        %v2804 = vshll.u32 %v2667, 16
        %v2806 = vor.u32 %v2803, %v2804
        %v2807 = vsel %vm1202, %v2799, %v2806
        %v2808 = vrot.slane %v2803, 4
        %v2810 = vshrl.u32 %v2668, 16
        %v2812 = vrot.slane %v2810, 7
        %v2813 = vshll.u32 %v2668, 16
        %v2815 = vor.u32 %v2812, %v2813
        %v2816 = vsel %vm1202, %v2808, %v2815
        %v2817 = vrot.slane %v2812, 4
        %v2819 = vshrl.u32 %v2669, 16
        %v2821 = vrot.slane %v2819, 7
        %v2822 = vshll.u32 %v2669, 16
        %v2824 = vor.u32 %v2821, %v2822
        %v2825 = vsel %vm1202, %v2817, %v2824
        %v2826 = vrot.slane %v2821, 4
        %v2828 = vshrl.u32 %v2670, 16
        %v2830 = vrot.slane %v2828, 7
        %v2831 = vshll.u32 %v2670, 16
        %v2833 = vor.u32 %v2830, %v2831
        %v2834 = vsel %vm1202, %v2826, %v2833
        %v2835 = vrot.slane %v2830, 4
        %v2837 = vshrl.u32 %v2671, 16
        %v2839 = vrot.slane %v2837, 7
        %v2840 = vshll.u32 %v2671, 16
        %v2842 = vor.u32 %v2839, %v2840
        %v2843 = vsel %vm1202, %v2835, %v2842
        %v2844 = vrot.slane %v2839, 4
        %v2846 = vshrl.u32 %v2672, 16
        %v2848 = vrot.slane %v2846, 7
        %v2849 = vshll.u32 %v2672, 16
        %v2851 = vor.u32 %v2848, %v2849
        %v2852 = vsel %vm1202, %v2844, %v2851
        %v2853 = vrot.slane %v2848, 4
        %v2855 = vshrl.u32 %v2673, 16
        %v2857 = vrot.slane %v2855, 7
        %v2858 = vshll.u32 %v2673, 16
        %v2860 = vor.u32 %v2857, %v2858
        %v2861 = vsel %vm1202, %v2853, %v2860
        %v2862 = vrot.slane %v2857, 4
        %v2864 = vshrl.u32 %v2674, 16
        %v2866 = vrot.slane %v2864, 7
        %v2867 = vshll.u32 %v2674, 16
        %v2869 = vor.u32 %v2866, %v2867
        %v2870 = vsel %vm1202, %v2862, %v2869
        %v2871 = vrot.slane %v2866, 4
        %v2873 = vshrl.u32 %v2675, 16
        %v2875 = vrot.slane %v2873, 7
        %v2876 = vshll.u32 %v2675, 16
        %v2878 = vor.u32 %v2875, %v2876
        %v2879 = vsel %vm1202, %v2871, %v2878
        %v2880 = vrot.slane %v2875, 4
        %v2882 = vshrl.u32 %v2676, 16
        %v2884 = vrot.slane %v2882, 7
        %v2885 = vshll.u32 %v2676, 16
        %v2887 = vor.u32 %v2884, %v2885
        %v2888 = vsel %vm1202, %v2880, %v2887
        %v2889 = vrot.slane %v2884, 4
        %v2891 = vshrl.u32 %v2677, 16
        %v2893 = vrot.slane %v2891, 7
        %v2894 = vshll.u32 %v2677, 16
        %v2896 = vor.u32 %v2893, %v2894
        %v2897 = vsel %vm1202, %v2889, %v2896
        %v2898 = vrot.slane %v2893, 4
        %v2900 = vshrl.u32 %v2678, 16
        %v2902 = vrot.slane %v2900, 7
        %v2903 = vshll.u32 %v2678, 16
        %v2905 = vor.u32 %v2902, %v2903
        %v2906 = vsel %vm1202, %v2898, %v2905
        %v2907 = vrot.slane %v2902, 4
        %v2909 = vshrl.u32 %v2679, 16
        %v2911 = vrot.slane %v2909, 7
        %v2912 = vshll.u32 %v2679, 16
        %v2914 = vor.u32 %v2911, %v2912
        %v2915 = vsel %vm1202, %v2907, %v2914
        %v2916 = vrot.slane %v2911, 4
        %v2918 = vshrl.u32 %v2680, 16
        %v2920 = vrot.slane %v2918, 7
        %v2921 = vshll.u32 %v2680, 16
        %v2923 = vor.u32 %v2920, %v2921
        %v2924 = vsel %vm1202, %v2916, %v2923
        %v2925 = vrot.slane %v2920, 4
        %v2927 = vshrl.u32 %v2681, 16
        %v2929 = vrot.slane %v2927, 7
        %v2930 = vshll.u32 %v2681, 16
        %v2932 = vor.u32 %v2929, %v2930
        %v2933 = vsel %vm1202, %v2925, %v2932
        %v2934 = vrot.slane %v2929, 4
        %v2936 = vshrl.u32 %v2682, 16
        %v2938 = vrot.slane %v2936, 7
        %v2939 = vshll.u32 %v2682, 16
        %v2941 = vor.u32 %v2938, %v2939
        %v2942 = vsel %vm1202, %v2934, %v2941
        %v2943 = vrot.slane %v2938, 4
        %v2945 = vshrl.u32 %v2683, 16
        %v2947 = vrot.slane %v2945, 7
        %v2948 = vshll.u32 %v2683, 16
        %v2950 = vor.u32 %v2947, %v2948
        %v2951 = vsel %vm1202, %v2943, %v2950
        %v2952 = vrot.slane %v2947, 4
        %v2954 = vshrl.u32 %v2684, 16
        %v2956 = vrot.slane %v2954, 7
        %v2957 = vshll.u32 %v2684, 16
        %v2959 = vor.u32 %v2956, %v2957
        %v2960 = vsel %vm1202, %v2952, %v2959
        %v2961 = vrot.slane %v2956, 4
        %v2963 = vshrl.u32 %v2685, 16
        %v2965 = vrot.slane %v2963, 7
        %v2966 = vshll.u32 %v2685, 16
        %v2968 = vor.u32 %v2965, %v2966
        %v2969 = vsel %vm1202, %v2961, %v2968
        %v2970 = vrot.slane %v2965, 4
        %v2972 = vshrl.u32 %v2686, 16
        %v2974 = vrot.slane %v2972, 7
        %v2975 = vshll.u32 %v2686, 16
        %v2977 = vor.u32 %v2974, %v2975
        %v2978 = vsel %vm1202, %v2970, %v2977
        %3011 = vst [vmem:[#allocation4 + $0xc] sm:$0xf] %v2699
        %3012 = vst [vmem:[#allocation4 + $0x30] sm:$0xf] %v2708
        %3013 = vst [vmem:[#allocation4 + $0x54] sm:$0xf] %v2717
        %3014 = vst [vmem:[#allocation4 + $0x78] sm:$0xf] %v2726
        %3015 = vst [vmem:[#allocation4 + $0x9c] sm:$0xf] %v2735
        %3016 = vst [vmem:[#allocation4 + $0xc0] sm:$0xf] %v2744
        %3017 = vst [vmem:[#allocation4 + $0xe4] sm:$0xf] %v2753
        %3018 = vst [vmem:[#allocation4 + $0x108] sm:$0xf] %v2762
        %3019 = vst [vmem:[#allocation4 + $0x12c] sm:$0xf] %v2771
        %3020 = vst [vmem:[#allocation4 + $0x150] sm:$0xf] %v2780
        %3021 = vst [vmem:[#allocation4 + $0x174] sm:$0xf] %v2789
        %3022 = vst [vmem:[#allocation4 + $0x198] sm:$0xf] %v2798
        %3023 = vst [vmem:[#allocation4 + $0x1bc] sm:$0xf] %v2807
        %3024 = vst [vmem:[#allocation4 + $0x1e0] sm:$0xf] %v2816
        %3025 = vst [vmem:[#allocation4 + $0x204] sm:$0xf] %v2825
        %3026 = vst [vmem:[#allocation4 + $0x228] sm:$0xf] %v2834
        %3027 = vst [vmem:[#allocation4 + $0x24c] sm:$0xf] %v2843
        %3028 = vst [vmem:[#allocation4 + $0x270] sm:$0xf] %v2852
        %3029 = vst [vmem:[#allocation4 + $0x294] sm:$0xf] %v2861
        %3030 = vst [vmem:[#allocation4 + $0x2b8] sm:$0xf] %v2870
        %3031 = vst [vmem:[#allocation4 + $0x2dc] sm:$0xf] %v2879
        %3032 = vst [vmem:[#allocation4 + $0x300] sm:$0xf] %v2888
        %3033 = vst [vmem:[#allocation4 + $0x324] sm:$0xf] %v2897
        %3034 = vst [vmem:[#allocation4 + $0x348] sm:$0xf] %v2906
        %3035 = vst [vmem:[#allocation4 + $0x36c] sm:$0xf] %v2915
        %3036 = vst [vmem:[#allocation4 + $0x390] sm:$0xf] %v2924
        %3037 = vst [vmem:[#allocation4 + $0x3b4] sm:$0xf] %v2933
        %3038 = vst [vmem:[#allocation4 + $0x3d8] sm:$0xf] %v2942
        %3039 = vst [vmem:[#allocation4 + $0x3fc] sm:$0xf] %v2951
        %3040 = vst [vmem:[#allocation4 + $0x420] sm:$0xf] %v2960
        %3041 = vst [vmem:[#allocation4 + $0x444] sm:$0xf] %v2969
        %3042 = vst [vmem:[#allocation4 + $0x468] sm:$0xf] %v2978
        %v3043 = vld [vmem:[#allocation2 + $0xc] sm:$0xf]
        %v3044 = vld [vmem:[#allocation2 + $0x10] sm:$0xf]
        %v3045 = vld [vmem:[#allocation2 + $0x14] sm:$0xf]
        %v3046 = vld [vmem:[#allocation2 + $0x18] sm:$0xf]
        %v3047 = vld [vmem:[#allocation2 + $0x1c] sm:$0xf]
        %v3048 = vld [vmem:[#allocation2 + $0x20] sm:$0xf]
        %v3049 = vld [vmem:[#allocation2 + $0x24] sm:$0xf]
        %v3050 = vld [vmem:[#allocation2 + $0x28] sm:$0xf]
        %v3051 = vld [vmem:[#allocation2 + $0x2c] sm:$0xf]
        %v3052 = vld [vmem:[#allocation2 + $0x30] sm:$0xf]
        %v3053 = vld [vmem:[#allocation2 + $0x34] sm:$0xf]
        %v3054 = vld [vmem:[#allocation2 + $0x38] sm:$0xf]
        %v3055 = vld [vmem:[#allocation2 + $0x3c] sm:$0xf]
        %v3056 = vld [vmem:[#allocation2 + $0x40] sm:$0xf]
        %v3057 = vld [vmem:[#allocation2 + $0x44] sm:$0xf]
        %v3058 = vld [vmem:[#allocation2 + $0x48] sm:$0xf]
        %v3059 = vld [vmem:[#allocation2 + $0x4c] sm:$0xf]
        %v3060 = vld [vmem:[#allocation2 + $0x50] sm:$0xf]
        %v3061 = vld [vmem:[#allocation2 + $0x54] sm:$0xf]
        %v3062 = vld [vmem:[#allocation2 + $0x58] sm:$0xf]
        %v3063 = vld [vmem:[#allocation2 + $0x5c] sm:$0xf]
        %v3064 = vld [vmem:[#allocation2 + $0x60] sm:$0xf]
        %v3065 = vld [vmem:[#allocation2 + $0x64] sm:$0xf]
        %v3066 = vld [vmem:[#allocation2 + $0x68] sm:$0xf]
        %v3067 = vld [vmem:[#allocation2 + $0x6c] sm:$0xf]
        %v3068 = vld [vmem:[#allocation2 + $0x70] sm:$0xf]
        %v3069 = vld [vmem:[#allocation2 + $0x74] sm:$0xf]
        %v3070 = vld [vmem:[#allocation2 + $0x78] sm:$0xf]
        %v3071 = vld [vmem:[#allocation2 + $0x7c] sm:$0xf]
        %v3072 = vld [vmem:[#allocation2 + $0x80] sm:$0xf]
        %v3073 = vld [vmem:[#allocation2 + $0x84] sm:$0xf]
        %v3074 = vld [vmem:[#allocation2 + $0x88] sm:$0xf]
        %3075 = vst [vmem:[#allocation4 + $0x10] sm:$0xf] %v3043
        %3076 = vst [vmem:[#allocation4 + $0x34] sm:$0xf] %v3044
        %3077 = vst [vmem:[#allocation4 + $0x58] sm:$0xf] %v3045
        %3078 = vst [vmem:[#allocation4 + $0x7c] sm:$0xf] %v3046
        %3079 = vst [vmem:[#allocation4 + $0xa0] sm:$0xf] %v3047
        %3080 = vst [vmem:[#allocation4 + $0xc4] sm:$0xf] %v3048
        %3081 = vst [vmem:[#allocation4 + $0xe8] sm:$0xf] %v3049
        %3082 = vst [vmem:[#allocation4 + $0x10c] sm:$0xf] %v3050
        %3083 = vst [vmem:[#allocation4 + $0x130] sm:$0xf] %v3051
        %3084 = vst [vmem:[#allocation4 + $0x154] sm:$0xf] %v3052
        %3085 = vst [vmem:[#allocation4 + $0x178] sm:$0xf] %v3053
        %3086 = vst [vmem:[#allocation4 + $0x19c] sm:$0xf] %v3054
        %3087 = vst [vmem:[#allocation4 + $0x1c0] sm:$0xf] %v3055
        %3088 = vst [vmem:[#allocation4 + $0x1e4] sm:$0xf] %v3056
        %3089 = vst [vmem:[#allocation4 + $0x208] sm:$0xf] %v3057
        %3090 = vst [vmem:[#allocation4 + $0x22c] sm:$0xf] %v3058
        %3091 = vst [vmem:[#allocation4 + $0x250] sm:$0xf] %v3059
        %3092 = vst [vmem:[#allocation4 + $0x274] sm:$0xf] %v3060
        %3093 = vst [vmem:[#allocation4 + $0x298] sm:$0xf] %v3061
        %3094 = vst [vmem:[#allocation4 + $0x2bc] sm:$0xf] %v3062
        %3095 = vst [vmem:[#allocation4 + $0x2e0] sm:$0xf] %v3063
        %3096 = vst [vmem:[#allocation4 + $0x304] sm:$0xf] %v3064
        %3097 = vst [vmem:[#allocation4 + $0x328] sm:$0xf] %v3065
        %3098 = vst [vmem:[#allocation4 + $0x34c] sm:$0xf] %v3066
        %3099 = vst [vmem:[#allocation4 + $0x370] sm:$0xf] %v3067
        %3100 = vst [vmem:[#allocation4 + $0x394] sm:$0xf] %v3068
        %3101 = vst [vmem:[#allocation4 + $0x3b8] sm:$0xf] %v3069
        %3102 = vst [vmem:[#allocation4 + $0x3dc] sm:$0xf] %v3070
        %3103 = vst [vmem:[#allocation4 + $0x400] sm:$0xf] %v3071
        %3104 = vst [vmem:[#allocation4 + $0x424] sm:$0xf] %v3072
        %3105 = vst [vmem:[#allocation4 + $0x448] sm:$0xf] %v3073
        %3106 = vst [vmem:[#allocation4 + $0x46c] sm:$0xf] %v3074
        %v3107 = vld [vmem:[#allocation2 + $0xc] sm:$0xf]
        %v3108 = vld [vmem:[#allocation2 + $0x10] sm:$0xf]
        %v3109 = vld [vmem:[#allocation2 + $0x14] sm:$0xf]
        %v3110 = vld [vmem:[#allocation2 + $0x18] sm:$0xf]
        %v3111 = vld [vmem:[#allocation2 + $0x1c] sm:$0xf]
        %v3112 = vld [vmem:[#allocation2 + $0x20] sm:$0xf]
        %v3113 = vld [vmem:[#allocation2 + $0x24] sm:$0xf]
        %v3114 = vld [vmem:[#allocation2 + $0x28] sm:$0xf]
        %v3115 = vld [vmem:[#allocation2 + $0x2c] sm:$0xf]
        %v3116 = vld [vmem:[#allocation2 + $0x30] sm:$0xf]
        %v3117 = vld [vmem:[#allocation2 + $0x34] sm:$0xf]
        %v3118 = vld [vmem:[#allocation2 + $0x38] sm:$0xf]
        %v3119 = vld [vmem:[#allocation2 + $0x3c] sm:$0xf]
        %v3120 = vld [vmem:[#allocation2 + $0x40] sm:$0xf]
        %v3121 = vld [vmem:[#allocation2 + $0x44] sm:$0xf]
        %v3122 = vld [vmem:[#allocation2 + $0x48] sm:$0xf]
        %v3123 = vld [vmem:[#allocation2 + $0x4c] sm:$0xf]
        %v3124 = vld [vmem:[#allocation2 + $0x50] sm:$0xf]
        %v3125 = vld [vmem:[#allocation2 + $0x54] sm:$0xf]
        %v3126 = vld [vmem:[#allocation2 + $0x58] sm:$0xf]
        %v3127 = vld [vmem:[#allocation2 + $0x5c] sm:$0xf]
        %v3128 = vld [vmem:[#allocation2 + $0x60] sm:$0xf]
        %v3129 = vld [vmem:[#allocation2 + $0x64] sm:$0xf]
        %v3130 = vld [vmem:[#allocation2 + $0x68] sm:$0xf]
        %v3131 = vld [vmem:[#allocation2 + $0x6c] sm:$0xf]
        %v3132 = vld [vmem:[#allocation2 + $0x70] sm:$0xf]
        %v3133 = vld [vmem:[#allocation2 + $0x74] sm:$0xf]
        %v3134 = vld [vmem:[#allocation2 + $0x78] sm:$0xf]
        %v3135 = vld [vmem:[#allocation2 + $0x7c] sm:$0xf]
        %v3136 = vld [vmem:[#allocation2 + $0x80] sm:$0xf]
        %v3137 = vld [vmem:[#allocation2 + $0x84] sm:$0xf]
        %v3138 = vld [vmem:[#allocation2 + $0x88] sm:$0xf]
        %v3139 = vld [vmem:[#allocation2 + $0x8c] sm:$0x1]
        %v3140 = vsel %vm2167, %v3107, 0
        %v3141 = vsel %vm2168, %v3108, 0
        %v3142 = vsel %vm2169, %v3109, 0
        %v3143 = vsel %vm2170, %v3110, 0
        %v3144 = vsel %vm2171, %v3111, 0
        %v3145 = vsel %vm2172, %v3112, 0
        %v3146 = vsel %vm2173, %v3113, 0
        %v3147 = vsel %vm2174, %v3114, 0
        %v3148 = vsel %vm2175, %v3115, 0
        %v3149 = vsel %vm2176, %v3116, 0
        %v3150 = vsel %vm2177, %v3117, 0
        %v3151 = vsel %vm2178, %v3118, 0
        %v3152 = vsel %vm2179, %v3119, 0
        %v3153 = vsel %vm2180, %v3120, 0
        %v3154 = vsel %vm2181, %v3121, 0
        %v3155 = vsel %vm2182, %v3122, 0
        %v3156 = vsel %vm2183, %v3123, 0
        %v3157 = vsel %vm2184, %v3124, 0
        %v3158 = vsel %vm2185, %v3125, 0
        %v3159 = vsel %vm2186, %v3126, 0
        %v3160 = vsel %vm2187, %v3127, 0
        %v3161 = vsel %vm2188, %v3128, 0
        %v3162 = vsel %vm2189, %v3129, 0
        %v3163 = vsel %vm2190, %v3130, 0
        %v3164 = vsel %vm2191, %v3131, 0
        %v3165 = vsel %vm2192, %v3132, 0
        %v3166 = vsel %vm2193, %v3133, 0
        %v3167 = vsel %vm2194, %v3134, 0
        %v3168 = vsel %vm2195, %v3135, 0
        %v3169 = vsel %vm2196, %v3136, 0
        %v3170 = vsel %vm2197, %v3137, 0
        %v3171 = vsel %vm2198, %v3138, 0
        %v3172 = vsel %vm2199, %v3139, 0
        %v3174 = vshrl.u32 %v3140, 16
        %v3176 = vrot.slane %v3174, 4
        %v3177 = vshll.u32 %v3140, 16
        %v3179 = vrot.slane %v3177, 5
        %v3180 = vor.u32 %v3176, %v3179
        %v3181 = vrot.slane %v3180, 4
        %v3183 = vshll.u32 %v3141, 16
        %v3185 = vrot.slane %v3183, 5
        %v3186 = vsel %vm814, %v3181, %v3185
        %v3187 = vshrl.u32 %v3141, 16
        %v3189 = vrot.slane %v3187, 4
        %v3190 = vor.u32 %v3189, %v3185
        %v3191 = vrot.slane %v3190, 4
        %v3193 = vshll.u32 %v3142, 16
        %v3195 = vrot.slane %v3193, 5
        %v3196 = vsel %vm814, %v3191, %v3195
        %v3197 = vshrl.u32 %v3142, 16
        %v3199 = vrot.slane %v3197, 4
        %v3200 = vor.u32 %v3199, %v3195
        %v3201 = vrot.slane %v3200, 4
        %v3203 = vshll.u32 %v3143, 16
        %v3205 = vrot.slane %v3203, 5
        %v3206 = vsel %vm814, %v3201, %v3205
        %v3207 = vshrl.u32 %v3143, 16
        %v3209 = vrot.slane %v3207, 4
        %v3210 = vor.u32 %v3209, %v3205
        %v3211 = vrot.slane %v3210, 4
        %v3213 = vshll.u32 %v3144, 16
        %v3215 = vrot.slane %v3213, 5
        %v3216 = vsel %vm814, %v3211, %v3215
        %v3217 = vshrl.u32 %v3144, 16
        %v3219 = vrot.slane %v3217, 4
        %v3220 = vor.u32 %v3219, %v3215
        %v3221 = vrot.slane %v3220, 4
        %v3223 = vshll.u32 %v3145, 16
        %v3225 = vrot.slane %v3223, 5
        %v3226 = vsel %vm814, %v3221, %v3225
        %v3227 = vshrl.u32 %v3145, 16
        %v3229 = vrot.slane %v3227, 4
        %v3230 = vor.u32 %v3229, %v3225
        %v3231 = vrot.slane %v3230, 4
        %v3233 = vshll.u32 %v3146, 16
        %v3235 = vrot.slane %v3233, 5
        %v3236 = vsel %vm814, %v3231, %v3235
        %v3237 = vshrl.u32 %v3146, 16
        %v3239 = vrot.slane %v3237, 4
        %v3240 = vor.u32 %v3239, %v3235
        %v3241 = vrot.slane %v3240, 4
        %v3243 = vshll.u32 %v3147, 16
        %v3245 = vrot.slane %v3243, 5
        %v3246 = vsel %vm814, %v3241, %v3245
        %v3247 = vshrl.u32 %v3147, 16
        %v3249 = vrot.slane %v3247, 4
        %v3250 = vor.u32 %v3249, %v3245
        %v3251 = vrot.slane %v3250, 4
        %v3253 = vshll.u32 %v3148, 16
        %v3255 = vrot.slane %v3253, 5
        %v3256 = vsel %vm814, %v3251, %v3255
        %v3257 = vshrl.u32 %v3148, 16
        %v3259 = vrot.slane %v3257, 4
        %v3260 = vor.u32 %v3259, %v3255
        %v3261 = vrot.slane %v3260, 4
        %v3263 = vshll.u32 %v3149, 16
        %v3265 = vrot.slane %v3263, 5
        %v3266 = vsel %vm814, %v3261, %v3265
        %v3267 = vshrl.u32 %v3149, 16
        %v3269 = vrot.slane %v3267, 4
        %v3270 = vor.u32 %v3269, %v3265
        %v3271 = vrot.slane %v3270, 4
        %v3273 = vshll.u32 %v3150, 16
        %v3275 = vrot.slane %v3273, 5
        %v3276 = vsel %vm814, %v3271, %v3275
        %v3277 = vshrl.u32 %v3150, 16
        %v3279 = vrot.slane %v3277, 4
        %v3280 = vor.u32 %v3279, %v3275
        %v3281 = vrot.slane %v3280, 4
        %v3283 = vshll.u32 %v3151, 16
        %v3285 = vrot.slane %v3283, 5
        %v3286 = vsel %vm814, %v3281, %v3285
        %v3287 = vshrl.u32 %v3151, 16
        %v3289 = vrot.slane %v3287, 4
        %v3290 = vor.u32 %v3289, %v3285
        %v3291 = vrot.slane %v3290, 4
        %v3293 = vshll.u32 %v3152, 16
        %v3295 = vrot.slane %v3293, 5
        %v3296 = vsel %vm814, %v3291, %v3295
        %v3297 = vshrl.u32 %v3152, 16
        %v3299 = vrot.slane %v3297, 4
        %v3300 = vor.u32 %v3299, %v3295
        %v3301 = vrot.slane %v3300, 4
        %v3303 = vshll.u32 %v3153, 16
        %v3305 = vrot.slane %v3303, 5
        %v3306 = vsel %vm814, %v3301, %v3305
        %v3307 = vshrl.u32 %v3153, 16
        %v3309 = vrot.slane %v3307, 4
        %v3310 = vor.u32 %v3309, %v3305
        %v3311 = vrot.slane %v3310, 4
        %v3313 = vshll.u32 %v3154, 16
        %v3315 = vrot.slane %v3313, 5
        %v3316 = vsel %vm814, %v3311, %v3315
        %v3317 = vshrl.u32 %v3154, 16
        %v3319 = vrot.slane %v3317, 4
        %v3320 = vor.u32 %v3319, %v3315
        %v3321 = vrot.slane %v3320, 4
        %v3323 = vshll.u32 %v3155, 16
        %v3325 = vrot.slane %v3323, 5
        %v3326 = vsel %vm814, %v3321, %v3325
        %v3327 = vshrl.u32 %v3155, 16
        %v3329 = vrot.slane %v3327, 4
        %v3330 = vor.u32 %v3329, %v3325
        %v3331 = vrot.slane %v3330, 4
        %v3333 = vshll.u32 %v3156, 16
        %v3335 = vrot.slane %v3333, 5
        %v3336 = vsel %vm814, %v3331, %v3335
        %v3337 = vshrl.u32 %v3156, 16
        %v3339 = vrot.slane %v3337, 4
        %v3340 = vor.u32 %v3339, %v3335
        %v3341 = vrot.slane %v3340, 4
        %v3343 = vshll.u32 %v3157, 16
        %v3345 = vrot.slane %v3343, 5
        %v3346 = vsel %vm814, %v3341, %v3345
        %v3347 = vshrl.u32 %v3157, 16
        %v3349 = vrot.slane %v3347, 4
        %v3350 = vor.u32 %v3349, %v3345
        %v3351 = vrot.slane %v3350, 4
        %v3353 = vshll.u32 %v3158, 16
        %v3355 = vrot.slane %v3353, 5
        %v3356 = vsel %vm814, %v3351, %v3355
        %v3357 = vshrl.u32 %v3158, 16
        %v3359 = vrot.slane %v3357, 4
        %v3360 = vor.u32 %v3359, %v3355
        %v3361 = vrot.slane %v3360, 4
        %v3363 = vshll.u32 %v3159, 16
        %v3365 = vrot.slane %v3363, 5
        %v3366 = vsel %vm814, %v3361, %v3365
        %v3367 = vshrl.u32 %v3159, 16
        %v3369 = vrot.slane %v3367, 4
        %v3370 = vor.u32 %v3369, %v3365
        %v3371 = vrot.slane %v3370, 4
        %v3373 = vshll.u32 %v3160, 16
        %v3375 = vrot.slane %v3373, 5
        %v3376 = vsel %vm814, %v3371, %v3375
        %v3377 = vshrl.u32 %v3160, 16
        %v3379 = vrot.slane %v3377, 4
        %v3380 = vor.u32 %v3379, %v3375
        %v3381 = vrot.slane %v3380, 4
        %v3383 = vshll.u32 %v3161, 16
        %v3385 = vrot.slane %v3383, 5
        %v3386 = vsel %vm814, %v3381, %v3385
        %v3387 = vshrl.u32 %v3161, 16
        %v3389 = vrot.slane %v3387, 4
        %v3390 = vor.u32 %v3389, %v3385
        %v3391 = vrot.slane %v3390, 4
        %v3393 = vshll.u32 %v3162, 16
        %v3395 = vrot.slane %v3393, 5
        %v3396 = vsel %vm814, %v3391, %v3395
        %v3397 = vshrl.u32 %v3162, 16
        %v3399 = vrot.slane %v3397, 4
        %v3400 = vor.u32 %v3399, %v3395
        %v3401 = vrot.slane %v3400, 4
        %v3403 = vshll.u32 %v3163, 16
        %v3405 = vrot.slane %v3403, 5
        %v3406 = vsel %vm814, %v3401, %v3405
        %v3407 = vshrl.u32 %v3163, 16
        %v3409 = vrot.slane %v3407, 4
        %v3410 = vor.u32 %v3409, %v3405
        %v3411 = vrot.slane %v3410, 4
        %v3413 = vshll.u32 %v3164, 16
        %v3415 = vrot.slane %v3413, 5
        %v3416 = vsel %vm814, %v3411, %v3415
        %v3417 = vshrl.u32 %v3164, 16
        %v3419 = vrot.slane %v3417, 4
        %v3420 = vor.u32 %v3419, %v3415
        %v3421 = vrot.slane %v3420, 4
        %v3423 = vshll.u32 %v3165, 16
        %v3425 = vrot.slane %v3423, 5
        %v3426 = vsel %vm814, %v3421, %v3425
        %v3427 = vshrl.u32 %v3165, 16
        %v3429 = vrot.slane %v3427, 4
        %v3430 = vor.u32 %v3429, %v3425
        %v3431 = vrot.slane %v3430, 4
        %v3433 = vshll.u32 %v3166, 16
        %v3435 = vrot.slane %v3433, 5
        %v3436 = vsel %vm814, %v3431, %v3435
        %v3437 = vshrl.u32 %v3166, 16
        %v3439 = vrot.slane %v3437, 4
        %v3440 = vor.u32 %v3439, %v3435
        %v3441 = vrot.slane %v3440, 4
        %v3443 = vshll.u32 %v3167, 16
        %v3445 = vrot.slane %v3443, 5
        %v3446 = vsel %vm814, %v3441, %v3445
        %v3447 = vshrl.u32 %v3167, 16
        %v3449 = vrot.slane %v3447, 4
        %v3450 = vor.u32 %v3449, %v3445
        %v3451 = vrot.slane %v3450, 4
        %v3453 = vshll.u32 %v3168, 16
        %v3455 = vrot.slane %v3453, 5
        %v3456 = vsel %vm814, %v3451, %v3455
        %v3457 = vshrl.u32 %v3168, 16
        %v3459 = vrot.slane %v3457, 4
        %v3460 = vor.u32 %v3459, %v3455
        %v3461 = vrot.slane %v3460, 4
        %v3463 = vshll.u32 %v3169, 16
        %v3465 = vrot.slane %v3463, 5
        %v3466 = vsel %vm814, %v3461, %v3465
        %v3467 = vshrl.u32 %v3169, 16
        %v3469 = vrot.slane %v3467, 4
        %v3470 = vor.u32 %v3469, %v3465
        %v3471 = vrot.slane %v3470, 4
        %v3473 = vshll.u32 %v3170, 16
        %v3475 = vrot.slane %v3473, 5
        %v3476 = vsel %vm814, %v3471, %v3475
        %v3477 = vshrl.u32 %v3170, 16
        %v3479 = vrot.slane %v3477, 4
        %v3480 = vor.u32 %v3479, %v3475
        %v3481 = vrot.slane %v3480, 4
        %v3483 = vshll.u32 %v3171, 16
        %v3485 = vrot.slane %v3483, 5
        %v3486 = vsel %vm814, %v3481, %v3485
        %v3487 = vshrl.u32 %v3171, 16
        %v3489 = vrot.slane %v3487, 4
        %v3490 = vor.u32 %v3489, %v3485
        %v3491 = vrot.slane %v3490, 4
        %v3493 = vshll.u32 %v3172, 16
        %v3495 = vrot.slane %v3493, 5
        %v3496 = vsel %vm814, %v3491, %v3495
        %3529 = vst [vmem:[#allocation4 + $0x14] sm:$0xf] %v3186
        %3530 = vst [vmem:[#allocation4 + $0x38] sm:$0xf] %v3196
        %3531 = vst [vmem:[#allocation4 + $0x5c] sm:$0xf] %v3206
        %3532 = vst [vmem:[#allocation4 + $0x80] sm:$0xf] %v3216
        %3533 = vst [vmem:[#allocation4 + $0xa4] sm:$0xf] %v3226
        %3534 = vst [vmem:[#allocation4 + $0xc8] sm:$0xf] %v3236
        %3535 = vst [vmem:[#allocation4 + $0xec] sm:$0xf] %v3246
        %3536 = vst [vmem:[#allocation4 + $0x110] sm:$0xf] %v3256
        %3537 = vst [vmem:[#allocation4 + $0x134] sm:$0xf] %v3266
        %3538 = vst [vmem:[#allocation4 + $0x158] sm:$0xf] %v3276
        %3539 = vst [vmem:[#allocation4 + $0x17c] sm:$0xf] %v3286
        %3540 = vst [vmem:[#allocation4 + $0x1a0] sm:$0xf] %v3296
        %3541 = vst [vmem:[#allocation4 + $0x1c4] sm:$0xf] %v3306
        %3542 = vst [vmem:[#allocation4 + $0x1e8] sm:$0xf] %v3316
        %3543 = vst [vmem:[#allocation4 + $0x20c] sm:$0xf] %v3326
        %3544 = vst [vmem:[#allocation4 + $0x230] sm:$0xf] %v3336
        %3545 = vst [vmem:[#allocation4 + $0x254] sm:$0xf] %v3346
        %3546 = vst [vmem:[#allocation4 + $0x278] sm:$0xf] %v3356
        %3547 = vst [vmem:[#allocation4 + $0x29c] sm:$0xf] %v3366
        %3548 = vst [vmem:[#allocation4 + $0x2c0] sm:$0xf] %v3376
        %3549 = vst [vmem:[#allocation4 + $0x2e4] sm:$0xf] %v3386
        %3550 = vst [vmem:[#allocation4 + $0x308] sm:$0xf] %v3396
        %3551 = vst [vmem:[#allocation4 + $0x32c] sm:$0xf] %v3406
        %3552 = vst [vmem:[#allocation4 + $0x350] sm:$0xf] %v3416
        %3553 = vst [vmem:[#allocation4 + $0x374] sm:$0xf] %v3426
        %3554 = vst [vmem:[#allocation4 + $0x398] sm:$0xf] %v3436
        %3555 = vst [vmem:[#allocation4 + $0x3bc] sm:$0xf] %v3446
        %3556 = vst [vmem:[#allocation4 + $0x3e0] sm:$0xf] %v3456
        %3557 = vst [vmem:[#allocation4 + $0x404] sm:$0xf] %v3466
        %3558 = vst [vmem:[#allocation4 + $0x428] sm:$0xf] %v3476
        %3559 = vst [vmem:[#allocation4 + $0x44c] sm:$0xf] %v3486
        %3560 = vst [vmem:[#allocation4 + $0x470] sm:$0xf] %v3496
        %v3561 = vld [vmem:[#allocation2 + $0x10] sm:$0x8]
        %v3562 = vld [vmem:[#allocation2 + $0x14] sm:$0xf]
        %v3563 = vld [vmem:[#allocation2 + $0x18] sm:$0xf]
        %v3564 = vld [vmem:[#allocation2 + $0x1c] sm:$0xf]
        %v3565 = vld [vmem:[#allocation2 + $0x20] sm:$0xf]
        %v3566 = vld [vmem:[#allocation2 + $0x24] sm:$0xf]
        %v3567 = vld [vmem:[#allocation2 + $0x28] sm:$0xf]
        %v3568 = vld [vmem:[#allocation2 + $0x2c] sm:$0xf]
        %v3569 = vld [vmem:[#allocation2 + $0x30] sm:$0xf]
        %v3570 = vld [vmem:[#allocation2 + $0x34] sm:$0xf]
        %v3571 = vld [vmem:[#allocation2 + $0x38] sm:$0xf]
        %v3572 = vld [vmem:[#allocation2 + $0x3c] sm:$0xf]
        %v3573 = vld [vmem:[#allocation2 + $0x40] sm:$0xf]
        %v3574 = vld [vmem:[#allocation2 + $0x44] sm:$0xf]
        %v3575 = vld [vmem:[#allocation2 + $0x48] sm:$0xf]
        %v3576 = vld [vmem:[#allocation2 + $0x4c] sm:$0xf]
        %v3577 = vld [vmem:[#allocation2 + $0x50] sm:$0xf]
        %v3578 = vld [vmem:[#allocation2 + $0x54] sm:$0xf]
        %v3579 = vld [vmem:[#allocation2 + $0x58] sm:$0xf]
        %v3580 = vld [vmem:[#allocation2 + $0x5c] sm:$0xf]
        %v3581 = vld [vmem:[#allocation2 + $0x60] sm:$0xf]
        %v3582 = vld [vmem:[#allocation2 + $0x64] sm:$0xf]
        %v3583 = vld [vmem:[#allocation2 + $0x68] sm:$0xf]
        %v3584 = vld [vmem:[#allocation2 + $0x6c] sm:$0xf]
        %v3585 = vld [vmem:[#allocation2 + $0x70] sm:$0xf]
        %v3586 = vld [vmem:[#allocation2 + $0x74] sm:$0xf]
        %v3587 = vld [vmem:[#allocation2 + $0x78] sm:$0xf]
        %v3588 = vld [vmem:[#allocation2 + $0x7c] sm:$0xf]
        %v3589 = vld [vmem:[#allocation2 + $0x80] sm:$0xf]
        %v3590 = vld [vmem:[#allocation2 + $0x84] sm:$0xf]
        %v3591 = vld [vmem:[#allocation2 + $0x88] sm:$0xf]
        %v3592 = vld [vmem:[#allocation2 + $0x8c] sm:$0xf]
        %v3593 = vld [vmem:[#allocation2 + $0x90] sm:$0xf]
        %v3594 = vsel %vm1134, %v3561, 0
        %v3595 = vsel %vm1135, %v3562, 0
        %v3596 = vsel %vm1136, %v3563, 0
        %v3597 = vsel %vm1137, %v3564, 0
        %v3598 = vsel %vm1138, %v3565, 0
        %v3599 = vsel %vm1139, %v3566, 0
        %v3600 = vsel %vm1140, %v3567, 0
        %v3601 = vsel %vm1141, %v3568, 0
        %v3602 = vsel %vm1142, %v3569, 0
        %v3603 = vsel %vm1143, %v3570, 0
        %v3604 = vsel %vm1144, %v3571, 0
        %v3605 = vsel %vm1145, %v3572, 0
        %v3606 = vsel %vm1146, %v3573, 0
        %v3607 = vsel %vm1147, %v3574, 0
        %v3608 = vsel %vm1148, %v3575, 0
        %v3609 = vsel %vm1149, %v3576, 0
        %v3610 = vsel %vm1150, %v3577, 0
        %v3611 = vsel %vm1151, %v3578, 0
        %v3612 = vsel %vm1152, %v3579, 0
        %v3613 = vsel %vm1153, %v3580, 0
        %v3614 = vsel %vm1154, %v3581, 0
        %v3615 = vsel %vm1155, %v3582, 0
        %v3616 = vsel %vm1156, %v3583, 0
        %v3617 = vsel %vm1157, %v3584, 0
        %v3618 = vsel %vm1158, %v3585, 0
        %v3619 = vsel %vm1159, %v3586, 0
        %v3620 = vsel %vm1160, %v3587, 0
        %v3621 = vsel %vm1161, %v3588, 0
        %v3622 = vsel %vm1162, %v3589, 0
        %v3623 = vsel %vm1163, %v3590, 0
        %v3624 = vsel %vm1164, %v3591, 0
        %v3625 = vsel %vm1165, %v3592, 0
        %v3626 = vsel %vm1166, %v3593, 0
        %v3628 = vshrl.u32 %v3594, 16
        %v3630 = vrot.slane %v3628, 7
        %v3631 = vrot.slane %v3630, 4
        %v3633 = vshrl.u32 %v3595, 16
        %v3635 = vrot.slane %v3633, 7
        %v3636 = vshll.u32 %v3595, 16
        %v3638 = vor.u32 %v3635, %v3636
        %v3639 = vsel %vm1202, %v3631, %v3638
        %v3640 = vrot.slane %v3635, 4
        %v3642 = vshrl.u32 %v3596, 16
        %v3644 = vrot.slane %v3642, 7
        %v3645 = vshll.u32 %v3596, 16
        %v3647 = vor.u32 %v3644, %v3645
        %v3648 = vsel %vm1202, %v3640, %v3647
        %v3649 = vrot.slane %v3644, 4
        %v3651 = vshrl.u32 %v3597, 16
        %v3653 = vrot.slane %v3651, 7
        %v3654 = vshll.u32 %v3597, 16
        %v3656 = vor.u32 %v3653, %v3654
        %v3657 = vsel %vm1202, %v3649, %v3656
        %v3658 = vrot.slane %v3653, 4
        %v3660 = vshrl.u32 %v3598, 16
        %v3662 = vrot.slane %v3660, 7
        %v3663 = vshll.u32 %v3598, 16
        %v3665 = vor.u32 %v3662, %v3663
        %v3666 = vsel %vm1202, %v3658, %v3665
        %v3667 = vrot.slane %v3662, 4
        %v3669 = vshrl.u32 %v3599, 16
        %v3671 = vrot.slane %v3669, 7
        %v3672 = vshll.u32 %v3599, 16
        %v3674 = vor.u32 %v3671, %v3672
        %v3675 = vsel %vm1202, %v3667, %v3674
        %v3676 = vrot.slane %v3671, 4
        %v3678 = vshrl.u32 %v3600, 16
        %v3680 = vrot.slane %v3678, 7
        %v3681 = vshll.u32 %v3600, 16
        %v3683 = vor.u32 %v3680, %v3681
        %v3684 = vsel %vm1202, %v3676, %v3683
        %v3685 = vrot.slane %v3680, 4
        %v3687 = vshrl.u32 %v3601, 16
        %v3689 = vrot.slane %v3687, 7
        %v3690 = vshll.u32 %v3601, 16
        %v3692 = vor.u32 %v3689, %v3690
        %v3693 = vsel %vm1202, %v3685, %v3692
        %v3694 = vrot.slane %v3689, 4
        %v3696 = vshrl.u32 %v3602, 16
        %v3698 = vrot.slane %v3696, 7
        %v3699 = vshll.u32 %v3602, 16
        %v3701 = vor.u32 %v3698, %v3699
        %v3702 = vsel %vm1202, %v3694, %v3701
        %v3703 = vrot.slane %v3698, 4
        %v3705 = vshrl.u32 %v3603, 16
        %v3707 = vrot.slane %v3705, 7
        %v3708 = vshll.u32 %v3603, 16
        %v3710 = vor.u32 %v3707, %v3708
        %v3711 = vsel %vm1202, %v3703, %v3710
        %v3712 = vrot.slane %v3707, 4
        %v3714 = vshrl.u32 %v3604, 16
        %v3716 = vrot.slane %v3714, 7
        %v3717 = vshll.u32 %v3604, 16
        %v3719 = vor.u32 %v3716, %v3717
        %v3720 = vsel %vm1202, %v3712, %v3719
        %v3721 = vrot.slane %v3716, 4
        %v3723 = vshrl.u32 %v3605, 16
        %v3725 = vrot.slane %v3723, 7
        %v3726 = vshll.u32 %v3605, 16
        %v3728 = vor.u32 %v3725, %v3726
        %v3729 = vsel %vm1202, %v3721, %v3728
        %v3730 = vrot.slane %v3725, 4
        %v3732 = vshrl.u32 %v3606, 16
        %v3734 = vrot.slane %v3732, 7
        %v3735 = vshll.u32 %v3606, 16
        %v3737 = vor.u32 %v3734, %v3735
        %v3738 = vsel %vm1202, %v3730, %v3737
        %v3739 = vrot.slane %v3734, 4
        %v3741 = vshrl.u32 %v3607, 16
        %v3743 = vrot.slane %v3741, 7
        %v3744 = vshll.u32 %v3607, 16
        %v3746 = vor.u32 %v3743, %v3744
        %v3747 = vsel %vm1202, %v3739, %v3746
        %v3748 = vrot.slane %v3743, 4
        %v3750 = vshrl.u32 %v3608, 16
        %v3752 = vrot.slane %v3750, 7
        %v3753 = vshll.u32 %v3608, 16
        %v3755 = vor.u32 %v3752, %v3753
        %v3756 = vsel %vm1202, %v3748, %v3755
        %v3757 = vrot.slane %v3752, 4
        %v3759 = vshrl.u32 %v3609, 16
        %v3761 = vrot.slane %v3759, 7
        %v3762 = vshll.u32 %v3609, 16
        %v3764 = vor.u32 %v3761, %v3762
        %v3765 = vsel %vm1202, %v3757, %v3764
        %v3766 = vrot.slane %v3761, 4
        %v3768 = vshrl.u32 %v3610, 16
        %v3770 = vrot.slane %v3768, 7
        %v3771 = vshll.u32 %v3610, 16
        %v3773 = vor.u32 %v3770, %v3771
        %v3774 = vsel %vm1202, %v3766, %v3773
        %v3775 = vrot.slane %v3770, 4
        %v3777 = vshrl.u32 %v3611, 16
        %v3779 = vrot.slane %v3777, 7
        %v3780 = vshll.u32 %v3611, 16
        %v3782 = vor.u32 %v3779, %v3780
        %v3783 = vsel %vm1202, %v3775, %v3782
        %v3784 = vrot.slane %v3779, 4
        %v3786 = vshrl.u32 %v3612, 16
        %v3788 = vrot.slane %v3786, 7
        %v3789 = vshll.u32 %v3612, 16
        %v3791 = vor.u32 %v3788, %v3789
        %v3792 = vsel %vm1202, %v3784, %v3791
        %v3793 = vrot.slane %v3788, 4
        %v3795 = vshrl.u32 %v3613, 16
        %v3797 = vrot.slane %v3795, 7
        %v3798 = vshll.u32 %v3613, 16
        %v3800 = vor.u32 %v3797, %v3798
        %v3801 = vsel %vm1202, %v3793, %v3800
        %v3802 = vrot.slane %v3797, 4
        %v3804 = vshrl.u32 %v3614, 16
        %v3806 = vrot.slane %v3804, 7
        %v3807 = vshll.u32 %v3614, 16
        %v3809 = vor.u32 %v3806, %v3807
        %v3810 = vsel %vm1202, %v3802, %v3809
        %v3811 = vrot.slane %v3806, 4
        %v3813 = vshrl.u32 %v3615, 16
        %v3815 = vrot.slane %v3813, 7
        %v3816 = vshll.u32 %v3615, 16
        %v3818 = vor.u32 %v3815, %v3816
        %v3819 = vsel %vm1202, %v3811, %v3818
        %v3820 = vrot.slane %v3815, 4
        %v3822 = vshrl.u32 %v3616, 16
        %v3824 = vrot.slane %v3822, 7
        %v3825 = vshll.u32 %v3616, 16
        %v3827 = vor.u32 %v3824, %v3825
        %v3828 = vsel %vm1202, %v3820, %v3827
        %v3829 = vrot.slane %v3824, 4
        %v3831 = vshrl.u32 %v3617, 16
        %v3833 = vrot.slane %v3831, 7
        %v3834 = vshll.u32 %v3617, 16
        %v3836 = vor.u32 %v3833, %v3834
        %v3837 = vsel %vm1202, %v3829, %v3836
        %v3838 = vrot.slane %v3833, 4
        %v3840 = vshrl.u32 %v3618, 16
        %v3842 = vrot.slane %v3840, 7
        %v3843 = vshll.u32 %v3618, 16
        %v3845 = vor.u32 %v3842, %v3843
        %v3846 = vsel %vm1202, %v3838, %v3845
        %v3847 = vrot.slane %v3842, 4
        %v3849 = vshrl.u32 %v3619, 16
        %v3851 = vrot.slane %v3849, 7
        %v3852 = vshll.u32 %v3619, 16
        %v3854 = vor.u32 %v3851, %v3852
        %v3855 = vsel %vm1202, %v3847, %v3854
        %v3856 = vrot.slane %v3851, 4
        %v3858 = vshrl.u32 %v3620, 16
        %v3860 = vrot.slane %v3858, 7
        %v3861 = vshll.u32 %v3620, 16
        %v3863 = vor.u32 %v3860, %v3861
        %v3864 = vsel %vm1202, %v3856, %v3863
        %v3865 = vrot.slane %v3860, 4
        %v3867 = vshrl.u32 %v3621, 16
        %v3869 = vrot.slane %v3867, 7
        %v3870 = vshll.u32 %v3621, 16
        %v3872 = vor.u32 %v3869, %v3870
        %v3873 = vsel %vm1202, %v3865, %v3872
        %v3874 = vrot.slane %v3869, 4
        %v3876 = vshrl.u32 %v3622, 16
        %v3878 = vrot.slane %v3876, 7
        %v3879 = vshll.u32 %v3622, 16
        %v3881 = vor.u32 %v3878, %v3879
        %v3882 = vsel %vm1202, %v3874, %v3881
        %v3883 = vrot.slane %v3878, 4
        %v3885 = vshrl.u32 %v3623, 16
        %v3887 = vrot.slane %v3885, 7
        %v3888 = vshll.u32 %v3623, 16
        %v3890 = vor.u32 %v3887, %v3888
        %v3891 = vsel %vm1202, %v3883, %v3890
        %v3892 = vrot.slane %v3887, 4
        %v3894 = vshrl.u32 %v3624, 16
        %v3896 = vrot.slane %v3894, 7
        %v3897 = vshll.u32 %v3624, 16
        %v3899 = vor.u32 %v3896, %v3897
        %v3900 = vsel %vm1202, %v3892, %v3899
        %v3901 = vrot.slane %v3896, 4
        %v3903 = vshrl.u32 %v3625, 16
        %v3905 = vrot.slane %v3903, 7
        %v3906 = vshll.u32 %v3625, 16
        %v3908 = vor.u32 %v3905, %v3906
        %v3909 = vsel %vm1202, %v3901, %v3908
        %v3910 = vrot.slane %v3905, 4
        %v3912 = vshrl.u32 %v3626, 16
        %v3914 = vrot.slane %v3912, 7
        %v3915 = vshll.u32 %v3626, 16
        %v3917 = vor.u32 %v3914, %v3915
        %v3918 = vsel %vm1202, %v3910, %v3917
        %3951 = vst [vmem:[#allocation4 + $0x18] sm:$0xf] %v3639
        %3952 = vst [vmem:[#allocation4 + $0x3c] sm:$0xf] %v3648
        %3953 = vst [vmem:[#allocation4 + $0x60] sm:$0xf] %v3657
        %3954 = vst [vmem:[#allocation4 + $0x84] sm:$0xf] %v3666
        %3955 = vst [vmem:[#allocation4 + $0xa8] sm:$0xf] %v3675
        %3956 = vst [vmem:[#allocation4 + $0xcc] sm:$0xf] %v3684
        %3957 = vst [vmem:[#allocation4 + $0xf0] sm:$0xf] %v3693
        %3958 = vst [vmem:[#allocation4 + $0x114] sm:$0xf] %v3702
        %3959 = vst [vmem:[#allocation4 + $0x138] sm:$0xf] %v3711
        %3960 = vst [vmem:[#allocation4 + $0x15c] sm:$0xf] %v3720
        %3961 = vst [vmem:[#allocation4 + $0x180] sm:$0xf] %v3729
        %3962 = vst [vmem:[#allocation4 + $0x1a4] sm:$0xf] %v3738
        %3963 = vst [vmem:[#allocation4 + $0x1c8] sm:$0xf] %v3747
        %3964 = vst [vmem:[#allocation4 + $0x1ec] sm:$0xf] %v3756
        %3965 = vst [vmem:[#allocation4 + $0x210] sm:$0xf] %v3765
        %3966 = vst [vmem:[#allocation4 + $0x234] sm:$0xf] %v3774
        %3967 = vst [vmem:[#allocation4 + $0x258] sm:$0xf] %v3783
        %3968 = vst [vmem:[#allocation4 + $0x27c] sm:$0xf] %v3792
        %3969 = vst [vmem:[#allocation4 + $0x2a0] sm:$0xf] %v3801
        %3970 = vst [vmem:[#allocation4 + $0x2c4] sm:$0xf] %v3810
        %3971 = vst [vmem:[#allocation4 + $0x2e8] sm:$0xf] %v3819
        %3972 = vst [vmem:[#allocation4 + $0x30c] sm:$0xf] %v3828
        %3973 = vst [vmem:[#allocation4 + $0x330] sm:$0xf] %v3837
        %3974 = vst [vmem:[#allocation4 + $0x354] sm:$0xf] %v3846
        %3975 = vst [vmem:[#allocation4 + $0x378] sm:$0xf] %v3855
        %3976 = vst [vmem:[#allocation4 + $0x39c] sm:$0xf] %v3864
        %3977 = vst [vmem:[#allocation4 + $0x3c0] sm:$0xf] %v3873
        %3978 = vst [vmem:[#allocation4 + $0x3e4] sm:$0xf] %v3882
        %3979 = vst [vmem:[#allocation4 + $0x408] sm:$0xf] %v3891
        %3980 = vst [vmem:[#allocation4 + $0x42c] sm:$0xf] %v3900
        %3981 = vst [vmem:[#allocation4 + $0x450] sm:$0xf] %v3909
        %3982 = vst [vmem:[#allocation4 + $0x474] sm:$0xf] %v3918
        %v3983 = vld [vmem:[#allocation2 + $0x14] sm:$0xf]
        %v3984 = vld [vmem:[#allocation2 + $0x18] sm:$0xf]
        %v3985 = vld [vmem:[#allocation2 + $0x1c] sm:$0xf]
        %v3986 = vld [vmem:[#allocation2 + $0x20] sm:$0xf]
        %v3987 = vld [vmem:[#allocation2 + $0x24] sm:$0xf]
        %v3988 = vld [vmem:[#allocation2 + $0x28] sm:$0xf]
        %v3989 = vld [vmem:[#allocation2 + $0x2c] sm:$0xf]
        %v3990 = vld [vmem:[#allocation2 + $0x30] sm:$0xf]
        %v3991 = vld [vmem:[#allocation2 + $0x34] sm:$0xf]
        %v3992 = vld [vmem:[#allocation2 + $0x38] sm:$0xf]
        %v3993 = vld [vmem:[#allocation2 + $0x3c] sm:$0xf]
        %v3994 = vld [vmem:[#allocation2 + $0x40] sm:$0xf]
        %v3995 = vld [vmem:[#allocation2 + $0x44] sm:$0xf]
        %v3996 = vld [vmem:[#allocation2 + $0x48] sm:$0xf]
        %v3997 = vld [vmem:[#allocation2 + $0x4c] sm:$0xf]
        %v3998 = vld [vmem:[#allocation2 + $0x50] sm:$0xf]
        %v3999 = vld [vmem:[#allocation2 + $0x54] sm:$0xf]
        %v4000 = vld [vmem:[#allocation2 + $0x58] sm:$0xf]
        %v4001 = vld [vmem:[#allocation2 + $0x5c] sm:$0xf]
        %v4002 = vld [vmem:[#allocation2 + $0x60] sm:$0xf]
        %v4003 = vld [vmem:[#allocation2 + $0x64] sm:$0xf]
        %v4004 = vld [vmem:[#allocation2 + $0x68] sm:$0xf]
        %v4005 = vld [vmem:[#allocation2 + $0x6c] sm:$0xf]
        %v4006 = vld [vmem:[#allocation2 + $0x70] sm:$0xf]
        %v4007 = vld [vmem:[#allocation2 + $0x74] sm:$0xf]
        %v4008 = vld [vmem:[#allocation2 + $0x78] sm:$0xf]
        %v4009 = vld [vmem:[#allocation2 + $0x7c] sm:$0xf]
        %v4010 = vld [vmem:[#allocation2 + $0x80] sm:$0xf]
        %v4011 = vld [vmem:[#allocation2 + $0x84] sm:$0xf]
        %v4012 = vld [vmem:[#allocation2 + $0x88] sm:$0xf]
        %v4013 = vld [vmem:[#allocation2 + $0x8c] sm:$0xf]
        %v4014 = vld [vmem:[#allocation2 + $0x90] sm:$0xf]
        %4015 = vst [vmem:[#allocation4 + $0x1c] sm:$0xf] %v3983
        %4016 = vst [vmem:[#allocation4 + $0x40] sm:$0xf] %v3984
        %4017 = vst [vmem:[#allocation4 + $0x64] sm:$0xf] %v3985
        %4018 = vst [vmem:[#allocation4 + $0x88] sm:$0xf] %v3986
        %4019 = vst [vmem:[#allocation4 + $0xac] sm:$0xf] %v3987
        %4020 = vst [vmem:[#allocation4 + $0xd0] sm:$0xf] %v3988
        %4021 = vst [vmem:[#allocation4 + $0xf4] sm:$0xf] %v3989
        %4022 = vst [vmem:[#allocation4 + $0x118] sm:$0xf] %v3990
        %4023 = vst [vmem:[#allocation4 + $0x13c] sm:$0xf] %v3991
        %4024 = vst [vmem:[#allocation4 + $0x160] sm:$0xf] %v3992
        %4025 = vst [vmem:[#allocation4 + $0x184] sm:$0xf] %v3993
        %4026 = vst [vmem:[#allocation4 + $0x1a8] sm:$0xf] %v3994
        %4027 = vst [vmem:[#allocation4 + $0x1cc] sm:$0xf] %v3995
        %4028 = vst [vmem:[#allocation4 + $0x1f0] sm:$0xf] %v3996
        %4029 = vst [vmem:[#allocation4 + $0x214] sm:$0xf] %v3997
        %4030 = vst [vmem:[#allocation4 + $0x238] sm:$0xf] %v3998
        %4031 = vst [vmem:[#allocation4 + $0x25c] sm:$0xf] %v3999
        %4032 = vst [vmem:[#allocation4 + $0x280] sm:$0xf] %v4000
        %4033 = vst [vmem:[#allocation4 + $0x2a4] sm:$0xf] %v4001
        %4034 = vst [vmem:[#allocation4 + $0x2c8] sm:$0xf] %v4002
        %4035 = vst [vmem:[#allocation4 + $0x2ec] sm:$0xf] %v4003
        %4036 = vst [vmem:[#allocation4 + $0x310] sm:$0xf] %v4004
        %4037 = vst [vmem:[#allocation4 + $0x334] sm:$0xf] %v4005
        %4038 = vst [vmem:[#allocation4 + $0x358] sm:$0xf] %v4006
        %4039 = vst [vmem:[#allocation4 + $0x37c] sm:$0xf] %v4007
        %4040 = vst [vmem:[#allocation4 + $0x3a0] sm:$0xf] %v4008
        %4041 = vst [vmem:[#allocation4 + $0x3c4] sm:$0xf] %v4009
        %4042 = vst [vmem:[#allocation4 + $0x3e8] sm:$0xf] %v4010
        %4043 = vst [vmem:[#allocation4 + $0x40c] sm:$0xf] %v4011
        %4044 = vst [vmem:[#allocation4 + $0x430] sm:$0xf] %v4012
        %4045 = vst [vmem:[#allocation4 + $0x454] sm:$0xf] %v4013
        %4046 = vst [vmem:[#allocation4 + $0x478] sm:$0xf] %v4014
        %v4047 = vld [vmem:[#allocation2 + $0x14] sm:$0xf]
        %v4048 = vld [vmem:[#allocation2 + $0x18] sm:$0xf]
        %v4049 = vld [vmem:[#allocation2 + $0x1c] sm:$0xf]
        %v4050 = vld [vmem:[#allocation2 + $0x20] sm:$0xf]
        %v4051 = vld [vmem:[#allocation2 + $0x24] sm:$0xf]
        %v4052 = vld [vmem:[#allocation2 + $0x28] sm:$0xf]
        %v4053 = vld [vmem:[#allocation2 + $0x2c] sm:$0xf]
        %v4054 = vld [vmem:[#allocation2 + $0x30] sm:$0xf]
        %v4055 = vld [vmem:[#allocation2 + $0x34] sm:$0xf]
        %v4056 = vld [vmem:[#allocation2 + $0x38] sm:$0xf]
        %v4057 = vld [vmem:[#allocation2 + $0x3c] sm:$0xf]
        %v4058 = vld [vmem:[#allocation2 + $0x40] sm:$0xf]
        %v4059 = vld [vmem:[#allocation2 + $0x44] sm:$0xf]
        %v4060 = vld [vmem:[#allocation2 + $0x48] sm:$0xf]
        %v4061 = vld [vmem:[#allocation2 + $0x4c] sm:$0xf]
        %v4062 = vld [vmem:[#allocation2 + $0x50] sm:$0xf]
        %v4063 = vld [vmem:[#allocation2 + $0x54] sm:$0xf]
        %v4064 = vld [vmem:[#allocation2 + $0x58] sm:$0xf]
        %v4065 = vld [vmem:[#allocation2 + $0x5c] sm:$0xf]
        %v4066 = vld [vmem:[#allocation2 + $0x60] sm:$0xf]
        %v4067 = vld [vmem:[#allocation2 + $0x64] sm:$0xf]
        %v4068 = vld [vmem:[#allocation2 + $0x68] sm:$0xf]
        %v4069 = vld [vmem:[#allocation2 + $0x6c] sm:$0xf]
        %v4070 = vld [vmem:[#allocation2 + $0x70] sm:$0xf]
        %v4071 = vld [vmem:[#allocation2 + $0x74] sm:$0xf]
        %v4072 = vld [vmem:[#allocation2 + $0x78] sm:$0xf]
        %v4073 = vld [vmem:[#allocation2 + $0x7c] sm:$0xf]
        %v4074 = vld [vmem:[#allocation2 + $0x80] sm:$0xf]
        %v4075 = vld [vmem:[#allocation2 + $0x84] sm:$0xf]
        %v4076 = vld [vmem:[#allocation2 + $0x88] sm:$0xf]
        %v4077 = vld [vmem:[#allocation2 + $0x8c] sm:$0xf]
        %v4078 = vld [vmem:[#allocation2 + $0x90] sm:$0xf]
        %v4079 = vld [vmem:[#allocation2 + $0x94] sm:$0x1]
        %v4080 = vsel %vm2167, %v4047, 0
        %v4081 = vsel %vm2168, %v4048, 0
        %v4082 = vsel %vm2169, %v4049, 0
        %v4083 = vsel %vm2170, %v4050, 0
        %v4084 = vsel %vm2171, %v4051, 0
        %v4085 = vsel %vm2172, %v4052, 0
        %v4086 = vsel %vm2173, %v4053, 0
        %v4087 = vsel %vm2174, %v4054, 0
        %v4088 = vsel %vm2175, %v4055, 0
        %v4089 = vsel %vm2176, %v4056, 0
        %v4090 = vsel %vm2177, %v4057, 0
        %v4091 = vsel %vm2178, %v4058, 0
        %v4092 = vsel %vm2179, %v4059, 0
        %v4093 = vsel %vm2180, %v4060, 0
        %v4094 = vsel %vm2181, %v4061, 0
        %v4095 = vsel %vm2182, %v4062, 0
        %v4096 = vsel %vm2183, %v4063, 0
        %v4097 = vsel %vm2184, %v4064, 0
        %v4098 = vsel %vm2185, %v4065, 0
        %v4099 = vsel %vm2186, %v4066, 0
        %v4100 = vsel %vm2187, %v4067, 0
        %v4101 = vsel %vm2188, %v4068, 0
        %v4102 = vsel %vm2189, %v4069, 0
        %v4103 = vsel %vm2190, %v4070, 0
        %v4104 = vsel %vm2191, %v4071, 0
        %v4105 = vsel %vm2192, %v4072, 0
        %v4106 = vsel %vm2193, %v4073, 0
        %v4107 = vsel %vm2194, %v4074, 0
        %v4108 = vsel %vm2195, %v4075, 0
        %v4109 = vsel %vm2196, %v4076, 0
        %v4110 = vsel %vm2197, %v4077, 0
        %v4111 = vsel %vm2198, %v4078, 0
        %v4112 = vsel %vm2199, %v4079, 0
        %v4114 = vshrl.u32 %v4080, 16
        %v4116 = vrot.slane %v4114, 4
        %v4117 = vshll.u32 %v4080, 16
        %v4119 = vrot.slane %v4117, 5
        %v4120 = vor.u32 %v4116, %v4119
        %v4121 = vrot.slane %v4120, 4
        %v4123 = vshll.u32 %v4081, 16
        %v4125 = vrot.slane %v4123, 5
        %v4126 = vsel %vm814, %v4121, %v4125
        %v4127 = vshrl.u32 %v4081, 16
        %v4129 = vrot.slane %v4127, 4
        %v4130 = vor.u32 %v4129, %v4125
        %v4131 = vrot.slane %v4130, 4
        %v4133 = vshll.u32 %v4082, 16
        %v4135 = vrot.slane %v4133, 5
        %v4136 = vsel %vm814, %v4131, %v4135
        %v4137 = vshrl.u32 %v4082, 16
        %v4139 = vrot.slane %v4137, 4
        %v4140 = vor.u32 %v4139, %v4135
        %v4141 = vrot.slane %v4140, 4
        %v4143 = vshll.u32 %v4083, 16
        %v4145 = vrot.slane %v4143, 5
        %v4146 = vsel %vm814, %v4141, %v4145
        %v4147 = vshrl.u32 %v4083, 16
        %v4149 = vrot.slane %v4147, 4
        %v4150 = vor.u32 %v4149, %v4145
        %v4151 = vrot.slane %v4150, 4
        %v4153 = vshll.u32 %v4084, 16
        %v4155 = vrot.slane %v4153, 5
        %v4156 = vsel %vm814, %v4151, %v4155
        %v4157 = vshrl.u32 %v4084, 16
        %v4159 = vrot.slane %v4157, 4
        %v4160 = vor.u32 %v4159, %v4155
        %v4161 = vrot.slane %v4160, 4
        %v4163 = vshll.u32 %v4085, 16
        %v4165 = vrot.slane %v4163, 5
        %v4166 = vsel %vm814, %v4161, %v4165
        %v4167 = vshrl.u32 %v4085, 16
        %v4169 = vrot.slane %v4167, 4
        %v4170 = vor.u32 %v4169, %v4165
        %v4171 = vrot.slane %v4170, 4
        %v4173 = vshll.u32 %v4086, 16
        %v4175 = vrot.slane %v4173, 5
        %v4176 = vsel %vm814, %v4171, %v4175
        %v4177 = vshrl.u32 %v4086, 16
        %v4179 = vrot.slane %v4177, 4
        %v4180 = vor.u32 %v4179, %v4175
        %v4181 = vrot.slane %v4180, 4
        %v4183 = vshll.u32 %v4087, 16
        %v4185 = vrot.slane %v4183, 5
        %v4186 = vsel %vm814, %v4181, %v4185
        %v4187 = vshrl.u32 %v4087, 16
        %v4189 = vrot.slane %v4187, 4
        %v4190 = vor.u32 %v4189, %v4185
        %v4191 = vrot.slane %v4190, 4
        %v4193 = vshll.u32 %v4088, 16
        %v4195 = vrot.slane %v4193, 5
        %v4196 = vsel %vm814, %v4191, %v4195
        %v4197 = vshrl.u32 %v4088, 16
        %v4199 = vrot.slane %v4197, 4
        %v4200 = vor.u32 %v4199, %v4195
        %v4201 = vrot.slane %v4200, 4
        %v4203 = vshll.u32 %v4089, 16
        %v4205 = vrot.slane %v4203, 5
        %v4206 = vsel %vm814, %v4201, %v4205
        %v4207 = vshrl.u32 %v4089, 16
        %v4209 = vrot.slane %v4207, 4
        %v4210 = vor.u32 %v4209, %v4205
        %v4211 = vrot.slane %v4210, 4
        %v4213 = vshll.u32 %v4090, 16
        %v4215 = vrot.slane %v4213, 5
        %v4216 = vsel %vm814, %v4211, %v4215
        %v4217 = vshrl.u32 %v4090, 16
        %v4219 = vrot.slane %v4217, 4
        %v4220 = vor.u32 %v4219, %v4215
        %v4221 = vrot.slane %v4220, 4
        %v4223 = vshll.u32 %v4091, 16
        %v4225 = vrot.slane %v4223, 5
        %v4226 = vsel %vm814, %v4221, %v4225
        %v4227 = vshrl.u32 %v4091, 16
        %v4229 = vrot.slane %v4227, 4
        %v4230 = vor.u32 %v4229, %v4225
        %v4231 = vrot.slane %v4230, 4
        %v4233 = vshll.u32 %v4092, 16
        %v4235 = vrot.slane %v4233, 5
        %v4236 = vsel %vm814, %v4231, %v4235
        %v4237 = vshrl.u32 %v4092, 16
        %v4239 = vrot.slane %v4237, 4
        %v4240 = vor.u32 %v4239, %v4235
        %v4241 = vrot.slane %v4240, 4
        %v4243 = vshll.u32 %v4093, 16
        %v4245 = vrot.slane %v4243, 5
        %v4246 = vsel %vm814, %v4241, %v4245
        %v4247 = vshrl.u32 %v4093, 16
        %v4249 = vrot.slane %v4247, 4
        %v4250 = vor.u32 %v4249, %v4245
        %v4251 = vrot.slane %v4250, 4
        %v4253 = vshll.u32 %v4094, 16
        %v4255 = vrot.slane %v4253, 5
        %v4256 = vsel %vm814, %v4251, %v4255
        %v4257 = vshrl.u32 %v4094, 16
        %v4259 = vrot.slane %v4257, 4
        %v4260 = vor.u32 %v4259, %v4255
        %v4261 = vrot.slane %v4260, 4
        %v4263 = vshll.u32 %v4095, 16
        %v4265 = vrot.slane %v4263, 5
        %v4266 = vsel %vm814, %v4261, %v4265
        %v4267 = vshrl.u32 %v4095, 16
        %v4269 = vrot.slane %v4267, 4
        %v4270 = vor.u32 %v4269, %v4265
        %v4271 = vrot.slane %v4270, 4
        %v4273 = vshll.u32 %v4096, 16
        %v4275 = vrot.slane %v4273, 5
        %v4276 = vsel %vm814, %v4271, %v4275
        %v4277 = vshrl.u32 %v4096, 16
        %v4279 = vrot.slane %v4277, 4
        %v4280 = vor.u32 %v4279, %v4275
        %v4281 = vrot.slane %v4280, 4
        %v4283 = vshll.u32 %v4097, 16
        %v4285 = vrot.slane %v4283, 5
        %v4286 = vsel %vm814, %v4281, %v4285
        %v4287 = vshrl.u32 %v4097, 16
        %v4289 = vrot.slane %v4287, 4
        %v4290 = vor.u32 %v4289, %v4285
        %v4291 = vrot.slane %v4290, 4
        %v4293 = vshll.u32 %v4098, 16
        %v4295 = vrot.slane %v4293, 5
        %v4296 = vsel %vm814, %v4291, %v4295
        %v4297 = vshrl.u32 %v4098, 16
        %v4299 = vrot.slane %v4297, 4
        %v4300 = vor.u32 %v4299, %v4295
        %v4301 = vrot.slane %v4300, 4
        %v4303 = vshll.u32 %v4099, 16
        %v4305 = vrot.slane %v4303, 5
        %v4306 = vsel %vm814, %v4301, %v4305
        %v4307 = vshrl.u32 %v4099, 16
        %v4309 = vrot.slane %v4307, 4
        %v4310 = vor.u32 %v4309, %v4305
        %v4311 = vrot.slane %v4310, 4
        %v4313 = vshll.u32 %v4100, 16
        %v4315 = vrot.slane %v4313, 5
        %v4316 = vsel %vm814, %v4311, %v4315
        %v4317 = vshrl.u32 %v4100, 16
        %v4319 = vrot.slane %v4317, 4
        %v4320 = vor.u32 %v4319, %v4315
        %v4321 = vrot.slane %v4320, 4
        %v4323 = vshll.u32 %v4101, 16
        %v4325 = vrot.slane %v4323, 5
        %v4326 = vsel %vm814, %v4321, %v4325
        %v4327 = vshrl.u32 %v4101, 16
        %v4329 = vrot.slane %v4327, 4
        %v4330 = vor.u32 %v4329, %v4325
        %v4331 = vrot.slane %v4330, 4
        %v4333 = vshll.u32 %v4102, 16
        %v4335 = vrot.slane %v4333, 5
        %v4336 = vsel %vm814, %v4331, %v4335
        %v4337 = vshrl.u32 %v4102, 16
        %v4339 = vrot.slane %v4337, 4
        %v4340 = vor.u32 %v4339, %v4335
        %v4341 = vrot.slane %v4340, 4
        %v4343 = vshll.u32 %v4103, 16
        %v4345 = vrot.slane %v4343, 5
        %v4346 = vsel %vm814, %v4341, %v4345
        %v4347 = vshrl.u32 %v4103, 16
        %v4349 = vrot.slane %v4347, 4
        %v4350 = vor.u32 %v4349, %v4345
        %v4351 = vrot.slane %v4350, 4
        %v4353 = vshll.u32 %v4104, 16
        %v4355 = vrot.slane %v4353, 5
        %v4356 = vsel %vm814, %v4351, %v4355
        %v4357 = vshrl.u32 %v4104, 16
        %v4359 = vrot.slane %v4357, 4
        %v4360 = vor.u32 %v4359, %v4355
        %v4361 = vrot.slane %v4360, 4
        %v4363 = vshll.u32 %v4105, 16
        %v4365 = vrot.slane %v4363, 5
        %v4366 = vsel %vm814, %v4361, %v4365
        %v4367 = vshrl.u32 %v4105, 16
        %v4369 = vrot.slane %v4367, 4
        %v4370 = vor.u32 %v4369, %v4365
        %v4371 = vrot.slane %v4370, 4
        %v4373 = vshll.u32 %v4106, 16
        %v4375 = vrot.slane %v4373, 5
        %v4376 = vsel %vm814, %v4371, %v4375
        %v4377 = vshrl.u32 %v4106, 16
        %v4379 = vrot.slane %v4377, 4
        %v4380 = vor.u32 %v4379, %v4375
        %v4381 = vrot.slane %v4380, 4
        %v4383 = vshll.u32 %v4107, 16
        %v4385 = vrot.slane %v4383, 5
        %v4386 = vsel %vm814, %v4381, %v4385
        %v4387 = vshrl.u32 %v4107, 16
        %v4389 = vrot.slane %v4387, 4
        %v4390 = vor.u32 %v4389, %v4385
        %v4391 = vrot.slane %v4390, 4
        %v4393 = vshll.u32 %v4108, 16
        %v4395 = vrot.slane %v4393, 5
        %v4396 = vsel %vm814, %v4391, %v4395
        %v4397 = vshrl.u32 %v4108, 16
        %v4399 = vrot.slane %v4397, 4
        %v4400 = vor.u32 %v4399, %v4395
        %v4401 = vrot.slane %v4400, 4
        %v4403 = vshll.u32 %v4109, 16
        %v4405 = vrot.slane %v4403, 5
        %v4406 = vsel %vm814, %v4401, %v4405
        %v4407 = vshrl.u32 %v4109, 16
        %v4409 = vrot.slane %v4407, 4
        %v4410 = vor.u32 %v4409, %v4405
        %v4411 = vrot.slane %v4410, 4
        %v4413 = vshll.u32 %v4110, 16
        %v4415 = vrot.slane %v4413, 5
        %v4416 = vsel %vm814, %v4411, %v4415
        %v4417 = vshrl.u32 %v4110, 16
        %v4419 = vrot.slane %v4417, 4
        %v4420 = vor.u32 %v4419, %v4415
        %v4421 = vrot.slane %v4420, 4
        %v4423 = vshll.u32 %v4111, 16
        %v4425 = vrot.slane %v4423, 5
        %v4426 = vsel %vm814, %v4421, %v4425
        %v4427 = vshrl.u32 %v4111, 16
        %v4429 = vrot.slane %v4427, 4
        %v4430 = vor.u32 %v4429, %v4425
        %v4431 = vrot.slane %v4430, 4
        %v4433 = vshll.u32 %v4112, 16
        %v4435 = vrot.slane %v4433, 5
        %v4436 = vsel %vm814, %v4431, %v4435
        %4469 = vst [vmem:[#allocation4 + $0x20] sm:$0xf] %v4126
        %4470 = vst [vmem:[#allocation4 + $0x44] sm:$0xf] %v4136
        %4471 = vst [vmem:[#allocation4 + $0x68] sm:$0xf] %v4146
        %4472 = vst [vmem:[#allocation4 + $0x8c] sm:$0xf] %v4156
        %4473 = vst [vmem:[#allocation4 + $0xb0] sm:$0xf] %v4166
        %4474 = vst [vmem:[#allocation4 + $0xd4] sm:$0xf] %v4176
        %4475 = vst [vmem:[#allocation4 + $0xf8] sm:$0xf] %v4186
        %4476 = vst [vmem:[#allocation4 + $0x11c] sm:$0xf] %v4196
        %4477 = vst [vmem:[#allocation4 + $0x140] sm:$0xf] %v4206
        %4478 = vst [vmem:[#allocation4 + $0x164] sm:$0xf] %v4216
        %4479 = vst [vmem:[#allocation4 + $0x188] sm:$0xf] %v4226
        %4480 = vst [vmem:[#allocation4 + $0x1ac] sm:$0xf] %v4236
        %4481 = vst [vmem:[#allocation4 + $0x1d0] sm:$0xf] %v4246
        %4482 = vst [vmem:[#allocation4 + $0x1f4] sm:$0xf] %v4256
        %4483 = vst [vmem:[#allocation4 + $0x218] sm:$0xf] %v4266
        %4484 = vst [vmem:[#allocation4 + $0x23c] sm:$0xf] %v4276
        %4485 = vst [vmem:[#allocation4 + $0x260] sm:$0xf] %v4286
        %4486 = vst [vmem:[#allocation4 + $0x284] sm:$0xf] %v4296
        %4487 = vst [vmem:[#allocation4 + $0x2a8] sm:$0xf] %v4306
        %4488 = vst [vmem:[#allocation4 + $0x2cc] sm:$0xf] %v4316
        %4489 = vst [vmem:[#allocation4 + $0x2f0] sm:$0xf] %v4326
        %4490 = vst [vmem:[#allocation4 + $0x314] sm:$0xf] %v4336
        %4491 = vst [vmem:[#allocation4 + $0x338] sm:$0xf] %v4346
        %4492 = vst [vmem:[#allocation4 + $0x35c] sm:$0xf] %v4356
        %4493 = vst [vmem:[#allocation4 + $0x380] sm:$0xf] %v4366
        %4494 = vst [vmem:[#allocation4 + $0x3a4] sm:$0xf] %v4376
        %4495 = vst [vmem:[#allocation4 + $0x3c8] sm:$0xf] %v4386
        %4496 = vst [vmem:[#allocation4 + $0x3ec] sm:$0xf] %v4396
        %4497 = vst [vmem:[#allocation4 + $0x410] sm:$0xf] %v4406
        %4498 = vst [vmem:[#allocation4 + $0x434] sm:$0xf] %v4416
        %4499 = vst [vmem:[#allocation4 + $0x458] sm:$0xf] %v4426
        %4500 = vst [vmem:[#allocation4 + $0x47c] sm:$0xf] %v4436
        %v4501 = vld [vmem:[#allocation4] sm:$0xff]
        %v4502 = vld [vmem:[#allocation4 + $0x8] sm:$0xff]
        %v4503 = vld [vmem:[#allocation4 + $0x10] sm:$0xff]
        %v4504 = vld [vmem:[#allocation4 + $0x18] sm:$0xff]
        %v4505 = vld [vmem:[#allocation4 + $0x20] sm:$0xf]
        %v4506 = vld [vmem:[#allocation4 + $0x24] sm:$0xff]
        %v4507 = vld [vmem:[#allocation4 + $0x2c] sm:$0xff]
        %v4508 = vld [vmem:[#allocation4 + $0x34] sm:$0xff]
        %v4509 = vld [vmem:[#allocation4 + $0x3c] sm:$0xff]
        %v4510 = vld [vmem:[#allocation4 + $0x44] sm:$0xf]
        %v4511 = vld [vmem:[#allocation4 + $0x48] sm:$0xff]
        %v4512 = vld [vmem:[#allocation4 + $0x50] sm:$0xff]
        %v4513 = vld [vmem:[#allocation4 + $0x58] sm:$0xff]
        %v4514 = vld [vmem:[#allocation4 + $0x60] sm:$0xff]
        %v4515 = vld [vmem:[#allocation4 + $0x68] sm:$0xf]
        %v4516 = vld [vmem:[#allocation4 + $0x6c] sm:$0xff]
        %v4517 = vld [vmem:[#allocation4 + $0x74] sm:$0xff]
        %v4518 = vld [vmem:[#allocation4 + $0x7c] sm:$0xff]
        %v4519 = vld [vmem:[#allocation4 + $0x84] sm:$0xff]
        %v4520 = vld [vmem:[#allocation4 + $0x8c] sm:$0xf]
        %v4521 = vld [vmem:[#allocation4 + $0x90] sm:$0xff]
        %v4522 = vld [vmem:[#allocation4 + $0x98] sm:$0xff]
        %v4523 = vld [vmem:[#allocation4 + $0xa0] sm:$0xff]
        %v4524 = vld [vmem:[#allocation4 + $0xa8] sm:$0xff]
        %v4525 = vld [vmem:[#allocation4 + $0xb0] sm:$0xf]
        %v4526 = vld [vmem:[#allocation4 + $0xb4] sm:$0xff]
        %v4527 = vld [vmem:[#allocation4 + $0xbc] sm:$0xff]
        %v4528 = vld [vmem:[#allocation4 + $0xc4] sm:$0xff]
        %v4529 = vld [vmem:[#allocation4 + $0xcc] sm:$0xff]
        %v4530 = vld [vmem:[#allocation4 + $0xd4] sm:$0xf]
        %v4531 = vld [vmem:[#allocation4 + $0xd8] sm:$0xff]
        %v4532 = vld [vmem:[#allocation4 + $0xe0] sm:$0xff]
        %v4533 = vld [vmem:[#allocation4 + $0xe8] sm:$0xff]
        %v4534 = vld [vmem:[#allocation4 + $0xf0] sm:$0xff]
        %v4535 = vld [vmem:[#allocation4 + $0xf8] sm:$0xf]
        %v4536 = vld [vmem:[#allocation4 + $0xfc] sm:$0xff]
        %v4537 = vld [vmem:[#allocation4 + $0x104] sm:$0xff]
        %v4538 = vld [vmem:[#allocation4 + $0x10c] sm:$0xff]
        %v4539 = vld [vmem:[#allocation4 + $0x114] sm:$0xff]
        %v4540 = vld [vmem:[#allocation4 + $0x11c] sm:$0xf]
        %v4541 = vld [vmem:[#allocation4 + $0x120] sm:$0xff]
        %v4542 = vld [vmem:[#allocation4 + $0x128] sm:$0xff]
        %v4543 = vld [vmem:[#allocation4 + $0x130] sm:$0xff]
        %v4544 = vld [vmem:[#allocation4 + $0x138] sm:$0xff]
        %v4545 = vld [vmem:[#allocation4 + $0x140] sm:$0xf]
        %v4546 = vld [vmem:[#allocation4 + $0x144] sm:$0xff]
        %v4547 = vld [vmem:[#allocation4 + $0x14c] sm:$0xff]
        %v4548 = vld [vmem:[#allocation4 + $0x154] sm:$0xff]
        %v4549 = vld [vmem:[#allocation4 + $0x15c] sm:$0xff]
        %v4550 = vld [vmem:[#allocation4 + $0x164] sm:$0xf]
        %v4551 = vld [vmem:[#allocation4 + $0x168] sm:$0xff]
        %v4552 = vld [vmem:[#allocation4 + $0x170] sm:$0xff]
        %v4553 = vld [vmem:[#allocation4 + $0x178] sm:$0xff]
        %v4554 = vld [vmem:[#allocation4 + $0x180] sm:$0xff]
        %v4555 = vld [vmem:[#allocation4 + $0x188] sm:$0xf]
        %v4556 = vld [vmem:[#allocation4 + $0x18c] sm:$0xff]
        %v4557 = vld [vmem:[#allocation4 + $0x194] sm:$0xff]
        %v4558 = vld [vmem:[#allocation4 + $0x19c] sm:$0xff]
        %v4559 = vld [vmem:[#allocation4 + $0x1a4] sm:$0xff]
        %v4560 = vld [vmem:[#allocation4 + $0x1ac] sm:$0xf]
        %v4561 = vld [vmem:[#allocation4 + $0x1b0] sm:$0xff]
        %v4562 = vld [vmem:[#allocation4 + $0x1b8] sm:$0xff]
        %v4563 = vld [vmem:[#allocation4 + $0x1c0] sm:$0xff]
        %v4564 = vld [vmem:[#allocation4 + $0x1c8] sm:$0xff]
        %v4565 = vld [vmem:[#allocation4 + $0x1d0] sm:$0xf]
        %v4566 = vld [vmem:[#allocation4 + $0x1d4] sm:$0xff]
        %v4567 = vld [vmem:[#allocation4 + $0x1dc] sm:$0xff]
        %v4568 = vld [vmem:[#allocation4 + $0x1e4] sm:$0xff]
        %v4569 = vld [vmem:[#allocation4 + $0x1ec] sm:$0xff]
        %v4570 = vld [vmem:[#allocation4 + $0x1f4] sm:$0xf]
        %v4571 = vld [vmem:[#allocation4 + $0x1f8] sm:$0xff]
        %v4572 = vld [vmem:[#allocation4 + $0x200] sm:$0xff]
        %v4573 = vld [vmem:[#allocation4 + $0x208] sm:$0xff]
        %v4574 = vld [vmem:[#allocation4 + $0x210] sm:$0xff]
        %v4575 = vld [vmem:[#allocation4 + $0x218] sm:$0xf]
        %v4576 = vld [vmem:[#allocation4 + $0x21c] sm:$0xff]
        %v4577 = vld [vmem:[#allocation4 + $0x224] sm:$0xff]
        %v4578 = vld [vmem:[#allocation4 + $0x22c] sm:$0xff]
        %v4579 = vld [vmem:[#allocation4 + $0x234] sm:$0xff]
        %v4580 = vld [vmem:[#allocation4 + $0x23c] sm:$0xf]
        %v4581 = vld [vmem:[#allocation4 + $0x240] sm:$0xff]
        %v4582 = vld [vmem:[#allocation4 + $0x248] sm:$0xff]
        %v4583 = vld [vmem:[#allocation4 + $0x250] sm:$0xff]
        %v4584 = vld [vmem:[#allocation4 + $0x258] sm:$0xff]
        %v4585 = vld [vmem:[#allocation4 + $0x260] sm:$0xf]
        %v4586 = vld [vmem:[#allocation4 + $0x264] sm:$0xff]
        %v4587 = vld [vmem:[#allocation4 + $0x26c] sm:$0xff]
        %v4588 = vld [vmem:[#allocation4 + $0x274] sm:$0xff]
        %v4589 = vld [vmem:[#allocation4 + $0x27c] sm:$0xff]
        %v4590 = vld [vmem:[#allocation4 + $0x284] sm:$0xf]
        %v4591 = vld [vmem:[#allocation4 + $0x288] sm:$0xff]
        %v4592 = vld [vmem:[#allocation4 + $0x290] sm:$0xff]
        %v4593 = vld [vmem:[#allocation4 + $0x298] sm:$0xff]
        %v4594 = vld [vmem:[#allocation4 + $0x2a0] sm:$0xff]
        %v4595 = vld [vmem:[#allocation4 + $0x2a8] sm:$0xf]
        %v4596 = vld [vmem:[#allocation4 + $0x2ac] sm:$0xff]
        %v4597 = vld [vmem:[#allocation4 + $0x2b4] sm:$0xff]
        %v4598 = vld [vmem:[#allocation4 + $0x2bc] sm:$0xff]
        %v4599 = vld [vmem:[#allocation4 + $0x2c4] sm:$0xff]
        %v4600 = vld [vmem:[#allocation4 + $0x2cc] sm:$0xf]
        %v4601 = vld [vmem:[#allocation4 + $0x2d0] sm:$0xff]
        %v4602 = vld [vmem:[#allocation4 + $0x2d8] sm:$0xff]
        %v4603 = vld [vmem:[#allocation4 + $0x2e0] sm:$0xff]
        %v4604 = vld [vmem:[#allocation4 + $0x2e8] sm:$0xff]
        %v4605 = vld [vmem:[#allocation4 + $0x2f0] sm:$0xf]
        %v4606 = vld [vmem:[#allocation4 + $0x2f4] sm:$0xff]
        %v4607 = vld [vmem:[#allocation4 + $0x2fc] sm:$0xff]
        %v4608 = vld [vmem:[#allocation4 + $0x304] sm:$0xff]
        %v4609 = vld [vmem:[#allocation4 + $0x30c] sm:$0xff]
        %v4610 = vld [vmem:[#allocation4 + $0x314] sm:$0xf]
        %v4611 = vld [vmem:[#allocation4 + $0x318] sm:$0xff]
        %v4612 = vld [vmem:[#allocation4 + $0x320] sm:$0xff]
        %v4613 = vld [vmem:[#allocation4 + $0x328] sm:$0xff]
        %v4614 = vld [vmem:[#allocation4 + $0x330] sm:$0xff]
        %v4615 = vld [vmem:[#allocation4 + $0x338] sm:$0xf]
        %v4616 = vld [vmem:[#allocation4 + $0x33c] sm:$0xff]
        %v4617 = vld [vmem:[#allocation4 + $0x344] sm:$0xff]
        %v4618 = vld [vmem:[#allocation4 + $0x34c] sm:$0xff]
        %v4619 = vld [vmem:[#allocation4 + $0x354] sm:$0xff]
        %v4620 = vld [vmem:[#allocation4 + $0x35c] sm:$0xf]
        %v4621 = vld [vmem:[#allocation4 + $0x360] sm:$0xff]
        %v4622 = vld [vmem:[#allocation4 + $0x368] sm:$0xff]
        %v4623 = vld [vmem:[#allocation4 + $0x370] sm:$0xff]
        %v4624 = vld [vmem:[#allocation4 + $0x378] sm:$0xff]
        %v4625 = vld [vmem:[#allocation4 + $0x380] sm:$0xf]
        %v4626 = vld [vmem:[#allocation4 + $0x384] sm:$0xff]
        %v4627 = vld [vmem:[#allocation4 + $0x38c] sm:$0xff]
        %v4628 = vld [vmem:[#allocation4 + $0x394] sm:$0xff]
        %v4629 = vld [vmem:[#allocation4 + $0x39c] sm:$0xff]
        %v4630 = vld [vmem:[#allocation4 + $0x3a4] sm:$0xf]
        %v4631 = vld [vmem:[#allocation4 + $0x3a8] sm:$0xff]
        %v4632 = vld [vmem:[#allocation4 + $0x3b0] sm:$0xff]
        %v4633 = vld [vmem:[#allocation4 + $0x3b8] sm:$0xff]
        %v4634 = vld [vmem:[#allocation4 + $0x3c0] sm:$0xff]
        %v4635 = vld [vmem:[#allocation4 + $0x3c8] sm:$0xf]
        %v4636 = vld [vmem:[#allocation4 + $0x3cc] sm:$0xff]
        %v4637 = vld [vmem:[#allocation4 + $0x3d4] sm:$0xff]
        %v4638 = vld [vmem:[#allocation4 + $0x3dc] sm:$0xff]
        %v4639 = vld [vmem:[#allocation4 + $0x3e4] sm:$0xff]
        %v4640 = vld [vmem:[#allocation4 + $0x3ec] sm:$0xf]
        %v4641 = vld [vmem:[#allocation4 + $0x3f0] sm:$0xff]
        %v4642 = vld [vmem:[#allocation4 + $0x3f8] sm:$0xff]
        %v4643 = vld [vmem:[#allocation4 + $0x400] sm:$0xff]
        %v4644 = vld [vmem:[#allocation4 + $0x408] sm:$0xff]
        %v4645 = vld [vmem:[#allocation4 + $0x410] sm:$0xf]
        %v4646 = vld [vmem:[#allocation4 + $0x414] sm:$0xff]
        %v4647 = vld [vmem:[#allocation4 + $0x41c] sm:$0xff]
        %v4648 = vld [vmem:[#allocation4 + $0x424] sm:$0xff]
        %v4649 = vld [vmem:[#allocation4 + $0x42c] sm:$0xff]
        %v4650 = vld [vmem:[#allocation4 + $0x434] sm:$0xf]
        %v4651 = vld [vmem:[#allocation4 + $0x438] sm:$0xff]
        %v4652 = vld [vmem:[#allocation4 + $0x440] sm:$0xff]
        %v4653 = vld [vmem:[#allocation4 + $0x448] sm:$0xff]
        %v4654 = vld [vmem:[#allocation4 + $0x450] sm:$0xff]
        %v4655 = vld [vmem:[#allocation4 + $0x458] sm:$0xf]
        %v4656 = vld [vmem:[#allocation4 + $0x45c] sm:$0xff]
        %v4657 = vld [vmem:[#allocation4 + $0x464] sm:$0xff]
        %v4658 = vld [vmem:[#allocation4 + $0x46c] sm:$0xff]
        %v4659 = vld [vmem:[#allocation4 + $0x474] sm:$0xff]
        %v4660 = vld [vmem:[#allocation4 + $0x47c] sm:$0xf]
        %v4661 = vld [vmem:[#allocation8] sm:$0xf]
        %v4662 = vld [vmem:[#allocation8 + $0x4] sm:$0xf]
        %v4663 = vld [vmem:[#allocation8 + $0x8] sm:$0xf]
        %v4664 = vld [vmem:[#allocation8 + $0xc] sm:$0xf]
        %v4665 = vld [vmem:[#allocation8 + $0x10] sm:$0xf]
        %v4666 = vld [vmem:[#allocation8 + $0x14] sm:$0xf]
        %v4667 = vld [vmem:[#allocation8 + $0x18] sm:$0xf]
        %v4668 = vld [vmem:[#allocation8 + $0x1c] sm:$0xf]
        %v4669 = vld [vmem:[#allocation8 + $0x20] sm:$0xf]
        %v4670 = vld [vmem:[#allocation8 + $0x24] sm:$0xf]
        %v4671 = vld [vmem:[#allocation8 + $0x28] sm:$0xf]
        %v4672 = vld [vmem:[#allocation8 + $0x2c] sm:$0xf]
        %v4673 = vld [vmem:[#allocation8 + $0x30] sm:$0xf]
        %v4674 = vld [vmem:[#allocation8 + $0x34] sm:$0xf]
        %v4675 = vld [vmem:[#allocation8 + $0x38] sm:$0xf]
        %v4676 = vld [vmem:[#allocation8 + $0x3c] sm:$0xf]
        %v4677 = vld [vmem:[#allocation8 + $0x40] sm:$0xf]
        %v4678 = vld [vmem:[#allocation8 + $0x44] sm:$0xf]
        %v4679 = vld [vmem:[#allocation8 + $0x48] sm:$0xf]
        %v4680 = vld [vmem:[#allocation8 + $0x4c] sm:$0xf]
        %v4681 = vld [vmem:[#allocation8 + $0x50] sm:$0xf]
        %v4682 = vld [vmem:[#allocation8 + $0x54] sm:$0xf]
        %v4683 = vld [vmem:[#allocation8 + $0x58] sm:$0xf]
        %v4684 = vld [vmem:[#allocation8 + $0x5c] sm:$0xf]
        %v4685 = vld [vmem:[#allocation8 + $0x60] sm:$0xf]
        %v4686 = vld [vmem:[#allocation8 + $0x64] sm:$0xf]
        %v4687 = vld [vmem:[#allocation8 + $0x68] sm:$0xf]
        %v4688 = vld [vmem:[#allocation8 + $0x6c] sm:$0xf]
        %v4689 = vld [vmem:[#allocation8 + $0x70] sm:$0xf]
        %v4690 = vld [vmem:[#allocation8 + $0x74] sm:$0xf]
        %v4691 = vld [vmem:[#allocation8 + $0x78] sm:$0xf]
        %v4692 = vld [vmem:[#allocation8 + $0x7c] sm:$0xf]
        %v4693 = vld [vmem:[#allocation8 + $0x80] sm:$0xf]
        %v4694 = vld [vmem:[#allocation8 + $0x84] sm:$0xf]
        %v4695 = vld [vmem:[#allocation8 + $0x88] sm:$0xf]
        %v4696 = vld [vmem:[#allocation8 + $0x8c] sm:$0xf]
        %v4697 = vld [vmem:[#allocation8 + $0x90] sm:$0xf]
        %v4698 = vld [vmem:[#allocation8 + $0x94] sm:$0xf]
        %v4699 = vld [vmem:[#allocation8 + $0x98] sm:$0xf]
        %v4700 = vld [vmem:[#allocation8 + $0x9c] sm:$0xf]
        %v4701 = vld [vmem:[#allocation8 + $0xa0] sm:$0xf]
        %v4702 = vld [vmem:[#allocation8 + $0xa4] sm:$0xf]
        %v4703 = vld [vmem:[#allocation8 + $0xa8] sm:$0xf]
        %v4704 = vld [vmem:[#allocation8 + $0xac] sm:$0xf]
        %v4705 = vld [vmem:[#allocation8 + $0xb0] sm:$0xf]
        %v4706 = vld [vmem:[#allocation8 + $0xb4] sm:$0xf]
        %v4707 = vld [vmem:[#allocation8 + $0xb8] sm:$0xf]
        %v4708 = vld [vmem:[#allocation8 + $0xbc] sm:$0xf]
        %v4709 = vld [vmem:[#allocation8 + $0xc0] sm:$0xf]
        %v4710 = vld [vmem:[#allocation8 + $0xc4] sm:$0xf]
        %v4711 = vld [vmem:[#allocation8 + $0xc8] sm:$0xf]
        %v4712 = vld [vmem:[#allocation8 + $0xcc] sm:$0xf]
        %v4713 = vld [vmem:[#allocation8 + $0xd0] sm:$0xf]
        %v4714 = vld [vmem:[#allocation8 + $0xd4] sm:$0xf]
        %v4715 = vld [vmem:[#allocation8 + $0xd8] sm:$0xf]
        %v4716 = vld [vmem:[#allocation8 + $0xdc] sm:$0xf]
        %v4717 = vld [vmem:[#allocation8 + $0xe0] sm:$0xf]
        %v4718 = vld [vmem:[#allocation8 + $0xe4] sm:$0xf]
        %v4719 = vld [vmem:[#allocation8 + $0xe8] sm:$0xf]
        %v4720 = vld [vmem:[#allocation8 + $0xec] sm:$0xf]
        %v4721 = vld [vmem:[#allocation8 + $0xf0] sm:$0xf]
        %v4722 = vld [vmem:[#allocation8 + $0xf4] sm:$0xf]
        %v4723 = vld [vmem:[#allocation8 + $0xf8] sm:$0xf]
        %v4724 = vld [vmem:[#allocation8 + $0xfc] sm:$0xf]
        %v4725 = vld [vmem:[#allocation8 + $0x100] sm:$0xf]
        %v4726 = vld [vmem:[#allocation8 + $0x104] sm:$0xf]
        %v4727 = vld [vmem:[#allocation8 + $0x108] sm:$0xf]
        %v4728 = vld [vmem:[#allocation8 + $0x10c] sm:$0xf]
        %v4729 = vld [vmem:[#allocation8 + $0x110] sm:$0xf]
        %v4730 = vld [vmem:[#allocation8 + $0x114] sm:$0xf]
        %v4731 = vld [vmem:[#allocation8 + $0x118] sm:$0xf]
        %v4732 = vld [vmem:[#allocation8 + $0x11c] sm:$0xf]
        %v4733 = vld [vmem:[#allocation8 + $0x120] sm:$0xf]
        %v4734 = vld [vmem:[#allocation8 + $0x124] sm:$0xf]
        %v4735 = vld [vmem:[#allocation8 + $0x128] sm:$0xf]
        %v4736 = vld [vmem:[#allocation8 + $0x12c] sm:$0xf]
        %v4737 = vld [vmem:[#allocation8 + $0x130] sm:$0xf]
        %v4738 = vld [vmem:[#allocation8 + $0x134] sm:$0xf]
        %v4739 = vld [vmem:[#allocation8 + $0x138] sm:$0xf]
        %v4740 = vld [vmem:[#allocation8 + $0x13c] sm:$0xf]
        %v4741 = vld [vmem:[#allocation8 + $0x140] sm:$0xf]
        %v4742 = vld [vmem:[#allocation8 + $0x144] sm:$0xf]
        %v4743 = vld [vmem:[#allocation8 + $0x148] sm:$0xf]
        %v4744 = vld [vmem:[#allocation8 + $0x14c] sm:$0xf]
        %v4745 = vld [vmem:[#allocation8 + $0x150] sm:$0xf]
        %v4746 = vld [vmem:[#allocation8 + $0x154] sm:$0xf]
        %v4747 = vld [vmem:[#allocation8 + $0x158] sm:$0xf]
        %v4748 = vld [vmem:[#allocation8 + $0x15c] sm:$0xf]
        %v4749 = vld [vmem:[#allocation8 + $0x160] sm:$0xf]
        %v4750 = vld [vmem:[#allocation8 + $0x164] sm:$0xf]
        %v4751 = vld [vmem:[#allocation8 + $0x168] sm:$0xf]
        %v4752 = vld [vmem:[#allocation8 + $0x16c] sm:$0xf]
        %v4753 = vld [vmem:[#allocation8 + $0x170] sm:$0xf]
        %v4754 = vld [vmem:[#allocation8 + $0x174] sm:$0xf]
        %v4755 = vld [vmem:[#allocation8 + $0x178] sm:$0xf]
        %v4756 = vld [vmem:[#allocation8 + $0x17c] sm:$0xf]
        %v4757 = vld [vmem:[#allocation8 + $0x180] sm:$0xf]
        %v4758 = vld [vmem:[#allocation8 + $0x184] sm:$0xf]
        %v4759 = vld [vmem:[#allocation8 + $0x188] sm:$0xf]
        %v4760 = vld [vmem:[#allocation8 + $0x18c] sm:$0xf]
        %v4761 = vld [vmem:[#allocation8 + $0x190] sm:$0xf]
        %v4762 = vld [vmem:[#allocation8 + $0x194] sm:$0xf]
        %v4763 = vld [vmem:[#allocation8 + $0x198] sm:$0xf]
        %v4764 = vld [vmem:[#allocation8 + $0x19c] sm:$0xf]
        %v4765 = vld [vmem:[#allocation8 + $0x1a0] sm:$0xf]
        %v4766 = vld [vmem:[#allocation8 + $0x1a4] sm:$0xf]
        %v4767 = vld [vmem:[#allocation8 + $0x1a8] sm:$0xf]
        %v4768 = vld [vmem:[#allocation8 + $0x1ac] sm:$0xf]
        %v4769 = vld [vmem:[#allocation8 + $0x1b0] sm:$0xf]
        %v4770 = vld [vmem:[#allocation8 + $0x1b4] sm:$0xf]
        %v4771 = vld [vmem:[#allocation8 + $0x1b8] sm:$0xf]
        %v4772 = vld [vmem:[#allocation8 + $0x1bc] sm:$0xf]
        %v4773 = vld [vmem:[#allocation8 + $0x1c0] sm:$0xf]
        %v4774 = vld [vmem:[#allocation8 + $0x1c4] sm:$0xf]
        %v4775 = vld [vmem:[#allocation8 + $0x1c8] sm:$0xf]
        %v4776 = vld [vmem:[#allocation8 + $0x1cc] sm:$0xf]
        %v4777 = vld [vmem:[#allocation8 + $0x1d0] sm:$0xf]
        %v4778 = vld [vmem:[#allocation8 + $0x1d4] sm:$0xf]
        %v4779 = vld [vmem:[#allocation8 + $0x1d8] sm:$0xf]
        %v4780 = vld [vmem:[#allocation8 + $0x1dc] sm:$0xf]
        %v4781 = vld [vmem:[#allocation8 + $0x1e0] sm:$0xf]
        %v4782 = vld [vmem:[#allocation8 + $0x1e4] sm:$0xf]
        %v4783 = vld [vmem:[#allocation8 + $0x1e8] sm:$0xf]
        %v4784 = vld [vmem:[#allocation8 + $0x1ec] sm:$0xf]
        %v4785 = vld [vmem:[#allocation8 + $0x1f0] sm:$0xf]
        %v4786 = vld [vmem:[#allocation8 + $0x1f4] sm:$0xf]
        %v4787 = vld [vmem:[#allocation8 + $0x1f8] sm:$0xf]
        %v4788 = vld [vmem:[#allocation8 + $0x1fc] sm:$0xf]
        %v4789 = vld [vmem:[#allocation8 + $0x200] sm:$0xf]
        %v4790 = vld [vmem:[#allocation8 + $0x204] sm:$0xf]
        %v4791 = vld [vmem:[#allocation8 + $0x208] sm:$0xf]
        %v4792 = vld [vmem:[#allocation8 + $0x20c] sm:$0xf]
        %v4793 = vld [vmem:[#allocation8 + $0x210] sm:$0xf]
        %v4794 = vld [vmem:[#allocation8 + $0x214] sm:$0xf]
        %v4795 = vld [vmem:[#allocation8 + $0x218] sm:$0xf]
        %v4796 = vld [vmem:[#allocation8 + $0x21c] sm:$0xf]
        %v4797 = vld [vmem:[#allocation8 + $0x220] sm:$0xf]
        %v4798 = vld [vmem:[#allocation8 + $0x224] sm:$0xf]
        %v4799 = vld [vmem:[#allocation8 + $0x228] sm:$0xf]
        %v4800 = vld [vmem:[#allocation8 + $0x22c] sm:$0xf]
        %v4801 = vld [vmem:[#allocation8 + $0x230] sm:$0xf]
        %v4802 = vld [vmem:[#allocation8 + $0x234] sm:$0xf]
        %v4803 = vld [vmem:[#allocation8 + $0x238] sm:$0xf]
        %v4804 = vld [vmem:[#allocation8 + $0x23c] sm:$0xf]
        %v4805 = vld [vmem:[%s3] sm:$0x1]
        %v4807 = vlaneseq
        %v4808 = vshrl.u32 %v4807, 7
        %v4809 = vsub.s32 0, %v4808
        %v4810 = vrot.slane %v4805, %v4809
        %v4972 = vunpack.c.l.b16 %v4501
        %v4973 = vunpack.c.h.b16 %v4501
        %v4974 = vunpack.c.l.b16 %v4502
        %v4975 = vunpack.c.h.b16 %v4502
        %v4976 = vunpack.c.l.b16 %v4503
        %v4977 = vunpack.c.h.b16 %v4503
        %v4978 = vunpack.c.l.b16 %v4504
        %v4979 = vunpack.c.h.b16 %v4504
        %v4980 = vunpack.c.l.b16 %v4505
        %v4981 = vunpack.c.l.b16 %v4506
        %v4982 = vunpack.c.h.b16 %v4506
        %v4983 = vunpack.c.l.b16 %v4507
        %v4984 = vunpack.c.h.b16 %v4507
        %v4985 = vunpack.c.l.b16 %v4508
        %v4986 = vunpack.c.h.b16 %v4508
        %v4987 = vunpack.c.l.b16 %v4509
        %v4988 = vunpack.c.h.b16 %v4509
        %v4989 = vunpack.c.l.b16 %v4510
        %v4990 = vunpack.c.l.b16 %v4511
        %v4991 = vunpack.c.h.b16 %v4511
        %v4992 = vunpack.c.l.b16 %v4512
        %v4993 = vunpack.c.h.b16 %v4512
        %v4994 = vunpack.c.l.b16 %v4513
        %v4995 = vunpack.c.h.b16 %v4513
        %v4996 = vunpack.c.l.b16 %v4514
        %v4997 = vunpack.c.h.b16 %v4514
        %v4998 = vunpack.c.l.b16 %v4515
        %v4999 = vunpack.c.l.b16 %v4516
        %v5000 = vunpack.c.h.b16 %v4516
        %v5001 = vunpack.c.l.b16 %v4517
        %v5002 = vunpack.c.h.b16 %v4517
        %v5003 = vunpack.c.l.b16 %v4518
        %v5004 = vunpack.c.h.b16 %v4518
        %v5005 = vunpack.c.l.b16 %v4519
        %v5006 = vunpack.c.h.b16 %v4519
        %v5007 = vunpack.c.l.b16 %v4520
        %v5008 = vunpack.c.l.b16 %v4521
        %v5009 = vunpack.c.h.b16 %v4521
        %v5010 = vunpack.c.l.b16 %v4522
        %v5011 = vunpack.c.h.b16 %v4522
        %v5012 = vunpack.c.l.b16 %v4523
        %v5013 = vunpack.c.h.b16 %v4523
        %v5014 = vunpack.c.l.b16 %v4524
        %v5015 = vunpack.c.h.b16 %v4524
        %v5016 = vunpack.c.l.b16 %v4525
        %v5017 = vunpack.c.l.b16 %v4526
        %v5018 = vunpack.c.h.b16 %v4526
        %v5019 = vunpack.c.l.b16 %v4527
        %v5020 = vunpack.c.h.b16 %v4527
        %v5021 = vunpack.c.l.b16 %v4528
        %v5022 = vunpack.c.h.b16 %v4528
        %v5023 = vunpack.c.l.b16 %v4529
        %v5024 = vunpack.c.h.b16 %v4529
        %v5025 = vunpack.c.l.b16 %v4530
        %v5026 = vunpack.c.l.b16 %v4531
        %v5027 = vunpack.c.h.b16 %v4531
        %v5028 = vunpack.c.l.b16 %v4532
        %v5029 = vunpack.c.h.b16 %v4532
        %v5030 = vunpack.c.l.b16 %v4533
        %v5031 = vunpack.c.h.b16 %v4533
        %v5032 = vunpack.c.l.b16 %v4534
        %v5033 = vunpack.c.h.b16 %v4534
        %v5034 = vunpack.c.l.b16 %v4535
        %v5035 = vunpack.c.l.b16 %v4536
        %v5036 = vunpack.c.h.b16 %v4536
        %v5037 = vunpack.c.l.b16 %v4537
        %v5038 = vunpack.c.h.b16 %v4537
        %v5039 = vunpack.c.l.b16 %v4538
        %v5040 = vunpack.c.h.b16 %v4538
        %v5041 = vunpack.c.l.b16 %v4539
        %v5042 = vunpack.c.h.b16 %v4539
        %v5043 = vunpack.c.l.b16 %v4540
        %v5044 = vunpack.c.l.b16 %v4541
        %v5045 = vunpack.c.h.b16 %v4541
        %v5046 = vunpack.c.l.b16 %v4542
        %v5047 = vunpack.c.h.b16 %v4542
        %v5048 = vunpack.c.l.b16 %v4543
        %v5049 = vunpack.c.h.b16 %v4543
        %v5050 = vunpack.c.l.b16 %v4544
        %v5051 = vunpack.c.h.b16 %v4544
        %v5052 = vunpack.c.l.b16 %v4545
        %v5053 = vunpack.c.l.b16 %v4546
        %v5054 = vunpack.c.h.b16 %v4546
        %v5055 = vunpack.c.l.b16 %v4547
        %v5056 = vunpack.c.h.b16 %v4547
        %v5057 = vunpack.c.l.b16 %v4548
        %v5058 = vunpack.c.h.b16 %v4548
        %v5059 = vunpack.c.l.b16 %v4549
        %v5060 = vunpack.c.h.b16 %v4549
        %v5061 = vunpack.c.l.b16 %v4550
        %v5062 = vunpack.c.l.b16 %v4551
        %v5063 = vunpack.c.h.b16 %v4551
        %v5064 = vunpack.c.l.b16 %v4552
        %v5065 = vunpack.c.h.b16 %v4552
        %v5066 = vunpack.c.l.b16 %v4553
        %v5067 = vunpack.c.h.b16 %v4553
        %v5068 = vunpack.c.l.b16 %v4554
        %v5069 = vunpack.c.h.b16 %v4554
        %v5070 = vunpack.c.l.b16 %v4555
        %v5071 = vunpack.c.l.b16 %v4556
        %v5072 = vunpack.c.h.b16 %v4556
        %v5073 = vunpack.c.l.b16 %v4557
        %v5074 = vunpack.c.h.b16 %v4557
        %v5075 = vunpack.c.l.b16 %v4558
        %v5076 = vunpack.c.h.b16 %v4558
        %v5077 = vunpack.c.l.b16 %v4559
        %v5078 = vunpack.c.h.b16 %v4559
        %v5079 = vunpack.c.l.b16 %v4560
        %v5080 = vunpack.c.l.b16 %v4561
        %v5081 = vunpack.c.h.b16 %v4561
        %v5082 = vunpack.c.l.b16 %v4562
        %v5083 = vunpack.c.h.b16 %v4562
        %v5084 = vunpack.c.l.b16 %v4563
        %v5085 = vunpack.c.h.b16 %v4563
        %v5086 = vunpack.c.l.b16 %v4564
        %v5087 = vunpack.c.h.b16 %v4564
        %v5088 = vunpack.c.l.b16 %v4565
        %v5089 = vunpack.c.l.b16 %v4566
        %v5090 = vunpack.c.h.b16 %v4566
        %v5091 = vunpack.c.l.b16 %v4567
        %v5092 = vunpack.c.h.b16 %v4567
        %v5093 = vunpack.c.l.b16 %v4568
        %v5094 = vunpack.c.h.b16 %v4568
        %v5095 = vunpack.c.l.b16 %v4569
        %v5096 = vunpack.c.h.b16 %v4569
        %v5097 = vunpack.c.l.b16 %v4570
        %v5098 = vunpack.c.l.b16 %v4571
        %v5099 = vunpack.c.h.b16 %v4571
        %v5100 = vunpack.c.l.b16 %v4572
        %v5101 = vunpack.c.h.b16 %v4572
        %v5102 = vunpack.c.l.b16 %v4573
        %v5103 = vunpack.c.h.b16 %v4573
        %v5104 = vunpack.c.l.b16 %v4574
        %v5105 = vunpack.c.h.b16 %v4574
        %v5106 = vunpack.c.l.b16 %v4575
        %v5107 = vunpack.c.l.b16 %v4576
        %v5108 = vunpack.c.h.b16 %v4576
        %v5109 = vunpack.c.l.b16 %v4577
        %v5110 = vunpack.c.h.b16 %v4577
        %v5111 = vunpack.c.l.b16 %v4578
        %v5112 = vunpack.c.h.b16 %v4578
        %v5113 = vunpack.c.l.b16 %v4579
        %v5114 = vunpack.c.h.b16 %v4579
        %v5115 = vunpack.c.l.b16 %v4580
        %v5116 = vunpack.c.l.b16 %v4581
        %v5117 = vunpack.c.h.b16 %v4581
        %v5118 = vunpack.c.l.b16 %v4582
        %v5119 = vunpack.c.h.b16 %v4582
        %v5120 = vunpack.c.l.b16 %v4583
        %v5121 = vunpack.c.h.b16 %v4583
        %v5122 = vunpack.c.l.b16 %v4584
        %v5123 = vunpack.c.h.b16 %v4584
        %v5124 = vunpack.c.l.b16 %v4585
        %v5125 = vunpack.c.l.b16 %v4586
        %v5126 = vunpack.c.h.b16 %v4586
        %v5127 = vunpack.c.l.b16 %v4587
        %v5128 = vunpack.c.h.b16 %v4587
        %v5129 = vunpack.c.l.b16 %v4588
        %v5130 = vunpack.c.h.b16 %v4588
        %v5131 = vunpack.c.l.b16 %v4589
        %v5132 = vunpack.c.h.b16 %v4589
        %v5133 = vunpack.c.l.b16 %v4590
        %v5134 = vunpack.c.l.b16 %v4591
        %v5135 = vunpack.c.h.b16 %v4591
        %v5136 = vunpack.c.l.b16 %v4592
        %v5137 = vunpack.c.h.b16 %v4592
        %v5138 = vunpack.c.l.b16 %v4593
        %v5139 = vunpack.c.h.b16 %v4593
        %v5140 = vunpack.c.l.b16 %v4594
        %v5141 = vunpack.c.h.b16 %v4594
        %v5142 = vunpack.c.l.b16 %v4595
        %v5143 = vunpack.c.l.b16 %v4596
        %v5144 = vunpack.c.h.b16 %v4596
        %v5145 = vunpack.c.l.b16 %v4597
        %v5146 = vunpack.c.h.b16 %v4597
        %v5147 = vunpack.c.l.b16 %v4598
        %v5148 = vunpack.c.h.b16 %v4598
        %v5149 = vunpack.c.l.b16 %v4599
        %v5150 = vunpack.c.h.b16 %v4599
        %v5151 = vunpack.c.l.b16 %v4600
        %v5152 = vunpack.c.l.b16 %v4601
        %v5153 = vunpack.c.h.b16 %v4601
        %v5154 = vunpack.c.l.b16 %v4602
        %v5155 = vunpack.c.h.b16 %v4602
        %v5156 = vunpack.c.l.b16 %v4603
        %v5157 = vunpack.c.h.b16 %v4603
        %v5158 = vunpack.c.l.b16 %v4604
        %v5159 = vunpack.c.h.b16 %v4604
        %v5160 = vunpack.c.l.b16 %v4605
        %v5161 = vunpack.c.l.b16 %v4606
        %v5162 = vunpack.c.h.b16 %v4606
        %v5163 = vunpack.c.l.b16 %v4607
        %v5164 = vunpack.c.h.b16 %v4607
        %v5165 = vunpack.c.l.b16 %v4608
        %v5166 = vunpack.c.h.b16 %v4608
        %v5167 = vunpack.c.l.b16 %v4609
        %v5168 = vunpack.c.h.b16 %v4609
        %v5169 = vunpack.c.l.b16 %v4610
        %v5170 = vunpack.c.l.b16 %v4611
        %v5171 = vunpack.c.h.b16 %v4611
        %v5172 = vunpack.c.l.b16 %v4612
        %v5173 = vunpack.c.h.b16 %v4612
        %v5174 = vunpack.c.l.b16 %v4613
        %v5175 = vunpack.c.h.b16 %v4613
        %v5176 = vunpack.c.l.b16 %v4614
        %v5177 = vunpack.c.h.b16 %v4614
        %v5178 = vunpack.c.l.b16 %v4615
        %v5179 = vunpack.c.l.b16 %v4616
        %v5180 = vunpack.c.h.b16 %v4616
        %v5181 = vunpack.c.l.b16 %v4617
        %v5182 = vunpack.c.h.b16 %v4617
        %v5183 = vunpack.c.l.b16 %v4618
        %v5184 = vunpack.c.h.b16 %v4618
        %v5185 = vunpack.c.l.b16 %v4619
        %v5186 = vunpack.c.h.b16 %v4619
        %v5187 = vunpack.c.l.b16 %v4620
        %v5188 = vunpack.c.l.b16 %v4621
        %v5189 = vunpack.c.h.b16 %v4621
        %v5190 = vunpack.c.l.b16 %v4622
        %v5191 = vunpack.c.h.b16 %v4622
        %v5192 = vunpack.c.l.b16 %v4623
        %v5193 = vunpack.c.h.b16 %v4623
        %v5194 = vunpack.c.l.b16 %v4624
        %v5195 = vunpack.c.h.b16 %v4624
        %v5196 = vunpack.c.l.b16 %v4625
        %v5197 = vunpack.c.l.b16 %v4626
        %v5198 = vunpack.c.h.b16 %v4626
        %v5199 = vunpack.c.l.b16 %v4627
        %v5200 = vunpack.c.h.b16 %v4627
        %v5201 = vunpack.c.l.b16 %v4628
        %v5202 = vunpack.c.h.b16 %v4628
        %v5203 = vunpack.c.l.b16 %v4629
        %v5204 = vunpack.c.h.b16 %v4629
        %v5205 = vunpack.c.l.b16 %v4630
        %v5206 = vunpack.c.l.b16 %v4631
        %v5207 = vunpack.c.h.b16 %v4631
        %v5208 = vunpack.c.l.b16 %v4632
        %v5209 = vunpack.c.h.b16 %v4632
        %v5210 = vunpack.c.l.b16 %v4633
        %v5211 = vunpack.c.h.b16 %v4633
        %v5212 = vunpack.c.l.b16 %v4634
        %v5213 = vunpack.c.h.b16 %v4634
        %v5214 = vunpack.c.l.b16 %v4635
        %v5215 = vunpack.c.l.b16 %v4636
        %v5216 = vunpack.c.h.b16 %v4636
        %v5217 = vunpack.c.l.b16 %v4637
        %v5218 = vunpack.c.h.b16 %v4637
        %v5219 = vunpack.c.l.b16 %v4638
        %v5220 = vunpack.c.h.b16 %v4638
        %v5221 = vunpack.c.l.b16 %v4639
        %v5222 = vunpack.c.h.b16 %v4639
        %v5223 = vunpack.c.l.b16 %v4640
        %v5224 = vunpack.c.l.b16 %v4641
        %v5225 = vunpack.c.h.b16 %v4641
        %v5226 = vunpack.c.l.b16 %v4642
        %v5227 = vunpack.c.h.b16 %v4642
        %v5228 = vunpack.c.l.b16 %v4643
        %v5229 = vunpack.c.h.b16 %v4643
        %v5230 = vunpack.c.l.b16 %v4644
        %v5231 = vunpack.c.h.b16 %v4644
        %v5232 = vunpack.c.l.b16 %v4645
        %v5233 = vunpack.c.l.b16 %v4646
        %v5234 = vunpack.c.h.b16 %v4646
        %v5235 = vunpack.c.l.b16 %v4647
        %v5236 = vunpack.c.h.b16 %v4647
        %v5237 = vunpack.c.l.b16 %v4648
        %v5238 = vunpack.c.h.b16 %v4648
        %v5239 = vunpack.c.l.b16 %v4649
        %v5240 = vunpack.c.h.b16 %v4649
        %v5241 = vunpack.c.l.b16 %v4650
        %v5242 = vunpack.c.l.b16 %v4651
        %v5243 = vunpack.c.h.b16 %v4651
        %v5244 = vunpack.c.l.b16 %v4652
        %v5245 = vunpack.c.h.b16 %v4652
        %v5246 = vunpack.c.l.b16 %v4653
        %v5247 = vunpack.c.h.b16 %v4653
        %v5248 = vunpack.c.l.b16 %v4654
        %v5249 = vunpack.c.h.b16 %v4654
        %v5250 = vunpack.c.l.b16 %v4655
        %v5251 = vunpack.c.l.b16 %v4656
        %v5252 = vunpack.c.h.b16 %v4656
        %v5253 = vunpack.c.l.b16 %v4657
        %v5254 = vunpack.c.h.b16 %v4657
        %v5255 = vunpack.c.l.b16 %v4658
        %v5256 = vunpack.c.h.b16 %v4658
        %v5257 = vunpack.c.l.b16 %v4659
        %v5258 = vunpack.c.h.b16 %v4659
        %v5259 = vunpack.c.l.b16 %v4660
        %v5260 = vpack.c.b16 %v4981, %v4972
        %v5261 = vpack.c.b16 %v4982, %v4973
        %v5262 = vpack.c.b16 %v4983, %v4974
        %v5263 = vpack.c.b16 %v4984, %v4975
        %v5264 = vpack.c.b16 %v4985, %v4976
        %v5265 = vpack.c.b16 %v4986, %v4977
        %v5266 = vpack.c.b16 %v4987, %v4978
        %v5267 = vpack.c.b16 %v4988, %v4979
        %v5268 = vpack.c.b16 %v4989, %v4980
        %v5269 = vpack.c.b16 %v4999, %v4990
        %v5270 = vpack.c.b16 %v5000, %v4991
        %v5271 = vpack.c.b16 %v5001, %v4992
        %v5272 = vpack.c.b16 %v5002, %v4993
        %v5273 = vpack.c.b16 %v5003, %v4994
        %v5274 = vpack.c.b16 %v5004, %v4995
        %v5275 = vpack.c.b16 %v5005, %v4996
        %v5276 = vpack.c.b16 %v5006, %v4997
        %v5277 = vpack.c.b16 %v5007, %v4998
        %v5278 = vpack.c.b16 %v5017, %v5008
        %v5279 = vpack.c.b16 %v5018, %v5009
        %v5280 = vpack.c.b16 %v5019, %v5010
        %v5281 = vpack.c.b16 %v5020, %v5011
        %v5282 = vpack.c.b16 %v5021, %v5012
        %v5283 = vpack.c.b16 %v5022, %v5013
        %v5284 = vpack.c.b16 %v5023, %v5014
        %v5285 = vpack.c.b16 %v5024, %v5015
        %v5286 = vpack.c.b16 %v5025, %v5016
        %v5287 = vpack.c.b16 %v5035, %v5026
        %v5288 = vpack.c.b16 %v5036, %v5027
        %v5289 = vpack.c.b16 %v5037, %v5028
        %v5290 = vpack.c.b16 %v5038, %v5029
        %v5291 = vpack.c.b16 %v5039, %v5030
        %v5292 = vpack.c.b16 %v5040, %v5031
        %v5293 = vpack.c.b16 %v5041, %v5032
        %v5294 = vpack.c.b16 %v5042, %v5033
        %v5295 = vpack.c.b16 %v5043, %v5034
        %v5296 = vpack.c.b16 %v5053, %v5044
        %v5297 = vpack.c.b16 %v5054, %v5045
        %v5298 = vpack.c.b16 %v5055, %v5046
        %v5299 = vpack.c.b16 %v5056, %v5047
        %v5300 = vpack.c.b16 %v5057, %v5048
        %v5301 = vpack.c.b16 %v5058, %v5049
        %v5302 = vpack.c.b16 %v5059, %v5050
        %v5303 = vpack.c.b16 %v5060, %v5051
        %v5304 = vpack.c.b16 %v5061, %v5052
        %v5305 = vpack.c.b16 %v5071, %v5062
        %v5306 = vpack.c.b16 %v5072, %v5063
        %v5307 = vpack.c.b16 %v5073, %v5064
        %v5308 = vpack.c.b16 %v5074, %v5065
        %v5309 = vpack.c.b16 %v5075, %v5066
        %v5310 = vpack.c.b16 %v5076, %v5067
        %v5311 = vpack.c.b16 %v5077, %v5068
        %v5312 = vpack.c.b16 %v5078, %v5069
        %v5313 = vpack.c.b16 %v5079, %v5070
        %v5314 = vpack.c.b16 %v5089, %v5080
        %v5315 = vpack.c.b16 %v5090, %v5081
        %v5316 = vpack.c.b16 %v5091, %v5082
        %v5317 = vpack.c.b16 %v5092, %v5083
        %v5318 = vpack.c.b16 %v5093, %v5084
        %v5319 = vpack.c.b16 %v5094, %v5085
        %v5320 = vpack.c.b16 %v5095, %v5086
        %v5321 = vpack.c.b16 %v5096, %v5087
        %v5322 = vpack.c.b16 %v5097, %v5088
        %v5323 = vpack.c.b16 %v5107, %v5098
        %v5324 = vpack.c.b16 %v5108, %v5099
        %v5325 = vpack.c.b16 %v5109, %v5100
        %v5326 = vpack.c.b16 %v5110, %v5101
        %v5327 = vpack.c.b16 %v5111, %v5102
        %v5328 = vpack.c.b16 %v5112, %v5103
        %v5329 = vpack.c.b16 %v5113, %v5104
        %v5330 = vpack.c.b16 %v5114, %v5105
        %v5331 = vpack.c.b16 %v5115, %v5106
        %v5332 = vpack.c.b16 %v5125, %v5116
        %v5333 = vpack.c.b16 %v5126, %v5117
        %v5334 = vpack.c.b16 %v5127, %v5118
        %v5335 = vpack.c.b16 %v5128, %v5119
        %v5336 = vpack.c.b16 %v5129, %v5120
        %v5337 = vpack.c.b16 %v5130, %v5121
        %v5338 = vpack.c.b16 %v5131, %v5122
        %v5339 = vpack.c.b16 %v5132, %v5123
        %v5340 = vpack.c.b16 %v5133, %v5124
        %v5341 = vpack.c.b16 %v5143, %v5134
        %v5342 = vpack.c.b16 %v5144, %v5135
        %v5343 = vpack.c.b16 %v5145, %v5136
        %v5344 = vpack.c.b16 %v5146, %v5137
        %v5345 = vpack.c.b16 %v5147, %v5138
        %v5346 = vpack.c.b16 %v5148, %v5139
        %v5347 = vpack.c.b16 %v5149, %v5140
        %v5348 = vpack.c.b16 %v5150, %v5141
        %v5349 = vpack.c.b16 %v5151, %v5142
        %v5350 = vpack.c.b16 %v5161, %v5152
        %v5351 = vpack.c.b16 %v5162, %v5153
        %v5352 = vpack.c.b16 %v5163, %v5154
        %v5353 = vpack.c.b16 %v5164, %v5155
        %v5354 = vpack.c.b16 %v5165, %v5156
        %v5355 = vpack.c.b16 %v5166, %v5157
        %v5356 = vpack.c.b16 %v5167, %v5158
        %v5357 = vpack.c.b16 %v5168, %v5159
        %v5358 = vpack.c.b16 %v5169, %v5160
        %v5359 = vpack.c.b16 %v5179, %v5170
        %v5360 = vpack.c.b16 %v5180, %v5171
        %v5361 = vpack.c.b16 %v5181, %v5172
        %v5362 = vpack.c.b16 %v5182, %v5173
        %v5363 = vpack.c.b16 %v5183, %v5174
        %v5364 = vpack.c.b16 %v5184, %v5175
        %v5365 = vpack.c.b16 %v5185, %v5176
        %v5366 = vpack.c.b16 %v5186, %v5177
        %v5367 = vpack.c.b16 %v5187, %v5178
        %v5368 = vpack.c.b16 %v5197, %v5188
        %v5369 = vpack.c.b16 %v5198, %v5189
        %v5370 = vpack.c.b16 %v5199, %v5190
        %v5371 = vpack.c.b16 %v5200, %v5191
        %v5372 = vpack.c.b16 %v5201, %v5192
        %v5373 = vpack.c.b16 %v5202, %v5193
        %v5374 = vpack.c.b16 %v5203, %v5194
        %v5375 = vpack.c.b16 %v5204, %v5195
        %v5376 = vpack.c.b16 %v5205, %v5196
        %v5377 = vpack.c.b16 %v5215, %v5206
        %v5378 = vpack.c.b16 %v5216, %v5207
        %v5379 = vpack.c.b16 %v5217, %v5208
        %v5380 = vpack.c.b16 %v5218, %v5209
        %v5381 = vpack.c.b16 %v5219, %v5210
        %v5382 = vpack.c.b16 %v5220, %v5211
        %v5383 = vpack.c.b16 %v5221, %v5212
        %v5384 = vpack.c.b16 %v5222, %v5213
        %v5385 = vpack.c.b16 %v5223, %v5214
        %v5386 = vpack.c.b16 %v5233, %v5224
        %v5387 = vpack.c.b16 %v5234, %v5225
        %v5388 = vpack.c.b16 %v5235, %v5226
        %v5389 = vpack.c.b16 %v5236, %v5227
        %v5390 = vpack.c.b16 %v5237, %v5228
        %v5391 = vpack.c.b16 %v5238, %v5229
        %v5392 = vpack.c.b16 %v5239, %v5230
        %v5393 = vpack.c.b16 %v5240, %v5231
        %v5394 = vpack.c.b16 %v5241, %v5232
        %v5395 = vpack.c.b16 %v5251, %v5242
        %v5396 = vpack.c.b16 %v5252, %v5243
        %v5397 = vpack.c.b16 %v5253, %v5244
        %v5398 = vpack.c.b16 %v5254, %v5245
        %v5399 = vpack.c.b16 %v5255, %v5246
        %v5400 = vpack.c.b16 %v5256, %v5247
        %v5401 = vpack.c.b16 %v5257, %v5248
        %v5402 = vpack.c.b16 %v5258, %v5249
        %v5403 = vpack.c.b16 %v5259, %v5250
        %v5692 = vunpack.c.l.b16 %v4661
        %v5693 = vunpack.c.l.b16 %v4662
        %v5694 = vunpack.c.l.b16 %v4663
        %v5695 = vunpack.c.l.b16 %v4664
        %v5696 = vunpack.c.l.b16 %v4665
        %v5697 = vunpack.c.l.b16 %v4666
        %v5698 = vunpack.c.l.b16 %v4667
        %v5699 = vunpack.c.l.b16 %v4668
        %v5700 = vunpack.c.l.b16 %v4669
        %v5701 = vunpack.c.l.b16 %v4670
        %v5702 = vunpack.c.l.b16 %v4671
        %v5703 = vunpack.c.l.b16 %v4672
        %v5704 = vunpack.c.l.b16 %v4673
        %v5705 = vunpack.c.l.b16 %v4674
        %v5706 = vunpack.c.l.b16 %v4675
        %v5707 = vunpack.c.l.b16 %v4676
        %v5708 = vunpack.c.l.b16 %v4677
        %v5709 = vunpack.c.l.b16 %v4678
        %v5710 = vunpack.c.l.b16 %v4679
        %v5711 = vunpack.c.l.b16 %v4680
        %v5712 = vunpack.c.l.b16 %v4681
        %v5713 = vunpack.c.l.b16 %v4682
        %v5714 = vunpack.c.l.b16 %v4683
        %v5715 = vunpack.c.l.b16 %v4684
        %v5716 = vunpack.c.l.b16 %v4685
        %v5717 = vunpack.c.l.b16 %v4686
        %v5718 = vunpack.c.l.b16 %v4687
        %v5719 = vunpack.c.l.b16 %v4688
        %v5720 = vunpack.c.l.b16 %v4689
        %v5721 = vunpack.c.l.b16 %v4690
        %v5722 = vunpack.c.l.b16 %v4691
        %v5723 = vunpack.c.l.b16 %v4692
        %v5724 = vunpack.c.l.b16 %v4693
        %v5725 = vunpack.c.l.b16 %v4694
        %v5726 = vunpack.c.l.b16 %v4695
        %v5727 = vunpack.c.l.b16 %v4696
        %v5728 = vunpack.c.l.b16 %v4697
        %v5729 = vunpack.c.l.b16 %v4698
        %v5730 = vunpack.c.l.b16 %v4699
        %v5731 = vunpack.c.l.b16 %v4700
        %v5732 = vunpack.c.l.b16 %v4701
        %v5733 = vunpack.c.l.b16 %v4702
        %v5734 = vunpack.c.l.b16 %v4703
        %v5735 = vunpack.c.l.b16 %v4704
        %v5736 = vunpack.c.l.b16 %v4705
        %v5737 = vunpack.c.l.b16 %v4706
        %v5738 = vunpack.c.l.b16 %v4707
        %v5739 = vunpack.c.l.b16 %v4708
        %v5740 = vunpack.c.l.b16 %v4709
        %v5741 = vunpack.c.l.b16 %v4710
        %v5742 = vunpack.c.l.b16 %v4711
        %v5743 = vunpack.c.l.b16 %v4712
        %v5744 = vunpack.c.l.b16 %v4713
        %v5745 = vunpack.c.l.b16 %v4714
        %v5746 = vunpack.c.l.b16 %v4715
        %v5747 = vunpack.c.l.b16 %v4716
        %v5748 = vunpack.c.l.b16 %v4717
        %v5749 = vunpack.c.l.b16 %v4718
        %v5750 = vunpack.c.l.b16 %v4719
        %v5751 = vunpack.c.l.b16 %v4720
        %v5752 = vunpack.c.l.b16 %v4721
        %v5753 = vunpack.c.l.b16 %v4722
        %v5754 = vunpack.c.l.b16 %v4723
        %v5755 = vunpack.c.l.b16 %v4724
        %v5756 = vunpack.c.l.b16 %v4725
        %v5757 = vunpack.c.l.b16 %v4726
        %v5758 = vunpack.c.l.b16 %v4727
        %v5759 = vunpack.c.l.b16 %v4728
        %v5760 = vunpack.c.l.b16 %v4729
        %v5761 = vunpack.c.l.b16 %v4730
        %v5762 = vunpack.c.l.b16 %v4731
        %v5763 = vunpack.c.l.b16 %v4732
        %v5764 = vunpack.c.l.b16 %v4733
        %v5765 = vunpack.c.l.b16 %v4734
        %v5766 = vunpack.c.l.b16 %v4735
        %v5767 = vunpack.c.l.b16 %v4736
        %v5768 = vunpack.c.l.b16 %v4737
        %v5769 = vunpack.c.l.b16 %v4738
        %v5770 = vunpack.c.l.b16 %v4739
        %v5771 = vunpack.c.l.b16 %v4740
        %v5772 = vunpack.c.l.b16 %v4741
        %v5773 = vunpack.c.l.b16 %v4742
        %v5774 = vunpack.c.l.b16 %v4743
        %v5775 = vunpack.c.l.b16 %v4744
        %v5776 = vunpack.c.l.b16 %v4745
        %v5777 = vunpack.c.l.b16 %v4746
        %v5778 = vunpack.c.l.b16 %v4747
        %v5779 = vunpack.c.l.b16 %v4748
        %v5780 = vunpack.c.l.b16 %v4749
        %v5781 = vunpack.c.l.b16 %v4750
        %v5782 = vunpack.c.l.b16 %v4751
        %v5783 = vunpack.c.l.b16 %v4752
        %v5784 = vunpack.c.l.b16 %v4753
        %v5785 = vunpack.c.l.b16 %v4754
        %v5786 = vunpack.c.l.b16 %v4755
        %v5787 = vunpack.c.l.b16 %v4756
        %v5788 = vunpack.c.l.b16 %v4757
        %v5789 = vunpack.c.l.b16 %v4758
        %v5790 = vunpack.c.l.b16 %v4759
        %v5791 = vunpack.c.l.b16 %v4760
        %v5792 = vunpack.c.l.b16 %v4761
        %v5793 = vunpack.c.l.b16 %v4762
        %v5794 = vunpack.c.l.b16 %v4763
        %v5795 = vunpack.c.l.b16 %v4764
        %v5796 = vunpack.c.l.b16 %v4765
        %v5797 = vunpack.c.l.b16 %v4766
        %v5798 = vunpack.c.l.b16 %v4767
        %v5799 = vunpack.c.l.b16 %v4768
        %v5800 = vunpack.c.l.b16 %v4769
        %v5801 = vunpack.c.l.b16 %v4770
        %v5802 = vunpack.c.l.b16 %v4771
        %v5803 = vunpack.c.l.b16 %v4772
        %v5804 = vunpack.c.l.b16 %v4773
        %v5805 = vunpack.c.l.b16 %v4774
        %v5806 = vunpack.c.l.b16 %v4775
        %v5807 = vunpack.c.l.b16 %v4776
        %v5808 = vunpack.c.l.b16 %v4777
        %v5809 = vunpack.c.l.b16 %v4778
        %v5810 = vunpack.c.l.b16 %v4779
        %v5811 = vunpack.c.l.b16 %v4780
        %v5812 = vunpack.c.l.b16 %v4781
        %v5813 = vunpack.c.l.b16 %v4782
        %v5814 = vunpack.c.l.b16 %v4783
        %v5815 = vunpack.c.l.b16 %v4784
        %v5816 = vunpack.c.l.b16 %v4785
        %v5817 = vunpack.c.l.b16 %v4786
        %v5818 = vunpack.c.l.b16 %v4787
        %v5819 = vunpack.c.l.b16 %v4788
        %v5820 = vunpack.c.l.b16 %v4789
        %v5821 = vunpack.c.l.b16 %v4790
        %v5822 = vunpack.c.l.b16 %v4791
        %v5823 = vunpack.c.l.b16 %v4792
        %v5824 = vunpack.c.l.b16 %v4793
        %v5825 = vunpack.c.l.b16 %v4794
        %v5826 = vunpack.c.l.b16 %v4795
        %v5827 = vunpack.c.l.b16 %v4796
        %v5828 = vunpack.c.l.b16 %v4797
        %v5829 = vunpack.c.l.b16 %v4798
        %v5830 = vunpack.c.l.b16 %v4799
        %v5831 = vunpack.c.l.b16 %v4800
        %v5832 = vunpack.c.l.b16 %v4801
        %v5833 = vunpack.c.l.b16 %v4802
        %v5834 = vunpack.c.l.b16 %v4803
        %v5835 = vunpack.c.l.b16 %v4804
        %v5836 = vpack.c.b16 %v5693, %v5692
        %v5837 = vpack.c.b16 %v5695, %v5694
        %v5838 = vpack.c.b16 %v5697, %v5696
        %v5839 = vpack.c.b16 %v5699, %v5698
        %v5840 = vpack.c.b16 %v5701, %v5700
        %v5841 = vpack.c.b16 %v5703, %v5702
        %v5842 = vpack.c.b16 %v5705, %v5704
        %v5843 = vpack.c.b16 %v5707, %v5706
        %v5844 = vpack.c.b16 %v5709, %v5708
        %v5845 = vpack.c.b16 %v5711, %v5710
        %v5846 = vpack.c.b16 %v5713, %v5712
        %v5847 = vpack.c.b16 %v5715, %v5714
        %v5848 = vpack.c.b16 %v5717, %v5716
        %v5849 = vpack.c.b16 %v5719, %v5718
        %v5850 = vpack.c.b16 %v5721, %v5720
        %v5851 = vpack.c.b16 %v5723, %v5722
        %v5852 = vpack.c.b16 %v5725, %v5724
        %v5853 = vpack.c.b16 %v5727, %v5726
        %v5854 = vpack.c.b16 %v5729, %v5728
        %v5855 = vpack.c.b16 %v5731, %v5730
        %v5856 = vpack.c.b16 %v5733, %v5732
        %v5857 = vpack.c.b16 %v5735, %v5734
        %v5858 = vpack.c.b16 %v5737, %v5736
        %v5859 = vpack.c.b16 %v5739, %v5738
        %v5860 = vpack.c.b16 %v5741, %v5740
        %v5861 = vpack.c.b16 %v5743, %v5742
        %v5862 = vpack.c.b16 %v5745, %v5744
        %v5863 = vpack.c.b16 %v5747, %v5746
        %v5864 = vpack.c.b16 %v5749, %v5748
        %v5865 = vpack.c.b16 %v5751, %v5750
        %v5866 = vpack.c.b16 %v5753, %v5752
        %v5867 = vpack.c.b16 %v5755, %v5754
        %v5868 = vpack.c.b16 %v5757, %v5756
        %v5869 = vpack.c.b16 %v5759, %v5758
        %v5870 = vpack.c.b16 %v5761, %v5760
        %v5871 = vpack.c.b16 %v5763, %v5762
        %v5872 = vpack.c.b16 %v5765, %v5764
        %v5873 = vpack.c.b16 %v5767, %v5766
        %v5874 = vpack.c.b16 %v5769, %v5768
        %v5875 = vpack.c.b16 %v5771, %v5770
        %v5876 = vpack.c.b16 %v5773, %v5772
        %v5877 = vpack.c.b16 %v5775, %v5774
        %v5878 = vpack.c.b16 %v5777, %v5776
        %v5879 = vpack.c.b16 %v5779, %v5778
        %v5880 = vpack.c.b16 %v5781, %v5780
        %v5881 = vpack.c.b16 %v5783, %v5782
        %v5882 = vpack.c.b16 %v5785, %v5784
        %v5883 = vpack.c.b16 %v5787, %v5786
        %v5884 = vpack.c.b16 %v5789, %v5788
        %v5885 = vpack.c.b16 %v5791, %v5790
        %v5886 = vpack.c.b16 %v5793, %v5792
        %v5887 = vpack.c.b16 %v5795, %v5794
        %v5888 = vpack.c.b16 %v5797, %v5796
        %v5889 = vpack.c.b16 %v5799, %v5798
        %v5890 = vpack.c.b16 %v5801, %v5800
        %v5891 = vpack.c.b16 %v5803, %v5802
        %v5892 = vpack.c.b16 %v5805, %v5804
        %v5893 = vpack.c.b16 %v5807, %v5806
        %v5894 = vpack.c.b16 %v5809, %v5808
        %v5895 = vpack.c.b16 %v5811, %v5810
        %v5896 = vpack.c.b16 %v5813, %v5812
        %v5897 = vpack.c.b16 %v5815, %v5814
        %v5898 = vpack.c.b16 %v5817, %v5816
        %v5899 = vpack.c.b16 %v5819, %v5818
        %v5900 = vpack.c.b16 %v5821, %v5820
        %v5901 = vpack.c.b16 %v5823, %v5822
        %v5902 = vpack.c.b16 %v5825, %v5824
        %v5903 = vpack.c.b16 %v5827, %v5826
        %v5904 = vpack.c.b16 %v5829, %v5828
        %v5905 = vpack.c.b16 %v5831, %v5830
        %v5906 = vpack.c.b16 %v5833, %v5832
        %v5907 = vpack.c.b16 %v5835, %v5834
        %5980 = vmatprep.subr.bf16.mxu0 0
        %5981 = vmatpush1.bf16.msra.mxu0 %v5843
        %5982 = vmatprep.subr.bf16.mxu0 0
        %5983 = vmatpush1.bf16.msra.mxu0 %v5842
        %5984 = vmatprep.subr.bf16.mxu0 0
        %5985 = vmatpush1.bf16.msra.mxu0 %v5841
        %5986 = vmatprep.subr.bf16.mxu0 0
        %5987 = vmatpush1.bf16.msra.mxu0 %v5840
        %5988 = vmatprep.subr.bf16.mxu0 0
        %5989 = vmatpush1.bf16.msra.mxu0 %v5839
        %5990 = vmatprep.subr.bf16.mxu0 0
        %5991 = vmatpush1.bf16.msra.mxu0 %v5838
        %5992 = vmatprep.subr.bf16.mxu0 0
        %5993 = vmatpush1.bf16.msra.mxu0 %v5837
        %5994 = vmatprep.subr.bf16.mxu0 0
        %5995 = vmatpush1.bf16.msra.mxu0 %v5836
        %5996 = vmatprep.subr.bf16.mxu0 0
        %5997 = vmatpush2.bf16.msra.mxu0 %v5851
        %5998 = vmatprep.subr.bf16.mxu0 0
        %5999 = vmatpush2.bf16.msra.mxu0 %v5850
        %6000 = vmatprep.subr.bf16.mxu0 0
        %6001 = vmatpush2.bf16.msra.mxu0 %v5849
        %6002 = vmatprep.subr.bf16.mxu0 0
        %6003 = vmatpush2.bf16.msra.mxu0 %v5848
        %6004 = vmatprep.subr.bf16.mxu0 0
        %6005 = vmatpush2.bf16.msra.mxu0 %v5847
        %6006 = vmatprep.subr.bf16.mxu0 0
        %6007 = vmatpush2.bf16.msra.mxu0 %v5846
        %6008 = vmatprep.subr.bf16.mxu0 0
        %6009 = vmatpush2.bf16.msra.mxu0 %v5845
        %6010 = vmatprep.subr.bf16.mxu0 0
        %6011 = vmatpush2.bf16.msra.mxu0 %v5844
        %6012 = vmatprep.mubr.bf16.mxu0 %v5261
        %6013 = vmatmul.mubr.bf16.gmra.mxu0 %v5260
        %v6014 = vpop.f32.mrf.mxu0
        %v6015 = vadd.f32 %v4810, %v6014
        %v6016 = vpop.f32.mrf.mxu0
        %v6017 = vpop.f32.mrf.mxu0
        %v6018 = vadd.f32 %v4810, %v6017
        %v6019 = vpop.f32.mrf.mxu0
        %6020 = vmatprep.mubr.bf16.mxu0 %v5270
        %6021 = vmatmul.mubr.bf16.gmra.mxu0 %v5269
        %v6022 = vpop.f32.mrf.mxu0
        %v6023 = vadd.f32 %v4810, %v6022
        %v6024 = vpop.f32.mrf.mxu0
        %v6025 = vpop.f32.mrf.mxu0
        %v6026 = vadd.f32 %v4810, %v6025
        %v6027 = vpop.f32.mrf.mxu0
        %6028 = vmatprep.mubr.bf16.mxu0 %v5279
        %6029 = vmatmul.mubr.bf16.gmra.mxu0 %v5278
        %v6030 = vpop.f32.mrf.mxu0
        %v6031 = vadd.f32 %v4810, %v6030
        %v6032 = vpop.f32.mrf.mxu0
        %v6033 = vpop.f32.mrf.mxu0
        %v6034 = vadd.f32 %v4810, %v6033
        %v6035 = vpop.f32.mrf.mxu0
        %6036 = vmatprep.mubr.bf16.mxu0 %v5288
        %6037 = vmatmul.mubr.bf16.gmra.mxu0 %v5287
        %v6038 = vpop.f32.mrf.mxu0
        %v6039 = vadd.f32 %v4810, %v6038
        %v6040 = vpop.f32.mrf.mxu0
        %v6041 = vpop.f32.mrf.mxu0
        %v6042 = vadd.f32 %v4810, %v6041
        %v6043 = vpop.f32.mrf.mxu0
        %6044 = vmatprep.mubr.bf16.mxu0 %v5297
        %6045 = vmatmul.mubr.bf16.gmra.mxu0 %v5296
        %v6046 = vpop.f32.mrf.mxu0
        %v6047 = vadd.f32 %v4810, %v6046
        %v6048 = vpop.f32.mrf.mxu0
        %v6049 = vpop.f32.mrf.mxu0
        %v6050 = vadd.f32 %v4810, %v6049
        %v6051 = vpop.f32.mrf.mxu0
        %6052 = vmatprep.mubr.bf16.mxu0 %v5306
        %6053 = vmatmul.mubr.bf16.gmra.mxu0 %v5305
        %v6054 = vpop.f32.mrf.mxu0
        %v6055 = vadd.f32 %v4810, %v6054
        %v6056 = vpop.f32.mrf.mxu0
        %v6057 = vpop.f32.mrf.mxu0
        %v6058 = vadd.f32 %v4810, %v6057
        %v6059 = vpop.f32.mrf.mxu0
        %6060 = vmatprep.mubr.bf16.mxu0 %v5315
        %6061 = vmatmul.mubr.bf16.gmra.mxu0 %v5314
        %v6062 = vpop.f32.mrf.mxu0
        %v6063 = vadd.f32 %v4810, %v6062
        %v6064 = vpop.f32.mrf.mxu0
        %v6065 = vpop.f32.mrf.mxu0
        %v6066 = vadd.f32 %v4810, %v6065
        %v6067 = vpop.f32.mrf.mxu0
        %6068 = vmatprep.mubr.bf16.mxu0 %v5324
        %6069 = vmatmul.mubr.bf16.gmra.mxu0 %v5323
        %v6070 = vpop.f32.mrf.mxu0
        %v6071 = vadd.f32 %v4810, %v6070
        %v6072 = vpop.f32.mrf.mxu0
        %v6073 = vpop.f32.mrf.mxu0
        %v6074 = vadd.f32 %v4810, %v6073
        %v6075 = vpop.f32.mrf.mxu0
        %6076 = vmatprep.mubr.bf16.mxu0 %v5333
        %6077 = vmatmul.mubr.bf16.gmra.mxu0 %v5332
        %v6078 = vpop.f32.mrf.mxu0
        %v6079 = vadd.f32 %v4810, %v6078
        %v6080 = vpop.f32.mrf.mxu0
        %v6081 = vpop.f32.mrf.mxu0
        %v6082 = vadd.f32 %v4810, %v6081
        %v6083 = vpop.f32.mrf.mxu0
        %6084 = vmatprep.mubr.bf16.mxu0 %v5342
        %6085 = vmatmul.mubr.bf16.gmra.mxu0 %v5341
        %v6086 = vpop.f32.mrf.mxu0
        %v6087 = vadd.f32 %v4810, %v6086
        %v6088 = vpop.f32.mrf.mxu0
        %v6089 = vpop.f32.mrf.mxu0
        %v6090 = vadd.f32 %v4810, %v6089
        %v6091 = vpop.f32.mrf.mxu0
        %6092 = vmatprep.mubr.bf16.mxu0 %v5351
        %6093 = vmatmul.mubr.bf16.gmra.mxu0 %v5350
        %v6094 = vpop.f32.mrf.mxu0
        %v6095 = vadd.f32 %v4810, %v6094
        %v6096 = vpop.f32.mrf.mxu0
        %v6097 = vpop.f32.mrf.mxu0
        %v6098 = vadd.f32 %v4810, %v6097
        %v6099 = vpop.f32.mrf.mxu0
        %6100 = vmatprep.mubr.bf16.mxu0 %v5360
        %6101 = vmatmul.mubr.bf16.gmra.mxu0 %v5359
        %v6102 = vpop.f32.mrf.mxu0
        %v6103 = vadd.f32 %v4810, %v6102
        %v6104 = vpop.f32.mrf.mxu0
        %v6105 = vpop.f32.mrf.mxu0
        %v6106 = vadd.f32 %v4810, %v6105
        %v6107 = vpop.f32.mrf.mxu0
        %6108 = vmatprep.mubr.bf16.mxu0 %v5369
        %6109 = vmatmul.mubr.bf16.gmra.mxu0 %v5368
        %v6110 = vpop.f32.mrf.mxu0
        %v6111 = vadd.f32 %v4810, %v6110
        %v6112 = vpop.f32.mrf.mxu0
        %v6113 = vpop.f32.mrf.mxu0
        %v6114 = vadd.f32 %v4810, %v6113
        %v6115 = vpop.f32.mrf.mxu0
        %6116 = vmatprep.mubr.bf16.mxu0 %v5378
        %6117 = vmatmul.mubr.bf16.gmra.mxu0 %v5377
        %v6118 = vpop.f32.mrf.mxu0
        %v6119 = vadd.f32 %v4810, %v6118
        %v6120 = vpop.f32.mrf.mxu0
        %v6121 = vpop.f32.mrf.mxu0
        %v6122 = vadd.f32 %v4810, %v6121
        %v6123 = vpop.f32.mrf.mxu0
        %6124 = vmatprep.mubr.bf16.mxu0 %v5387
        %6125 = vmatmul.mubr.bf16.gmra.mxu0 %v5386
        %v6126 = vpop.f32.mrf.mxu0
        %v6127 = vadd.f32 %v4810, %v6126
        %v6128 = vpop.f32.mrf.mxu0
        %v6129 = vpop.f32.mrf.mxu0
        %v6130 = vadd.f32 %v4810, %v6129
        %v6131 = vpop.f32.mrf.mxu0
        %6132 = vmatprep.mubr.bf16.mxu0 %v5396
        %6133 = vmatmul.mubr.bf16.gmra.mxu0 %v5395
        %v6134 = vpop.f32.mrf.mxu0
        %v6135 = vadd.f32 %v4810, %v6134
        %v6136 = vpop.f32.mrf.mxu0
        %v6137 = vpop.f32.mrf.mxu0
        %v6138 = vadd.f32 %v4810, %v6137
        %v6139 = vpop.f32.mrf.mxu0
        %6140 = vdwg.mxu0
        %6141 = vmatprep.subr.bf16.mxu0 0
        %6142 = vmatpush1.bf16.msra.mxu0 %v5859
        %6143 = vmatprep.subr.bf16.mxu0 0
        %6144 = vmatpush1.bf16.msra.mxu0 %v5858
        %6145 = vmatprep.subr.bf16.mxu0 0
        %6146 = vmatpush1.bf16.msra.mxu0 %v5857
        %6147 = vmatprep.subr.bf16.mxu0 0
        %6148 = vmatpush1.bf16.msra.mxu0 %v5856
        %6149 = vmatprep.subr.bf16.mxu0 0
        %6150 = vmatpush1.bf16.msra.mxu0 %v5855
        %6151 = vmatprep.subr.bf16.mxu0 0
        %6152 = vmatpush1.bf16.msra.mxu0 %v5854
        %6153 = vmatprep.subr.bf16.mxu0 0
        %6154 = vmatpush1.bf16.msra.mxu0 %v5853
        %6155 = vmatprep.subr.bf16.mxu0 0
        %6156 = vmatpush1.bf16.msra.mxu0 %v5852
        %6157 = vmatprep.subr.bf16.mxu0 0
        %6158 = vmatpush2.bf16.msra.mxu0 %v5867
        %6159 = vmatprep.subr.bf16.mxu0 0
        %6160 = vmatpush2.bf16.msra.mxu0 %v5866
        %6161 = vmatprep.subr.bf16.mxu0 0
        %6162 = vmatpush2.bf16.msra.mxu0 %v5865
        %6163 = vmatprep.subr.bf16.mxu0 0
        %6164 = vmatpush2.bf16.msra.mxu0 %v5864
        %6165 = vmatprep.subr.bf16.mxu0 0
        %6166 = vmatpush2.bf16.msra.mxu0 %v5863
        %6167 = vmatprep.subr.bf16.mxu0 0
        %6168 = vmatpush2.bf16.msra.mxu0 %v5862
        %6169 = vmatprep.subr.bf16.mxu0 0
        %6170 = vmatpush2.bf16.msra.mxu0 %v5861
        %6171 = vmatprep.subr.bf16.mxu0 0
        %6172 = vmatpush2.bf16.msra.mxu0 %v5860
        %6173 = vmatprep.mubr.bf16.mxu0 %v5263
        %6174 = vmatmul.mubr.bf16.gmra.mxu0 %v5262
        %v6175 = vpop.f32.mrf.mxu0
        %v6176 = vadd.f32 %v6015, %v6175
        %v6177 = vpop.f32.mrf.mxu0
        %v6178 = vpop.f32.mrf.mxu0
        %v6179 = vadd.f32 %v6018, %v6178
        %v6180 = vpop.f32.mrf.mxu0
        %6181 = vmatprep.mubr.bf16.mxu0 %v5272
        %6182 = vmatmul.mubr.bf16.gmra.mxu0 %v5271
        %v6183 = vpop.f32.mrf.mxu0
        %v6184 = vadd.f32 %v6023, %v6183
        %v6185 = vpop.f32.mrf.mxu0
        %v6186 = vpop.f32.mrf.mxu0
        %v6187 = vadd.f32 %v6026, %v6186
        %v6188 = vpop.f32.mrf.mxu0
        %6189 = vmatprep.mubr.bf16.mxu0 %v5281
        %6190 = vmatmul.mubr.bf16.gmra.mxu0 %v5280
        %v6191 = vpop.f32.mrf.mxu0
        %v6192 = vadd.f32 %v6031, %v6191
        %v6193 = vpop.f32.mrf.mxu0
        %v6194 = vpop.f32.mrf.mxu0
        %v6195 = vadd.f32 %v6034, %v6194
        %v6196 = vpop.f32.mrf.mxu0
        %6197 = vmatprep.mubr.bf16.mxu0 %v5290
        %6198 = vmatmul.mubr.bf16.gmra.mxu0 %v5289
        %v6199 = vpop.f32.mrf.mxu0
        %v6200 = vadd.f32 %v6039, %v6199
        %v6201 = vpop.f32.mrf.mxu0
        %v6202 = vpop.f32.mrf.mxu0
        %v6203 = vadd.f32 %v6042, %v6202
        %v6204 = vpop.f32.mrf.mxu0
        %6205 = vmatprep.mubr.bf16.mxu0 %v5299
        %6206 = vmatmul.mubr.bf16.gmra.mxu0 %v5298
        %v6207 = vpop.f32.mrf.mxu0
        %v6208 = vadd.f32 %v6047, %v6207
        %v6209 = vpop.f32.mrf.mxu0
        %v6210 = vpop.f32.mrf.mxu0
        %v6211 = vadd.f32 %v6050, %v6210
        %v6212 = vpop.f32.mrf.mxu0
        %6213 = vmatprep.mubr.bf16.mxu0 %v5308
        %6214 = vmatmul.mubr.bf16.gmra.mxu0 %v5307
        %v6215 = vpop.f32.mrf.mxu0
        %v6216 = vadd.f32 %v6055, %v6215
        %v6217 = vpop.f32.mrf.mxu0
        %v6218 = vpop.f32.mrf.mxu0
        %v6219 = vadd.f32 %v6058, %v6218
        %v6220 = vpop.f32.mrf.mxu0
        %6221 = vmatprep.mubr.bf16.mxu0 %v5317
        %6222 = vmatmul.mubr.bf16.gmra.mxu0 %v5316
        %v6223 = vpop.f32.mrf.mxu0
        %v6224 = vadd.f32 %v6063, %v6223
        %v6225 = vpop.f32.mrf.mxu0
        %v6226 = vpop.f32.mrf.mxu0
        %v6227 = vadd.f32 %v6066, %v6226
        %v6228 = vpop.f32.mrf.mxu0
        %6229 = vmatprep.mubr.bf16.mxu0 %v5326
        %6230 = vmatmul.mubr.bf16.gmra.mxu0 %v5325
        %v6231 = vpop.f32.mrf.mxu0
        %v6232 = vadd.f32 %v6071, %v6231
        %v6233 = vpop.f32.mrf.mxu0
        %v6234 = vpop.f32.mrf.mxu0
        %v6235 = vadd.f32 %v6074, %v6234
        %v6236 = vpop.f32.mrf.mxu0
        %6237 = vmatprep.mubr.bf16.mxu0 %v5335
        %6238 = vmatmul.mubr.bf16.gmra.mxu0 %v5334
        %v6239 = vpop.f32.mrf.mxu0
        %v6240 = vadd.f32 %v6079, %v6239
        %v6241 = vpop.f32.mrf.mxu0
        %v6242 = vpop.f32.mrf.mxu0
        %v6243 = vadd.f32 %v6082, %v6242
        %v6244 = vpop.f32.mrf.mxu0
        %6245 = vmatprep.mubr.bf16.mxu0 %v5344
        %6246 = vmatmul.mubr.bf16.gmra.mxu0 %v5343
        %v6247 = vpop.f32.mrf.mxu0
        %v6248 = vadd.f32 %v6087, %v6247
        %v6249 = vpop.f32.mrf.mxu0
        %v6250 = vpop.f32.mrf.mxu0
        %v6251 = vadd.f32 %v6090, %v6250
        %v6252 = vpop.f32.mrf.mxu0
        %6253 = vmatprep.mubr.bf16.mxu0 %v5353
        %6254 = vmatmul.mubr.bf16.gmra.mxu0 %v5352
        %v6255 = vpop.f32.mrf.mxu0
        %v6256 = vadd.f32 %v6095, %v6255
        %v6257 = vpop.f32.mrf.mxu0
        %v6258 = vpop.f32.mrf.mxu0
        %v6259 = vadd.f32 %v6098, %v6258
        %v6260 = vpop.f32.mrf.mxu0
        %6261 = vmatprep.mubr.bf16.mxu0 %v5362
        %6262 = vmatmul.mubr.bf16.gmra.mxu0 %v5361
        %v6263 = vpop.f32.mrf.mxu0
        %v6264 = vadd.f32 %v6103, %v6263
        %v6265 = vpop.f32.mrf.mxu0
        %v6266 = vpop.f32.mrf.mxu0
        %v6267 = vadd.f32 %v6106, %v6266
        %v6268 = vpop.f32.mrf.mxu0
        %6269 = vmatprep.mubr.bf16.mxu0 %v5371
        %6270 = vmatmul.mubr.bf16.gmra.mxu0 %v5370
        %v6271 = vpop.f32.mrf.mxu0
        %v6272 = vadd.f32 %v6111, %v6271
        %v6273 = vpop.f32.mrf.mxu0
        %v6274 = vpop.f32.mrf.mxu0
        %v6275 = vadd.f32 %v6114, %v6274
        %v6276 = vpop.f32.mrf.mxu0
        %6277 = vmatprep.mubr.bf16.mxu0 %v5380
        %6278 = vmatmul.mubr.bf16.gmra.mxu0 %v5379
        %v6279 = vpop.f32.mrf.mxu0
        %v6280 = vadd.f32 %v6119, %v6279
        %v6281 = vpop.f32.mrf.mxu0
        %v6282 = vpop.f32.mrf.mxu0
        %v6283 = vadd.f32 %v6122, %v6282
        %v6284 = vpop.f32.mrf.mxu0
        %6285 = vmatprep.mubr.bf16.mxu0 %v5389
        %6286 = vmatmul.mubr.bf16.gmra.mxu0 %v5388
        %v6287 = vpop.f32.mrf.mxu0
        %v6288 = vadd.f32 %v6127, %v6287
        %v6289 = vpop.f32.mrf.mxu0
        %v6290 = vpop.f32.mrf.mxu0
        %v6291 = vadd.f32 %v6130, %v6290
        %v6292 = vpop.f32.mrf.mxu0
        %6293 = vmatprep.mubr.bf16.mxu0 %v5398
        %6294 = vmatmul.mubr.bf16.gmra.mxu0 %v5397
        %v6295 = vpop.f32.mrf.mxu0
        %v6296 = vadd.f32 %v6135, %v6295
        %v6297 = vpop.f32.mrf.mxu0
        %v6298 = vpop.f32.mrf.mxu0
        %v6299 = vadd.f32 %v6138, %v6298
        %v6300 = vpop.f32.mrf.mxu0
        %6301 = vdwg.mxu0
        %6302 = vmatprep.subr.bf16.mxu0 0
        %6303 = vmatpush1.bf16.msra.mxu0 %v5875
        %6304 = vmatprep.subr.bf16.mxu0 0
        %6305 = vmatpush1.bf16.msra.mxu0 %v5874
        %6306 = vmatprep.subr.bf16.mxu0 0
        %6307 = vmatpush1.bf16.msra.mxu0 %v5873
        %6308 = vmatprep.subr.bf16.mxu0 0
        %6309 = vmatpush1.bf16.msra.mxu0 %v5872
        %6310 = vmatprep.subr.bf16.mxu0 0
        %6311 = vmatpush1.bf16.msra.mxu0 %v5871
        %6312 = vmatprep.subr.bf16.mxu0 0
        %6313 = vmatpush1.bf16.msra.mxu0 %v5870
        %6314 = vmatprep.subr.bf16.mxu0 0
        %6315 = vmatpush1.bf16.msra.mxu0 %v5869
        %6316 = vmatprep.subr.bf16.mxu0 0
        %6317 = vmatpush1.bf16.msra.mxu0 %v5868
        %6318 = vmatprep.subr.bf16.mxu0 0
        %6319 = vmatpush2.bf16.msra.mxu0 %v5883
        %6320 = vmatprep.subr.bf16.mxu0 0
        %6321 = vmatpush2.bf16.msra.mxu0 %v5882
        %6322 = vmatprep.subr.bf16.mxu0 0
        %6323 = vmatpush2.bf16.msra.mxu0 %v5881
        %6324 = vmatprep.subr.bf16.mxu0 0
        %6325 = vmatpush2.bf16.msra.mxu0 %v5880
        %6326 = vmatprep.subr.bf16.mxu0 0
        %6327 = vmatpush2.bf16.msra.mxu0 %v5879
        %6328 = vmatprep.subr.bf16.mxu0 0
        %6329 = vmatpush2.bf16.msra.mxu0 %v5878
        %6330 = vmatprep.subr.bf16.mxu0 0
        %6331 = vmatpush2.bf16.msra.mxu0 %v5877
        %6332 = vmatprep.subr.bf16.mxu0 0
        %6333 = vmatpush2.bf16.msra.mxu0 %v5876
        %6334 = vmatprep.mubr.bf16.mxu0 %v5265
        %6335 = vmatmul.mubr.bf16.gmra.mxu0 %v5264
        %v6336 = vpop.f32.mrf.mxu0
        %v6337 = vadd.f32 %v6176, %v6336
        %v6338 = vpop.f32.mrf.mxu0
        %v6339 = vpop.f32.mrf.mxu0
        %v6340 = vadd.f32 %v6179, %v6339
        %v6341 = vpop.f32.mrf.mxu0
        %6342 = vmatprep.mubr.bf16.mxu0 %v5274
        %6343 = vmatmul.mubr.bf16.gmra.mxu0 %v5273
        %v6344 = vpop.f32.mrf.mxu0
        %v6345 = vadd.f32 %v6184, %v6344
        %v6346 = vpop.f32.mrf.mxu0
        %v6347 = vpop.f32.mrf.mxu0
        %v6348 = vadd.f32 %v6187, %v6347
        %v6349 = vpop.f32.mrf.mxu0
        %6350 = vmatprep.mubr.bf16.mxu0 %v5283
        %6351 = vmatmul.mubr.bf16.gmra.mxu0 %v5282
        %v6352 = vpop.f32.mrf.mxu0
        %v6353 = vadd.f32 %v6192, %v6352
        %v6354 = vpop.f32.mrf.mxu0
        %v6355 = vpop.f32.mrf.mxu0
        %v6356 = vadd.f32 %v6195, %v6355
        %v6357 = vpop.f32.mrf.mxu0
        %6358 = vmatprep.mubr.bf16.mxu0 %v5292
        %6359 = vmatmul.mubr.bf16.gmra.mxu0 %v5291
        %v6360 = vpop.f32.mrf.mxu0
        %v6361 = vadd.f32 %v6200, %v6360
        %v6362 = vpop.f32.mrf.mxu0
        %v6363 = vpop.f32.mrf.mxu0
        %v6364 = vadd.f32 %v6203, %v6363
        %v6365 = vpop.f32.mrf.mxu0
        %6366 = vmatprep.mubr.bf16.mxu0 %v5301
        %6367 = vmatmul.mubr.bf16.gmra.mxu0 %v5300
        %v6368 = vpop.f32.mrf.mxu0
        %v6369 = vadd.f32 %v6208, %v6368
        %v6370 = vpop.f32.mrf.mxu0
        %v6371 = vpop.f32.mrf.mxu0
        %v6372 = vadd.f32 %v6211, %v6371
        %v6373 = vpop.f32.mrf.mxu0
        %6374 = vmatprep.mubr.bf16.mxu0 %v5310
        %6375 = vmatmul.mubr.bf16.gmra.mxu0 %v5309
        %v6376 = vpop.f32.mrf.mxu0
        %v6377 = vadd.f32 %v6216, %v6376
        %v6378 = vpop.f32.mrf.mxu0
        %v6379 = vpop.f32.mrf.mxu0
        %v6380 = vadd.f32 %v6219, %v6379
        %v6381 = vpop.f32.mrf.mxu0
        %6382 = vmatprep.mubr.bf16.mxu0 %v5319
        %6383 = vmatmul.mubr.bf16.gmra.mxu0 %v5318
        %v6384 = vpop.f32.mrf.mxu0
        %v6385 = vadd.f32 %v6224, %v6384
        %v6386 = vpop.f32.mrf.mxu0
        %v6387 = vpop.f32.mrf.mxu0
        %v6388 = vadd.f32 %v6227, %v6387
        %v6389 = vpop.f32.mrf.mxu0
        %6390 = vmatprep.mubr.bf16.mxu0 %v5328
        %6391 = vmatmul.mubr.bf16.gmra.mxu0 %v5327
        %v6392 = vpop.f32.mrf.mxu0
        %v6393 = vadd.f32 %v6232, %v6392
        %v6394 = vpop.f32.mrf.mxu0
        %v6395 = vpop.f32.mrf.mxu0
        %v6396 = vadd.f32 %v6235, %v6395
        %v6397 = vpop.f32.mrf.mxu0
        %6398 = vmatprep.mubr.bf16.mxu0 %v5337
        %6399 = vmatmul.mubr.bf16.gmra.mxu0 %v5336
        %v6400 = vpop.f32.mrf.mxu0
        %v6401 = vadd.f32 %v6240, %v6400
        %v6402 = vpop.f32.mrf.mxu0
        %v6403 = vpop.f32.mrf.mxu0
        %v6404 = vadd.f32 %v6243, %v6403
        %v6405 = vpop.f32.mrf.mxu0
        %6406 = vmatprep.mubr.bf16.mxu0 %v5346
        %6407 = vmatmul.mubr.bf16.gmra.mxu0 %v5345
        %v6408 = vpop.f32.mrf.mxu0
        %v6409 = vadd.f32 %v6248, %v6408
        %v6410 = vpop.f32.mrf.mxu0
        %v6411 = vpop.f32.mrf.mxu0
        %v6412 = vadd.f32 %v6251, %v6411
        %v6413 = vpop.f32.mrf.mxu0
        %6414 = vmatprep.mubr.bf16.mxu0 %v5355
        %6415 = vmatmul.mubr.bf16.gmra.mxu0 %v5354
        %v6416 = vpop.f32.mrf.mxu0
        %v6417 = vadd.f32 %v6256, %v6416
        %v6418 = vpop.f32.mrf.mxu0
        %v6419 = vpop.f32.mrf.mxu0
        %v6420 = vadd.f32 %v6259, %v6419
        %v6421 = vpop.f32.mrf.mxu0
        %6422 = vmatprep.mubr.bf16.mxu0 %v5364
        %6423 = vmatmul.mubr.bf16.gmra.mxu0 %v5363
        %v6424 = vpop.f32.mrf.mxu0
        %v6425 = vadd.f32 %v6264, %v6424
        %v6426 = vpop.f32.mrf.mxu0
        %v6427 = vpop.f32.mrf.mxu0
        %v6428 = vadd.f32 %v6267, %v6427
        %v6429 = vpop.f32.mrf.mxu0
        %6430 = vmatprep.mubr.bf16.mxu0 %v5373
        %6431 = vmatmul.mubr.bf16.gmra.mxu0 %v5372
        %v6432 = vpop.f32.mrf.mxu0
        %v6433 = vadd.f32 %v6272, %v6432
        %v6434 = vpop.f32.mrf.mxu0
        %v6435 = vpop.f32.mrf.mxu0
        %v6436 = vadd.f32 %v6275, %v6435
        %v6437 = vpop.f32.mrf.mxu0
        %6438 = vmatprep.mubr.bf16.mxu0 %v5382
        %6439 = vmatmul.mubr.bf16.gmra.mxu0 %v5381
        %v6440 = vpop.f32.mrf.mxu0
        %v6441 = vadd.f32 %v6280, %v6440
        %v6442 = vpop.f32.mrf.mxu0
        %v6443 = vpop.f32.mrf.mxu0
        %v6444 = vadd.f32 %v6283, %v6443
        %v6445 = vpop.f32.mrf.mxu0
        %6446 = vmatprep.mubr.bf16.mxu0 %v5391
        %6447 = vmatmul.mubr.bf16.gmra.mxu0 %v5390
        %v6448 = vpop.f32.mrf.mxu0
        %v6449 = vadd.f32 %v6288, %v6448
        %v6450 = vpop.f32.mrf.mxu0
        %v6451 = vpop.f32.mrf.mxu0
        %v6452 = vadd.f32 %v6291, %v6451
        %v6453 = vpop.f32.mrf.mxu0
        %6454 = vmatprep.mubr.bf16.mxu0 %v5400
        %6455 = vmatmul.mubr.bf16.gmra.mxu0 %v5399
        %v6456 = vpop.f32.mrf.mxu0
        %v6457 = vadd.f32 %v6296, %v6456
        %v6458 = vpop.f32.mrf.mxu0
        %v6459 = vpop.f32.mrf.mxu0
        %v6460 = vadd.f32 %v6299, %v6459
        %v6461 = vpop.f32.mrf.mxu0
        %6462 = vdwg.mxu0
        %6463 = vmatprep.subr.bf16.mxu0 0
        %6464 = vmatpush1.bf16.msra.mxu0 %v5891
        %6465 = vmatprep.subr.bf16.mxu0 0
        %6466 = vmatpush1.bf16.msra.mxu0 %v5890
        %6467 = vmatprep.subr.bf16.mxu0 0
        %6468 = vmatpush1.bf16.msra.mxu0 %v5889
        %6469 = vmatprep.subr.bf16.mxu0 0
        %6470 = vmatpush1.bf16.msra.mxu0 %v5888
        %6471 = vmatprep.subr.bf16.mxu0 0
        %6472 = vmatpush1.bf16.msra.mxu0 %v5887
        %6473 = vmatprep.subr.bf16.mxu0 0
        %6474 = vmatpush1.bf16.msra.mxu0 %v5886
        %6475 = vmatprep.subr.bf16.mxu0 0
        %6476 = vmatpush1.bf16.msra.mxu0 %v5885
        %6477 = vmatprep.subr.bf16.mxu0 0
        %6478 = vmatpush1.bf16.msra.mxu0 %v5884
        %6479 = vmatprep.subr.bf16.mxu0 0
        %6480 = vmatpush2.bf16.msra.mxu0 %v5899
        %6481 = vmatprep.subr.bf16.mxu0 0
        %6482 = vmatpush2.bf16.msra.mxu0 %v5898
        %6483 = vmatprep.subr.bf16.mxu0 0
        %6484 = vmatpush2.bf16.msra.mxu0 %v5897
        %6485 = vmatprep.subr.bf16.mxu0 0
        %6486 = vmatpush2.bf16.msra.mxu0 %v5896
        %6487 = vmatprep.subr.bf16.mxu0 0
        %6488 = vmatpush2.bf16.msra.mxu0 %v5895
        %6489 = vmatprep.subr.bf16.mxu0 0
        %6490 = vmatpush2.bf16.msra.mxu0 %v5894
        %6491 = vmatprep.subr.bf16.mxu0 0
        %6492 = vmatpush2.bf16.msra.mxu0 %v5893
        %6493 = vmatprep.subr.bf16.mxu0 0
        %6494 = vmatpush2.bf16.msra.mxu0 %v5892
        %6495 = vmatprep.mubr.bf16.mxu0 %v5267
        %6496 = vmatmul.mubr.bf16.gmra.mxu0 %v5266
        %v6497 = vpop.f32.mrf.mxu0
        %v6498 = vadd.f32 %v6337, %v6497
        %v6499 = vpop.f32.mrf.mxu0
        %v6500 = vpop.f32.mrf.mxu0
        %v6501 = vadd.f32 %v6340, %v6500
        %v6502 = vpop.f32.mrf.mxu0
        %6503 = vmatprep.mubr.bf16.mxu0 %v5276
        %6504 = vmatmul.mubr.bf16.gmra.mxu0 %v5275
        %v6505 = vpop.f32.mrf.mxu0
        %v6506 = vadd.f32 %v6345, %v6505
        %v6507 = vpop.f32.mrf.mxu0
        %v6508 = vpop.f32.mrf.mxu0
        %v6509 = vadd.f32 %v6348, %v6508
        %v6510 = vpop.f32.mrf.mxu0
        %6511 = vmatprep.mubr.bf16.mxu0 %v5285
        %6512 = vmatmul.mubr.bf16.gmra.mxu0 %v5284
        %v6513 = vpop.f32.mrf.mxu0
        %v6514 = vadd.f32 %v6353, %v6513
        %v6515 = vpop.f32.mrf.mxu0
        %v6516 = vpop.f32.mrf.mxu0
        %v6517 = vadd.f32 %v6356, %v6516
        %v6518 = vpop.f32.mrf.mxu0
        %6519 = vmatprep.mubr.bf16.mxu0 %v5294
        %6520 = vmatmul.mubr.bf16.gmra.mxu0 %v5293
        %v6521 = vpop.f32.mrf.mxu0
        %v6522 = vadd.f32 %v6361, %v6521
        %v6523 = vpop.f32.mrf.mxu0
        %v6524 = vpop.f32.mrf.mxu0
        %v6525 = vadd.f32 %v6364, %v6524
        %v6526 = vpop.f32.mrf.mxu0
        %6527 = vmatprep.mubr.bf16.mxu0 %v5303
        %6528 = vmatmul.mubr.bf16.gmra.mxu0 %v5302
        %v6529 = vpop.f32.mrf.mxu0
        %v6530 = vadd.f32 %v6369, %v6529
        %v6531 = vpop.f32.mrf.mxu0
        %v6532 = vpop.f32.mrf.mxu0
        %v6533 = vadd.f32 %v6372, %v6532
        %v6534 = vpop.f32.mrf.mxu0
        %6535 = vmatprep.mubr.bf16.mxu0 %v5312
        %6536 = vmatmul.mubr.bf16.gmra.mxu0 %v5311
        %v6537 = vpop.f32.mrf.mxu0
        %v6538 = vadd.f32 %v6377, %v6537
        %v6539 = vpop.f32.mrf.mxu0
        %v6540 = vpop.f32.mrf.mxu0
        %v6541 = vadd.f32 %v6380, %v6540
        %v6542 = vpop.f32.mrf.mxu0
        %6543 = vmatprep.mubr.bf16.mxu0 %v5321
        %6544 = vmatmul.mubr.bf16.gmra.mxu0 %v5320
        %v6545 = vpop.f32.mrf.mxu0
        %v6546 = vadd.f32 %v6385, %v6545
        %v6547 = vpop.f32.mrf.mxu0
        %v6548 = vpop.f32.mrf.mxu0
        %v6549 = vadd.f32 %v6388, %v6548
        %v6550 = vpop.f32.mrf.mxu0
        %6551 = vmatprep.mubr.bf16.mxu0 %v5330
        %6552 = vmatmul.mubr.bf16.gmra.mxu0 %v5329
        %v6553 = vpop.f32.mrf.mxu0
        %v6554 = vadd.f32 %v6393, %v6553
        %v6555 = vpop.f32.mrf.mxu0
        %v6556 = vpop.f32.mrf.mxu0
        %v6557 = vadd.f32 %v6396, %v6556
        %v6558 = vpop.f32.mrf.mxu0
        %6559 = vmatprep.mubr.bf16.mxu0 %v5339
        %6560 = vmatmul.mubr.bf16.gmra.mxu0 %v5338
        %v6561 = vpop.f32.mrf.mxu0
        %v6562 = vadd.f32 %v6401, %v6561
        %v6563 = vpop.f32.mrf.mxu0
        %v6564 = vpop.f32.mrf.mxu0
        %v6565 = vadd.f32 %v6404, %v6564
        %v6566 = vpop.f32.mrf.mxu0
        %6567 = vmatprep.mubr.bf16.mxu0 %v5348
        %6568 = vmatmul.mubr.bf16.gmra.mxu0 %v5347
        %v6569 = vpop.f32.mrf.mxu0
        %v6570 = vadd.f32 %v6409, %v6569
        %v6571 = vpop.f32.mrf.mxu0
        %v6572 = vpop.f32.mrf.mxu0
        %v6573 = vadd.f32 %v6412, %v6572
        %v6574 = vpop.f32.mrf.mxu0
        %6575 = vmatprep.mubr.bf16.mxu0 %v5357
        %6576 = vmatmul.mubr.bf16.gmra.mxu0 %v5356
        %v6577 = vpop.f32.mrf.mxu0
        %v6578 = vadd.f32 %v6417, %v6577
        %v6579 = vpop.f32.mrf.mxu0
        %v6580 = vpop.f32.mrf.mxu0
        %v6581 = vadd.f32 %v6420, %v6580
        %v6582 = vpop.f32.mrf.mxu0
        %6583 = vmatprep.mubr.bf16.mxu0 %v5366
        %6584 = vmatmul.mubr.bf16.gmra.mxu0 %v5365
        %v6585 = vpop.f32.mrf.mxu0
        %v6586 = vadd.f32 %v6425, %v6585
        %v6587 = vpop.f32.mrf.mxu0
        %v6588 = vpop.f32.mrf.mxu0
        %v6589 = vadd.f32 %v6428, %v6588
        %v6590 = vpop.f32.mrf.mxu0
        %6591 = vmatprep.mubr.bf16.mxu0 %v5375
        %6592 = vmatmul.mubr.bf16.gmra.mxu0 %v5374
        %v6593 = vpop.f32.mrf.mxu0
        %v6594 = vadd.f32 %v6433, %v6593
        %v6595 = vpop.f32.mrf.mxu0
        %v6596 = vpop.f32.mrf.mxu0
        %v6597 = vadd.f32 %v6436, %v6596
        %v6598 = vpop.f32.mrf.mxu0
        %6599 = vmatprep.mubr.bf16.mxu0 %v5384
        %6600 = vmatmul.mubr.bf16.gmra.mxu0 %v5383
        %v6601 = vpop.f32.mrf.mxu0
        %v6602 = vadd.f32 %v6441, %v6601
        %v6603 = vpop.f32.mrf.mxu0
        %v6604 = vpop.f32.mrf.mxu0
        %v6605 = vadd.f32 %v6444, %v6604
        %v6606 = vpop.f32.mrf.mxu0
        %6607 = vmatprep.mubr.bf16.mxu0 %v5393
        %6608 = vmatmul.mubr.bf16.gmra.mxu0 %v5392
        %v6609 = vpop.f32.mrf.mxu0
        %v6610 = vadd.f32 %v6449, %v6609
        %v6611 = vpop.f32.mrf.mxu0
        %v6612 = vpop.f32.mrf.mxu0
        %v6613 = vadd.f32 %v6452, %v6612
        %v6614 = vpop.f32.mrf.mxu0
        %6615 = vmatprep.mubr.bf16.mxu0 %v5402
        %6616 = vmatmul.mubr.bf16.gmra.mxu0 %v5401
        %v6617 = vpop.f32.mrf.mxu0
        %v6618 = vadd.f32 %v6457, %v6617
        %v6619 = vpop.f32.mrf.mxu0
        %v6620 = vpop.f32.mrf.mxu0
        %v6621 = vadd.f32 %v6460, %v6620
        %v6622 = vpop.f32.mrf.mxu0
        %6623 = vdwg.mxu0
        %6624 = vmatprep.subr.bf16.mxu0 0
        %6625 = vmatpush1.bf16.msra.mxu0 %v5907
        %6626 = vmatprep.subr.bf16.mxu0 0
        %6627 = vmatpush1.bf16.msra.mxu0 %v5906
        %6628 = vmatprep.subr.bf16.mxu0 0
        %6629 = vmatpush1.bf16.msra.mxu0 %v5905
        %6630 = vmatprep.subr.bf16.mxu0 0
        %6631 = vmatpush1.bf16.msra.mxu0 %v5904
        %6632 = vmatprep.subr.bf16.mxu0 0
        %6633 = vmatpush1.bf16.msra.mxu0 %v5903
        %6634 = vmatprep.subr.bf16.mxu0 0
        %6635 = vmatpush1.bf16.msra.mxu0 %v5902
        %6636 = vmatprep.subr.bf16.mxu0 0
        %6637 = vmatpush1.bf16.msra.mxu0 %v5901
        %6638 = vmatprep.subr.bf16.mxu0 0
        %6639 = vmatpush1.bf16.msra.mxu0 %v5900
        %6640 = vmatprep.subr.bf16.mxu0 0
        %6641 = vmatpush2.bf16.msra.mxu0 0
        %6642 = vmatprep.subr.bf16.mxu0 0
        %6643 = vmatpush2.bf16.msra.mxu0 0
        %6644 = vmatprep.subr.bf16.mxu0 0
        %6645 = vmatpush2.bf16.msra.mxu0 0
        %6646 = vmatprep.subr.bf16.mxu0 0
        %6647 = vmatpush2.bf16.msra.mxu0 0
        %6648 = vmatprep.subr.bf16.mxu0 0
        %6649 = vmatpush2.bf16.msra.mxu0 0
        %6650 = vmatprep.subr.bf16.mxu0 0
        %6651 = vmatpush2.bf16.msra.mxu0 0
        %6652 = vmatprep.subr.bf16.mxu0 0
        %6653 = vmatpush2.bf16.msra.mxu0 0
        %6654 = vmatprep.subr.bf16.mxu0 0
        %6655 = vmatpush2.bf16.msra.mxu0 0
        %6656 = vmatprep.mubr.bf16.mxu0 0
        %6657 = vmatmul.mubr.bf16.gmra.mxu0 %v5268
        %v6658 = vpop.f32.mrf.mxu0
        %v6659 = vadd.f32 %v6498, %v6658
        %v6660 = vpop.f32.mrf.mxu0
        %v6661 = vpop.f32.mrf.mxu0
        %v6662 = vadd.f32 %v6501, %v6661
        %v6663 = vpop.f32.mrf.mxu0
        %6664 = vmatprep.mubr.bf16.mxu0 0
        %6665 = vmatmul.mubr.bf16.gmra.mxu0 %v5277
        %v6666 = vpop.f32.mrf.mxu0
        %v6667 = vadd.f32 %v6506, %v6666
        %v6668 = vpop.f32.mrf.mxu0
        %v6669 = vpop.f32.mrf.mxu0
        %v6670 = vadd.f32 %v6509, %v6669
        %v6671 = vpop.f32.mrf.mxu0
        %6672 = vmatprep.mubr.bf16.mxu0 0
        %6673 = vmatmul.mubr.bf16.gmra.mxu0 %v5286
        %v6674 = vpop.f32.mrf.mxu0
        %v6675 = vadd.f32 %v6514, %v6674
        %v6676 = vpop.f32.mrf.mxu0
        %v6677 = vpop.f32.mrf.mxu0
        %v6678 = vadd.f32 %v6517, %v6677
        %v6679 = vpop.f32.mrf.mxu0
        %6680 = vmatprep.mubr.bf16.mxu0 0
        %6681 = vmatmul.mubr.bf16.gmra.mxu0 %v5295
        %v6682 = vpop.f32.mrf.mxu0
        %v6683 = vadd.f32 %v6522, %v6682
        %v6684 = vpop.f32.mrf.mxu0
        %v6685 = vpop.f32.mrf.mxu0
        %v6686 = vadd.f32 %v6525, %v6685
        %v6687 = vpop.f32.mrf.mxu0
        %6688 = vmatprep.mubr.bf16.mxu0 0
        %6689 = vmatmul.mubr.bf16.gmra.mxu0 %v5304
        %v6690 = vpop.f32.mrf.mxu0
        %v6691 = vadd.f32 %v6530, %v6690
        %v6692 = vpop.f32.mrf.mxu0
        %v6693 = vpop.f32.mrf.mxu0
        %v6694 = vadd.f32 %v6533, %v6693
        %v6695 = vpop.f32.mrf.mxu0
        %6696 = vmatprep.mubr.bf16.mxu0 0
        %6697 = vmatmul.mubr.bf16.gmra.mxu0 %v5313
        %v6698 = vpop.f32.mrf.mxu0
        %v6699 = vadd.f32 %v6538, %v6698
        %v6700 = vpop.f32.mrf.mxu0
        %v6701 = vpop.f32.mrf.mxu0
        %v6702 = vadd.f32 %v6541, %v6701
        %v6703 = vpop.f32.mrf.mxu0
        %6704 = vmatprep.mubr.bf16.mxu0 0
        %6705 = vmatmul.mubr.bf16.gmra.mxu0 %v5322
        %v6706 = vpop.f32.mrf.mxu0
        %v6707 = vadd.f32 %v6546, %v6706
        %v6708 = vpop.f32.mrf.mxu0
        %v6709 = vpop.f32.mrf.mxu0
        %v6710 = vadd.f32 %v6549, %v6709
        %v6711 = vpop.f32.mrf.mxu0
        %6712 = vmatprep.mubr.bf16.mxu0 0
        %6713 = vmatmul.mubr.bf16.gmra.mxu0 %v5331
        %v6714 = vpop.f32.mrf.mxu0
        %v6715 = vadd.f32 %v6554, %v6714
        %v6716 = vpop.f32.mrf.mxu0
        %v6717 = vpop.f32.mrf.mxu0
        %v6718 = vadd.f32 %v6557, %v6717
        %v6719 = vpop.f32.mrf.mxu0
        %6720 = vmatprep.mubr.bf16.mxu0 0
        %6721 = vmatmul.mubr.bf16.gmra.mxu0 %v5340
        %v6722 = vpop.f32.mrf.mxu0
        %v6723 = vadd.f32 %v6562, %v6722
        %v6724 = vpop.f32.mrf.mxu0
        %v6725 = vpop.f32.mrf.mxu0
        %v6726 = vadd.f32 %v6565, %v6725
        %v6727 = vpop.f32.mrf.mxu0
        %6728 = vmatprep.mubr.bf16.mxu0 0
        %6729 = vmatmul.mubr.bf16.gmra.mxu0 %v5349
        %v6730 = vpop.f32.mrf.mxu0
        %v6731 = vadd.f32 %v6570, %v6730
        %v6732 = vpop.f32.mrf.mxu0
        %v6733 = vpop.f32.mrf.mxu0
        %v6734 = vadd.f32 %v6573, %v6733
        %v6735 = vpop.f32.mrf.mxu0
        %6736 = vmatprep.mubr.bf16.mxu0 0
        %6737 = vmatmul.mubr.bf16.gmra.mxu0 %v5358
        %v6738 = vpop.f32.mrf.mxu0
        %v6739 = vadd.f32 %v6578, %v6738
        %v6740 = vpop.f32.mrf.mxu0
        %v6741 = vpop.f32.mrf.mxu0
        %v6742 = vadd.f32 %v6581, %v6741
        %v6743 = vpop.f32.mrf.mxu0
        %6744 = vmatprep.mubr.bf16.mxu0 0
        %6745 = vmatmul.mubr.bf16.gmra.mxu0 %v5367
        %v6746 = vpop.f32.mrf.mxu0
        %v6747 = vadd.f32 %v6586, %v6746
        %v6748 = vpop.f32.mrf.mxu0
        %v6749 = vpop.f32.mrf.mxu0
        %v6750 = vadd.f32 %v6589, %v6749
        %v6751 = vpop.f32.mrf.mxu0
        %6752 = vmatprep.mubr.bf16.mxu0 0
        %6753 = vmatmul.mubr.bf16.gmra.mxu0 %v5376
        %v6754 = vpop.f32.mrf.mxu0
        %v6755 = vadd.f32 %v6594, %v6754
        %v6756 = vpop.f32.mrf.mxu0
        %v6757 = vpop.f32.mrf.mxu0
        %v6758 = vadd.f32 %v6597, %v6757
        %v6759 = vpop.f32.mrf.mxu0
        %6760 = vmatprep.mubr.bf16.mxu0 0
        %6761 = vmatmul.mubr.bf16.gmra.mxu0 %v5385
        %v6762 = vpop.f32.mrf.mxu0
        %v6763 = vadd.f32 %v6602, %v6762
        %v6764 = vpop.f32.mrf.mxu0
        %v6765 = vpop.f32.mrf.mxu0
        %v6766 = vadd.f32 %v6605, %v6765
        %v6767 = vpop.f32.mrf.mxu0
        %6768 = vmatprep.mubr.bf16.mxu0 0
        %6769 = vmatmul.mubr.bf16.gmra.mxu0 %v5394
        %v6770 = vpop.f32.mrf.mxu0
        %v6771 = vadd.f32 %v6610, %v6770
        %v6772 = vpop.f32.mrf.mxu0
        %v6773 = vpop.f32.mrf.mxu0
        %v6774 = vadd.f32 %v6613, %v6773
        %v6775 = vpop.f32.mrf.mxu0
        %6776 = vmatprep.mubr.bf16.mxu0 0
        %6777 = vmatmul.mubr.bf16.gmra.mxu0 %v5403
        %v6778 = vpop.f32.mrf.mxu0
        %v6779 = vadd.f32 %v6618, %v6778
        %v6780 = vpop.f32.mrf.mxu0
        %v6781 = vpop.f32.mrf.mxu0
        %v6782 = vadd.f32 %v6621, %v6781
        %v6783 = vpop.f32.mrf.mxu0
        %6784 = vdwg.mxu0
        %v6785 = vmax.f32 %v6659, 0.0
        %v6786 = vmax.f32 %v6662, 0.0
        %v6787 = vmax.f32 %v6667, 0.0
        %v6788 = vmax.f32 %v6670, 0.0
        %v6789 = vmax.f32 %v6675, 0.0
        %v6790 = vmax.f32 %v6678, 0.0
        %v6791 = vmax.f32 %v6683, 0.0
        %v6792 = vmax.f32 %v6686, 0.0
        %v6793 = vmax.f32 %v6691, 0.0
        %v6794 = vmax.f32 %v6694, 0.0
        %v6795 = vmax.f32 %v6699, 0.0
        %v6796 = vmax.f32 %v6702, 0.0
        %v6797 = vmax.f32 %v6707, 0.0
        %v6798 = vmax.f32 %v6710, 0.0
        %v6799 = vmax.f32 %v6715, 0.0
        %v6800 = vmax.f32 %v6718, 0.0
        %v6801 = vmax.f32 %v6723, 0.0
        %v6802 = vmax.f32 %v6726, 0.0
        %v6803 = vmax.f32 %v6731, 0.0
        %v6804 = vmax.f32 %v6734, 0.0
        %v6805 = vmax.f32 %v6739, 0.0
        %v6806 = vmax.f32 %v6742, 0.0
        %v6807 = vmax.f32 %v6747, 0.0
        %v6808 = vmax.f32 %v6750, 0.0
        %v6809 = vmax.f32 %v6755, 0.0
        %v6810 = vmax.f32 %v6758, 0.0
        %v6811 = vmax.f32 %v6763, 0.0
        %v6812 = vmax.f32 %v6766, 0.0
        %v6813 = vmax.f32 %v6771, 0.0
        %v6814 = vmax.f32 %v6774, 0.0
        %v6815 = vmax.f32 %v6779, 0.0
        %v6816 = vmax.f32 %v6782, 0.0
        %v6817 = vpack.c.bf16 %v6786, %v6785
        %v6818 = vpack.c.bf16 %v6788, %v6787
        %v6819 = vpack.c.bf16 %v6790, %v6789
        %v6820 = vpack.c.bf16 %v6792, %v6791
        %v6821 = vpack.c.bf16 %v6794, %v6793
        %v6822 = vpack.c.bf16 %v6796, %v6795
        %v6823 = vpack.c.bf16 %v6798, %v6797
        %v6824 = vpack.c.bf16 %v6800, %v6799
        %v6825 = vpack.c.bf16 %v6802, %v6801
        %v6826 = vpack.c.bf16 %v6804, %v6803
        %v6827 = vpack.c.bf16 %v6806, %v6805
        %v6828 = vpack.c.bf16 %v6808, %v6807
        %v6829 = vpack.c.bf16 %v6810, %v6809
        %v6830 = vpack.c.bf16 %v6812, %v6811
        %v6831 = vpack.c.bf16 %v6814, %v6813
        %v6832 = vpack.c.bf16 %v6816, %v6815
        %v6849 = vunpack.c.l.b16 %v6817
        %v6850 = vunpack.c.h.b16 %v6817
        %v6851 = vunpack.c.l.b16 %v6818
        %v6852 = vunpack.c.h.b16 %v6818
        %v6853 = vunpack.c.l.b16 %v6819
        %v6854 = vunpack.c.h.b16 %v6819
        %v6855 = vunpack.c.l.b16 %v6820
        %v6856 = vunpack.c.h.b16 %v6820
        %v6857 = vunpack.c.l.b16 %v6821
        %v6858 = vunpack.c.h.b16 %v6821
        %v6859 = vunpack.c.l.b16 %v6822
        %v6860 = vunpack.c.h.b16 %v6822
        %v6861 = vunpack.c.l.b16 %v6823
        %v6862 = vunpack.c.h.b16 %v6823
        %v6863 = vunpack.c.l.b16 %v6824
        %v6864 = vunpack.c.h.b16 %v6824
        %v6865 = vunpack.c.l.b16 %v6825
        %v6866 = vunpack.c.h.b16 %v6825
        %v6867 = vunpack.c.l.b16 %v6826
        %v6868 = vunpack.c.h.b16 %v6826
        %v6869 = vunpack.c.l.b16 %v6827
        %v6870 = vunpack.c.h.b16 %v6827
        %v6871 = vunpack.c.l.b16 %v6828
        %v6872 = vunpack.c.h.b16 %v6828
        %v6873 = vunpack.c.l.b16 %v6829
        %v6874 = vunpack.c.h.b16 %v6829
        %v6875 = vunpack.c.l.b16 %v6830
        %v6876 = vunpack.c.h.b16 %v6830
        %v6877 = vunpack.c.l.b16 %v6831
        %v6878 = vunpack.c.h.b16 %v6831
        %v6879 = vunpack.c.l.b16 %v6832
        %v6880 = vunpack.c.h.b16 %v6832
        %v6881 = vpack.c.b16 %v6849, %v6849
        %v6882 = vpack.c.b16 %v6850, %v6850
        %v6883 = vpack.c.b16 %v6851, %v6851
        %v6884 = vpack.c.b16 %v6852, %v6852
        %v6885 = vpack.c.b16 %v6853, %v6853
        %v6886 = vpack.c.b16 %v6854, %v6854
        %v6887 = vpack.c.b16 %v6855, %v6855
        %v6888 = vpack.c.b16 %v6856, %v6856
        %v6889 = vpack.c.b16 %v6857, %v6857
        %v6890 = vpack.c.b16 %v6858, %v6858
        %v6891 = vpack.c.b16 %v6859, %v6859
        %v6892 = vpack.c.b16 %v6860, %v6860
        %v6893 = vpack.c.b16 %v6861, %v6861
        %v6894 = vpack.c.b16 %v6862, %v6862
        %v6895 = vpack.c.b16 %v6863, %v6863
        %v6896 = vpack.c.b16 %v6864, %v6864
        %v6897 = vpack.c.b16 %v6865, %v6865
        %v6898 = vpack.c.b16 %v6866, %v6866
        %v6899 = vpack.c.b16 %v6867, %v6867
        %v6900 = vpack.c.b16 %v6868, %v6868
        %v6901 = vpack.c.b16 %v6869, %v6869
        %v6902 = vpack.c.b16 %v6870, %v6870
        %v6903 = vpack.c.b16 %v6871, %v6871
        %v6904 = vpack.c.b16 %v6872, %v6872
        %v6905 = vpack.c.b16 %v6873, %v6873
        %v6906 = vpack.c.b16 %v6874, %v6874
        %v6907 = vpack.c.b16 %v6875, %v6875
        %v6908 = vpack.c.b16 %v6876, %v6876
        %v6909 = vpack.c.b16 %v6877, %v6877
        %v6910 = vpack.c.b16 %v6878, %v6878
        %v6911 = vpack.c.b16 %v6879, %v6879
        %v6912 = vpack.c.b16 %v6880, %v6880
        %6945 = vst [vmem:[#allocation3 + $0xc] sm:$0xf] %v6881
        %6946 = vst [vmem:[#allocation3 + $0x10] sm:$0xf] %v6882
        %6947 = vst [vmem:[#allocation3 + $0x14] sm:$0xf] %v6883
        %6948 = vst [vmem:[#allocation3 + $0x18] sm:$0xf] %v6884
        %6949 = vst [vmem:[#allocation3 + $0x1c] sm:$0xf] %v6885
        %6950 = vst [vmem:[#allocation3 + $0x20] sm:$0xf] %v6886
        %6951 = vst [vmem:[#allocation3 + $0x24] sm:$0xf] %v6887
        %6952 = vst [vmem:[#allocation3 + $0x28] sm:$0xf] %v6888
        %6953 = vst [vmem:[#allocation3 + $0x2c] sm:$0xf] %v6889
        %6954 = vst [vmem:[#allocation3 + $0x30] sm:$0xf] %v6890
        %6955 = vst [vmem:[#allocation3 + $0x34] sm:$0xf] %v6891
        %6956 = vst [vmem:[#allocation3 + $0x38] sm:$0xf] %v6892
        %6957 = vst [vmem:[#allocation3 + $0x3c] sm:$0xf] %v6893
        %6958 = vst [vmem:[#allocation3 + $0x40] sm:$0xf] %v6894
        %6959 = vst [vmem:[#allocation3 + $0x44] sm:$0xf] %v6895
        %6960 = vst [vmem:[#allocation3 + $0x48] sm:$0xf] %v6896
        %6961 = vst [vmem:[#allocation3 + $0x4c] sm:$0xf] %v6897
        %6962 = vst [vmem:[#allocation3 + $0x50] sm:$0xf] %v6898
        %6963 = vst [vmem:[#allocation3 + $0x54] sm:$0xf] %v6899
        %6964 = vst [vmem:[#allocation3 + $0x58] sm:$0xf] %v6900
        %6965 = vst [vmem:[#allocation3 + $0x5c] sm:$0xf] %v6901
        %6966 = vst [vmem:[#allocation3 + $0x60] sm:$0xf] %v6902
        %6967 = vst [vmem:[#allocation3 + $0x64] sm:$0xf] %v6903
        %6968 = vst [vmem:[#allocation3 + $0x68] sm:$0xf] %v6904
        %6969 = vst [vmem:[#allocation3 + $0x6c] sm:$0xf] %v6905
        %6970 = vst [vmem:[#allocation3 + $0x70] sm:$0xf] %v6906
        %6971 = vst [vmem:[#allocation3 + $0x74] sm:$0xf] %v6907
        %6972 = vst [vmem:[#allocation3 + $0x78] sm:$0xf] %v6908
        %6973 = vst [vmem:[#allocation3 + $0x7c] sm:$0xf] %v6909
        %6974 = vst [vmem:[#allocation3 + $0x80] sm:$0xf] %v6910
        %6975 = vst [vmem:[#allocation3 + $0x84] sm:$0xf] %v6911
        %6976 = vst [vmem:[#allocation3 + $0x88] sm:$0xf] %v6912
        %v6977 = vld [vmem:[#allocation3] sm:$0x8]
        %v6978 = vld [vmem:[#allocation3 + $0x4] sm:$0xf]
        %v6979 = vld [vmem:[#allocation3 + $0x8] sm:$0xf]
        %v6980 = vld [vmem:[#allocation3 + $0xc] sm:$0xf]
        %v6981 = vld [vmem:[#allocation3 + $0x10] sm:$0xf]
        %v6982 = vld [vmem:[#allocation3 + $0x14] sm:$0xf]
        %v6983 = vld [vmem:[#allocation3 + $0x18] sm:$0xf]
        %v6984 = vld [vmem:[#allocation3 + $0x1c] sm:$0xf]
        %v6985 = vld [vmem:[#allocation3 + $0x20] sm:$0xf]
        %v6986 = vld [vmem:[#allocation3 + $0x24] sm:$0xf]
        %v6987 = vld [vmem:[#allocation3 + $0x28] sm:$0xf]
        %v6988 = vld [vmem:[#allocation3 + $0x2c] sm:$0xf]
        %v6989 = vld [vmem:[#allocation3 + $0x30] sm:$0xf]
        %v6990 = vld [vmem:[#allocation3 + $0x34] sm:$0xf]
        %v6991 = vld [vmem:[#allocation3 + $0x38] sm:$0xf]
        %v6992 = vld [vmem:[#allocation3 + $0x3c] sm:$0xf]
        %v6993 = vld [vmem:[#allocation3 + $0x40] sm:$0xf]
        %v6994 = vld [vmem:[#allocation3 + $0x44] sm:$0xf]
        %v6995 = vld [vmem:[#allocation3 + $0x48] sm:$0xf]
        %v6996 = vld [vmem:[#allocation3 + $0x4c] sm:$0xf]
        %v6997 = vld [vmem:[#allocation3 + $0x50] sm:$0xf]
        %v6998 = vld [vmem:[#allocation3 + $0x54] sm:$0xf]
        %v6999 = vld [vmem:[#allocation3 + $0x58] sm:$0xf]
        %v7000 = vld [vmem:[#allocation3 + $0x5c] sm:$0xf]
        %v7001 = vld [vmem:[#allocation3 + $0x60] sm:$0xf]
        %v7002 = vld [vmem:[#allocation3 + $0x64] sm:$0xf]
        %v7003 = vld [vmem:[#allocation3 + $0x68] sm:$0xf]
        %v7004 = vld [vmem:[#allocation3 + $0x6c] sm:$0xf]
        %v7005 = vld [vmem:[#allocation3 + $0x70] sm:$0xf]
        %v7006 = vld [vmem:[#allocation3 + $0x74] sm:$0xf]
        %v7007 = vld [vmem:[#allocation3 + $0x78] sm:$0xf]
        %v7008 = vld [vmem:[#allocation3 + $0x7c] sm:$0xf]
        %v7009 = vld [vmem:[#allocation3 + $0x80] sm:$0xf]
        %v7010 = vsel %vm1134, %v6977, 0
        %v7011 = vsel %vm1135, %v6978, 0
        %v7012 = vsel %vm1136, %v6979, 0
        %v7013 = vsel %vm1137, %v6980, 0
        %v7014 = vsel %vm1138, %v6981, 0
        %v7015 = vsel %vm1139, %v6982, 0
        %v7016 = vsel %vm1140, %v6983, 0
        %v7017 = vsel %vm1141, %v6984, 0
        %v7018 = vsel %vm1142, %v6985, 0
        %v7019 = vsel %vm1143, %v6986, 0
        %v7020 = vsel %vm1144, %v6987, 0
        %v7021 = vsel %vm1145, %v6988, 0
        %v7022 = vsel %vm1146, %v6989, 0
        %v7023 = vsel %vm1147, %v6990, 0
        %v7024 = vsel %vm1148, %v6991, 0
        %v7025 = vsel %vm1149, %v6992, 0
        %v7026 = vsel %vm1150, %v6993, 0
        %v7027 = vsel %vm1151, %v6994, 0
        %v7028 = vsel %vm1152, %v6995, 0
        %v7029 = vsel %vm1153, %v6996, 0
        %v7030 = vsel %vm1154, %v6997, 0
        %v7031 = vsel %vm1155, %v6998, 0
        %v7032 = vsel %vm1156, %v6999, 0
        %v7033 = vsel %vm1157, %v7000, 0
        %v7034 = vsel %vm1158, %v7001, 0
        %v7035 = vsel %vm1159, %v7002, 0
        %v7036 = vsel %vm1160, %v7003, 0
        %v7037 = vsel %vm1161, %v7004, 0
        %v7038 = vsel %vm1162, %v7005, 0
        %v7039 = vsel %vm1163, %v7006, 0
        %v7040 = vsel %vm1164, %v7007, 0
        %v7041 = vsel %vm1165, %v7008, 0
        %v7042 = vsel %vm1166, %v7009, 0
        %v7044 = vshrl.u32 %v7010, 16
        %v7046 = vrot.slane %v7044, 7
        %v7047 = vrot.slane %v7046, 4
        %v7049 = vshrl.u32 %v7011, 16
        %v7051 = vrot.slane %v7049, 7
        %v7052 = vshll.u32 %v7011, 16
        %v7054 = vor.u32 %v7051, %v7052
        %v7055 = vsel %vm1202, %v7047, %v7054
        %v7056 = vrot.slane %v7051, 4
        %v7058 = vshrl.u32 %v7012, 16
        %v7060 = vrot.slane %v7058, 7
        %v7061 = vshll.u32 %v7012, 16
        %v7063 = vor.u32 %v7060, %v7061
        %v7064 = vsel %vm1202, %v7056, %v7063
        %v7065 = vrot.slane %v7060, 4
        %v7067 = vshrl.u32 %v7013, 16
        %v7069 = vrot.slane %v7067, 7
        %v7070 = vshll.u32 %v7013, 16
        %v7072 = vor.u32 %v7069, %v7070
        %v7073 = vsel %vm1202, %v7065, %v7072
        %v7074 = vrot.slane %v7069, 4
        %v7076 = vshrl.u32 %v7014, 16
        %v7078 = vrot.slane %v7076, 7
        %v7079 = vshll.u32 %v7014, 16
        %v7081 = vor.u32 %v7078, %v7079
        %v7082 = vsel %vm1202, %v7074, %v7081
        %v7083 = vrot.slane %v7078, 4
        %v7085 = vshrl.u32 %v7015, 16
        %v7087 = vrot.slane %v7085, 7
        %v7088 = vshll.u32 %v7015, 16
        %v7090 = vor.u32 %v7087, %v7088
        %v7091 = vsel %vm1202, %v7083, %v7090
        %v7092 = vrot.slane %v7087, 4
        %v7094 = vshrl.u32 %v7016, 16
        %v7096 = vrot.slane %v7094, 7
        %v7097 = vshll.u32 %v7016, 16
        %v7099 = vor.u32 %v7096, %v7097
        %v7100 = vsel %vm1202, %v7092, %v7099
        %v7101 = vrot.slane %v7096, 4
        %v7103 = vshrl.u32 %v7017, 16
        %v7105 = vrot.slane %v7103, 7
        %v7106 = vshll.u32 %v7017, 16
        %v7108 = vor.u32 %v7105, %v7106
        %v7109 = vsel %vm1202, %v7101, %v7108
        %v7110 = vrot.slane %v7105, 4
        %v7112 = vshrl.u32 %v7018, 16
        %v7114 = vrot.slane %v7112, 7
        %v7115 = vshll.u32 %v7018, 16
        %v7117 = vor.u32 %v7114, %v7115
        %v7118 = vsel %vm1202, %v7110, %v7117
        %v7119 = vrot.slane %v7114, 4
        %v7121 = vshrl.u32 %v7019, 16
        %v7123 = vrot.slane %v7121, 7
        %v7124 = vshll.u32 %v7019, 16
        %v7126 = vor.u32 %v7123, %v7124
        %v7127 = vsel %vm1202, %v7119, %v7126
        %v7128 = vrot.slane %v7123, 4
        %v7130 = vshrl.u32 %v7020, 16
        %v7132 = vrot.slane %v7130, 7
        %v7133 = vshll.u32 %v7020, 16
        %v7135 = vor.u32 %v7132, %v7133
        %v7136 = vsel %vm1202, %v7128, %v7135
        %v7137 = vrot.slane %v7132, 4
        %v7139 = vshrl.u32 %v7021, 16
        %v7141 = vrot.slane %v7139, 7
        %v7142 = vshll.u32 %v7021, 16
        %v7144 = vor.u32 %v7141, %v7142
        %v7145 = vsel %vm1202, %v7137, %v7144
        %v7146 = vrot.slane %v7141, 4
        %v7148 = vshrl.u32 %v7022, 16
        %v7150 = vrot.slane %v7148, 7
        %v7151 = vshll.u32 %v7022, 16
        %v7153 = vor.u32 %v7150, %v7151
        %v7154 = vsel %vm1202, %v7146, %v7153
        %v7155 = vrot.slane %v7150, 4
        %v7157 = vshrl.u32 %v7023, 16
        %v7159 = vrot.slane %v7157, 7
        %v7160 = vshll.u32 %v7023, 16
        %v7162 = vor.u32 %v7159, %v7160
        %v7163 = vsel %vm1202, %v7155, %v7162
        %v7164 = vrot.slane %v7159, 4
        %v7166 = vshrl.u32 %v7024, 16
        %v7168 = vrot.slane %v7166, 7
        %v7169 = vshll.u32 %v7024, 16
        %v7171 = vor.u32 %v7168, %v7169
        %v7172 = vsel %vm1202, %v7164, %v7171
        %v7173 = vrot.slane %v7168, 4
        %v7175 = vshrl.u32 %v7025, 16
        %v7177 = vrot.slane %v7175, 7
        %v7178 = vshll.u32 %v7025, 16
        %v7180 = vor.u32 %v7177, %v7178
        %v7181 = vsel %vm1202, %v7173, %v7180
        %v7182 = vrot.slane %v7177, 4
        %v7184 = vshrl.u32 %v7026, 16
        %v7186 = vrot.slane %v7184, 7
        %v7187 = vshll.u32 %v7026, 16
        %v7189 = vor.u32 %v7186, %v7187
        %v7190 = vsel %vm1202, %v7182, %v7189
        %v7191 = vrot.slane %v7186, 4
        %v7193 = vshrl.u32 %v7027, 16
        %v7195 = vrot.slane %v7193, 7
        %v7196 = vshll.u32 %v7027, 16
        %v7198 = vor.u32 %v7195, %v7196
        %v7199 = vsel %vm1202, %v7191, %v7198
        %v7200 = vrot.slane %v7195, 4
        %v7202 = vshrl.u32 %v7028, 16
        %v7204 = vrot.slane %v7202, 7
        %v7205 = vshll.u32 %v7028, 16
        %v7207 = vor.u32 %v7204, %v7205
        %v7208 = vsel %vm1202, %v7200, %v7207
        %v7209 = vrot.slane %v7204, 4
        %v7211 = vshrl.u32 %v7029, 16
        %v7213 = vrot.slane %v7211, 7
        %v7214 = vshll.u32 %v7029, 16
        %v7216 = vor.u32 %v7213, %v7214
        %v7217 = vsel %vm1202, %v7209, %v7216
        %v7218 = vrot.slane %v7213, 4
        %v7220 = vshrl.u32 %v7030, 16
        %v7222 = vrot.slane %v7220, 7
        %v7223 = vshll.u32 %v7030, 16
        %v7225 = vor.u32 %v7222, %v7223
        %v7226 = vsel %vm1202, %v7218, %v7225
        %v7227 = vrot.slane %v7222, 4
        %v7229 = vshrl.u32 %v7031, 16
        %v7231 = vrot.slane %v7229, 7
        %v7232 = vshll.u32 %v7031, 16
        %v7234 = vor.u32 %v7231, %v7232
        %v7235 = vsel %vm1202, %v7227, %v7234
        %v7236 = vrot.slane %v7231, 4
        %v7238 = vshrl.u32 %v7032, 16
        %v7240 = vrot.slane %v7238, 7
        %v7241 = vshll.u32 %v7032, 16
        %v7243 = vor.u32 %v7240, %v7241
        %v7244 = vsel %vm1202, %v7236, %v7243
        %v7245 = vrot.slane %v7240, 4
        %v7247 = vshrl.u32 %v7033, 16
        %v7249 = vrot.slane %v7247, 7
        %v7250 = vshll.u32 %v7033, 16
        %v7252 = vor.u32 %v7249, %v7250
        %v7253 = vsel %vm1202, %v7245, %v7252
        %v7254 = vrot.slane %v7249, 4
        %v7256 = vshrl.u32 %v7034, 16
        %v7258 = vrot.slane %v7256, 7
        %v7259 = vshll.u32 %v7034, 16
        %v7261 = vor.u32 %v7258, %v7259
        %v7262 = vsel %vm1202, %v7254, %v7261
        %v7263 = vrot.slane %v7258, 4
        %v7265 = vshrl.u32 %v7035, 16
        %v7267 = vrot.slane %v7265, 7
        %v7268 = vshll.u32 %v7035, 16
        %v7270 = vor.u32 %v7267, %v7268
        %v7271 = vsel %vm1202, %v7263, %v7270
        %v7272 = vrot.slane %v7267, 4
        %v7274 = vshrl.u32 %v7036, 16
        %v7276 = vrot.slane %v7274, 7
        %v7277 = vshll.u32 %v7036, 16
        %v7279 = vor.u32 %v7276, %v7277
        %v7280 = vsel %vm1202, %v7272, %v7279
        %v7281 = vrot.slane %v7276, 4
        %v7283 = vshrl.u32 %v7037, 16
        %v7285 = vrot.slane %v7283, 7
        %v7286 = vshll.u32 %v7037, 16
        %v7288 = vor.u32 %v7285, %v7286
        %v7289 = vsel %vm1202, %v7281, %v7288
        %v7290 = vrot.slane %v7285, 4
        %v7292 = vshrl.u32 %v7038, 16
        %v7294 = vrot.slane %v7292, 7
        %v7295 = vshll.u32 %v7038, 16
        %v7297 = vor.u32 %v7294, %v7295
        %v7298 = vsel %vm1202, %v7290, %v7297
        %v7299 = vrot.slane %v7294, 4
        %v7301 = vshrl.u32 %v7039, 16
        %v7303 = vrot.slane %v7301, 7
        %v7304 = vshll.u32 %v7039, 16
        %v7306 = vor.u32 %v7303, %v7304
        %v7307 = vsel %vm1202, %v7299, %v7306
        %v7308 = vrot.slane %v7303, 4
        %v7310 = vshrl.u32 %v7040, 16
        %v7312 = vrot.slane %v7310, 7
        %v7313 = vshll.u32 %v7040, 16
        %v7315 = vor.u32 %v7312, %v7313
        %v7316 = vsel %vm1202, %v7308, %v7315
        %v7317 = vrot.slane %v7312, 4
        %v7319 = vshrl.u32 %v7041, 16
        %v7321 = vrot.slane %v7319, 7
        %v7322 = vshll.u32 %v7041, 16
        %v7324 = vor.u32 %v7321, %v7322
        %v7325 = vsel %vm1202, %v7317, %v7324
        %v7326 = vrot.slane %v7321, 4
        %v7328 = vshrl.u32 %v7042, 16
        %v7330 = vrot.slane %v7328, 7
        %v7331 = vshll.u32 %v7042, 16
        %v7333 = vor.u32 %v7330, %v7331
        %v7334 = vsel %vm1202, %v7326, %v7333
        %7367 = vst [vmem:[#allocation5] sm:$0xf] %v7055
        %7368 = vst [vmem:[#allocation5 + $0x24] sm:$0xf] %v7064
        %7369 = vst [vmem:[#allocation5 + $0x48] sm:$0xf] %v7073
        %7370 = vst [vmem:[#allocation5 + $0x6c] sm:$0xf] %v7082
        %7371 = vst [vmem:[#allocation5 + $0x90] sm:$0xf] %v7091
        %7372 = vst [vmem:[#allocation5 + $0xb4] sm:$0xf] %v7100
        %7373 = vst [vmem:[#allocation5 + $0xd8] sm:$0xf] %v7109
        %7374 = vst [vmem:[#allocation5 + $0xfc] sm:$0xf] %v7118
        %7375 = vst [vmem:[#allocation5 + $0x120] sm:$0xf] %v7127
        %7376 = vst [vmem:[#allocation5 + $0x144] sm:$0xf] %v7136
        %7377 = vst [vmem:[#allocation5 + $0x168] sm:$0xf] %v7145
        %7378 = vst [vmem:[#allocation5 + $0x18c] sm:$0xf] %v7154
        %7379 = vst [vmem:[#allocation5 + $0x1b0] sm:$0xf] %v7163
        %7380 = vst [vmem:[#allocation5 + $0x1d4] sm:$0xf] %v7172
        %7381 = vst [vmem:[#allocation5 + $0x1f8] sm:$0xf] %v7181
        %7382 = vst [vmem:[#allocation5 + $0x21c] sm:$0xf] %v7190
        %7383 = vst [vmem:[#allocation5 + $0x240] sm:$0xf] %v7199
        %7384 = vst [vmem:[#allocation5 + $0x264] sm:$0xf] %v7208
        %7385 = vst [vmem:[#allocation5 + $0x288] sm:$0xf] %v7217
        %7386 = vst [vmem:[#allocation5 + $0x2ac] sm:$0xf] %v7226
        %7387 = vst [vmem:[#allocation5 + $0x2d0] sm:$0xf] %v7235
        %7388 = vst [vmem:[#allocation5 + $0x2f4] sm:$0xf] %v7244
        %7389 = vst [vmem:[#allocation5 + $0x318] sm:$0xf] %v7253
        %7390 = vst [vmem:[#allocation5 + $0x33c] sm:$0xf] %v7262
        %7391 = vst [vmem:[#allocation5 + $0x360] sm:$0xf] %v7271
        %7392 = vst [vmem:[#allocation5 + $0x384] sm:$0xf] %v7280
        %7393 = vst [vmem:[#allocation5 + $0x3a8] sm:$0xf] %v7289
        %7394 = vst [vmem:[#allocation5 + $0x3cc] sm:$0xf] %v7298
        %7395 = vst [vmem:[#allocation5 + $0x3f0] sm:$0xf] %v7307
        %7396 = vst [vmem:[#allocation5 + $0x414] sm:$0xf] %v7316
        %7397 = vst [vmem:[#allocation5 + $0x438] sm:$0xf] %v7325
        %7398 = vst [vmem:[#allocation5 + $0x45c] sm:$0xf] %v7334
        %v7399 = vld [vmem:[#allocation3 + $0x4] sm:$0xf]
        %v7400 = vld [vmem:[#allocation3 + $0x8] sm:$0xf]
        %v7401 = vld [vmem:[#allocation3 + $0xc] sm:$0xf]
        %v7402 = vld [vmem:[#allocation3 + $0x10] sm:$0xf]
        %v7403 = vld [vmem:[#allocation3 + $0x14] sm:$0xf]
        %v7404 = vld [vmem:[#allocation3 + $0x18] sm:$0xf]
        %v7405 = vld [vmem:[#allocation3 + $0x1c] sm:$0xf]
        %v7406 = vld [vmem:[#allocation3 + $0x20] sm:$0xf]
        %v7407 = vld [vmem:[#allocation3 + $0x24] sm:$0xf]
        %v7408 = vld [vmem:[#allocation3 + $0x28] sm:$0xf]
        %v7409 = vld [vmem:[#allocation3 + $0x2c] sm:$0xf]
        %v7410 = vld [vmem:[#allocation3 + $0x30] sm:$0xf]
        %v7411 = vld [vmem:[#allocation3 + $0x34] sm:$0xf]
        %v7412 = vld [vmem:[#allocation3 + $0x38] sm:$0xf]
        %v7413 = vld [vmem:[#allocation3 + $0x3c] sm:$0xf]
        %v7414 = vld [vmem:[#allocation3 + $0x40] sm:$0xf]
        %v7415 = vld [vmem:[#allocation3 + $0x44] sm:$0xf]
        %v7416 = vld [vmem:[#allocation3 + $0x48] sm:$0xf]
        %v7417 = vld [vmem:[#allocation3 + $0x4c] sm:$0xf]
        %v7418 = vld [vmem:[#allocation3 + $0x50] sm:$0xf]
        %v7419 = vld [vmem:[#allocation3 + $0x54] sm:$0xf]
        %v7420 = vld [vmem:[#allocation3 + $0x58] sm:$0xf]
        %v7421 = vld [vmem:[#allocation3 + $0x5c] sm:$0xf]
        %v7422 = vld [vmem:[#allocation3 + $0x60] sm:$0xf]
        %v7423 = vld [vmem:[#allocation3 + $0x64] sm:$0xf]
        %v7424 = vld [vmem:[#allocation3 + $0x68] sm:$0xf]
        %v7425 = vld [vmem:[#allocation3 + $0x6c] sm:$0xf]
        %v7426 = vld [vmem:[#allocation3 + $0x70] sm:$0xf]
        %v7427 = vld [vmem:[#allocation3 + $0x74] sm:$0xf]
        %v7428 = vld [vmem:[#allocation3 + $0x78] sm:$0xf]
        %v7429 = vld [vmem:[#allocation3 + $0x7c] sm:$0xf]
        %v7430 = vld [vmem:[#allocation3 + $0x80] sm:$0xf]
        %7431 = vst [vmem:[#allocation5 + $0x4] sm:$0xf] %v7399
        %7432 = vst [vmem:[#allocation5 + $0x28] sm:$0xf] %v7400
        %7433 = vst [vmem:[#allocation5 + $0x4c] sm:$0xf] %v7401
        %7434 = vst [vmem:[#allocation5 + $0x70] sm:$0xf] %v7402
        %7435 = vst [vmem:[#allocation5 + $0x94] sm:$0xf] %v7403
        %7436 = vst [vmem:[#allocation5 + $0xb8] sm:$0xf] %v7404
        %7437 = vst [vmem:[#allocation5 + $0xdc] sm:$0xf] %v7405
        %7438 = vst [vmem:[#allocation5 + $0x100] sm:$0xf] %v7406
        %7439 = vst [vmem:[#allocation5 + $0x124] sm:$0xf] %v7407
        %7440 = vst [vmem:[#allocation5 + $0x148] sm:$0xf] %v7408
        %7441 = vst [vmem:[#allocation5 + $0x16c] sm:$0xf] %v7409
        %7442 = vst [vmem:[#allocation5 + $0x190] sm:$0xf] %v7410
        %7443 = vst [vmem:[#allocation5 + $0x1b4] sm:$0xf] %v7411
        %7444 = vst [vmem:[#allocation5 + $0x1d8] sm:$0xf] %v7412
        %7445 = vst [vmem:[#allocation5 + $0x1fc] sm:$0xf] %v7413
        %7446 = vst [vmem:[#allocation5 + $0x220] sm:$0xf] %v7414
        %7447 = vst [vmem:[#allocation5 + $0x244] sm:$0xf] %v7415
        %7448 = vst [vmem:[#allocation5 + $0x268] sm:$0xf] %v7416
        %7449 = vst [vmem:[#allocation5 + $0x28c] sm:$0xf] %v7417
        %7450 = vst [vmem:[#allocation5 + $0x2b0] sm:$0xf] %v7418
        %7451 = vst [vmem:[#allocation5 + $0x2d4] sm:$0xf] %v7419
        %7452 = vst [vmem:[#allocation5 + $0x2f8] sm:$0xf] %v7420
        %7453 = vst [vmem:[#allocation5 + $0x31c] sm:$0xf] %v7421
        %7454 = vst [vmem:[#allocation5 + $0x340] sm:$0xf] %v7422
        %7455 = vst [vmem:[#allocation5 + $0x364] sm:$0xf] %v7423
        %7456 = vst [vmem:[#allocation5 + $0x388] sm:$0xf] %v7424
        %7457 = vst [vmem:[#allocation5 + $0x3ac] sm:$0xf] %v7425
        %7458 = vst [vmem:[#allocation5 + $0x3d0] sm:$0xf] %v7426
        %7459 = vst [vmem:[#allocation5 + $0x3f4] sm:$0xf] %v7427
        %7460 = vst [vmem:[#allocation5 + $0x418] sm:$0xf] %v7428
        %7461 = vst [vmem:[#allocation5 + $0x43c] sm:$0xf] %v7429
        %7462 = vst [vmem:[#allocation5 + $0x460] sm:$0xf] %v7430
        %v7463 = vld [vmem:[#allocation3 + $0x4] sm:$0xf]
        %v7464 = vld [vmem:[#allocation3 + $0x8] sm:$0xf]
        %v7465 = vld [vmem:[#allocation3 + $0xc] sm:$0xf]
        %v7466 = vld [vmem:[#allocation3 + $0x10] sm:$0xf]
        %v7467 = vld [vmem:[#allocation3 + $0x14] sm:$0xf]
        %v7468 = vld [vmem:[#allocation3 + $0x18] sm:$0xf]
        %v7469 = vld [vmem:[#allocation3 + $0x1c] sm:$0xf]
        %v7470 = vld [vmem:[#allocation3 + $0x20] sm:$0xf]
        %v7471 = vld [vmem:[#allocation3 + $0x24] sm:$0xf]
        %v7472 = vld [vmem:[#allocation3 + $0x28] sm:$0xf]
        %v7473 = vld [vmem:[#allocation3 + $0x2c] sm:$0xf]
        %v7474 = vld [vmem:[#allocation3 + $0x30] sm:$0xf]
        %v7475 = vld [vmem:[#allocation3 + $0x34] sm:$0xf]
        %v7476 = vld [vmem:[#allocation3 + $0x38] sm:$0xf]
        %v7477 = vld [vmem:[#allocation3 + $0x3c] sm:$0xf]
        %v7478 = vld [vmem:[#allocation3 + $0x40] sm:$0xf]
        %v7479 = vld [vmem:[#allocation3 + $0x44] sm:$0xf]
        %v7480 = vld [vmem:[#allocation3 + $0x48] sm:$0xf]
        %v7481 = vld [vmem:[#allocation3 + $0x4c] sm:$0xf]
        %v7482 = vld [vmem:[#allocation3 + $0x50] sm:$0xf]
        %v7483 = vld [vmem:[#allocation3 + $0x54] sm:$0xf]
        %v7484 = vld [vmem:[#allocation3 + $0x58] sm:$0xf]
        %v7485 = vld [vmem:[#allocation3 + $0x5c] sm:$0xf]
        %v7486 = vld [vmem:[#allocation3 + $0x60] sm:$0xf]
        %v7487 = vld [vmem:[#allocation3 + $0x64] sm:$0xf]
        %v7488 = vld [vmem:[#allocation3 + $0x68] sm:$0xf]
        %v7489 = vld [vmem:[#allocation3 + $0x6c] sm:$0xf]
        %v7490 = vld [vmem:[#allocation3 + $0x70] sm:$0xf]
        %v7491 = vld [vmem:[#allocation3 + $0x74] sm:$0xf]
        %v7492 = vld [vmem:[#allocation3 + $0x78] sm:$0xf]
        %v7493 = vld [vmem:[#allocation3 + $0x7c] sm:$0xf]
        %v7494 = vld [vmem:[#allocation3 + $0x80] sm:$0xf]
        %v7495 = vld [vmem:[#allocation3 + $0x84] sm:$0x1]
        %v7496 = vsel %vm2167, %v7463, 0
        %v7497 = vsel %vm2168, %v7464, 0
        %v7498 = vsel %vm2169, %v7465, 0
        %v7499 = vsel %vm2170, %v7466, 0
        %v7500 = vsel %vm2171, %v7467, 0
        %v7501 = vsel %vm2172, %v7468, 0
        %v7502 = vsel %vm2173, %v7469, 0
        %v7503 = vsel %vm2174, %v7470, 0
        %v7504 = vsel %vm2175, %v7471, 0
        %v7505 = vsel %vm2176, %v7472, 0
        %v7506 = vsel %vm2177, %v7473, 0
        %v7507 = vsel %vm2178, %v7474, 0
        %v7508 = vsel %vm2179, %v7475, 0
        %v7509 = vsel %vm2180, %v7476, 0
        %v7510 = vsel %vm2181, %v7477, 0
        %v7511 = vsel %vm2182, %v7478, 0
        %v7512 = vsel %vm2183, %v7479, 0
        %v7513 = vsel %vm2184, %v7480, 0
        %v7514 = vsel %vm2185, %v7481, 0
        %v7515 = vsel %vm2186, %v7482, 0
        %v7516 = vsel %vm2187, %v7483, 0
        %v7517 = vsel %vm2188, %v7484, 0
        %v7518 = vsel %vm2189, %v7485, 0
        %v7519 = vsel %vm2190, %v7486, 0
        %v7520 = vsel %vm2191, %v7487, 0
        %v7521 = vsel %vm2192, %v7488, 0
        %v7522 = vsel %vm2193, %v7489, 0
        %v7523 = vsel %vm2194, %v7490, 0
        %v7524 = vsel %vm2195, %v7491, 0
        %v7525 = vsel %vm2196, %v7492, 0
        %v7526 = vsel %vm2197, %v7493, 0
        %v7527 = vsel %vm2198, %v7494, 0
        %v7528 = vsel %vm2199, %v7495, 0
        %v7530 = vshrl.u32 %v7496, 16
        %v7532 = vrot.slane %v7530, 4
        %v7533 = vshll.u32 %v7496, 16
        %v7535 = vrot.slane %v7533, 5
        %v7536 = vor.u32 %v7532, %v7535
        %v7537 = vrot.slane %v7536, 4
        %v7539 = vshll.u32 %v7497, 16
        %v7541 = vrot.slane %v7539, 5
        %v7542 = vsel %vm814, %v7537, %v7541
        %v7543 = vshrl.u32 %v7497, 16
        %v7545 = vrot.slane %v7543, 4
        %v7546 = vor.u32 %v7545, %v7541
        %v7547 = vrot.slane %v7546, 4
        %v7549 = vshll.u32 %v7498, 16
        %v7551 = vrot.slane %v7549, 5
        %v7552 = vsel %vm814, %v7547, %v7551
        %v7553 = vshrl.u32 %v7498, 16
        %v7555 = vrot.slane %v7553, 4
        %v7556 = vor.u32 %v7555, %v7551
        %v7557 = vrot.slane %v7556, 4
        %v7559 = vshll.u32 %v7499, 16
        %v7561 = vrot.slane %v7559, 5
        %v7562 = vsel %vm814, %v7557, %v7561
        %v7563 = vshrl.u32 %v7499, 16
        %v7565 = vrot.slane %v7563, 4
        %v7566 = vor.u32 %v7565, %v7561
        %v7567 = vrot.slane %v7566, 4
        %v7569 = vshll.u32 %v7500, 16
        %v7571 = vrot.slane %v7569, 5
        %v7572 = vsel %vm814, %v7567, %v7571
        %v7573 = vshrl.u32 %v7500, 16
        %v7575 = vrot.slane %v7573, 4
        %v7576 = vor.u32 %v7575, %v7571
        %v7577 = vrot.slane %v7576, 4
        %v7579 = vshll.u32 %v7501, 16
        %v7581 = vrot.slane %v7579, 5
        %v7582 = vsel %vm814, %v7577, %v7581
        %v7583 = vshrl.u32 %v7501, 16
        %v7585 = vrot.slane %v7583, 4
        %v7586 = vor.u32 %v7585, %v7581
        %v7587 = vrot.slane %v7586, 4
        %v7589 = vshll.u32 %v7502, 16
        %v7591 = vrot.slane %v7589, 5
        %v7592 = vsel %vm814, %v7587, %v7591
        %v7593 = vshrl.u32 %v7502, 16
        %v7595 = vrot.slane %v7593, 4
        %v7596 = vor.u32 %v7595, %v7591
        %v7597 = vrot.slane %v7596, 4
        %v7599 = vshll.u32 %v7503, 16
        %v7601 = vrot.slane %v7599, 5
        %v7602 = vsel %vm814, %v7597, %v7601
        %v7603 = vshrl.u32 %v7503, 16
        %v7605 = vrot.slane %v7603, 4
        %v7606 = vor.u32 %v7605, %v7601
        %v7607 = vrot.slane %v7606, 4
        %v7609 = vshll.u32 %v7504, 16
        %v7611 = vrot.slane %v7609, 5
        %v7612 = vsel %vm814, %v7607, %v7611
        %v7613 = vshrl.u32 %v7504, 16
        %v7615 = vrot.slane %v7613, 4
        %v7616 = vor.u32 %v7615, %v7611
        %v7617 = vrot.slane %v7616, 4
        %v7619 = vshll.u32 %v7505, 16
        %v7621 = vrot.slane %v7619, 5
        %v7622 = vsel %vm814, %v7617, %v7621
        %v7623 = vshrl.u32 %v7505, 16
        %v7625 = vrot.slane %v7623, 4
        %v7626 = vor.u32 %v7625, %v7621
        %v7627 = vrot.slane %v7626, 4
        %v7629 = vshll.u32 %v7506, 16
        %v7631 = vrot.slane %v7629, 5
        %v7632 = vsel %vm814, %v7627, %v7631
        %v7633 = vshrl.u32 %v7506, 16
        %v7635 = vrot.slane %v7633, 4
        %v7636 = vor.u32 %v7635, %v7631
        %v7637 = vrot.slane %v7636, 4
        %v7639 = vshll.u32 %v7507, 16
        %v7641 = vrot.slane %v7639, 5
        %v7642 = vsel %vm814, %v7637, %v7641
        %v7643 = vshrl.u32 %v7507, 16
        %v7645 = vrot.slane %v7643, 4
        %v7646 = vor.u32 %v7645, %v7641
        %v7647 = vrot.slane %v7646, 4
        %v7649 = vshll.u32 %v7508, 16
        %v7651 = vrot.slane %v7649, 5
        %v7652 = vsel %vm814, %v7647, %v7651
        %v7653 = vshrl.u32 %v7508, 16
        %v7655 = vrot.slane %v7653, 4
        %v7656 = vor.u32 %v7655, %v7651
        %v7657 = vrot.slane %v7656, 4
        %v7659 = vshll.u32 %v7509, 16
        %v7661 = vrot.slane %v7659, 5
        %v7662 = vsel %vm814, %v7657, %v7661
        %v7663 = vshrl.u32 %v7509, 16
        %v7665 = vrot.slane %v7663, 4
        %v7666 = vor.u32 %v7665, %v7661
        %v7667 = vrot.slane %v7666, 4
        %v7669 = vshll.u32 %v7510, 16
        %v7671 = vrot.slane %v7669, 5
        %v7672 = vsel %vm814, %v7667, %v7671
        %v7673 = vshrl.u32 %v7510, 16
        %v7675 = vrot.slane %v7673, 4
        %v7676 = vor.u32 %v7675, %v7671
        %v7677 = vrot.slane %v7676, 4
        %v7679 = vshll.u32 %v7511, 16
        %v7681 = vrot.slane %v7679, 5
        %v7682 = vsel %vm814, %v7677, %v7681
        %v7683 = vshrl.u32 %v7511, 16
        %v7685 = vrot.slane %v7683, 4
        %v7686 = vor.u32 %v7685, %v7681
        %v7687 = vrot.slane %v7686, 4
        %v7689 = vshll.u32 %v7512, 16
        %v7691 = vrot.slane %v7689, 5
        %v7692 = vsel %vm814, %v7687, %v7691
        %v7693 = vshrl.u32 %v7512, 16
        %v7695 = vrot.slane %v7693, 4
        %v7696 = vor.u32 %v7695, %v7691
        %v7697 = vrot.slane %v7696, 4
        %v7699 = vshll.u32 %v7513, 16
        %v7701 = vrot.slane %v7699, 5
        %v7702 = vsel %vm814, %v7697, %v7701
        %v7703 = vshrl.u32 %v7513, 16
        %v7705 = vrot.slane %v7703, 4
        %v7706 = vor.u32 %v7705, %v7701
        %v7707 = vrot.slane %v7706, 4
        %v7709 = vshll.u32 %v7514, 16
        %v7711 = vrot.slane %v7709, 5
        %v7712 = vsel %vm814, %v7707, %v7711
        %v7713 = vshrl.u32 %v7514, 16
        %v7715 = vrot.slane %v7713, 4
        %v7716 = vor.u32 %v7715, %v7711
        %v7717 = vrot.slane %v7716, 4
        %v7719 = vshll.u32 %v7515, 16
        %v7721 = vrot.slane %v7719, 5
        %v7722 = vsel %vm814, %v7717, %v7721
        %v7723 = vshrl.u32 %v7515, 16
        %v7725 = vrot.slane %v7723, 4
        %v7726 = vor.u32 %v7725, %v7721
        %v7727 = vrot.slane %v7726, 4
        %v7729 = vshll.u32 %v7516, 16
        %v7731 = vrot.slane %v7729, 5
        %v7732 = vsel %vm814, %v7727, %v7731
        %v7733 = vshrl.u32 %v7516, 16
        %v7735 = vrot.slane %v7733, 4
        %v7736 = vor.u32 %v7735, %v7731
        %v7737 = vrot.slane %v7736, 4
        %v7739 = vshll.u32 %v7517, 16
        %v7741 = vrot.slane %v7739, 5
        %v7742 = vsel %vm814, %v7737, %v7741
        %v7743 = vshrl.u32 %v7517, 16
        %v7745 = vrot.slane %v7743, 4
        %v7746 = vor.u32 %v7745, %v7741
        %v7747 = vrot.slane %v7746, 4
        %v7749 = vshll.u32 %v7518, 16
        %v7751 = vrot.slane %v7749, 5
        %v7752 = vsel %vm814, %v7747, %v7751
        %v7753 = vshrl.u32 %v7518, 16
        %v7755 = vrot.slane %v7753, 4
        %v7756 = vor.u32 %v7755, %v7751
        %v7757 = vrot.slane %v7756, 4
        %v7759 = vshll.u32 %v7519, 16
        %v7761 = vrot.slane %v7759, 5
        %v7762 = vsel %vm814, %v7757, %v7761
        %v7763 = vshrl.u32 %v7519, 16
        %v7765 = vrot.slane %v7763, 4
        %v7766 = vor.u32 %v7765, %v7761
        %v7767 = vrot.slane %v7766, 4
        %v7769 = vshll.u32 %v7520, 16
        %v7771 = vrot.slane %v7769, 5
        %v7772 = vsel %vm814, %v7767, %v7771
        %v7773 = vshrl.u32 %v7520, 16
        %v7775 = vrot.slane %v7773, 4
        %v7776 = vor.u32 %v7775, %v7771
        %v7777 = vrot.slane %v7776, 4
        %v7779 = vshll.u32 %v7521, 16
        %v7781 = vrot.slane %v7779, 5
        %v7782 = vsel %vm814, %v7777, %v7781
        %v7783 = vshrl.u32 %v7521, 16
        %v7785 = vrot.slane %v7783, 4
        %v7786 = vor.u32 %v7785, %v7781
        %v7787 = vrot.slane %v7786, 4
        %v7789 = vshll.u32 %v7522, 16
        %v7791 = vrot.slane %v7789, 5
        %v7792 = vsel %vm814, %v7787, %v7791
        %v7793 = vshrl.u32 %v7522, 16
        %v7795 = vrot.slane %v7793, 4
        %v7796 = vor.u32 %v7795, %v7791
        %v7797 = vrot.slane %v7796, 4
        %v7799 = vshll.u32 %v7523, 16
        %v7801 = vrot.slane %v7799, 5
        %v7802 = vsel %vm814, %v7797, %v7801
        %v7803 = vshrl.u32 %v7523, 16
        %v7805 = vrot.slane %v7803, 4
        %v7806 = vor.u32 %v7805, %v7801
        %v7807 = vrot.slane %v7806, 4
        %v7809 = vshll.u32 %v7524, 16
        %v7811 = vrot.slane %v7809, 5
        %v7812 = vsel %vm814, %v7807, %v7811
        %v7813 = vshrl.u32 %v7524, 16
        %v7815 = vrot.slane %v7813, 4
        %v7816 = vor.u32 %v7815, %v7811
        %v7817 = vrot.slane %v7816, 4
        %v7819 = vshll.u32 %v7525, 16
        %v7821 = vrot.slane %v7819, 5
        %v7822 = vsel %vm814, %v7817, %v7821
        %v7823 = vshrl.u32 %v7525, 16
        %v7825 = vrot.slane %v7823, 4
        %v7826 = vor.u32 %v7825, %v7821
        %v7827 = vrot.slane %v7826, 4
        %v7829 = vshll.u32 %v7526, 16
        %v7831 = vrot.slane %v7829, 5
        %v7832 = vsel %vm814, %v7827, %v7831
        %v7833 = vshrl.u32 %v7526, 16
        %v7835 = vrot.slane %v7833, 4
        %v7836 = vor.u32 %v7835, %v7831
        %v7837 = vrot.slane %v7836, 4
        %v7839 = vshll.u32 %v7527, 16
        %v7841 = vrot.slane %v7839, 5
        %v7842 = vsel %vm814, %v7837, %v7841
        %v7843 = vshrl.u32 %v7527, 16
        %v7845 = vrot.slane %v7843, 4
        %v7846 = vor.u32 %v7845, %v7841
        %v7847 = vrot.slane %v7846, 4
        %v7849 = vshll.u32 %v7528, 16
        %v7851 = vrot.slane %v7849, 5
        %v7852 = vsel %vm814, %v7847, %v7851
        %7885 = vst [vmem:[#allocation5 + $0x8] sm:$0xf] %v7542
        %7886 = vst [vmem:[#allocation5 + $0x2c] sm:$0xf] %v7552
        %7887 = vst [vmem:[#allocation5 + $0x50] sm:$0xf] %v7562
        %7888 = vst [vmem:[#allocation5 + $0x74] sm:$0xf] %v7572
        %7889 = vst [vmem:[#allocation5 + $0x98] sm:$0xf] %v7582
        %7890 = vst [vmem:[#allocation5 + $0xbc] sm:$0xf] %v7592
        %7891 = vst [vmem:[#allocation5 + $0xe0] sm:$0xf] %v7602
        %7892 = vst [vmem:[#allocation5 + $0x104] sm:$0xf] %v7612
        %7893 = vst [vmem:[#allocation5 + $0x128] sm:$0xf] %v7622
        %7894 = vst [vmem:[#allocation5 + $0x14c] sm:$0xf] %v7632
        %7895 = vst [vmem:[#allocation5 + $0x170] sm:$0xf] %v7642
        %7896 = vst [vmem:[#allocation5 + $0x194] sm:$0xf] %v7652
        %7897 = vst [vmem:[#allocation5 + $0x1b8] sm:$0xf] %v7662
        %7898 = vst [vmem:[#allocation5 + $0x1dc] sm:$0xf] %v7672
        %7899 = vst [vmem:[#allocation5 + $0x200] sm:$0xf] %v7682
        %7900 = vst [vmem:[#allocation5 + $0x224] sm:$0xf] %v7692
        %7901 = vst [vmem:[#allocation5 + $0x248] sm:$0xf] %v7702
        %7902 = vst [vmem:[#allocation5 + $0x26c] sm:$0xf] %v7712
        %7903 = vst [vmem:[#allocation5 + $0x290] sm:$0xf] %v7722
        %7904 = vst [vmem:[#allocation5 + $0x2b4] sm:$0xf] %v7732
        %7905 = vst [vmem:[#allocation5 + $0x2d8] sm:$0xf] %v7742
        %7906 = vst [vmem:[#allocation5 + $0x2fc] sm:$0xf] %v7752
        %7907 = vst [vmem:[#allocation5 + $0x320] sm:$0xf] %v7762
        %7908 = vst [vmem:[#allocation5 + $0x344] sm:$0xf] %v7772
        %7909 = vst [vmem:[#allocation5 + $0x368] sm:$0xf] %v7782
        %7910 = vst [vmem:[#allocation5 + $0x38c] sm:$0xf] %v7792
        %7911 = vst [vmem:[#allocation5 + $0x3b0] sm:$0xf] %v7802
        %7912 = vst [vmem:[#allocation5 + $0x3d4] sm:$0xf] %v7812
        %7913 = vst [vmem:[#allocation5 + $0x3f8] sm:$0xf] %v7822
        %7914 = vst [vmem:[#allocation5 + $0x41c] sm:$0xf] %v7832
        %7915 = vst [vmem:[#allocation5 + $0x440] sm:$0xf] %v7842
        %7916 = vst [vmem:[#allocation5 + $0x464] sm:$0xf] %v7852
        %v7917 = vld [vmem:[#allocation3 + $0x8] sm:$0x8]
        %v7918 = vld [vmem:[#allocation3 + $0xc] sm:$0xf]
        %v7919 = vld [vmem:[#allocation3 + $0x10] sm:$0xf]
        %v7920 = vld [vmem:[#allocation3 + $0x14] sm:$0xf]
        %v7921 = vld [vmem:[#allocation3 + $0x18] sm:$0xf]
        %v7922 = vld [vmem:[#allocation3 + $0x1c] sm:$0xf]
        %v7923 = vld [vmem:[#allocation3 + $0x20] sm:$0xf]
        %v7924 = vld [vmem:[#allocation3 + $0x24] sm:$0xf]
        %v7925 = vld [vmem:[#allocation3 + $0x28] sm:$0xf]
        %v7926 = vld [vmem:[#allocation3 + $0x2c] sm:$0xf]
        %v7927 = vld [vmem:[#allocation3 + $0x30] sm:$0xf]
        %v7928 = vld [vmem:[#allocation3 + $0x34] sm:$0xf]
        %v7929 = vld [vmem:[#allocation3 + $0x38] sm:$0xf]
        %v7930 = vld [vmem:[#allocation3 + $0x3c] sm:$0xf]
        %v7931 = vld [vmem:[#allocation3 + $0x40] sm:$0xf]
        %v7932 = vld [vmem:[#allocation3 + $0x44] sm:$0xf]
        %v7933 = vld [vmem:[#allocation3 + $0x48] sm:$0xf]
        %v7934 = vld [vmem:[#allocation3 + $0x4c] sm:$0xf]
        %v7935 = vld [vmem:[#allocation3 + $0x50] sm:$0xf]
        %v7936 = vld [vmem:[#allocation3 + $0x54] sm:$0xf]
        %v7937 = vld [vmem:[#allocation3 + $0x58] sm:$0xf]
        %v7938 = vld [vmem:[#allocation3 + $0x5c] sm:$0xf]
        %v7939 = vld [vmem:[#allocation3 + $0x60] sm:$0xf]
        %v7940 = vld [vmem:[#allocation3 + $0x64] sm:$0xf]
        %v7941 = vld [vmem:[#allocation3 + $0x68] sm:$0xf]
        %v7942 = vld [vmem:[#allocation3 + $0x6c] sm:$0xf]
        %v7943 = vld [vmem:[#allocation3 + $0x70] sm:$0xf]
        %v7944 = vld [vmem:[#allocation3 + $0x74] sm:$0xf]
        %v7945 = vld [vmem:[#allocation3 + $0x78] sm:$0xf]
        %v7946 = vld [vmem:[#allocation3 + $0x7c] sm:$0xf]
        %v7947 = vld [vmem:[#allocation3 + $0x80] sm:$0xf]
        %v7948 = vld [vmem:[#allocation3 + $0x84] sm:$0xf]
        %v7949 = vld [vmem:[#allocation3 + $0x88] sm:$0xf]
        %v7950 = vsel %vm1134, %v7917, 0
        %v7951 = vsel %vm1135, %v7918, 0
        %v7952 = vsel %vm1136, %v7919, 0
        %v7953 = vsel %vm1137, %v7920, 0
        %v7954 = vsel %vm1138, %v7921, 0
        %v7955 = vsel %vm1139, %v7922, 0
        %v7956 = vsel %vm1140, %v7923, 0
        %v7957 = vsel %vm1141, %v7924, 0
        %v7958 = vsel %vm1142, %v7925, 0
        %v7959 = vsel %vm1143, %v7926, 0
        %v7960 = vsel %vm1144, %v7927, 0
        %v7961 = vsel %vm1145, %v7928, 0
        %v7962 = vsel %vm1146, %v7929, 0
        %v7963 = vsel %vm1147, %v7930, 0
        %v7964 = vsel %vm1148, %v7931, 0
        %v7965 = vsel %vm1149, %v7932, 0
        %v7966 = vsel %vm1150, %v7933, 0
        %v7967 = vsel %vm1151, %v7934, 0
        %v7968 = vsel %vm1152, %v7935, 0
        %v7969 = vsel %vm1153, %v7936, 0
        %v7970 = vsel %vm1154, %v7937, 0
        %v7971 = vsel %vm1155, %v7938, 0
        %v7972 = vsel %vm1156, %v7939, 0
        %v7973 = vsel %vm1157, %v7940, 0
        %v7974 = vsel %vm1158, %v7941, 0
        %v7975 = vsel %vm1159, %v7942, 0
        %v7976 = vsel %vm1160, %v7943, 0
        %v7977 = vsel %vm1161, %v7944, 0
        %v7978 = vsel %vm1162, %v7945, 0
        %v7979 = vsel %vm1163, %v7946, 0
        %v7980 = vsel %vm1164, %v7947, 0
        %v7981 = vsel %vm1165, %v7948, 0
        %v7982 = vsel %vm1166, %v7949, 0
        %v7984 = vshrl.u32 %v7950, 16
        %v7986 = vrot.slane %v7984, 7
        %v7987 = vrot.slane %v7986, 4
        %v7989 = vshrl.u32 %v7951, 16
        %v7991 = vrot.slane %v7989, 7
        %v7992 = vshll.u32 %v7951, 16
        %v7994 = vor.u32 %v7991, %v7992
        %v7995 = vsel %vm1202, %v7987, %v7994
        %v7996 = vrot.slane %v7991, 4
        %v7998 = vshrl.u32 %v7952, 16
        %v8000 = vrot.slane %v7998, 7
        %v8001 = vshll.u32 %v7952, 16
        %v8003 = vor.u32 %v8000, %v8001
        %v8004 = vsel %vm1202, %v7996, %v8003
        %v8005 = vrot.slane %v8000, 4
        %v8007 = vshrl.u32 %v7953, 16
        %v8009 = vrot.slane %v8007, 7
        %v8010 = vshll.u32 %v7953, 16
        %v8012 = vor.u32 %v8009, %v8010
        %v8013 = vsel %vm1202, %v8005, %v8012
        %v8014 = vrot.slane %v8009, 4
        %v8016 = vshrl.u32 %v7954, 16
        %v8018 = vrot.slane %v8016, 7
        %v8019 = vshll.u32 %v7954, 16
        %v8021 = vor.u32 %v8018, %v8019
        %v8022 = vsel %vm1202, %v8014, %v8021
        %v8023 = vrot.slane %v8018, 4
        %v8025 = vshrl.u32 %v7955, 16
        %v8027 = vrot.slane %v8025, 7
        %v8028 = vshll.u32 %v7955, 16
        %v8030 = vor.u32 %v8027, %v8028
        %v8031 = vsel %vm1202, %v8023, %v8030
        %v8032 = vrot.slane %v8027, 4
        %v8034 = vshrl.u32 %v7956, 16
        %v8036 = vrot.slane %v8034, 7
        %v8037 = vshll.u32 %v7956, 16
        %v8039 = vor.u32 %v8036, %v8037
        %v8040 = vsel %vm1202, %v8032, %v8039
        %v8041 = vrot.slane %v8036, 4
        %v8043 = vshrl.u32 %v7957, 16
        %v8045 = vrot.slane %v8043, 7
        %v8046 = vshll.u32 %v7957, 16
        %v8048 = vor.u32 %v8045, %v8046
        %v8049 = vsel %vm1202, %v8041, %v8048
        %v8050 = vrot.slane %v8045, 4
        %v8052 = vshrl.u32 %v7958, 16
        %v8054 = vrot.slane %v8052, 7
        %v8055 = vshll.u32 %v7958, 16
        %v8057 = vor.u32 %v8054, %v8055
        %v8058 = vsel %vm1202, %v8050, %v8057
        %v8059 = vrot.slane %v8054, 4
        %v8061 = vshrl.u32 %v7959, 16
        %v8063 = vrot.slane %v8061, 7
        %v8064 = vshll.u32 %v7959, 16
        %v8066 = vor.u32 %v8063, %v8064
        %v8067 = vsel %vm1202, %v8059, %v8066
        %v8068 = vrot.slane %v8063, 4
        %v8070 = vshrl.u32 %v7960, 16
        %v8072 = vrot.slane %v8070, 7
        %v8073 = vshll.u32 %v7960, 16
        %v8075 = vor.u32 %v8072, %v8073
        %v8076 = vsel %vm1202, %v8068, %v8075
        %v8077 = vrot.slane %v8072, 4
        %v8079 = vshrl.u32 %v7961, 16
        %v8081 = vrot.slane %v8079, 7
        %v8082 = vshll.u32 %v7961, 16
        %v8084 = vor.u32 %v8081, %v8082
        %v8085 = vsel %vm1202, %v8077, %v8084
        %v8086 = vrot.slane %v8081, 4
        %v8088 = vshrl.u32 %v7962, 16
        %v8090 = vrot.slane %v8088, 7
        %v8091 = vshll.u32 %v7962, 16
        %v8093 = vor.u32 %v8090, %v8091
        %v8094 = vsel %vm1202, %v8086, %v8093
        %v8095 = vrot.slane %v8090, 4
        %v8097 = vshrl.u32 %v7963, 16
        %v8099 = vrot.slane %v8097, 7
        %v8100 = vshll.u32 %v7963, 16
        %v8102 = vor.u32 %v8099, %v8100
        %v8103 = vsel %vm1202, %v8095, %v8102
        %v8104 = vrot.slane %v8099, 4
        %v8106 = vshrl.u32 %v7964, 16
        %v8108 = vrot.slane %v8106, 7
        %v8109 = vshll.u32 %v7964, 16
        %v8111 = vor.u32 %v8108, %v8109
        %v8112 = vsel %vm1202, %v8104, %v8111
        %v8113 = vrot.slane %v8108, 4
        %v8115 = vshrl.u32 %v7965, 16
        %v8117 = vrot.slane %v8115, 7
        %v8118 = vshll.u32 %v7965, 16
        %v8120 = vor.u32 %v8117, %v8118
        %v8121 = vsel %vm1202, %v8113, %v8120
        %v8122 = vrot.slane %v8117, 4
        %v8124 = vshrl.u32 %v7966, 16
        %v8126 = vrot.slane %v8124, 7
        %v8127 = vshll.u32 %v7966, 16
        %v8129 = vor.u32 %v8126, %v8127
        %v8130 = vsel %vm1202, %v8122, %v8129
        %v8131 = vrot.slane %v8126, 4
        %v8133 = vshrl.u32 %v7967, 16
        %v8135 = vrot.slane %v8133, 7
        %v8136 = vshll.u32 %v7967, 16
        %v8138 = vor.u32 %v8135, %v8136
        %v8139 = vsel %vm1202, %v8131, %v8138
        %v8140 = vrot.slane %v8135, 4
        %v8142 = vshrl.u32 %v7968, 16
        %v8144 = vrot.slane %v8142, 7
        %v8145 = vshll.u32 %v7968, 16
        %v8147 = vor.u32 %v8144, %v8145
        %v8148 = vsel %vm1202, %v8140, %v8147
        %v8149 = vrot.slane %v8144, 4
        %v8151 = vshrl.u32 %v7969, 16
        %v8153 = vrot.slane %v8151, 7
        %v8154 = vshll.u32 %v7969, 16
        %v8156 = vor.u32 %v8153, %v8154
        %v8157 = vsel %vm1202, %v8149, %v8156
        %v8158 = vrot.slane %v8153, 4
        %v8160 = vshrl.u32 %v7970, 16
        %v8162 = vrot.slane %v8160, 7
        %v8163 = vshll.u32 %v7970, 16
        %v8165 = vor.u32 %v8162, %v8163
        %v8166 = vsel %vm1202, %v8158, %v8165
        %v8167 = vrot.slane %v8162, 4
        %v8169 = vshrl.u32 %v7971, 16
        %v8171 = vrot.slane %v8169, 7
        %v8172 = vshll.u32 %v7971, 16
        %v8174 = vor.u32 %v8171, %v8172
        %v8175 = vsel %vm1202, %v8167, %v8174
        %v8176 = vrot.slane %v8171, 4
        %v8178 = vshrl.u32 %v7972, 16
        %v8180 = vrot.slane %v8178, 7
        %v8181 = vshll.u32 %v7972, 16
        %v8183 = vor.u32 %v8180, %v8181
        %v8184 = vsel %vm1202, %v8176, %v8183
        %v8185 = vrot.slane %v8180, 4
        %v8187 = vshrl.u32 %v7973, 16
        %v8189 = vrot.slane %v8187, 7
        %v8190 = vshll.u32 %v7973, 16
        %v8192 = vor.u32 %v8189, %v8190
        %v8193 = vsel %vm1202, %v8185, %v8192
        %v8194 = vrot.slane %v8189, 4
        %v8196 = vshrl.u32 %v7974, 16
        %v8198 = vrot.slane %v8196, 7
        %v8199 = vshll.u32 %v7974, 16
        %v8201 = vor.u32 %v8198, %v8199
        %v8202 = vsel %vm1202, %v8194, %v8201
        %v8203 = vrot.slane %v8198, 4
        %v8205 = vshrl.u32 %v7975, 16
        %v8207 = vrot.slane %v8205, 7
        %v8208 = vshll.u32 %v7975, 16
        %v8210 = vor.u32 %v8207, %v8208
        %v8211 = vsel %vm1202, %v8203, %v8210
        %v8212 = vrot.slane %v8207, 4
        %v8214 = vshrl.u32 %v7976, 16
        %v8216 = vrot.slane %v8214, 7
        %v8217 = vshll.u32 %v7976, 16
        %v8219 = vor.u32 %v8216, %v8217
        %v8220 = vsel %vm1202, %v8212, %v8219
        %v8221 = vrot.slane %v8216, 4
        %v8223 = vshrl.u32 %v7977, 16
        %v8225 = vrot.slane %v8223, 7
        %v8226 = vshll.u32 %v7977, 16
        %v8228 = vor.u32 %v8225, %v8226
        %v8229 = vsel %vm1202, %v8221, %v8228
        %v8230 = vrot.slane %v8225, 4
        %v8232 = vshrl.u32 %v7978, 16
        %v8234 = vrot.slane %v8232, 7
        %v8235 = vshll.u32 %v7978, 16
        %v8237 = vor.u32 %v8234, %v8235
        %v8238 = vsel %vm1202, %v8230, %v8237
        %v8239 = vrot.slane %v8234, 4
        %v8241 = vshrl.u32 %v7979, 16
        %v8243 = vrot.slane %v8241, 7
        %v8244 = vshll.u32 %v7979, 16
        %v8246 = vor.u32 %v8243, %v8244
        %v8247 = vsel %vm1202, %v8239, %v8246
        %v8248 = vrot.slane %v8243, 4
        %v8250 = vshrl.u32 %v7980, 16
        %v8252 = vrot.slane %v8250, 7
        %v8253 = vshll.u32 %v7980, 16
        %v8255 = vor.u32 %v8252, %v8253
        %v8256 = vsel %vm1202, %v8248, %v8255
        %v8257 = vrot.slane %v8252, 4
        %v8259 = vshrl.u32 %v7981, 16
        %v8261 = vrot.slane %v8259, 7
        %v8262 = vshll.u32 %v7981, 16
        %v8264 = vor.u32 %v8261, %v8262
        %v8265 = vsel %vm1202, %v8257, %v8264
        %v8266 = vrot.slane %v8261, 4
        %v8268 = vshrl.u32 %v7982, 16
        %v8270 = vrot.slane %v8268, 7
        %v8271 = vshll.u32 %v7982, 16
        %v8273 = vor.u32 %v8270, %v8271
        %v8274 = vsel %vm1202, %v8266, %v8273
        %8307 = vst [vmem:[#allocation5 + $0xc] sm:$0xf] %v7995
        %8308 = vst [vmem:[#allocation5 + $0x30] sm:$0xf] %v8004
        %8309 = vst [vmem:[#allocation5 + $0x54] sm:$0xf] %v8013
        %8310 = vst [vmem:[#allocation5 + $0x78] sm:$0xf] %v8022
        %8311 = vst [vmem:[#allocation5 + $0x9c] sm:$0xf] %v8031
        %8312 = vst [vmem:[#allocation5 + $0xc0] sm:$0xf] %v8040
        %8313 = vst [vmem:[#allocation5 + $0xe4] sm:$0xf] %v8049
        %8314 = vst [vmem:[#allocation5 + $0x108] sm:$0xf] %v8058
        %8315 = vst [vmem:[#allocation5 + $0x12c] sm:$0xf] %v8067
        %8316 = vst [vmem:[#allocation5 + $0x150] sm:$0xf] %v8076
        %8317 = vst [vmem:[#allocation5 + $0x174] sm:$0xf] %v8085
        %8318 = vst [vmem:[#allocation5 + $0x198] sm:$0xf] %v8094
        %8319 = vst [vmem:[#allocation5 + $0x1bc] sm:$0xf] %v8103
        %8320 = vst [vmem:[#allocation5 + $0x1e0] sm:$0xf] %v8112
        %8321 = vst [vmem:[#allocation5 + $0x204] sm:$0xf] %v8121
        %8322 = vst [vmem:[#allocation5 + $0x228] sm:$0xf] %v8130
        %8323 = vst [vmem:[#allocation5 + $0x24c] sm:$0xf] %v8139
        %8324 = vst [vmem:[#allocation5 + $0x270] sm:$0xf] %v8148
        %8325 = vst [vmem:[#allocation5 + $0x294] sm:$0xf] %v8157
        %8326 = vst [vmem:[#allocation5 + $0x2b8] sm:$0xf] %v8166
        %8327 = vst [vmem:[#allocation5 + $0x2dc] sm:$0xf] %v8175
        %8328 = vst [vmem:[#allocation5 + $0x300] sm:$0xf] %v8184
        %8329 = vst [vmem:[#allocation5 + $0x324] sm:$0xf] %v8193
        %8330 = vst [vmem:[#allocation5 + $0x348] sm:$0xf] %v8202
        %8331 = vst [vmem:[#allocation5 + $0x36c] sm:$0xf] %v8211
        %8332 = vst [vmem:[#allocation5 + $0x390] sm:$0xf] %v8220
        %8333 = vst [vmem:[#allocation5 + $0x3b4] sm:$0xf] %v8229
        %8334 = vst [vmem:[#allocation5 + $0x3d8] sm:$0xf] %v8238
        %8335 = vst [vmem:[#allocation5 + $0x3fc] sm:$0xf] %v8247
        %8336 = vst [vmem:[#allocation5 + $0x420] sm:$0xf] %v8256
        %8337 = vst [vmem:[#allocation5 + $0x444] sm:$0xf] %v8265
        %8338 = vst [vmem:[#allocation5 + $0x468] sm:$0xf] %v8274
        %v8339 = vld [vmem:[#allocation3 + $0xc] sm:$0xf]
        %v8340 = vld [vmem:[#allocation3 + $0x10] sm:$0xf]
        %v8341 = vld [vmem:[#allocation3 + $0x14] sm:$0xf]
        %v8342 = vld [vmem:[#allocation3 + $0x18] sm:$0xf]
        %v8343 = vld [vmem:[#allocation3 + $0x1c] sm:$0xf]
        %v8344 = vld [vmem:[#allocation3 + $0x20] sm:$0xf]
        %v8345 = vld [vmem:[#allocation3 + $0x24] sm:$0xf]
        %v8346 = vld [vmem:[#allocation3 + $0x28] sm:$0xf]
        %v8347 = vld [vmem:[#allocation3 + $0x2c] sm:$0xf]
        %v8348 = vld [vmem:[#allocation3 + $0x30] sm:$0xf]
        %v8349 = vld [vmem:[#allocation3 + $0x34] sm:$0xf]
        %v8350 = vld [vmem:[#allocation3 + $0x38] sm:$0xf]
        %v8351 = vld [vmem:[#allocation3 + $0x3c] sm:$0xf]
        %v8352 = vld [vmem:[#allocation3 + $0x40] sm:$0xf]
        %v8353 = vld [vmem:[#allocation3 + $0x44] sm:$0xf]
        %v8354 = vld [vmem:[#allocation3 + $0x48] sm:$0xf]
        %v8355 = vld [vmem:[#allocation3 + $0x4c] sm:$0xf]
        %v8356 = vld [vmem:[#allocation3 + $0x50] sm:$0xf]
        %v8357 = vld [vmem:[#allocation3 + $0x54] sm:$0xf]
        %v8358 = vld [vmem:[#allocation3 + $0x58] sm:$0xf]
        %v8359 = vld [vmem:[#allocation3 + $0x5c] sm:$0xf]
        %v8360 = vld [vmem:[#allocation3 + $0x60] sm:$0xf]
        %v8361 = vld [vmem:[#allocation3 + $0x64] sm:$0xf]
        %v8362 = vld [vmem:[#allocation3 + $0x68] sm:$0xf]
        %v8363 = vld [vmem:[#allocation3 + $0x6c] sm:$0xf]
        %v8364 = vld [vmem:[#allocation3 + $0x70] sm:$0xf]
        %v8365 = vld [vmem:[#allocation3 + $0x74] sm:$0xf]
        %v8366 = vld [vmem:[#allocation3 + $0x78] sm:$0xf]
        %v8367 = vld [vmem:[#allocation3 + $0x7c] sm:$0xf]
        %v8368 = vld [vmem:[#allocation3 + $0x80] sm:$0xf]
        %v8369 = vld [vmem:[#allocation3 + $0x84] sm:$0xf]
        %v8370 = vld [vmem:[#allocation3 + $0x88] sm:$0xf]
        %8371 = vst [vmem:[#allocation5 + $0x10] sm:$0xf] %v8339
        %8372 = vst [vmem:[#allocation5 + $0x34] sm:$0xf] %v8340
        %8373 = vst [vmem:[#allocation5 + $0x58] sm:$0xf] %v8341
        %8374 = vst [vmem:[#allocation5 + $0x7c] sm:$0xf] %v8342
        %8375 = vst [vmem:[#allocation5 + $0xa0] sm:$0xf] %v8343
        %8376 = vst [vmem:[#allocation5 + $0xc4] sm:$0xf] %v8344
        %8377 = vst [vmem:[#allocation5 + $0xe8] sm:$0xf] %v8345
        %8378 = vst [vmem:[#allocation5 + $0x10c] sm:$0xf] %v8346
        %8379 = vst [vmem:[#allocation5 + $0x130] sm:$0xf] %v8347
        %8380 = vst [vmem:[#allocation5 + $0x154] sm:$0xf] %v8348
        %8381 = vst [vmem:[#allocation5 + $0x178] sm:$0xf] %v8349
        %8382 = vst [vmem:[#allocation5 + $0x19c] sm:$0xf] %v8350
        %8383 = vst [vmem:[#allocation5 + $0x1c0] sm:$0xf] %v8351
        %8384 = vst [vmem:[#allocation5 + $0x1e4] sm:$0xf] %v8352
        %8385 = vst [vmem:[#allocation5 + $0x208] sm:$0xf] %v8353
        %8386 = vst [vmem:[#allocation5 + $0x22c] sm:$0xf] %v8354
        %8387 = vst [vmem:[#allocation5 + $0x250] sm:$0xf] %v8355
        %8388 = vst [vmem:[#allocation5 + $0x274] sm:$0xf] %v8356
        %8389 = vst [vmem:[#allocation5 + $0x298] sm:$0xf] %v8357
        %8390 = vst [vmem:[#allocation5 + $0x2bc] sm:$0xf] %v8358
        %8391 = vst [vmem:[#allocation5 + $0x2e0] sm:$0xf] %v8359
        %8392 = vst [vmem:[#allocation5 + $0x304] sm:$0xf] %v8360
        %8393 = vst [vmem:[#allocation5 + $0x328] sm:$0xf] %v8361
        %8394 = vst [vmem:[#allocation5 + $0x34c] sm:$0xf] %v8362
        %8395 = vst [vmem:[#allocation5 + $0x370] sm:$0xf] %v8363
        %8396 = vst [vmem:[#allocation5 + $0x394] sm:$0xf] %v8364
        %8397 = vst [vmem:[#allocation5 + $0x3b8] sm:$0xf] %v8365
        %8398 = vst [vmem:[#allocation5 + $0x3dc] sm:$0xf] %v8366
        %8399 = vst [vmem:[#allocation5 + $0x400] sm:$0xf] %v8367
        %8400 = vst [vmem:[#allocation5 + $0x424] sm:$0xf] %v8368
        %8401 = vst [vmem:[#allocation5 + $0x448] sm:$0xf] %v8369
        %8402 = vst [vmem:[#allocation5 + $0x46c] sm:$0xf] %v8370
        %v8403 = vld [vmem:[#allocation3 + $0xc] sm:$0xf]
        %v8404 = vld [vmem:[#allocation3 + $0x10] sm:$0xf]
        %v8405 = vld [vmem:[#allocation3 + $0x14] sm:$0xf]
        %v8406 = vld [vmem:[#allocation3 + $0x18] sm:$0xf]
        %v8407 = vld [vmem:[#allocation3 + $0x1c] sm:$0xf]
        %v8408 = vld [vmem:[#allocation3 + $0x20] sm:$0xf]
        %v8409 = vld [vmem:[#allocation3 + $0x24] sm:$0xf]
        %v8410 = vld [vmem:[#allocation3 + $0x28] sm:$0xf]
        %v8411 = vld [vmem:[#allocation3 + $0x2c] sm:$0xf]
        %v8412 = vld [vmem:[#allocation3 + $0x30] sm:$0xf]
        %v8413 = vld [vmem:[#allocation3 + $0x34] sm:$0xf]
        %v8414 = vld [vmem:[#allocation3 + $0x38] sm:$0xf]
        %v8415 = vld [vmem:[#allocation3 + $0x3c] sm:$0xf]
        %v8416 = vld [vmem:[#allocation3 + $0x40] sm:$0xf]
        %v8417 = vld [vmem:[#allocation3 + $0x44] sm:$0xf]
        %v8418 = vld [vmem:[#allocation3 + $0x48] sm:$0xf]
        %v8419 = vld [vmem:[#allocation3 + $0x4c] sm:$0xf]
        %v8420 = vld [vmem:[#allocation3 + $0x50] sm:$0xf]
        %v8421 = vld [vmem:[#allocation3 + $0x54] sm:$0xf]
        %v8422 = vld [vmem:[#allocation3 + $0x58] sm:$0xf]
        %v8423 = vld [vmem:[#allocation3 + $0x5c] sm:$0xf]
        %v8424 = vld [vmem:[#allocation3 + $0x60] sm:$0xf]
        %v8425 = vld [vmem:[#allocation3 + $0x64] sm:$0xf]
        %v8426 = vld [vmem:[#allocation3 + $0x68] sm:$0xf]
        %v8427 = vld [vmem:[#allocation3 + $0x6c] sm:$0xf]
        %v8428 = vld [vmem:[#allocation3 + $0x70] sm:$0xf]
        %v8429 = vld [vmem:[#allocation3 + $0x74] sm:$0xf]
        %v8430 = vld [vmem:[#allocation3 + $0x78] sm:$0xf]
        %v8431 = vld [vmem:[#allocation3 + $0x7c] sm:$0xf]
        %v8432 = vld [vmem:[#allocation3 + $0x80] sm:$0xf]
        %v8433 = vld [vmem:[#allocation3 + $0x84] sm:$0xf]
        %v8434 = vld [vmem:[#allocation3 + $0x88] sm:$0xf]
        %v8435 = vld [vmem:[#allocation3 + $0x8c] sm:$0x1]
        %v8436 = vsel %vm2167, %v8403, 0
        %v8437 = vsel %vm2168, %v8404, 0
        %v8438 = vsel %vm2169, %v8405, 0
        %v8439 = vsel %vm2170, %v8406, 0
        %v8440 = vsel %vm2171, %v8407, 0
        %v8441 = vsel %vm2172, %v8408, 0
        %v8442 = vsel %vm2173, %v8409, 0
        %v8443 = vsel %vm2174, %v8410, 0
        %v8444 = vsel %vm2175, %v8411, 0
        %v8445 = vsel %vm2176, %v8412, 0
        %v8446 = vsel %vm2177, %v8413, 0
        %v8447 = vsel %vm2178, %v8414, 0
        %v8448 = vsel %vm2179, %v8415, 0
        %v8449 = vsel %vm2180, %v8416, 0
        %v8450 = vsel %vm2181, %v8417, 0
        %v8451 = vsel %vm2182, %v8418, 0
        %v8452 = vsel %vm2183, %v8419, 0
        %v8453 = vsel %vm2184, %v8420, 0
        %v8454 = vsel %vm2185, %v8421, 0
        %v8455 = vsel %vm2186, %v8422, 0
        %v8456 = vsel %vm2187, %v8423, 0
        %v8457 = vsel %vm2188, %v8424, 0
        %v8458 = vsel %vm2189, %v8425, 0
        %v8459 = vsel %vm2190, %v8426, 0
        %v8460 = vsel %vm2191, %v8427, 0
        %v8461 = vsel %vm2192, %v8428, 0
        %v8462 = vsel %vm2193, %v8429, 0
        %v8463 = vsel %vm2194, %v8430, 0
        %v8464 = vsel %vm2195, %v8431, 0
        %v8465 = vsel %vm2196, %v8432, 0
        %v8466 = vsel %vm2197, %v8433, 0
        %v8467 = vsel %vm2198, %v8434, 0
        %v8468 = vsel %vm2199, %v8435, 0
        %v8470 = vshrl.u32 %v8436, 16
        %v8472 = vrot.slane %v8470, 4
        %v8473 = vshll.u32 %v8436, 16
        %v8475 = vrot.slane %v8473, 5
        %v8476 = vor.u32 %v8472, %v8475
        %v8477 = vrot.slane %v8476, 4
        %v8479 = vshll.u32 %v8437, 16
        %v8481 = vrot.slane %v8479, 5
        %v8482 = vsel %vm814, %v8477, %v8481
        %v8483 = vshrl.u32 %v8437, 16
        %v8485 = vrot.slane %v8483, 4
        %v8486 = vor.u32 %v8485, %v8481
        %v8487 = vrot.slane %v8486, 4
        %v8489 = vshll.u32 %v8438, 16
        %v8491 = vrot.slane %v8489, 5
        %v8492 = vsel %vm814, %v8487, %v8491
        %v8493 = vshrl.u32 %v8438, 16
        %v8495 = vrot.slane %v8493, 4
        %v8496 = vor.u32 %v8495, %v8491
        %v8497 = vrot.slane %v8496, 4
        %v8499 = vshll.u32 %v8439, 16
        %v8501 = vrot.slane %v8499, 5
        %v8502 = vsel %vm814, %v8497, %v8501
        %v8503 = vshrl.u32 %v8439, 16
        %v8505 = vrot.slane %v8503, 4
        %v8506 = vor.u32 %v8505, %v8501
        %v8507 = vrot.slane %v8506, 4
        %v8509 = vshll.u32 %v8440, 16
        %v8511 = vrot.slane %v8509, 5
        %v8512 = vsel %vm814, %v8507, %v8511
        %v8513 = vshrl.u32 %v8440, 16
        %v8515 = vrot.slane %v8513, 4
        %v8516 = vor.u32 %v8515, %v8511
        %v8517 = vrot.slane %v8516, 4
        %v8519 = vshll.u32 %v8441, 16
        %v8521 = vrot.slane %v8519, 5
        %v8522 = vsel %vm814, %v8517, %v8521
        %v8523 = vshrl.u32 %v8441, 16
        %v8525 = vrot.slane %v8523, 4
        %v8526 = vor.u32 %v8525, %v8521
        %v8527 = vrot.slane %v8526, 4
        %v8529 = vshll.u32 %v8442, 16
        %v8531 = vrot.slane %v8529, 5
        %v8532 = vsel %vm814, %v8527, %v8531
        %v8533 = vshrl.u32 %v8442, 16
        %v8535 = vrot.slane %v8533, 4
        %v8536 = vor.u32 %v8535, %v8531
        %v8537 = vrot.slane %v8536, 4
        %v8539 = vshll.u32 %v8443, 16
        %v8541 = vrot.slane %v8539, 5
        %v8542 = vsel %vm814, %v8537, %v8541
        %v8543 = vshrl.u32 %v8443, 16
        %v8545 = vrot.slane %v8543, 4
        %v8546 = vor.u32 %v8545, %v8541
        %v8547 = vrot.slane %v8546, 4
        %v8549 = vshll.u32 %v8444, 16
        %v8551 = vrot.slane %v8549, 5
        %v8552 = vsel %vm814, %v8547, %v8551
        %v8553 = vshrl.u32 %v8444, 16
        %v8555 = vrot.slane %v8553, 4
        %v8556 = vor.u32 %v8555, %v8551
        %v8557 = vrot.slane %v8556, 4
        %v8559 = vshll.u32 %v8445, 16
        %v8561 = vrot.slane %v8559, 5
        %v8562 = vsel %vm814, %v8557, %v8561
        %v8563 = vshrl.u32 %v8445, 16
        %v8565 = vrot.slane %v8563, 4
        %v8566 = vor.u32 %v8565, %v8561
        %v8567 = vrot.slane %v8566, 4
        %v8569 = vshll.u32 %v8446, 16
        %v8571 = vrot.slane %v8569, 5
        %v8572 = vsel %vm814, %v8567, %v8571
        %v8573 = vshrl.u32 %v8446, 16
        %v8575 = vrot.slane %v8573, 4
        %v8576 = vor.u32 %v8575, %v8571
        %v8577 = vrot.slane %v8576, 4
        %v8579 = vshll.u32 %v8447, 16
        %v8581 = vrot.slane %v8579, 5
        %v8582 = vsel %vm814, %v8577, %v8581
        %v8583 = vshrl.u32 %v8447, 16
        %v8585 = vrot.slane %v8583, 4
        %v8586 = vor.u32 %v8585, %v8581
        %v8587 = vrot.slane %v8586, 4
        %v8589 = vshll.u32 %v8448, 16
        %v8591 = vrot.slane %v8589, 5
        %v8592 = vsel %vm814, %v8587, %v8591
        %v8593 = vshrl.u32 %v8448, 16
        %v8595 = vrot.slane %v8593, 4
        %v8596 = vor.u32 %v8595, %v8591
        %v8597 = vrot.slane %v8596, 4
        %v8599 = vshll.u32 %v8449, 16
        %v8601 = vrot.slane %v8599, 5
        %v8602 = vsel %vm814, %v8597, %v8601
        %v8603 = vshrl.u32 %v8449, 16
        %v8605 = vrot.slane %v8603, 4
        %v8606 = vor.u32 %v8605, %v8601
        %v8607 = vrot.slane %v8606, 4
        %v8609 = vshll.u32 %v8450, 16
        %v8611 = vrot.slane %v8609, 5
        %v8612 = vsel %vm814, %v8607, %v8611
        %v8613 = vshrl.u32 %v8450, 16
        %v8615 = vrot.slane %v8613, 4
        %v8616 = vor.u32 %v8615, %v8611
        %v8617 = vrot.slane %v8616, 4
        %v8619 = vshll.u32 %v8451, 16
        %v8621 = vrot.slane %v8619, 5
        %v8622 = vsel %vm814, %v8617, %v8621
        %v8623 = vshrl.u32 %v8451, 16
        %v8625 = vrot.slane %v8623, 4
        %v8626 = vor.u32 %v8625, %v8621
        %v8627 = vrot.slane %v8626, 4
        %v8629 = vshll.u32 %v8452, 16
        %v8631 = vrot.slane %v8629, 5
        %v8632 = vsel %vm814, %v8627, %v8631
        %v8633 = vshrl.u32 %v8452, 16
        %v8635 = vrot.slane %v8633, 4
        %v8636 = vor.u32 %v8635, %v8631
        %v8637 = vrot.slane %v8636, 4
        %v8639 = vshll.u32 %v8453, 16
        %v8641 = vrot.slane %v8639, 5
        %v8642 = vsel %vm814, %v8637, %v8641
        %v8643 = vshrl.u32 %v8453, 16
        %v8645 = vrot.slane %v8643, 4
        %v8646 = vor.u32 %v8645, %v8641
        %v8647 = vrot.slane %v8646, 4
        %v8649 = vshll.u32 %v8454, 16
        %v8651 = vrot.slane %v8649, 5
        %v8652 = vsel %vm814, %v8647, %v8651
        %v8653 = vshrl.u32 %v8454, 16
        %v8655 = vrot.slane %v8653, 4
        %v8656 = vor.u32 %v8655, %v8651
        %v8657 = vrot.slane %v8656, 4
        %v8659 = vshll.u32 %v8455, 16
        %v8661 = vrot.slane %v8659, 5
        %v8662 = vsel %vm814, %v8657, %v8661
        %v8663 = vshrl.u32 %v8455, 16
        %v8665 = vrot.slane %v8663, 4
        %v8666 = vor.u32 %v8665, %v8661
        %v8667 = vrot.slane %v8666, 4
        %v8669 = vshll.u32 %v8456, 16
        %v8671 = vrot.slane %v8669, 5
        %v8672 = vsel %vm814, %v8667, %v8671
        %v8673 = vshrl.u32 %v8456, 16
        %v8675 = vrot.slane %v8673, 4
        %v8676 = vor.u32 %v8675, %v8671
        %v8677 = vrot.slane %v8676, 4
        %v8679 = vshll.u32 %v8457, 16
        %v8681 = vrot.slane %v8679, 5
        %v8682 = vsel %vm814, %v8677, %v8681
        %v8683 = vshrl.u32 %v8457, 16
        %v8685 = vrot.slane %v8683, 4
        %v8686 = vor.u32 %v8685, %v8681
        %v8687 = vrot.slane %v8686, 4
        %v8689 = vshll.u32 %v8458, 16
        %v8691 = vrot.slane %v8689, 5
        %v8692 = vsel %vm814, %v8687, %v8691
        %v8693 = vshrl.u32 %v8458, 16
        %v8695 = vrot.slane %v8693, 4
        %v8696 = vor.u32 %v8695, %v8691
        %v8697 = vrot.slane %v8696, 4
        %v8699 = vshll.u32 %v8459, 16
        %v8701 = vrot.slane %v8699, 5
        %v8702 = vsel %vm814, %v8697, %v8701
        %v8703 = vshrl.u32 %v8459, 16
        %v8705 = vrot.slane %v8703, 4
        %v8706 = vor.u32 %v8705, %v8701
        %v8707 = vrot.slane %v8706, 4
        %v8709 = vshll.u32 %v8460, 16
        %v8711 = vrot.slane %v8709, 5
        %v8712 = vsel %vm814, %v8707, %v8711
        %v8713 = vshrl.u32 %v8460, 16
        %v8715 = vrot.slane %v8713, 4
        %v8716 = vor.u32 %v8715, %v8711
        %v8717 = vrot.slane %v8716, 4
        %v8719 = vshll.u32 %v8461, 16
        %v8721 = vrot.slane %v8719, 5
        %v8722 = vsel %vm814, %v8717, %v8721
        %v8723 = vshrl.u32 %v8461, 16
        %v8725 = vrot.slane %v8723, 4
        %v8726 = vor.u32 %v8725, %v8721
        %v8727 = vrot.slane %v8726, 4
        %v8729 = vshll.u32 %v8462, 16
        %v8731 = vrot.slane %v8729, 5
        %v8732 = vsel %vm814, %v8727, %v8731
        %v8733 = vshrl.u32 %v8462, 16
        %v8735 = vrot.slane %v8733, 4
        %v8736 = vor.u32 %v8735, %v8731
        %v8737 = vrot.slane %v8736, 4
        %v8739 = vshll.u32 %v8463, 16
        %v8741 = vrot.slane %v8739, 5
        %v8742 = vsel %vm814, %v8737, %v8741
        %v8743 = vshrl.u32 %v8463, 16
        %v8745 = vrot.slane %v8743, 4
        %v8746 = vor.u32 %v8745, %v8741
        %v8747 = vrot.slane %v8746, 4
        %v8749 = vshll.u32 %v8464, 16
        %v8751 = vrot.slane %v8749, 5
        %v8752 = vsel %vm814, %v8747, %v8751
        %v8753 = vshrl.u32 %v8464, 16
        %v8755 = vrot.slane %v8753, 4
        %v8756 = vor.u32 %v8755, %v8751
        %v8757 = vrot.slane %v8756, 4
        %v8759 = vshll.u32 %v8465, 16
        %v8761 = vrot.slane %v8759, 5
        %v8762 = vsel %vm814, %v8757, %v8761
        %v8763 = vshrl.u32 %v8465, 16
        %v8765 = vrot.slane %v8763, 4
        %v8766 = vor.u32 %v8765, %v8761
        %v8767 = vrot.slane %v8766, 4
        %v8769 = vshll.u32 %v8466, 16
        %v8771 = vrot.slane %v8769, 5
        %v8772 = vsel %vm814, %v8767, %v8771
        %v8773 = vshrl.u32 %v8466, 16
        %v8775 = vrot.slane %v8773, 4
        %v8776 = vor.u32 %v8775, %v8771
        %v8777 = vrot.slane %v8776, 4
        %v8779 = vshll.u32 %v8467, 16
        %v8781 = vrot.slane %v8779, 5
        %v8782 = vsel %vm814, %v8777, %v8781
        %v8783 = vshrl.u32 %v8467, 16
        %v8785 = vrot.slane %v8783, 4
        %v8786 = vor.u32 %v8785, %v8781
        %v8787 = vrot.slane %v8786, 4
        %v8789 = vshll.u32 %v8468, 16
        %v8791 = vrot.slane %v8789, 5
        %v8792 = vsel %vm814, %v8787, %v8791
        %8825 = vst [vmem:[#allocation5 + $0x14] sm:$0xf] %v8482
        %8826 = vst [vmem:[#allocation5 + $0x38] sm:$0xf] %v8492
        %8827 = vst [vmem:[#allocation5 + $0x5c] sm:$0xf] %v8502
        %8828 = vst [vmem:[#allocation5 + $0x80] sm:$0xf] %v8512
        %8829 = vst [vmem:[#allocation5 + $0xa4] sm:$0xf] %v8522
        %8830 = vst [vmem:[#allocation5 + $0xc8] sm:$0xf] %v8532
        %8831 = vst [vmem:[#allocation5 + $0xec] sm:$0xf] %v8542
        %8832 = vst [vmem:[#allocation5 + $0x110] sm:$0xf] %v8552
        %8833 = vst [vmem:[#allocation5 + $0x134] sm:$0xf] %v8562
        %8834 = vst [vmem:[#allocation5 + $0x158] sm:$0xf] %v8572
        %8835 = vst [vmem:[#allocation5 + $0x17c] sm:$0xf] %v8582
        %8836 = vst [vmem:[#allocation5 + $0x1a0] sm:$0xf] %v8592
        %8837 = vst [vmem:[#allocation5 + $0x1c4] sm:$0xf] %v8602
        %8838 = vst [vmem:[#allocation5 + $0x1e8] sm:$0xf] %v8612
        %8839 = vst [vmem:[#allocation5 + $0x20c] sm:$0xf] %v8622
        %8840 = vst [vmem:[#allocation5 + $0x230] sm:$0xf] %v8632
        %8841 = vst [vmem:[#allocation5 + $0x254] sm:$0xf] %v8642
        %8842 = vst [vmem:[#allocation5 + $0x278] sm:$0xf] %v8652
        %8843 = vst [vmem:[#allocation5 + $0x29c] sm:$0xf] %v8662
        %8844 = vst [vmem:[#allocation5 + $0x2c0] sm:$0xf] %v8672
        %8845 = vst [vmem:[#allocation5 + $0x2e4] sm:$0xf] %v8682
        %8846 = vst [vmem:[#allocation5 + $0x308] sm:$0xf] %v8692
        %8847 = vst [vmem:[#allocation5 + $0x32c] sm:$0xf] %v8702
        %8848 = vst [vmem:[#allocation5 + $0x350] sm:$0xf] %v8712
        %8849 = vst [vmem:[#allocation5 + $0x374] sm:$0xf] %v8722
        %8850 = vst [vmem:[#allocation5 + $0x398] sm:$0xf] %v8732
        %8851 = vst [vmem:[#allocation5 + $0x3bc] sm:$0xf] %v8742
        %8852 = vst [vmem:[#allocation5 + $0x3e0] sm:$0xf] %v8752
        %8853 = vst [vmem:[#allocation5 + $0x404] sm:$0xf] %v8762
        %8854 = vst [vmem:[#allocation5 + $0x428] sm:$0xf] %v8772
        %8855 = vst [vmem:[#allocation5 + $0x44c] sm:$0xf] %v8782
        %8856 = vst [vmem:[#allocation5 + $0x470] sm:$0xf] %v8792
        %v8857 = vld [vmem:[#allocation3 + $0x10] sm:$0x8]
        %v8858 = vld [vmem:[#allocation3 + $0x14] sm:$0xf]
        %v8859 = vld [vmem:[#allocation3 + $0x18] sm:$0xf]
        %v8860 = vld [vmem:[#allocation3 + $0x1c] sm:$0xf]
        %v8861 = vld [vmem:[#allocation3 + $0x20] sm:$0xf]
        %v8862 = vld [vmem:[#allocation3 + $0x24] sm:$0xf]
        %v8863 = vld [vmem:[#allocation3 + $0x28] sm:$0xf]
        %v8864 = vld [vmem:[#allocation3 + $0x2c] sm:$0xf]
        %v8865 = vld [vmem:[#allocation3 + $0x30] sm:$0xf]
        %v8866 = vld [vmem:[#allocation3 + $0x34] sm:$0xf]
        %v8867 = vld [vmem:[#allocation3 + $0x38] sm:$0xf]
        %v8868 = vld [vmem:[#allocation3 + $0x3c] sm:$0xf]
        %v8869 = vld [vmem:[#allocation3 + $0x40] sm:$0xf]
        %v8870 = vld [vmem:[#allocation3 + $0x44] sm:$0xf]
        %v8871 = vld [vmem:[#allocation3 + $0x48] sm:$0xf]
        %v8872 = vld [vmem:[#allocation3 + $0x4c] sm:$0xf]
        %v8873 = vld [vmem:[#allocation3 + $0x50] sm:$0xf]
        %v8874 = vld [vmem:[#allocation3 + $0x54] sm:$0xf]
        %v8875 = vld [vmem:[#allocation3 + $0x58] sm:$0xf]
        %v8876 = vld [vmem:[#allocation3 + $0x5c] sm:$0xf]
        %v8877 = vld [vmem:[#allocation3 + $0x60] sm:$0xf]
        %v8878 = vld [vmem:[#allocation3 + $0x64] sm:$0xf]
        %v8879 = vld [vmem:[#allocation3 + $0x68] sm:$0xf]
        %v8880 = vld [vmem:[#allocation3 + $0x6c] sm:$0xf]
        %v8881 = vld [vmem:[#allocation3 + $0x70] sm:$0xf]
        %v8882 = vld [vmem:[#allocation3 + $0x74] sm:$0xf]
        %v8883 = vld [vmem:[#allocation3 + $0x78] sm:$0xf]
        %v8884 = vld [vmem:[#allocation3 + $0x7c] sm:$0xf]
        %v8885 = vld [vmem:[#allocation3 + $0x80] sm:$0xf]
        %v8886 = vld [vmem:[#allocation3 + $0x84] sm:$0xf]
        %v8887 = vld [vmem:[#allocation3 + $0x88] sm:$0xf]
        %v8888 = vld [vmem:[#allocation3 + $0x8c] sm:$0xf]
        %v8889 = vld [vmem:[#allocation3 + $0x90] sm:$0xf]
        %v8890 = vsel %vm1134, %v8857, 0
        %v8891 = vsel %vm1135, %v8858, 0
        %v8892 = vsel %vm1136, %v8859, 0
        %v8893 = vsel %vm1137, %v8860, 0
        %v8894 = vsel %vm1138, %v8861, 0
        %v8895 = vsel %vm1139, %v8862, 0
        %v8896 = vsel %vm1140, %v8863, 0
        %v8897 = vsel %vm1141, %v8864, 0
        %v8898 = vsel %vm1142, %v8865, 0
        %v8899 = vsel %vm1143, %v8866, 0
        %v8900 = vsel %vm1144, %v8867, 0
        %v8901 = vsel %vm1145, %v8868, 0
        %v8902 = vsel %vm1146, %v8869, 0
        %v8903 = vsel %vm1147, %v8870, 0
        %v8904 = vsel %vm1148, %v8871, 0
        %v8905 = vsel %vm1149, %v8872, 0
        %v8906 = vsel %vm1150, %v8873, 0
        %v8907 = vsel %vm1151, %v8874, 0
        %v8908 = vsel %vm1152, %v8875, 0
        %v8909 = vsel %vm1153, %v8876, 0
        %v8910 = vsel %vm1154, %v8877, 0
        %v8911 = vsel %vm1155, %v8878, 0
        %v8912 = vsel %vm1156, %v8879, 0
        %v8913 = vsel %vm1157, %v8880, 0
        %v8914 = vsel %vm1158, %v8881, 0
        %v8915 = vsel %vm1159, %v8882, 0
        %v8916 = vsel %vm1160, %v8883, 0
        %v8917 = vsel %vm1161, %v8884, 0
        %v8918 = vsel %vm1162, %v8885, 0
        %v8919 = vsel %vm1163, %v8886, 0
        %v8920 = vsel %vm1164, %v8887, 0
        %v8921 = vsel %vm1165, %v8888, 0
        %v8922 = vsel %vm1166, %v8889, 0
        %v8924 = vshrl.u32 %v8890, 16
        %v8926 = vrot.slane %v8924, 7
        %v8927 = vrot.slane %v8926, 4
        %v8929 = vshrl.u32 %v8891, 16
        %v8931 = vrot.slane %v8929, 7
        %v8932 = vshll.u32 %v8891, 16
        %v8934 = vor.u32 %v8931, %v8932
        %v8935 = vsel %vm1202, %v8927, %v8934
        %v8936 = vrot.slane %v8931, 4
        %v8938 = vshrl.u32 %v8892, 16
        %v8940 = vrot.slane %v8938, 7
        %v8941 = vshll.u32 %v8892, 16
        %v8943 = vor.u32 %v8940, %v8941
        %v8944 = vsel %vm1202, %v8936, %v8943
        %v8945 = vrot.slane %v8940, 4
        %v8947 = vshrl.u32 %v8893, 16
        %v8949 = vrot.slane %v8947, 7
        %v8950 = vshll.u32 %v8893, 16
        %v8952 = vor.u32 %v8949, %v8950
        %v8953 = vsel %vm1202, %v8945, %v8952
        %v8954 = vrot.slane %v8949, 4
        %v8956 = vshrl.u32 %v8894, 16
        %v8958 = vrot.slane %v8956, 7
        %v8959 = vshll.u32 %v8894, 16
        %v8961 = vor.u32 %v8958, %v8959
        %v8962 = vsel %vm1202, %v8954, %v8961
        %v8963 = vrot.slane %v8958, 4
        %v8965 = vshrl.u32 %v8895, 16
        %v8967 = vrot.slane %v8965, 7
        %v8968 = vshll.u32 %v8895, 16
        %v8970 = vor.u32 %v8967, %v8968
        %v8971 = vsel %vm1202, %v8963, %v8970
        %v8972 = vrot.slane %v8967, 4
        %v8974 = vshrl.u32 %v8896, 16
        %v8976 = vrot.slane %v8974, 7
        %v8977 = vshll.u32 %v8896, 16
        %v8979 = vor.u32 %v8976, %v8977
        %v8980 = vsel %vm1202, %v8972, %v8979
        %v8981 = vrot.slane %v8976, 4
        %v8983 = vshrl.u32 %v8897, 16
        %v8985 = vrot.slane %v8983, 7
        %v8986 = vshll.u32 %v8897, 16
        %v8988 = vor.u32 %v8985, %v8986
        %v8989 = vsel %vm1202, %v8981, %v8988
        %v8990 = vrot.slane %v8985, 4
        %v8992 = vshrl.u32 %v8898, 16
        %v8994 = vrot.slane %v8992, 7
        %v8995 = vshll.u32 %v8898, 16
        %v8997 = vor.u32 %v8994, %v8995
        %v8998 = vsel %vm1202, %v8990, %v8997
        %v8999 = vrot.slane %v8994, 4
        %v9001 = vshrl.u32 %v8899, 16
        %v9003 = vrot.slane %v9001, 7
        %v9004 = vshll.u32 %v8899, 16
        %v9006 = vor.u32 %v9003, %v9004
        %v9007 = vsel %vm1202, %v8999, %v9006
        %v9008 = vrot.slane %v9003, 4
        %v9010 = vshrl.u32 %v8900, 16
        %v9012 = vrot.slane %v9010, 7
        %v9013 = vshll.u32 %v8900, 16
        %v9015 = vor.u32 %v9012, %v9013
        %v9016 = vsel %vm1202, %v9008, %v9015
        %v9017 = vrot.slane %v9012, 4
        %v9019 = vshrl.u32 %v8901, 16
        %v9021 = vrot.slane %v9019, 7
        %v9022 = vshll.u32 %v8901, 16
        %v9024 = vor.u32 %v9021, %v9022
        %v9025 = vsel %vm1202, %v9017, %v9024
        %v9026 = vrot.slane %v9021, 4
        %v9028 = vshrl.u32 %v8902, 16
        %v9030 = vrot.slane %v9028, 7
        %v9031 = vshll.u32 %v8902, 16
        %v9033 = vor.u32 %v9030, %v9031
        %v9034 = vsel %vm1202, %v9026, %v9033
        %v9035 = vrot.slane %v9030, 4
        %v9037 = vshrl.u32 %v8903, 16
        %v9039 = vrot.slane %v9037, 7
        %v9040 = vshll.u32 %v8903, 16
        %v9042 = vor.u32 %v9039, %v9040
        %v9043 = vsel %vm1202, %v9035, %v9042
        %v9044 = vrot.slane %v9039, 4
        %v9046 = vshrl.u32 %v8904, 16
        %v9048 = vrot.slane %v9046, 7
        %v9049 = vshll.u32 %v8904, 16
        %v9051 = vor.u32 %v9048, %v9049
        %v9052 = vsel %vm1202, %v9044, %v9051
        %v9053 = vrot.slane %v9048, 4
        %v9055 = vshrl.u32 %v8905, 16
        %v9057 = vrot.slane %v9055, 7
        %v9058 = vshll.u32 %v8905, 16
        %v9060 = vor.u32 %v9057, %v9058
        %v9061 = vsel %vm1202, %v9053, %v9060
        %v9062 = vrot.slane %v9057, 4
        %v9064 = vshrl.u32 %v8906, 16
        %v9066 = vrot.slane %v9064, 7
        %v9067 = vshll.u32 %v8906, 16
        %v9069 = vor.u32 %v9066, %v9067
        %v9070 = vsel %vm1202, %v9062, %v9069
        %v9071 = vrot.slane %v9066, 4
        %v9073 = vshrl.u32 %v8907, 16
        %v9075 = vrot.slane %v9073, 7
        %v9076 = vshll.u32 %v8907, 16
        %v9078 = vor.u32 %v9075, %v9076
        %v9079 = vsel %vm1202, %v9071, %v9078
        %v9080 = vrot.slane %v9075, 4
        %v9082 = vshrl.u32 %v8908, 16
        %v9084 = vrot.slane %v9082, 7
        %v9085 = vshll.u32 %v8908, 16
        %v9087 = vor.u32 %v9084, %v9085
        %v9088 = vsel %vm1202, %v9080, %v9087
        %v9089 = vrot.slane %v9084, 4
        %v9091 = vshrl.u32 %v8909, 16
        %v9093 = vrot.slane %v9091, 7
        %v9094 = vshll.u32 %v8909, 16
        %v9096 = vor.u32 %v9093, %v9094
        %v9097 = vsel %vm1202, %v9089, %v9096
        %v9098 = vrot.slane %v9093, 4
        %v9100 = vshrl.u32 %v8910, 16
        %v9102 = vrot.slane %v9100, 7
        %v9103 = vshll.u32 %v8910, 16
        %v9105 = vor.u32 %v9102, %v9103
        %v9106 = vsel %vm1202, %v9098, %v9105
        %v9107 = vrot.slane %v9102, 4
        %v9109 = vshrl.u32 %v8911, 16
        %v9111 = vrot.slane %v9109, 7
        %v9112 = vshll.u32 %v8911, 16
        %v9114 = vor.u32 %v9111, %v9112
        %v9115 = vsel %vm1202, %v9107, %v9114
        %v9116 = vrot.slane %v9111, 4
        %v9118 = vshrl.u32 %v8912, 16
        %v9120 = vrot.slane %v9118, 7
        %v9121 = vshll.u32 %v8912, 16
        %v9123 = vor.u32 %v9120, %v9121
        %v9124 = vsel %vm1202, %v9116, %v9123
        %v9125 = vrot.slane %v9120, 4
        %v9127 = vshrl.u32 %v8913, 16
        %v9129 = vrot.slane %v9127, 7
        %v9130 = vshll.u32 %v8913, 16
        %v9132 = vor.u32 %v9129, %v9130
        %v9133 = vsel %vm1202, %v9125, %v9132
        %v9134 = vrot.slane %v9129, 4
        %v9136 = vshrl.u32 %v8914, 16
        %v9138 = vrot.slane %v9136, 7
        %v9139 = vshll.u32 %v8914, 16
        %v9141 = vor.u32 %v9138, %v9139
        %v9142 = vsel %vm1202, %v9134, %v9141
        %v9143 = vrot.slane %v9138, 4
        %v9145 = vshrl.u32 %v8915, 16
        %v9147 = vrot.slane %v9145, 7
        %v9148 = vshll.u32 %v8915, 16
        %v9150 = vor.u32 %v9147, %v9148
        %v9151 = vsel %vm1202, %v9143, %v9150
        %v9152 = vrot.slane %v9147, 4
        %v9154 = vshrl.u32 %v8916, 16
        %v9156 = vrot.slane %v9154, 7
        %v9157 = vshll.u32 %v8916, 16
        %v9159 = vor.u32 %v9156, %v9157
        %v9160 = vsel %vm1202, %v9152, %v9159
        %v9161 = vrot.slane %v9156, 4
        %v9163 = vshrl.u32 %v8917, 16
        %v9165 = vrot.slane %v9163, 7
        %v9166 = vshll.u32 %v8917, 16
        %v9168 = vor.u32 %v9165, %v9166
        %v9169 = vsel %vm1202, %v9161, %v9168
        %v9170 = vrot.slane %v9165, 4
        %v9172 = vshrl.u32 %v8918, 16
        %v9174 = vrot.slane %v9172, 7
        %v9175 = vshll.u32 %v8918, 16
        %v9177 = vor.u32 %v9174, %v9175
        %v9178 = vsel %vm1202, %v9170, %v9177
        %v9179 = vrot.slane %v9174, 4
        %v9181 = vshrl.u32 %v8919, 16
        %v9183 = vrot.slane %v9181, 7
        %v9184 = vshll.u32 %v8919, 16
        %v9186 = vor.u32 %v9183, %v9184
        %v9187 = vsel %vm1202, %v9179, %v9186
        %v9188 = vrot.slane %v9183, 4
        %v9190 = vshrl.u32 %v8920, 16
        %v9192 = vrot.slane %v9190, 7
        %v9193 = vshll.u32 %v8920, 16
        %v9195 = vor.u32 %v9192, %v9193
        %v9196 = vsel %vm1202, %v9188, %v9195
        %v9197 = vrot.slane %v9192, 4
        %v9199 = vshrl.u32 %v8921, 16
        %v9201 = vrot.slane %v9199, 7
        %v9202 = vshll.u32 %v8921, 16
        %v9204 = vor.u32 %v9201, %v9202
        %v9205 = vsel %vm1202, %v9197, %v9204
        %v9206 = vrot.slane %v9201, 4
        %v9208 = vshrl.u32 %v8922, 16
        %v9210 = vrot.slane %v9208, 7
        %v9211 = vshll.u32 %v8922, 16
        %v9213 = vor.u32 %v9210, %v9211
        %v9214 = vsel %vm1202, %v9206, %v9213
        %9247 = vst [vmem:[#allocation5 + $0x18] sm:$0xf] %v8935
        %9248 = vst [vmem:[#allocation5 + $0x3c] sm:$0xf] %v8944
        %9249 = vst [vmem:[#allocation5 + $0x60] sm:$0xf] %v8953
        %9250 = vst [vmem:[#allocation5 + $0x84] sm:$0xf] %v8962
        %9251 = vst [vmem:[#allocation5 + $0xa8] sm:$0xf] %v8971
        %9252 = vst [vmem:[#allocation5 + $0xcc] sm:$0xf] %v8980
        %9253 = vst [vmem:[#allocation5 + $0xf0] sm:$0xf] %v8989
        %9254 = vst [vmem:[#allocation5 + $0x114] sm:$0xf] %v8998
        %9255 = vst [vmem:[#allocation5 + $0x138] sm:$0xf] %v9007
        %9256 = vst [vmem:[#allocation5 + $0x15c] sm:$0xf] %v9016
        %9257 = vst [vmem:[#allocation5 + $0x180] sm:$0xf] %v9025
        %9258 = vst [vmem:[#allocation5 + $0x1a4] sm:$0xf] %v9034
        %9259 = vst [vmem:[#allocation5 + $0x1c8] sm:$0xf] %v9043
        %9260 = vst [vmem:[#allocation5 + $0x1ec] sm:$0xf] %v9052
        %9261 = vst [vmem:[#allocation5 + $0x210] sm:$0xf] %v9061
        %9262 = vst [vmem:[#allocation5 + $0x234] sm:$0xf] %v9070
        %9263 = vst [vmem:[#allocation5 + $0x258] sm:$0xf] %v9079
        %9264 = vst [vmem:[#allocation5 + $0x27c] sm:$0xf] %v9088
        %9265 = vst [vmem:[#allocation5 + $0x2a0] sm:$0xf] %v9097
        %9266 = vst [vmem:[#allocation5 + $0x2c4] sm:$0xf] %v9106
        %9267 = vst [vmem:[#allocation5 + $0x2e8] sm:$0xf] %v9115
        %9268 = vst [vmem:[#allocation5 + $0x30c] sm:$0xf] %v9124
        %9269 = vst [vmem:[#allocation5 + $0x330] sm:$0xf] %v9133
        %9270 = vst [vmem:[#allocation5 + $0x354] sm:$0xf] %v9142
        %9271 = vst [vmem:[#allocation5 + $0x378] sm:$0xf] %v9151
        %9272 = vst [vmem:[#allocation5 + $0x39c] sm:$0xf] %v9160
        %9273 = vst [vmem:[#allocation5 + $0x3c0] sm:$0xf] %v9169
        %9274 = vst [vmem:[#allocation5 + $0x3e4] sm:$0xf] %v9178
        %9275 = vst [vmem:[#allocation5 + $0x408] sm:$0xf] %v9187
        %9276 = vst [vmem:[#allocation5 + $0x42c] sm:$0xf] %v9196
        %9277 = vst [vmem:[#allocation5 + $0x450] sm:$0xf] %v9205
        %9278 = vst [vmem:[#allocation5 + $0x474] sm:$0xf] %v9214
        %v9279 = vld [vmem:[#allocation3 + $0x14] sm:$0xf]
        %v9280 = vld [vmem:[#allocation3 + $0x18] sm:$0xf]
        %v9281 = vld [vmem:[#allocation3 + $0x1c] sm:$0xf]
        %v9282 = vld [vmem:[#allocation3 + $0x20] sm:$0xf]
        %v9283 = vld [vmem:[#allocation3 + $0x24] sm:$0xf]
        %v9284 = vld [vmem:[#allocation3 + $0x28] sm:$0xf]
        %v9285 = vld [vmem:[#allocation3 + $0x2c] sm:$0xf]
        %v9286 = vld [vmem:[#allocation3 + $0x30] sm:$0xf]
        %v9287 = vld [vmem:[#allocation3 + $0x34] sm:$0xf]
        %v9288 = vld [vmem:[#allocation3 + $0x38] sm:$0xf]
        %v9289 = vld [vmem:[#allocation3 + $0x3c] sm:$0xf]
        %v9290 = vld [vmem:[#allocation3 + $0x40] sm:$0xf]
        %v9291 = vld [vmem:[#allocation3 + $0x44] sm:$0xf]
        %v9292 = vld [vmem:[#allocation3 + $0x48] sm:$0xf]
        %v9293 = vld [vmem:[#allocation3 + $0x4c] sm:$0xf]
        %v9294 = vld [vmem:[#allocation3 + $0x50] sm:$0xf]
        %v9295 = vld [vmem:[#allocation3 + $0x54] sm:$0xf]
        %v9296 = vld [vmem:[#allocation3 + $0x58] sm:$0xf]
        %v9297 = vld [vmem:[#allocation3 + $0x5c] sm:$0xf]
        %v9298 = vld [vmem:[#allocation3 + $0x60] sm:$0xf]
        %v9299 = vld [vmem:[#allocation3 + $0x64] sm:$0xf]
        %v9300 = vld [vmem:[#allocation3 + $0x68] sm:$0xf]
        %v9301 = vld [vmem:[#allocation3 + $0x6c] sm:$0xf]
        %v9302 = vld [vmem:[#allocation3 + $0x70] sm:$0xf]
        %v9303 = vld [vmem:[#allocation3 + $0x74] sm:$0xf]
        %v9304 = vld [vmem:[#allocation3 + $0x78] sm:$0xf]
        %v9305 = vld [vmem:[#allocation3 + $0x7c] sm:$0xf]
        %v9306 = vld [vmem:[#allocation3 + $0x80] sm:$0xf]
        %v9307 = vld [vmem:[#allocation3 + $0x84] sm:$0xf]
        %v9308 = vld [vmem:[#allocation3 + $0x88] sm:$0xf]
        %v9309 = vld [vmem:[#allocation3 + $0x8c] sm:$0xf]
        %v9310 = vld [vmem:[#allocation3 + $0x90] sm:$0xf]
        %9311 = vst [vmem:[#allocation5 + $0x1c] sm:$0xf] %v9279
        %9312 = vst [vmem:[#allocation5 + $0x40] sm:$0xf] %v9280
        %9313 = vst [vmem:[#allocation5 + $0x64] sm:$0xf] %v9281
        %9314 = vst [vmem:[#allocation5 + $0x88] sm:$0xf] %v9282
        %9315 = vst [vmem:[#allocation5 + $0xac] sm:$0xf] %v9283
        %9316 = vst [vmem:[#allocation5 + $0xd0] sm:$0xf] %v9284
        %9317 = vst [vmem:[#allocation5 + $0xf4] sm:$0xf] %v9285
        %9318 = vst [vmem:[#allocation5 + $0x118] sm:$0xf] %v9286
        %9319 = vst [vmem:[#allocation5 + $0x13c] sm:$0xf] %v9287
        %9320 = vst [vmem:[#allocation5 + $0x160] sm:$0xf] %v9288
        %9321 = vst [vmem:[#allocation5 + $0x184] sm:$0xf] %v9289
        %9322 = vst [vmem:[#allocation5 + $0x1a8] sm:$0xf] %v9290
        %9323 = vst [vmem:[#allocation5 + $0x1cc] sm:$0xf] %v9291
        %9324 = vst [vmem:[#allocation5 + $0x1f0] sm:$0xf] %v9292
        %9325 = vst [vmem:[#allocation5 + $0x214] sm:$0xf] %v9293
        %9326 = vst [vmem:[#allocation5 + $0x238] sm:$0xf] %v9294
        %9327 = vst [vmem:[#allocation5 + $0x25c] sm:$0xf] %v9295
        %9328 = vst [vmem:[#allocation5 + $0x280] sm:$0xf] %v9296
        %9329 = vst [vmem:[#allocation5 + $0x2a4] sm:$0xf] %v9297
        %9330 = vst [vmem:[#allocation5 + $0x2c8] sm:$0xf] %v9298
        %9331 = vst [vmem:[#allocation5 + $0x2ec] sm:$0xf] %v9299
        %9332 = vst [vmem:[#allocation5 + $0x310] sm:$0xf] %v9300
        %9333 = vst [vmem:[#allocation5 + $0x334] sm:$0xf] %v9301
        %9334 = vst [vmem:[#allocation5 + $0x358] sm:$0xf] %v9302
        %9335 = vst [vmem:[#allocation5 + $0x37c] sm:$0xf] %v9303
        %9336 = vst [vmem:[#allocation5 + $0x3a0] sm:$0xf] %v9304
        %9337 = vst [vmem:[#allocation5 + $0x3c4] sm:$0xf] %v9305
        %9338 = vst [vmem:[#allocation5 + $0x3e8] sm:$0xf] %v9306
        %9339 = vst [vmem:[#allocation5 + $0x40c] sm:$0xf] %v9307
        %9340 = vst [vmem:[#allocation5 + $0x430] sm:$0xf] %v9308
        %9341 = vst [vmem:[#allocation5 + $0x454] sm:$0xf] %v9309
        %9342 = vst [vmem:[#allocation5 + $0x478] sm:$0xf] %v9310
        %v9343 = vld [vmem:[#allocation3 + $0x14] sm:$0xf]
        %v9344 = vld [vmem:[#allocation3 + $0x18] sm:$0xf]
        %v9345 = vld [vmem:[#allocation3 + $0x1c] sm:$0xf]
        %v9346 = vld [vmem:[#allocation3 + $0x20] sm:$0xf]
        %v9347 = vld [vmem:[#allocation3 + $0x24] sm:$0xf]
        %v9348 = vld [vmem:[#allocation3 + $0x28] sm:$0xf]
        %v9349 = vld [vmem:[#allocation3 + $0x2c] sm:$0xf]
        %v9350 = vld [vmem:[#allocation3 + $0x30] sm:$0xf]
        %v9351 = vld [vmem:[#allocation3 + $0x34] sm:$0xf]
        %v9352 = vld [vmem:[#allocation3 + $0x38] sm:$0xf]
        %v9353 = vld [vmem:[#allocation3 + $0x3c] sm:$0xf]
        %v9354 = vld [vmem:[#allocation3 + $0x40] sm:$0xf]
        %v9355 = vld [vmem:[#allocation3 + $0x44] sm:$0xf]
        %v9356 = vld [vmem:[#allocation3 + $0x48] sm:$0xf]
        %v9357 = vld [vmem:[#allocation3 + $0x4c] sm:$0xf]
        %v9358 = vld [vmem:[#allocation3 + $0x50] sm:$0xf]
        %v9359 = vld [vmem:[#allocation3 + $0x54] sm:$0xf]
        %v9360 = vld [vmem:[#allocation3 + $0x58] sm:$0xf]
        %v9361 = vld [vmem:[#allocation3 + $0x5c] sm:$0xf]
        %v9362 = vld [vmem:[#allocation3 + $0x60] sm:$0xf]
        %v9363 = vld [vmem:[#allocation3 + $0x64] sm:$0xf]
        %v9364 = vld [vmem:[#allocation3 + $0x68] sm:$0xf]
        %v9365 = vld [vmem:[#allocation3 + $0x6c] sm:$0xf]
        %v9366 = vld [vmem:[#allocation3 + $0x70] sm:$0xf]
        %v9367 = vld [vmem:[#allocation3 + $0x74] sm:$0xf]
        %v9368 = vld [vmem:[#allocation3 + $0x78] sm:$0xf]
        %v9369 = vld [vmem:[#allocation3 + $0x7c] sm:$0xf]
        %v9370 = vld [vmem:[#allocation3 + $0x80] sm:$0xf]
        %v9371 = vld [vmem:[#allocation3 + $0x84] sm:$0xf]
        %v9372 = vld [vmem:[#allocation3 + $0x88] sm:$0xf]
        %v9373 = vld [vmem:[#allocation3 + $0x8c] sm:$0xf]
        %v9374 = vld [vmem:[#allocation3 + $0x90] sm:$0xf]
        %v9375 = vld [vmem:[#allocation3 + $0x94] sm:$0x1]
        %v9376 = vsel %vm2167, %v9343, 0
        %v9377 = vsel %vm2168, %v9344, 0
        %v9378 = vsel %vm2169, %v9345, 0
        %v9379 = vsel %vm2170, %v9346, 0
        %v9380 = vsel %vm2171, %v9347, 0
        %v9381 = vsel %vm2172, %v9348, 0
        %v9382 = vsel %vm2173, %v9349, 0
        %v9383 = vsel %vm2174, %v9350, 0
        %v9384 = vsel %vm2175, %v9351, 0
        %v9385 = vsel %vm2176, %v9352, 0
        %v9386 = vsel %vm2177, %v9353, 0
        %v9387 = vsel %vm2178, %v9354, 0
        %v9388 = vsel %vm2179, %v9355, 0
        %v9389 = vsel %vm2180, %v9356, 0
        %v9390 = vsel %vm2181, %v9357, 0
        %v9391 = vsel %vm2182, %v9358, 0
        %v9392 = vsel %vm2183, %v9359, 0
        %v9393 = vsel %vm2184, %v9360, 0
        %v9394 = vsel %vm2185, %v9361, 0
        %v9395 = vsel %vm2186, %v9362, 0
        %v9396 = vsel %vm2187, %v9363, 0
        %v9397 = vsel %vm2188, %v9364, 0
        %v9398 = vsel %vm2189, %v9365, 0
        %v9399 = vsel %vm2190, %v9366, 0
        %v9400 = vsel %vm2191, %v9367, 0
        %v9401 = vsel %vm2192, %v9368, 0
        %v9402 = vsel %vm2193, %v9369, 0
        %v9403 = vsel %vm2194, %v9370, 0
        %v9404 = vsel %vm2195, %v9371, 0
        %v9405 = vsel %vm2196, %v9372, 0
        %v9406 = vsel %vm2197, %v9373, 0
        %v9407 = vsel %vm2198, %v9374, 0
        %v9408 = vsel %vm2199, %v9375, 0
        %v9410 = vshrl.u32 %v9376, 16
        %v9412 = vrot.slane %v9410, 4
        %v9413 = vshll.u32 %v9376, 16
        %v9415 = vrot.slane %v9413, 5
        %v9416 = vor.u32 %v9412, %v9415
        %v9417 = vrot.slane %v9416, 4
        %v9419 = vshll.u32 %v9377, 16
        %v9421 = vrot.slane %v9419, 5
        %v9422 = vsel %vm814, %v9417, %v9421
        %v9423 = vshrl.u32 %v9377, 16
        %v9425 = vrot.slane %v9423, 4
        %v9426 = vor.u32 %v9425, %v9421
        %v9427 = vrot.slane %v9426, 4
        %v9429 = vshll.u32 %v9378, 16
        %v9431 = vrot.slane %v9429, 5
        %v9432 = vsel %vm814, %v9427, %v9431
        %v9433 = vshrl.u32 %v9378, 16
        %v9435 = vrot.slane %v9433, 4
        %v9436 = vor.u32 %v9435, %v9431
        %v9437 = vrot.slane %v9436, 4
        %v9439 = vshll.u32 %v9379, 16
        %v9441 = vrot.slane %v9439, 5
        %v9442 = vsel %vm814, %v9437, %v9441
        %v9443 = vshrl.u32 %v9379, 16
        %v9445 = vrot.slane %v9443, 4
        %v9446 = vor.u32 %v9445, %v9441
        %v9447 = vrot.slane %v9446, 4
        %v9449 = vshll.u32 %v9380, 16
        %v9451 = vrot.slane %v9449, 5
        %v9452 = vsel %vm814, %v9447, %v9451
        %v9453 = vshrl.u32 %v9380, 16
        %v9455 = vrot.slane %v9453, 4
        %v9456 = vor.u32 %v9455, %v9451
        %v9457 = vrot.slane %v9456, 4
        %v9459 = vshll.u32 %v9381, 16
        %v9461 = vrot.slane %v9459, 5
        %v9462 = vsel %vm814, %v9457, %v9461
        %v9463 = vshrl.u32 %v9381, 16
        %v9465 = vrot.slane %v9463, 4
        %v9466 = vor.u32 %v9465, %v9461
        %v9467 = vrot.slane %v9466, 4
        %v9469 = vshll.u32 %v9382, 16
        %v9471 = vrot.slane %v9469, 5
        %v9472 = vsel %vm814, %v9467, %v9471
        %v9473 = vshrl.u32 %v9382, 16
        %v9475 = vrot.slane %v9473, 4
        %v9476 = vor.u32 %v9475, %v9471
        %v9477 = vrot.slane %v9476, 4
        %v9479 = vshll.u32 %v9383, 16
        %v9481 = vrot.slane %v9479, 5
        %v9482 = vsel %vm814, %v9477, %v9481
        %v9483 = vshrl.u32 %v9383, 16
        %v9485 = vrot.slane %v9483, 4
        %v9486 = vor.u32 %v9485, %v9481
        %v9487 = vrot.slane %v9486, 4
        %v9489 = vshll.u32 %v9384, 16
        %v9491 = vrot.slane %v9489, 5
        %v9492 = vsel %vm814, %v9487, %v9491
        %v9493 = vshrl.u32 %v9384, 16
        %v9495 = vrot.slane %v9493, 4
        %v9496 = vor.u32 %v9495, %v9491
        %v9497 = vrot.slane %v9496, 4
        %v9499 = vshll.u32 %v9385, 16
        %v9501 = vrot.slane %v9499, 5
        %v9502 = vsel %vm814, %v9497, %v9501
        %v9503 = vshrl.u32 %v9385, 16
        %v9505 = vrot.slane %v9503, 4
        %v9506 = vor.u32 %v9505, %v9501
        %v9507 = vrot.slane %v9506, 4
        %v9509 = vshll.u32 %v9386, 16
        %v9511 = vrot.slane %v9509, 5
        %v9512 = vsel %vm814, %v9507, %v9511
        %v9513 = vshrl.u32 %v9386, 16
        %v9515 = vrot.slane %v9513, 4
        %v9516 = vor.u32 %v9515, %v9511
        %v9517 = vrot.slane %v9516, 4
        %v9519 = vshll.u32 %v9387, 16
        %v9521 = vrot.slane %v9519, 5
        %v9522 = vsel %vm814, %v9517, %v9521
        %v9523 = vshrl.u32 %v9387, 16
        %v9525 = vrot.slane %v9523, 4
        %v9526 = vor.u32 %v9525, %v9521
        %v9527 = vrot.slane %v9526, 4
        %v9529 = vshll.u32 %v9388, 16
        %v9531 = vrot.slane %v9529, 5
        %v9532 = vsel %vm814, %v9527, %v9531
        %v9533 = vshrl.u32 %v9388, 16
        %v9535 = vrot.slane %v9533, 4
        %v9536 = vor.u32 %v9535, %v9531
        %v9537 = vrot.slane %v9536, 4
        %v9539 = vshll.u32 %v9389, 16
        %v9541 = vrot.slane %v9539, 5
        %v9542 = vsel %vm814, %v9537, %v9541
        %v9543 = vshrl.u32 %v9389, 16
        %v9545 = vrot.slane %v9543, 4
        %v9546 = vor.u32 %v9545, %v9541
        %v9547 = vrot.slane %v9546, 4
        %v9549 = vshll.u32 %v9390, 16
        %v9551 = vrot.slane %v9549, 5
        %v9552 = vsel %vm814, %v9547, %v9551
        %v9553 = vshrl.u32 %v9390, 16
        %v9555 = vrot.slane %v9553, 4
        %v9556 = vor.u32 %v9555, %v9551
        %v9557 = vrot.slane %v9556, 4
        %v9559 = vshll.u32 %v9391, 16
        %v9561 = vrot.slane %v9559, 5
        %v9562 = vsel %vm814, %v9557, %v9561
        %v9563 = vshrl.u32 %v9391, 16
        %v9565 = vrot.slane %v9563, 4
        %v9566 = vor.u32 %v9565, %v9561
        %v9567 = vrot.slane %v9566, 4
        %v9569 = vshll.u32 %v9392, 16
        %v9571 = vrot.slane %v9569, 5
        %v9572 = vsel %vm814, %v9567, %v9571
        %v9573 = vshrl.u32 %v9392, 16
        %v9575 = vrot.slane %v9573, 4
        %v9576 = vor.u32 %v9575, %v9571
        %v9577 = vrot.slane %v9576, 4
        %v9579 = vshll.u32 %v9393, 16
        %v9581 = vrot.slane %v9579, 5
        %v9582 = vsel %vm814, %v9577, %v9581
        %v9583 = vshrl.u32 %v9393, 16
        %v9585 = vrot.slane %v9583, 4
        %v9586 = vor.u32 %v9585, %v9581
        %v9587 = vrot.slane %v9586, 4
        %v9589 = vshll.u32 %v9394, 16
        %v9591 = vrot.slane %v9589, 5
        %v9592 = vsel %vm814, %v9587, %v9591
        %v9593 = vshrl.u32 %v9394, 16
        %v9595 = vrot.slane %v9593, 4
        %v9596 = vor.u32 %v9595, %v9591
        %v9597 = vrot.slane %v9596, 4
        %v9599 = vshll.u32 %v9395, 16
        %v9601 = vrot.slane %v9599, 5
        %v9602 = vsel %vm814, %v9597, %v9601
        %v9603 = vshrl.u32 %v9395, 16
        %v9605 = vrot.slane %v9603, 4
        %v9606 = vor.u32 %v9605, %v9601
        %v9607 = vrot.slane %v9606, 4
        %v9609 = vshll.u32 %v9396, 16
        %v9611 = vrot.slane %v9609, 5
        %v9612 = vsel %vm814, %v9607, %v9611
        %v9613 = vshrl.u32 %v9396, 16
        %v9615 = vrot.slane %v9613, 4
        %v9616 = vor.u32 %v9615, %v9611
        %v9617 = vrot.slane %v9616, 4
        %v9619 = vshll.u32 %v9397, 16
        %v9621 = vrot.slane %v9619, 5
        %v9622 = vsel %vm814, %v9617, %v9621
        %v9623 = vshrl.u32 %v9397, 16
        %v9625 = vrot.slane %v9623, 4
        %v9626 = vor.u32 %v9625, %v9621
        %v9627 = vrot.slane %v9626, 4
        %v9629 = vshll.u32 %v9398, 16
        %v9631 = vrot.slane %v9629, 5
        %v9632 = vsel %vm814, %v9627, %v9631
        %v9633 = vshrl.u32 %v9398, 16
        %v9635 = vrot.slane %v9633, 4
        %v9636 = vor.u32 %v9635, %v9631
        %v9637 = vrot.slane %v9636, 4
        %v9639 = vshll.u32 %v9399, 16
        %v9641 = vrot.slane %v9639, 5
        %v9642 = vsel %vm814, %v9637, %v9641
        %v9643 = vshrl.u32 %v9399, 16
        %v9645 = vrot.slane %v9643, 4
        %v9646 = vor.u32 %v9645, %v9641
        %v9647 = vrot.slane %v9646, 4
        %v9649 = vshll.u32 %v9400, 16
        %v9651 = vrot.slane %v9649, 5
        %v9652 = vsel %vm814, %v9647, %v9651
        %v9653 = vshrl.u32 %v9400, 16
        %v9655 = vrot.slane %v9653, 4
        %v9656 = vor.u32 %v9655, %v9651
        %v9657 = vrot.slane %v9656, 4
        %v9659 = vshll.u32 %v9401, 16
        %v9661 = vrot.slane %v9659, 5
        %v9662 = vsel %vm814, %v9657, %v9661
        %v9663 = vshrl.u32 %v9401, 16
        %v9665 = vrot.slane %v9663, 4
        %v9666 = vor.u32 %v9665, %v9661
        %v9667 = vrot.slane %v9666, 4
        %v9669 = vshll.u32 %v9402, 16
        %v9671 = vrot.slane %v9669, 5
        %v9672 = vsel %vm814, %v9667, %v9671
        %v9673 = vshrl.u32 %v9402, 16
        %v9675 = vrot.slane %v9673, 4
        %v9676 = vor.u32 %v9675, %v9671
        %v9677 = vrot.slane %v9676, 4
        %v9679 = vshll.u32 %v9403, 16
        %v9681 = vrot.slane %v9679, 5
        %v9682 = vsel %vm814, %v9677, %v9681
        %v9683 = vshrl.u32 %v9403, 16
        %v9685 = vrot.slane %v9683, 4
        %v9686 = vor.u32 %v9685, %v9681
        %v9687 = vrot.slane %v9686, 4
        %v9689 = vshll.u32 %v9404, 16
        %v9691 = vrot.slane %v9689, 5
        %v9692 = vsel %vm814, %v9687, %v9691
        %v9693 = vshrl.u32 %v9404, 16
        %v9695 = vrot.slane %v9693, 4
        %v9696 = vor.u32 %v9695, %v9691
        %v9697 = vrot.slane %v9696, 4
        %v9699 = vshll.u32 %v9405, 16
        %v9701 = vrot.slane %v9699, 5
        %v9702 = vsel %vm814, %v9697, %v9701
        %v9703 = vshrl.u32 %v9405, 16
        %v9705 = vrot.slane %v9703, 4
        %v9706 = vor.u32 %v9705, %v9701
        %v9707 = vrot.slane %v9706, 4
        %v9709 = vshll.u32 %v9406, 16
        %v9711 = vrot.slane %v9709, 5
        %v9712 = vsel %vm814, %v9707, %v9711
        %v9713 = vshrl.u32 %v9406, 16
        %v9715 = vrot.slane %v9713, 4
        %v9716 = vor.u32 %v9715, %v9711
        %v9717 = vrot.slane %v9716, 4
        %v9719 = vshll.u32 %v9407, 16
        %v9721 = vrot.slane %v9719, 5
        %v9722 = vsel %vm814, %v9717, %v9721
        %v9723 = vshrl.u32 %v9407, 16
        %v9725 = vrot.slane %v9723, 4
        %v9726 = vor.u32 %v9725, %v9721
        %v9727 = vrot.slane %v9726, 4
        %v9729 = vshll.u32 %v9408, 16
        %v9731 = vrot.slane %v9729, 5
        %v9732 = vsel %vm814, %v9727, %v9731
        %9765 = vst [vmem:[#allocation5 + $0x20] sm:$0xf] %v9422
        %9766 = vst [vmem:[#allocation5 + $0x44] sm:$0xf] %v9432
        %9767 = vst [vmem:[#allocation5 + $0x68] sm:$0xf] %v9442
        %9768 = vst [vmem:[#allocation5 + $0x8c] sm:$0xf] %v9452
        %9769 = vst [vmem:[#allocation5 + $0xb0] sm:$0xf] %v9462
        %9770 = vst [vmem:[#allocation5 + $0xd4] sm:$0xf] %v9472
        %9771 = vst [vmem:[#allocation5 + $0xf8] sm:$0xf] %v9482
        %9772 = vst [vmem:[#allocation5 + $0x11c] sm:$0xf] %v9492
        %9773 = vst [vmem:[#allocation5 + $0x140] sm:$0xf] %v9502
        %9774 = vst [vmem:[#allocation5 + $0x164] sm:$0xf] %v9512
        %9775 = vst [vmem:[#allocation5 + $0x188] sm:$0xf] %v9522
        %9776 = vst [vmem:[#allocation5 + $0x1ac] sm:$0xf] %v9532
        %9777 = vst [vmem:[#allocation5 + $0x1d0] sm:$0xf] %v9542
        %9778 = vst [vmem:[#allocation5 + $0x1f4] sm:$0xf] %v9552
        %9779 = vst [vmem:[#allocation5 + $0x218] sm:$0xf] %v9562
        %9780 = vst [vmem:[#allocation5 + $0x23c] sm:$0xf] %v9572
        %9781 = vst [vmem:[#allocation5 + $0x260] sm:$0xf] %v9582
        %9782 = vst [vmem:[#allocation5 + $0x284] sm:$0xf] %v9592
        %9783 = vst [vmem:[#allocation5 + $0x2a8] sm:$0xf] %v9602
        %9784 = vst [vmem:[#allocation5 + $0x2cc] sm:$0xf] %v9612
        %9785 = vst [vmem:[#allocation5 + $0x2f0] sm:$0xf] %v9622
        %9786 = vst [vmem:[#allocation5 + $0x314] sm:$0xf] %v9632
        %9787 = vst [vmem:[#allocation5 + $0x338] sm:$0xf] %v9642
        %9788 = vst [vmem:[#allocation5 + $0x35c] sm:$0xf] %v9652
        %9789 = vst [vmem:[#allocation5 + $0x380] sm:$0xf] %v9662
        %9790 = vst [vmem:[#allocation5 + $0x3a4] sm:$0xf] %v9672
        %9791 = vst [vmem:[#allocation5 + $0x3c8] sm:$0xf] %v9682
        %9792 = vst [vmem:[#allocation5 + $0x3ec] sm:$0xf] %v9692
        %9793 = vst [vmem:[#allocation5 + $0x410] sm:$0xf] %v9702
        %9794 = vst [vmem:[#allocation5 + $0x434] sm:$0xf] %v9712
        %9795 = vst [vmem:[#allocation5 + $0x458] sm:$0xf] %v9722
        %9796 = vst [vmem:[#allocation5 + $0x47c] sm:$0xf] %v9732
        %v9797 = vld [vmem:[#allocation5] sm:$0xff]
        %v9798 = vld [vmem:[#allocation5 + $0x8] sm:$0xff]
        %v9799 = vld [vmem:[#allocation5 + $0x10] sm:$0xff]
        %v9800 = vld [vmem:[#allocation5 + $0x18] sm:$0xff]
        %v9801 = vld [vmem:[#allocation5 + $0x20] sm:$0xf]
        %v9802 = vld [vmem:[#allocation5 + $0x24] sm:$0xff]
        %v9803 = vld [vmem:[#allocation5 + $0x2c] sm:$0xff]
        %v9804 = vld [vmem:[#allocation5 + $0x34] sm:$0xff]
        %v9805 = vld [vmem:[#allocation5 + $0x3c] sm:$0xff]
        %v9806 = vld [vmem:[#allocation5 + $0x44] sm:$0xf]
        %v9807 = vld [vmem:[#allocation5 + $0x48] sm:$0xff]
        %v9808 = vld [vmem:[#allocation5 + $0x50] sm:$0xff]
        %v9809 = vld [vmem:[#allocation5 + $0x58] sm:$0xff]
        %v9810 = vld [vmem:[#allocation5 + $0x60] sm:$0xff]
        %v9811 = vld [vmem:[#allocation5 + $0x68] sm:$0xf]
        %v9812 = vld [vmem:[#allocation5 + $0x6c] sm:$0xff]
        %v9813 = vld [vmem:[#allocation5 + $0x74] sm:$0xff]
        %v9814 = vld [vmem:[#allocation5 + $0x7c] sm:$0xff]
        %v9815 = vld [vmem:[#allocation5 + $0x84] sm:$0xff]
        %v9816 = vld [vmem:[#allocation5 + $0x8c] sm:$0xf]
        %v9817 = vld [vmem:[#allocation5 + $0x90] sm:$0xff]
        %v9818 = vld [vmem:[#allocation5 + $0x98] sm:$0xff]
        %v9819 = vld [vmem:[#allocation5 + $0xa0] sm:$0xff]
        %v9820 = vld [vmem:[#allocation5 + $0xa8] sm:$0xff]
        %v9821 = vld [vmem:[#allocation5 + $0xb0] sm:$0xf]
        %v9822 = vld [vmem:[#allocation5 + $0xb4] sm:$0xff]
        %v9823 = vld [vmem:[#allocation5 + $0xbc] sm:$0xff]
        %v9824 = vld [vmem:[#allocation5 + $0xc4] sm:$0xff]
        %v9825 = vld [vmem:[#allocation5 + $0xcc] sm:$0xff]
        %v9826 = vld [vmem:[#allocation5 + $0xd4] sm:$0xf]
        %v9827 = vld [vmem:[#allocation5 + $0xd8] sm:$0xff]
        %v9828 = vld [vmem:[#allocation5 + $0xe0] sm:$0xff]
        %v9829 = vld [vmem:[#allocation5 + $0xe8] sm:$0xff]
        %v9830 = vld [vmem:[#allocation5 + $0xf0] sm:$0xff]
        %v9831 = vld [vmem:[#allocation5 + $0xf8] sm:$0xf]
        %v9832 = vld [vmem:[#allocation5 + $0xfc] sm:$0xff]
        %v9833 = vld [vmem:[#allocation5 + $0x104] sm:$0xff]
        %v9834 = vld [vmem:[#allocation5 + $0x10c] sm:$0xff]
        %v9835 = vld [vmem:[#allocation5 + $0x114] sm:$0xff]
        %v9836 = vld [vmem:[#allocation5 + $0x11c] sm:$0xf]
        %v9837 = vld [vmem:[#allocation5 + $0x120] sm:$0xff]
        %v9838 = vld [vmem:[#allocation5 + $0x128] sm:$0xff]
        %v9839 = vld [vmem:[#allocation5 + $0x130] sm:$0xff]
        %v9840 = vld [vmem:[#allocation5 + $0x138] sm:$0xff]
        %v9841 = vld [vmem:[#allocation5 + $0x140] sm:$0xf]
        %v9842 = vld [vmem:[#allocation5 + $0x144] sm:$0xff]
        %v9843 = vld [vmem:[#allocation5 + $0x14c] sm:$0xff]
        %v9844 = vld [vmem:[#allocation5 + $0x154] sm:$0xff]
        %v9845 = vld [vmem:[#allocation5 + $0x15c] sm:$0xff]
        %v9846 = vld [vmem:[#allocation5 + $0x164] sm:$0xf]
        %v9847 = vld [vmem:[#allocation5 + $0x168] sm:$0xff]
        %v9848 = vld [vmem:[#allocation5 + $0x170] sm:$0xff]
        %v9849 = vld [vmem:[#allocation5 + $0x178] sm:$0xff]
        %v9850 = vld [vmem:[#allocation5 + $0x180] sm:$0xff]
        %v9851 = vld [vmem:[#allocation5 + $0x188] sm:$0xf]
        %v9852 = vld [vmem:[#allocation5 + $0x18c] sm:$0xff]
        %v9853 = vld [vmem:[#allocation5 + $0x194] sm:$0xff]
        %v9854 = vld [vmem:[#allocation5 + $0x19c] sm:$0xff]
        %v9855 = vld [vmem:[#allocation5 + $0x1a4] sm:$0xff]
        %v9856 = vld [vmem:[#allocation5 + $0x1ac] sm:$0xf]
        %v9857 = vld [vmem:[#allocation5 + $0x1b0] sm:$0xff]
        %v9858 = vld [vmem:[#allocation5 + $0x1b8] sm:$0xff]
        %v9859 = vld [vmem:[#allocation5 + $0x1c0] sm:$0xff]
        %v9860 = vld [vmem:[#allocation5 + $0x1c8] sm:$0xff]
        %v9861 = vld [vmem:[#allocation5 + $0x1d0] sm:$0xf]
        %v9862 = vld [vmem:[#allocation5 + $0x1d4] sm:$0xff]
        %v9863 = vld [vmem:[#allocation5 + $0x1dc] sm:$0xff]
        %v9864 = vld [vmem:[#allocation5 + $0x1e4] sm:$0xff]
        %v9865 = vld [vmem:[#allocation5 + $0x1ec] sm:$0xff]
        %v9866 = vld [vmem:[#allocation5 + $0x1f4] sm:$0xf]
        %v9867 = vld [vmem:[#allocation5 + $0x1f8] sm:$0xff]
        %v9868 = vld [vmem:[#allocation5 + $0x200] sm:$0xff]
        %v9869 = vld [vmem:[#allocation5 + $0x208] sm:$0xff]
        %v9870 = vld [vmem:[#allocation5 + $0x210] sm:$0xff]
        %v9871 = vld [vmem:[#allocation5 + $0x218] sm:$0xf]
        %v9872 = vld [vmem:[#allocation5 + $0x21c] sm:$0xff]
        %v9873 = vld [vmem:[#allocation5 + $0x224] sm:$0xff]
        %v9874 = vld [vmem:[#allocation5 + $0x22c] sm:$0xff]
        %v9875 = vld [vmem:[#allocation5 + $0x234] sm:$0xff]
        %v9876 = vld [vmem:[#allocation5 + $0x23c] sm:$0xf]
        %v9877 = vld [vmem:[#allocation5 + $0x240] sm:$0xff]
        %v9878 = vld [vmem:[#allocation5 + $0x248] sm:$0xff]
        %v9879 = vld [vmem:[#allocation5 + $0x250] sm:$0xff]
        %v9880 = vld [vmem:[#allocation5 + $0x258] sm:$0xff]
        %v9881 = vld [vmem:[#allocation5 + $0x260] sm:$0xf]
        %v9882 = vld [vmem:[#allocation5 + $0x264] sm:$0xff]
        %v9883 = vld [vmem:[#allocation5 + $0x26c] sm:$0xff]
        %v9884 = vld [vmem:[#allocation5 + $0x274] sm:$0xff]
        %v9885 = vld [vmem:[#allocation5 + $0x27c] sm:$0xff]
        %v9886 = vld [vmem:[#allocation5 + $0x284] sm:$0xf]
        %v9887 = vld [vmem:[#allocation5 + $0x288] sm:$0xff]
        %v9888 = vld [vmem:[#allocation5 + $0x290] sm:$0xff]
        %v9889 = vld [vmem:[#allocation5 + $0x298] sm:$0xff]
        %v9890 = vld [vmem:[#allocation5 + $0x2a0] sm:$0xff]
        %v9891 = vld [vmem:[#allocation5 + $0x2a8] sm:$0xf]
        %v9892 = vld [vmem:[#allocation5 + $0x2ac] sm:$0xff]
        %v9893 = vld [vmem:[#allocation5 + $0x2b4] sm:$0xff]
        %v9894 = vld [vmem:[#allocation5 + $0x2bc] sm:$0xff]
        %v9895 = vld [vmem:[#allocation5 + $0x2c4] sm:$0xff]
        %v9896 = vld [vmem:[#allocation5 + $0x2cc] sm:$0xf]
        %v9897 = vld [vmem:[#allocation5 + $0x2d0] sm:$0xff]
        %v9898 = vld [vmem:[#allocation5 + $0x2d8] sm:$0xff]
        %v9899 = vld [vmem:[#allocation5 + $0x2e0] sm:$0xff]
        %v9900 = vld [vmem:[#allocation5 + $0x2e8] sm:$0xff]
        %v9901 = vld [vmem:[#allocation5 + $0x2f0] sm:$0xf]
        %v9902 = vld [vmem:[#allocation5 + $0x2f4] sm:$0xff]
        %v9903 = vld [vmem:[#allocation5 + $0x2fc] sm:$0xff]
        %v9904 = vld [vmem:[#allocation5 + $0x304] sm:$0xff]
        %v9905 = vld [vmem:[#allocation5 + $0x30c] sm:$0xff]
        %v9906 = vld [vmem:[#allocation5 + $0x314] sm:$0xf]
        %v9907 = vld [vmem:[#allocation5 + $0x318] sm:$0xff]
        %v9908 = vld [vmem:[#allocation5 + $0x320] sm:$0xff]
        %v9909 = vld [vmem:[#allocation5 + $0x328] sm:$0xff]
        %v9910 = vld [vmem:[#allocation5 + $0x330] sm:$0xff]
        %v9911 = vld [vmem:[#allocation5 + $0x338] sm:$0xf]
        %v9912 = vld [vmem:[#allocation5 + $0x33c] sm:$0xff]
        %v9913 = vld [vmem:[#allocation5 + $0x344] sm:$0xff]
        %v9914 = vld [vmem:[#allocation5 + $0x34c] sm:$0xff]
        %v9915 = vld [vmem:[#allocation5 + $0x354] sm:$0xff]
        %v9916 = vld [vmem:[#allocation5 + $0x35c] sm:$0xf]
        %v9917 = vld [vmem:[#allocation5 + $0x360] sm:$0xff]
        %v9918 = vld [vmem:[#allocation5 + $0x368] sm:$0xff]
        %v9919 = vld [vmem:[#allocation5 + $0x370] sm:$0xff]
        %v9920 = vld [vmem:[#allocation5 + $0x378] sm:$0xff]
        %v9921 = vld [vmem:[#allocation5 + $0x380] sm:$0xf]
        %v9922 = vld [vmem:[#allocation5 + $0x384] sm:$0xff]
        %v9923 = vld [vmem:[#allocation5 + $0x38c] sm:$0xff]
        %v9924 = vld [vmem:[#allocation5 + $0x394] sm:$0xff]
        %v9925 = vld [vmem:[#allocation5 + $0x39c] sm:$0xff]
        %v9926 = vld [vmem:[#allocation5 + $0x3a4] sm:$0xf]
        %v9927 = vld [vmem:[#allocation5 + $0x3a8] sm:$0xff]
        %v9928 = vld [vmem:[#allocation5 + $0x3b0] sm:$0xff]
        %v9929 = vld [vmem:[#allocation5 + $0x3b8] sm:$0xff]
        %v9930 = vld [vmem:[#allocation5 + $0x3c0] sm:$0xff]
        %v9931 = vld [vmem:[#allocation5 + $0x3c8] sm:$0xf]
        %v9932 = vld [vmem:[#allocation5 + $0x3cc] sm:$0xff]
        %v9933 = vld [vmem:[#allocation5 + $0x3d4] sm:$0xff]
        %v9934 = vld [vmem:[#allocation5 + $0x3dc] sm:$0xff]
        %v9935 = vld [vmem:[#allocation5 + $0x3e4] sm:$0xff]
        %v9936 = vld [vmem:[#allocation5 + $0x3ec] sm:$0xf]
        %v9937 = vld [vmem:[#allocation5 + $0x3f0] sm:$0xff]
        %v9938 = vld [vmem:[#allocation5 + $0x3f8] sm:$0xff]
        %v9939 = vld [vmem:[#allocation5 + $0x400] sm:$0xff]
        %v9940 = vld [vmem:[#allocation5 + $0x408] sm:$0xff]
        %v9941 = vld [vmem:[#allocation5 + $0x410] sm:$0xf]
        %v9942 = vld [vmem:[#allocation5 + $0x414] sm:$0xff]
        %v9943 = vld [vmem:[#allocation5 + $0x41c] sm:$0xff]
        %v9944 = vld [vmem:[#allocation5 + $0x424] sm:$0xff]
        %v9945 = vld [vmem:[#allocation5 + $0x42c] sm:$0xff]
        %v9946 = vld [vmem:[#allocation5 + $0x434] sm:$0xf]
        %v9947 = vld [vmem:[#allocation5 + $0x438] sm:$0xff]
        %v9948 = vld [vmem:[#allocation5 + $0x440] sm:$0xff]
        %v9949 = vld [vmem:[#allocation5 + $0x448] sm:$0xff]
        %v9950 = vld [vmem:[#allocation5 + $0x450] sm:$0xff]
        %v9951 = vld [vmem:[#allocation5 + $0x458] sm:$0xf]
        %v9952 = vld [vmem:[#allocation5 + $0x45c] sm:$0xff]
        %v9953 = vld [vmem:[#allocation5 + $0x464] sm:$0xff]
        %v9954 = vld [vmem:[#allocation5 + $0x46c] sm:$0xff]
        %v9955 = vld [vmem:[#allocation5 + $0x474] sm:$0xff]
        %v9956 = vld [vmem:[#allocation5 + $0x47c] sm:$0xf]
        %v9957 = vld [vmem:[#allocation11] sm:$0xf]
        %v9958 = vld [vmem:[#allocation11 + $0x4] sm:$0xf]
        %v9959 = vld [vmem:[#allocation11 + $0x8] sm:$0xf]
        %v9960 = vld [vmem:[#allocation11 + $0xc] sm:$0xf]
        %v9961 = vld [vmem:[#allocation11 + $0x10] sm:$0xf]
        %v9962 = vld [vmem:[#allocation11 + $0x14] sm:$0xf]
        %v9963 = vld [vmem:[#allocation11 + $0x18] sm:$0xf]
        %v9964 = vld [vmem:[#allocation11 + $0x1c] sm:$0xf]
        %v9965 = vld [vmem:[#allocation11 + $0x20] sm:$0xf]
        %v9966 = vld [vmem:[#allocation11 + $0x24] sm:$0xf]
        %v9967 = vld [vmem:[#allocation11 + $0x28] sm:$0xf]
        %v9968 = vld [vmem:[#allocation11 + $0x2c] sm:$0xf]
        %v9969 = vld [vmem:[#allocation11 + $0x30] sm:$0xf]
        %v9970 = vld [vmem:[#allocation11 + $0x34] sm:$0xf]
        %v9971 = vld [vmem:[#allocation11 + $0x38] sm:$0xf]
        %v9972 = vld [vmem:[#allocation11 + $0x3c] sm:$0xf]
        %v9973 = vld [vmem:[#allocation11 + $0x40] sm:$0xf]
        %v9974 = vld [vmem:[#allocation11 + $0x44] sm:$0xf]
        %v9975 = vld [vmem:[#allocation11 + $0x48] sm:$0xf]
        %v9976 = vld [vmem:[#allocation11 + $0x4c] sm:$0xf]
        %v9977 = vld [vmem:[#allocation11 + $0x50] sm:$0xf]
        %v9978 = vld [vmem:[#allocation11 + $0x54] sm:$0xf]
        %v9979 = vld [vmem:[#allocation11 + $0x58] sm:$0xf]
        %v9980 = vld [vmem:[#allocation11 + $0x5c] sm:$0xf]
        %v9981 = vld [vmem:[#allocation11 + $0x60] sm:$0xf]
        %v9982 = vld [vmem:[#allocation11 + $0x64] sm:$0xf]
        %v9983 = vld [vmem:[#allocation11 + $0x68] sm:$0xf]
        %v9984 = vld [vmem:[#allocation11 + $0x6c] sm:$0xf]
        %v9985 = vld [vmem:[#allocation11 + $0x70] sm:$0xf]
        %v9986 = vld [vmem:[#allocation11 + $0x74] sm:$0xf]
        %v9987 = vld [vmem:[#allocation11 + $0x78] sm:$0xf]
        %v9988 = vld [vmem:[#allocation11 + $0x7c] sm:$0xf]
        %v9989 = vld [vmem:[#allocation11 + $0x80] sm:$0xf]
        %v9990 = vld [vmem:[#allocation11 + $0x84] sm:$0xf]
        %v9991 = vld [vmem:[#allocation11 + $0x88] sm:$0xf]
        %v9992 = vld [vmem:[#allocation11 + $0x8c] sm:$0xf]
        %v9993 = vld [vmem:[#allocation11 + $0x90] sm:$0xf]
        %v9994 = vld [vmem:[#allocation11 + $0x94] sm:$0xf]
        %v9995 = vld [vmem:[#allocation11 + $0x98] sm:$0xf]
        %v9996 = vld [vmem:[#allocation11 + $0x9c] sm:$0xf]
        %v9997 = vld [vmem:[#allocation11 + $0xa0] sm:$0xf]
        %v9998 = vld [vmem:[#allocation11 + $0xa4] sm:$0xf]
        %v9999 = vld [vmem:[#allocation11 + $0xa8] sm:$0xf]
        %v10000 = vld [vmem:[#allocation11 + $0xac] sm:$0xf]
        %v10001 = vld [vmem:[#allocation11 + $0xb0] sm:$0xf]
        %v10002 = vld [vmem:[#allocation11 + $0xb4] sm:$0xf]
        %v10003 = vld [vmem:[#allocation11 + $0xb8] sm:$0xf]
        %v10004 = vld [vmem:[#allocation11 + $0xbc] sm:$0xf]
        %v10005 = vld [vmem:[#allocation11 + $0xc0] sm:$0xf]
        %v10006 = vld [vmem:[#allocation11 + $0xc4] sm:$0xf]
        %v10007 = vld [vmem:[#allocation11 + $0xc8] sm:$0xf]
        %v10008 = vld [vmem:[#allocation11 + $0xcc] sm:$0xf]
        %v10009 = vld [vmem:[#allocation11 + $0xd0] sm:$0xf]
        %v10010 = vld [vmem:[#allocation11 + $0xd4] sm:$0xf]
        %v10011 = vld [vmem:[#allocation11 + $0xd8] sm:$0xf]
        %v10012 = vld [vmem:[#allocation11 + $0xdc] sm:$0xf]
        %v10013 = vld [vmem:[#allocation11 + $0xe0] sm:$0xf]
        %v10014 = vld [vmem:[#allocation11 + $0xe4] sm:$0xf]
        %v10015 = vld [vmem:[#allocation11 + $0xe8] sm:$0xf]
        %v10016 = vld [vmem:[#allocation11 + $0xec] sm:$0xf]
        %v10017 = vld [vmem:[#allocation11 + $0xf0] sm:$0xf]
        %v10018 = vld [vmem:[#allocation11 + $0xf4] sm:$0xf]
        %v10019 = vld [vmem:[#allocation11 + $0xf8] sm:$0xf]
        %v10020 = vld [vmem:[#allocation11 + $0xfc] sm:$0xf]
        %v10021 = vld [vmem:[#allocation11 + $0x100] sm:$0xf]
        %v10022 = vld [vmem:[#allocation11 + $0x104] sm:$0xf]
        %v10023 = vld [vmem:[#allocation11 + $0x108] sm:$0xf]
        %v10024 = vld [vmem:[#allocation11 + $0x10c] sm:$0xf]
        %v10025 = vld [vmem:[#allocation11 + $0x110] sm:$0xf]
        %v10026 = vld [vmem:[#allocation11 + $0x114] sm:$0xf]
        %v10027 = vld [vmem:[#allocation11 + $0x118] sm:$0xf]
        %v10028 = vld [vmem:[#allocation11 + $0x11c] sm:$0xf]
        %v10029 = vld [vmem:[#allocation11 + $0x120] sm:$0xf]
        %v10030 = vld [vmem:[#allocation11 + $0x124] sm:$0xf]
        %v10031 = vld [vmem:[#allocation11 + $0x128] sm:$0xf]
        %v10032 = vld [vmem:[#allocation11 + $0x12c] sm:$0xf]
        %v10033 = vld [vmem:[#allocation11 + $0x130] sm:$0xf]
        %v10034 = vld [vmem:[#allocation11 + $0x134] sm:$0xf]
        %v10035 = vld [vmem:[#allocation11 + $0x138] sm:$0xf]
        %v10036 = vld [vmem:[#allocation11 + $0x13c] sm:$0xf]
        %v10037 = vld [vmem:[#allocation11 + $0x140] sm:$0xf]
        %v10038 = vld [vmem:[#allocation11 + $0x144] sm:$0xf]
        %v10039 = vld [vmem:[#allocation11 + $0x148] sm:$0xf]
        %v10040 = vld [vmem:[#allocation11 + $0x14c] sm:$0xf]
        %v10041 = vld [vmem:[#allocation11 + $0x150] sm:$0xf]
        %v10042 = vld [vmem:[#allocation11 + $0x154] sm:$0xf]
        %v10043 = vld [vmem:[#allocation11 + $0x158] sm:$0xf]
        %v10044 = vld [vmem:[#allocation11 + $0x15c] sm:$0xf]
        %v10045 = vld [vmem:[#allocation11 + $0x160] sm:$0xf]
        %v10046 = vld [vmem:[#allocation11 + $0x164] sm:$0xf]
        %v10047 = vld [vmem:[#allocation11 + $0x168] sm:$0xf]
        %v10048 = vld [vmem:[#allocation11 + $0x16c] sm:$0xf]
        %v10049 = vld [vmem:[#allocation11 + $0x170] sm:$0xf]
        %v10050 = vld [vmem:[#allocation11 + $0x174] sm:$0xf]
        %v10051 = vld [vmem:[#allocation11 + $0x178] sm:$0xf]
        %v10052 = vld [vmem:[#allocation11 + $0x17c] sm:$0xf]
        %v10053 = vld [vmem:[#allocation11 + $0x180] sm:$0xf]
        %v10054 = vld [vmem:[#allocation11 + $0x184] sm:$0xf]
        %v10055 = vld [vmem:[#allocation11 + $0x188] sm:$0xf]
        %v10056 = vld [vmem:[#allocation11 + $0x18c] sm:$0xf]
        %v10057 = vld [vmem:[#allocation11 + $0x190] sm:$0xf]
        %v10058 = vld [vmem:[#allocation11 + $0x194] sm:$0xf]
        %v10059 = vld [vmem:[#allocation11 + $0x198] sm:$0xf]
        %v10060 = vld [vmem:[#allocation11 + $0x19c] sm:$0xf]
        %v10061 = vld [vmem:[#allocation11 + $0x1a0] sm:$0xf]
        %v10062 = vld [vmem:[#allocation11 + $0x1a4] sm:$0xf]
        %v10063 = vld [vmem:[#allocation11 + $0x1a8] sm:$0xf]
        %v10064 = vld [vmem:[#allocation11 + $0x1ac] sm:$0xf]
        %v10065 = vld [vmem:[#allocation11 + $0x1b0] sm:$0xf]
        %v10066 = vld [vmem:[#allocation11 + $0x1b4] sm:$0xf]
        %v10067 = vld [vmem:[#allocation11 + $0x1b8] sm:$0xf]
        %v10068 = vld [vmem:[#allocation11 + $0x1bc] sm:$0xf]
        %v10069 = vld [vmem:[#allocation11 + $0x1c0] sm:$0xf]
        %v10070 = vld [vmem:[#allocation11 + $0x1c4] sm:$0xf]
        %v10071 = vld [vmem:[#allocation11 + $0x1c8] sm:$0xf]
        %v10072 = vld [vmem:[#allocation11 + $0x1cc] sm:$0xf]
        %v10073 = vld [vmem:[#allocation11 + $0x1d0] sm:$0xf]
        %v10074 = vld [vmem:[#allocation11 + $0x1d4] sm:$0xf]
        %v10075 = vld [vmem:[#allocation11 + $0x1d8] sm:$0xf]
        %v10076 = vld [vmem:[#allocation11 + $0x1dc] sm:$0xf]
        %v10077 = vld [vmem:[#allocation11 + $0x1e0] sm:$0xf]
        %v10078 = vld [vmem:[#allocation11 + $0x1e4] sm:$0xf]
        %v10079 = vld [vmem:[#allocation11 + $0x1e8] sm:$0xf]
        %v10080 = vld [vmem:[#allocation11 + $0x1ec] sm:$0xf]
        %v10081 = vld [vmem:[#allocation11 + $0x1f0] sm:$0xf]
        %v10082 = vld [vmem:[#allocation11 + $0x1f4] sm:$0xf]
        %v10083 = vld [vmem:[#allocation11 + $0x1f8] sm:$0xf]
        %v10084 = vld [vmem:[#allocation11 + $0x1fc] sm:$0xf]
        %v10085 = vld [vmem:[#allocation11 + $0x200] sm:$0xf]
        %v10086 = vld [vmem:[#allocation11 + $0x204] sm:$0xf]
        %v10087 = vld [vmem:[#allocation11 + $0x208] sm:$0xf]
        %v10088 = vld [vmem:[#allocation11 + $0x20c] sm:$0xf]
        %v10089 = vld [vmem:[#allocation11 + $0x210] sm:$0xf]
        %v10090 = vld [vmem:[#allocation11 + $0x214] sm:$0xf]
        %v10091 = vld [vmem:[#allocation11 + $0x218] sm:$0xf]
        %v10092 = vld [vmem:[#allocation11 + $0x21c] sm:$0xf]
        %v10093 = vld [vmem:[#allocation11 + $0x220] sm:$0xf]
        %v10094 = vld [vmem:[#allocation11 + $0x224] sm:$0xf]
        %v10095 = vld [vmem:[#allocation11 + $0x228] sm:$0xf]
        %v10096 = vld [vmem:[#allocation11 + $0x22c] sm:$0xf]
        %v10097 = vld [vmem:[#allocation11 + $0x230] sm:$0xf]
        %v10098 = vld [vmem:[#allocation11 + $0x234] sm:$0xf]
        %v10099 = vld [vmem:[#allocation11 + $0x238] sm:$0xf]
        %v10100 = vld [vmem:[#allocation11 + $0x23c] sm:$0xf]
        %v10101 = vld [vmem:[%s5] sm:$0x1]
        %v10103 = vlaneseq
        %v10104 = vshrl.u32 %v10103, 7
        %v10105 = vsub.s32 0, %v10104
        %v10106 = vrot.slane %v10101, %v10105
        %v10268 = vunpack.c.l.b16 %v9797
        %v10269 = vunpack.c.h.b16 %v9797
        %v10270 = vunpack.c.l.b16 %v9798
        %v10271 = vunpack.c.h.b16 %v9798
        %v10272 = vunpack.c.l.b16 %v9799
        %v10273 = vunpack.c.h.b16 %v9799
        %v10274 = vunpack.c.l.b16 %v9800
        %v10275 = vunpack.c.h.b16 %v9800
        %v10276 = vunpack.c.l.b16 %v9801
        %v10277 = vunpack.c.l.b16 %v9802
        %v10278 = vunpack.c.h.b16 %v9802
        %v10279 = vunpack.c.l.b16 %v9803
        %v10280 = vunpack.c.h.b16 %v9803
        %v10281 = vunpack.c.l.b16 %v9804
        %v10282 = vunpack.c.h.b16 %v9804
        %v10283 = vunpack.c.l.b16 %v9805
        %v10284 = vunpack.c.h.b16 %v9805
        %v10285 = vunpack.c.l.b16 %v9806
        %v10286 = vunpack.c.l.b16 %v9807
        %v10287 = vunpack.c.h.b16 %v9807
        %v10288 = vunpack.c.l.b16 %v9808
        %v10289 = vunpack.c.h.b16 %v9808
        %v10290 = vunpack.c.l.b16 %v9809
        %v10291 = vunpack.c.h.b16 %v9809
        %v10292 = vunpack.c.l.b16 %v9810
        %v10293 = vunpack.c.h.b16 %v9810
        %v10294 = vunpack.c.l.b16 %v9811
        %v10295 = vunpack.c.l.b16 %v9812
        %v10296 = vunpack.c.h.b16 %v9812
        %v10297 = vunpack.c.l.b16 %v9813
        %v10298 = vunpack.c.h.b16 %v9813
        %v10299 = vunpack.c.l.b16 %v9814
        %v10300 = vunpack.c.h.b16 %v9814
        %v10301 = vunpack.c.l.b16 %v9815
        %v10302 = vunpack.c.h.b16 %v9815
        %v10303 = vunpack.c.l.b16 %v9816
        %v10304 = vunpack.c.l.b16 %v9817
        %v10305 = vunpack.c.h.b16 %v9817
        %v10306 = vunpack.c.l.b16 %v9818
        %v10307 = vunpack.c.h.b16 %v9818
        %v10308 = vunpack.c.l.b16 %v9819
        %v10309 = vunpack.c.h.b16 %v9819
        %v10310 = vunpack.c.l.b16 %v9820
        %v10311 = vunpack.c.h.b16 %v9820
        %v10312 = vunpack.c.l.b16 %v9821
        %v10313 = vunpack.c.l.b16 %v9822
        %v10314 = vunpack.c.h.b16 %v9822
        %v10315 = vunpack.c.l.b16 %v9823
        %v10316 = vunpack.c.h.b16 %v9823
        %v10317 = vunpack.c.l.b16 %v9824
        %v10318 = vunpack.c.h.b16 %v9824
        %v10319 = vunpack.c.l.b16 %v9825
        %v10320 = vunpack.c.h.b16 %v9825
        %v10321 = vunpack.c.l.b16 %v9826
        %v10322 = vunpack.c.l.b16 %v9827
        %v10323 = vunpack.c.h.b16 %v9827
        %v10324 = vunpack.c.l.b16 %v9828
        %v10325 = vunpack.c.h.b16 %v9828
        %v10326 = vunpack.c.l.b16 %v9829
        %v10327 = vunpack.c.h.b16 %v9829
        %v10328 = vunpack.c.l.b16 %v9830
        %v10329 = vunpack.c.h.b16 %v9830
        %v10330 = vunpack.c.l.b16 %v9831
        %v10331 = vunpack.c.l.b16 %v9832
        %v10332 = vunpack.c.h.b16 %v9832
        %v10333 = vunpack.c.l.b16 %v9833
        %v10334 = vunpack.c.h.b16 %v9833
        %v10335 = vunpack.c.l.b16 %v9834
        %v10336 = vunpack.c.h.b16 %v9834
        %v10337 = vunpack.c.l.b16 %v9835
        %v10338 = vunpack.c.h.b16 %v9835
        %v10339 = vunpack.c.l.b16 %v9836
        %v10340 = vunpack.c.l.b16 %v9837
        %v10341 = vunpack.c.h.b16 %v9837
        %v10342 = vunpack.c.l.b16 %v9838
        %v10343 = vunpack.c.h.b16 %v9838
        %v10344 = vunpack.c.l.b16 %v9839
        %v10345 = vunpack.c.h.b16 %v9839
        %v10346 = vunpack.c.l.b16 %v9840
        %v10347 = vunpack.c.h.b16 %v9840
        %v10348 = vunpack.c.l.b16 %v9841
        %v10349 = vunpack.c.l.b16 %v9842
        %v10350 = vunpack.c.h.b16 %v9842
        %v10351 = vunpack.c.l.b16 %v9843
        %v10352 = vunpack.c.h.b16 %v9843
        %v10353 = vunpack.c.l.b16 %v9844
        %v10354 = vunpack.c.h.b16 %v9844
        %v10355 = vunpack.c.l.b16 %v9845
        %v10356 = vunpack.c.h.b16 %v9845
        %v10357 = vunpack.c.l.b16 %v9846
        %v10358 = vunpack.c.l.b16 %v9847
        %v10359 = vunpack.c.h.b16 %v9847
        %v10360 = vunpack.c.l.b16 %v9848
        %v10361 = vunpack.c.h.b16 %v9848
        %v10362 = vunpack.c.l.b16 %v9849
        %v10363 = vunpack.c.h.b16 %v9849
        %v10364 = vunpack.c.l.b16 %v9850
        %v10365 = vunpack.c.h.b16 %v9850
        %v10366 = vunpack.c.l.b16 %v9851
        %v10367 = vunpack.c.l.b16 %v9852
        %v10368 = vunpack.c.h.b16 %v9852
        %v10369 = vunpack.c.l.b16 %v9853
        %v10370 = vunpack.c.h.b16 %v9853
        %v10371 = vunpack.c.l.b16 %v9854
        %v10372 = vunpack.c.h.b16 %v9854
        %v10373 = vunpack.c.l.b16 %v9855
        %v10374 = vunpack.c.h.b16 %v9855
        %v10375 = vunpack.c.l.b16 %v9856
        %v10376 = vunpack.c.l.b16 %v9857
        %v10377 = vunpack.c.h.b16 %v9857
        %v10378 = vunpack.c.l.b16 %v9858
        %v10379 = vunpack.c.h.b16 %v9858
        %v10380 = vunpack.c.l.b16 %v9859
        %v10381 = vunpack.c.h.b16 %v9859
        %v10382 = vunpack.c.l.b16 %v9860
        %v10383 = vunpack.c.h.b16 %v9860
        %v10384 = vunpack.c.l.b16 %v9861
        %v10385 = vunpack.c.l.b16 %v9862
        %v10386 = vunpack.c.h.b16 %v9862
        %v10387 = vunpack.c.l.b16 %v9863
        %v10388 = vunpack.c.h.b16 %v9863
        %v10389 = vunpack.c.l.b16 %v9864
        %v10390 = vunpack.c.h.b16 %v9864
        %v10391 = vunpack.c.l.b16 %v9865
        %v10392 = vunpack.c.h.b16 %v9865
        %v10393 = vunpack.c.l.b16 %v9866
        %v10394 = vunpack.c.l.b16 %v9867
        %v10395 = vunpack.c.h.b16 %v9867
        %v10396 = vunpack.c.l.b16 %v9868
        %v10397 = vunpack.c.h.b16 %v9868
        %v10398 = vunpack.c.l.b16 %v9869
        %v10399 = vunpack.c.h.b16 %v9869
        %v10400 = vunpack.c.l.b16 %v9870
        %v10401 = vunpack.c.h.b16 %v9870
        %v10402 = vunpack.c.l.b16 %v9871
        %v10403 = vunpack.c.l.b16 %v9872
        %v10404 = vunpack.c.h.b16 %v9872
        %v10405 = vunpack.c.l.b16 %v9873
        %v10406 = vunpack.c.h.b16 %v9873
        %v10407 = vunpack.c.l.b16 %v9874
        %v10408 = vunpack.c.h.b16 %v9874
        %v10409 = vunpack.c.l.b16 %v9875
        %v10410 = vunpack.c.h.b16 %v9875
        %v10411 = vunpack.c.l.b16 %v9876
        %v10412 = vunpack.c.l.b16 %v9877
        %v10413 = vunpack.c.h.b16 %v9877
        %v10414 = vunpack.c.l.b16 %v9878
        %v10415 = vunpack.c.h.b16 %v9878
        %v10416 = vunpack.c.l.b16 %v9879
        %v10417 = vunpack.c.h.b16 %v9879
        %v10418 = vunpack.c.l.b16 %v9880
        %v10419 = vunpack.c.h.b16 %v9880
        %v10420 = vunpack.c.l.b16 %v9881
        %v10421 = vunpack.c.l.b16 %v9882
        %v10422 = vunpack.c.h.b16 %v9882
        %v10423 = vunpack.c.l.b16 %v9883
        %v10424 = vunpack.c.h.b16 %v9883
        %v10425 = vunpack.c.l.b16 %v9884
        %v10426 = vunpack.c.h.b16 %v9884
        %v10427 = vunpack.c.l.b16 %v9885
        %v10428 = vunpack.c.h.b16 %v9885
        %v10429 = vunpack.c.l.b16 %v9886
        %v10430 = vunpack.c.l.b16 %v9887
        %v10431 = vunpack.c.h.b16 %v9887
        %v10432 = vunpack.c.l.b16 %v9888
        %v10433 = vunpack.c.h.b16 %v9888
        %v10434 = vunpack.c.l.b16 %v9889
        %v10435 = vunpack.c.h.b16 %v9889
        %v10436 = vunpack.c.l.b16 %v9890
        %v10437 = vunpack.c.h.b16 %v9890
        %v10438 = vunpack.c.l.b16 %v9891
        %v10439 = vunpack.c.l.b16 %v9892
        %v10440 = vunpack.c.h.b16 %v9892
        %v10441 = vunpack.c.l.b16 %v9893
        %v10442 = vunpack.c.h.b16 %v9893
        %v10443 = vunpack.c.l.b16 %v9894
        %v10444 = vunpack.c.h.b16 %v9894
        %v10445 = vunpack.c.l.b16 %v9895
        %v10446 = vunpack.c.h.b16 %v9895
        %v10447 = vunpack.c.l.b16 %v9896
        %v10448 = vunpack.c.l.b16 %v9897
        %v10449 = vunpack.c.h.b16 %v9897
        %v10450 = vunpack.c.l.b16 %v9898
        %v10451 = vunpack.c.h.b16 %v9898
        %v10452 = vunpack.c.l.b16 %v9899
        %v10453 = vunpack.c.h.b16 %v9899
        %v10454 = vunpack.c.l.b16 %v9900
        %v10455 = vunpack.c.h.b16 %v9900
        %v10456 = vunpack.c.l.b16 %v9901
        %v10457 = vunpack.c.l.b16 %v9902
        %v10458 = vunpack.c.h.b16 %v9902
        %v10459 = vunpack.c.l.b16 %v9903
        %v10460 = vunpack.c.h.b16 %v9903
        %v10461 = vunpack.c.l.b16 %v9904
        %v10462 = vunpack.c.h.b16 %v9904
        %v10463 = vunpack.c.l.b16 %v9905
        %v10464 = vunpack.c.h.b16 %v9905
        %v10465 = vunpack.c.l.b16 %v9906
        %v10466 = vunpack.c.l.b16 %v9907
        %v10467 = vunpack.c.h.b16 %v9907
        %v10468 = vunpack.c.l.b16 %v9908
        %v10469 = vunpack.c.h.b16 %v9908
        %v10470 = vunpack.c.l.b16 %v9909
        %v10471 = vunpack.c.h.b16 %v9909
        %v10472 = vunpack.c.l.b16 %v9910
        %v10473 = vunpack.c.h.b16 %v9910
        %v10474 = vunpack.c.l.b16 %v9911
        %v10475 = vunpack.c.l.b16 %v9912
        %v10476 = vunpack.c.h.b16 %v9912
        %v10477 = vunpack.c.l.b16 %v9913
        %v10478 = vunpack.c.h.b16 %v9913
        %v10479 = vunpack.c.l.b16 %v9914
        %v10480 = vunpack.c.h.b16 %v9914
        %v10481 = vunpack.c.l.b16 %v9915
        %v10482 = vunpack.c.h.b16 %v9915
        %v10483 = vunpack.c.l.b16 %v9916
        %v10484 = vunpack.c.l.b16 %v9917
        %v10485 = vunpack.c.h.b16 %v9917
        %v10486 = vunpack.c.l.b16 %v9918
        %v10487 = vunpack.c.h.b16 %v9918
        %v10488 = vunpack.c.l.b16 %v9919
        %v10489 = vunpack.c.h.b16 %v9919
        %v10490 = vunpack.c.l.b16 %v9920
        %v10491 = vunpack.c.h.b16 %v9920
        %v10492 = vunpack.c.l.b16 %v9921
        %v10493 = vunpack.c.l.b16 %v9922
        %v10494 = vunpack.c.h.b16 %v9922
        %v10495 = vunpack.c.l.b16 %v9923
        %v10496 = vunpack.c.h.b16 %v9923
        %v10497 = vunpack.c.l.b16 %v9924
        %v10498 = vunpack.c.h.b16 %v9924
        %v10499 = vunpack.c.l.b16 %v9925
        %v10500 = vunpack.c.h.b16 %v9925
        %v10501 = vunpack.c.l.b16 %v9926
        %v10502 = vunpack.c.l.b16 %v9927
        %v10503 = vunpack.c.h.b16 %v9927
        %v10504 = vunpack.c.l.b16 %v9928
        %v10505 = vunpack.c.h.b16 %v9928
        %v10506 = vunpack.c.l.b16 %v9929
        %v10507 = vunpack.c.h.b16 %v9929
        %v10508 = vunpack.c.l.b16 %v9930
        %v10509 = vunpack.c.h.b16 %v9930
        %v10510 = vunpack.c.l.b16 %v9931
        %v10511 = vunpack.c.l.b16 %v9932
        %v10512 = vunpack.c.h.b16 %v9932
        %v10513 = vunpack.c.l.b16 %v9933
        %v10514 = vunpack.c.h.b16 %v9933
        %v10515 = vunpack.c.l.b16 %v9934
        %v10516 = vunpack.c.h.b16 %v9934
        %v10517 = vunpack.c.l.b16 %v9935
        %v10518 = vunpack.c.h.b16 %v9935
        %v10519 = vunpack.c.l.b16 %v9936
        %v10520 = vunpack.c.l.b16 %v9937
        %v10521 = vunpack.c.h.b16 %v9937
        %v10522 = vunpack.c.l.b16 %v9938
        %v10523 = vunpack.c.h.b16 %v9938
        %v10524 = vunpack.c.l.b16 %v9939
        %v10525 = vunpack.c.h.b16 %v9939
        %v10526 = vunpack.c.l.b16 %v9940
        %v10527 = vunpack.c.h.b16 %v9940
        %v10528 = vunpack.c.l.b16 %v9941
        %v10529 = vunpack.c.l.b16 %v9942
        %v10530 = vunpack.c.h.b16 %v9942
        %v10531 = vunpack.c.l.b16 %v9943
        %v10532 = vunpack.c.h.b16 %v9943
        %v10533 = vunpack.c.l.b16 %v9944
        %v10534 = vunpack.c.h.b16 %v9944
        %v10535 = vunpack.c.l.b16 %v9945
        %v10536 = vunpack.c.h.b16 %v9945
        %v10537 = vunpack.c.l.b16 %v9946
        %v10538 = vunpack.c.l.b16 %v9947
        %v10539 = vunpack.c.h.b16 %v9947
        %v10540 = vunpack.c.l.b16 %v9948
        %v10541 = vunpack.c.h.b16 %v9948
        %v10542 = vunpack.c.l.b16 %v9949
        %v10543 = vunpack.c.h.b16 %v9949
        %v10544 = vunpack.c.l.b16 %v9950
        %v10545 = vunpack.c.h.b16 %v9950
        %v10546 = vunpack.c.l.b16 %v9951
        %v10547 = vunpack.c.l.b16 %v9952
        %v10548 = vunpack.c.h.b16 %v9952
        %v10549 = vunpack.c.l.b16 %v9953
        %v10550 = vunpack.c.h.b16 %v9953
        %v10551 = vunpack.c.l.b16 %v9954
        %v10552 = vunpack.c.h.b16 %v9954
        %v10553 = vunpack.c.l.b16 %v9955
        %v10554 = vunpack.c.h.b16 %v9955
        %v10555 = vunpack.c.l.b16 %v9956
        %v10556 = vpack.c.b16 %v10277, %v10268
        %v10557 = vpack.c.b16 %v10278, %v10269
        %v10558 = vpack.c.b16 %v10279, %v10270
        %v10559 = vpack.c.b16 %v10280, %v10271
        %v10560 = vpack.c.b16 %v10281, %v10272
        %v10561 = vpack.c.b16 %v10282, %v10273
        %v10562 = vpack.c.b16 %v10283, %v10274
        %v10563 = vpack.c.b16 %v10284, %v10275
        %v10564 = vpack.c.b16 %v10285, %v10276
        %v10565 = vpack.c.b16 %v10295, %v10286
        %v10566 = vpack.c.b16 %v10296, %v10287
        %v10567 = vpack.c.b16 %v10297, %v10288
        %v10568 = vpack.c.b16 %v10298, %v10289
        %v10569 = vpack.c.b16 %v10299, %v10290
        %v10570 = vpack.c.b16 %v10300, %v10291
        %v10571 = vpack.c.b16 %v10301, %v10292
        %v10572 = vpack.c.b16 %v10302, %v10293
        %v10573 = vpack.c.b16 %v10303, %v10294
        %v10574 = vpack.c.b16 %v10313, %v10304
        %v10575 = vpack.c.b16 %v10314, %v10305
        %v10576 = vpack.c.b16 %v10315, %v10306
        %v10577 = vpack.c.b16 %v10316, %v10307
        %v10578 = vpack.c.b16 %v10317, %v10308
        %v10579 = vpack.c.b16 %v10318, %v10309
        %v10580 = vpack.c.b16 %v10319, %v10310
        %v10581 = vpack.c.b16 %v10320, %v10311
        %v10582 = vpack.c.b16 %v10321, %v10312
        %v10583 = vpack.c.b16 %v10331, %v10322
        %v10584 = vpack.c.b16 %v10332, %v10323
        %v10585 = vpack.c.b16 %v10333, %v10324
        %v10586 = vpack.c.b16 %v10334, %v10325
        %v10587 = vpack.c.b16 %v10335, %v10326
        %v10588 = vpack.c.b16 %v10336, %v10327
        %v10589 = vpack.c.b16 %v10337, %v10328
        %v10590 = vpack.c.b16 %v10338, %v10329
        %v10591 = vpack.c.b16 %v10339, %v10330
        %v10592 = vpack.c.b16 %v10349, %v10340
        %v10593 = vpack.c.b16 %v10350, %v10341
        %v10594 = vpack.c.b16 %v10351, %v10342
        %v10595 = vpack.c.b16 %v10352, %v10343
        %v10596 = vpack.c.b16 %v10353, %v10344
        %v10597 = vpack.c.b16 %v10354, %v10345
        %v10598 = vpack.c.b16 %v10355, %v10346
        %v10599 = vpack.c.b16 %v10356, %v10347
        %v10600 = vpack.c.b16 %v10357, %v10348
        %v10601 = vpack.c.b16 %v10367, %v10358
        %v10602 = vpack.c.b16 %v10368, %v10359
        %v10603 = vpack.c.b16 %v10369, %v10360
        %v10604 = vpack.c.b16 %v10370, %v10361
        %v10605 = vpack.c.b16 %v10371, %v10362
        %v10606 = vpack.c.b16 %v10372, %v10363
        %v10607 = vpack.c.b16 %v10373, %v10364
        %v10608 = vpack.c.b16 %v10374, %v10365
        %v10609 = vpack.c.b16 %v10375, %v10366
        %v10610 = vpack.c.b16 %v10385, %v10376
        %v10611 = vpack.c.b16 %v10386, %v10377
        %v10612 = vpack.c.b16 %v10387, %v10378
        %v10613 = vpack.c.b16 %v10388, %v10379
        %v10614 = vpack.c.b16 %v10389, %v10380
        %v10615 = vpack.c.b16 %v10390, %v10381
        %v10616 = vpack.c.b16 %v10391, %v10382
        %v10617 = vpack.c.b16 %v10392, %v10383
        %v10618 = vpack.c.b16 %v10393, %v10384
        %v10619 = vpack.c.b16 %v10403, %v10394
        %v10620 = vpack.c.b16 %v10404, %v10395
        %v10621 = vpack.c.b16 %v10405, %v10396
        %v10622 = vpack.c.b16 %v10406, %v10397
        %v10623 = vpack.c.b16 %v10407, %v10398
        %v10624 = vpack.c.b16 %v10408, %v10399
        %v10625 = vpack.c.b16 %v10409, %v10400
        %v10626 = vpack.c.b16 %v10410, %v10401
        %v10627 = vpack.c.b16 %v10411, %v10402
        %v10628 = vpack.c.b16 %v10421, %v10412
        %v10629 = vpack.c.b16 %v10422, %v10413
        %v10630 = vpack.c.b16 %v10423, %v10414
        %v10631 = vpack.c.b16 %v10424, %v10415
        %v10632 = vpack.c.b16 %v10425, %v10416
        %v10633 = vpack.c.b16 %v10426, %v10417
        %v10634 = vpack.c.b16 %v10427, %v10418
        %v10635 = vpack.c.b16 %v10428, %v10419
        %v10636 = vpack.c.b16 %v10429, %v10420
        %v10637 = vpack.c.b16 %v10439, %v10430
        %v10638 = vpack.c.b16 %v10440, %v10431
        %v10639 = vpack.c.b16 %v10441, %v10432
        %v10640 = vpack.c.b16 %v10442, %v10433
        %v10641 = vpack.c.b16 %v10443, %v10434
        %v10642 = vpack.c.b16 %v10444, %v10435
        %v10643 = vpack.c.b16 %v10445, %v10436
        %v10644 = vpack.c.b16 %v10446, %v10437
        %v10645 = vpack.c.b16 %v10447, %v10438
        %v10646 = vpack.c.b16 %v10457, %v10448
        %v10647 = vpack.c.b16 %v10458, %v10449
        %v10648 = vpack.c.b16 %v10459, %v10450
        %v10649 = vpack.c.b16 %v10460, %v10451
        %v10650 = vpack.c.b16 %v10461, %v10452
        %v10651 = vpack.c.b16 %v10462, %v10453
        %v10652 = vpack.c.b16 %v10463, %v10454
        %v10653 = vpack.c.b16 %v10464, %v10455
        %v10654 = vpack.c.b16 %v10465, %v10456
        %v10655 = vpack.c.b16 %v10475, %v10466
        %v10656 = vpack.c.b16 %v10476, %v10467
        %v10657 = vpack.c.b16 %v10477, %v10468
        %v10658 = vpack.c.b16 %v10478, %v10469
        %v10659 = vpack.c.b16 %v10479, %v10470
        %v10660 = vpack.c.b16 %v10480, %v10471
        %v10661 = vpack.c.b16 %v10481, %v10472
        %v10662 = vpack.c.b16 %v10482, %v10473
        %v10663 = vpack.c.b16 %v10483, %v10474
        %v10664 = vpack.c.b16 %v10493, %v10484
        %v10665 = vpack.c.b16 %v10494, %v10485
        %v10666 = vpack.c.b16 %v10495, %v10486
        %v10667 = vpack.c.b16 %v10496, %v10487
        %v10668 = vpack.c.b16 %v10497, %v10488
        %v10669 = vpack.c.b16 %v10498, %v10489
        %v10670 = vpack.c.b16 %v10499, %v10490
        %v10671 = vpack.c.b16 %v10500, %v10491
        %v10672 = vpack.c.b16 %v10501, %v10492
        %v10673 = vpack.c.b16 %v10511, %v10502
        %v10674 = vpack.c.b16 %v10512, %v10503
        %v10675 = vpack.c.b16 %v10513, %v10504
        %v10676 = vpack.c.b16 %v10514, %v10505
        %v10677 = vpack.c.b16 %v10515, %v10506
        %v10678 = vpack.c.b16 %v10516, %v10507
        %v10679 = vpack.c.b16 %v10517, %v10508
        %v10680 = vpack.c.b16 %v10518, %v10509
        %v10681 = vpack.c.b16 %v10519, %v10510
        %v10682 = vpack.c.b16 %v10529, %v10520
        %v10683 = vpack.c.b16 %v10530, %v10521
        %v10684 = vpack.c.b16 %v10531, %v10522
        %v10685 = vpack.c.b16 %v10532, %v10523
        %v10686 = vpack.c.b16 %v10533, %v10524
        %v10687 = vpack.c.b16 %v10534, %v10525
        %v10688 = vpack.c.b16 %v10535, %v10526
        %v10689 = vpack.c.b16 %v10536, %v10527
        %v10690 = vpack.c.b16 %v10537, %v10528
        %v10691 = vpack.c.b16 %v10547, %v10538
        %v10692 = vpack.c.b16 %v10548, %v10539
        %v10693 = vpack.c.b16 %v10549, %v10540
        %v10694 = vpack.c.b16 %v10550, %v10541
        %v10695 = vpack.c.b16 %v10551, %v10542
        %v10696 = vpack.c.b16 %v10552, %v10543
        %v10697 = vpack.c.b16 %v10553, %v10544
        %v10698 = vpack.c.b16 %v10554, %v10545
        %v10699 = vpack.c.b16 %v10555, %v10546
        %v10988 = vunpack.c.l.b16 %v9957
        %v10989 = vunpack.c.l.b16 %v9958
        %v10990 = vunpack.c.l.b16 %v9959
        %v10991 = vunpack.c.l.b16 %v9960
        %v10992 = vunpack.c.l.b16 %v9961
        %v10993 = vunpack.c.l.b16 %v9962
        %v10994 = vunpack.c.l.b16 %v9963
        %v10995 = vunpack.c.l.b16 %v9964
        %v10996 = vunpack.c.l.b16 %v9965
        %v10997 = vunpack.c.l.b16 %v9966
        %v10998 = vunpack.c.l.b16 %v9967
        %v10999 = vunpack.c.l.b16 %v9968
        %v11000 = vunpack.c.l.b16 %v9969
        %v11001 = vunpack.c.l.b16 %v9970
        %v11002 = vunpack.c.l.b16 %v9971
        %v11003 = vunpack.c.l.b16 %v9972
        %v11004 = vunpack.c.l.b16 %v9973
        %v11005 = vunpack.c.l.b16 %v9974
        %v11006 = vunpack.c.l.b16 %v9975
        %v11007 = vunpack.c.l.b16 %v9976
        %v11008 = vunpack.c.l.b16 %v9977
        %v11009 = vunpack.c.l.b16 %v9978
        %v11010 = vunpack.c.l.b16 %v9979
        %v11011 = vunpack.c.l.b16 %v9980
        %v11012 = vunpack.c.l.b16 %v9981
        %v11013 = vunpack.c.l.b16 %v9982
        %v11014 = vunpack.c.l.b16 %v9983
        %v11015 = vunpack.c.l.b16 %v9984
        %v11016 = vunpack.c.l.b16 %v9985
        %v11017 = vunpack.c.l.b16 %v9986
        %v11018 = vunpack.c.l.b16 %v9987
        %v11019 = vunpack.c.l.b16 %v9988
        %v11020 = vunpack.c.l.b16 %v9989
        %v11021 = vunpack.c.l.b16 %v9990
        %v11022 = vunpack.c.l.b16 %v9991
        %v11023 = vunpack.c.l.b16 %v9992
        %v11024 = vunpack.c.l.b16 %v9993
        %v11025 = vunpack.c.l.b16 %v9994
        %v11026 = vunpack.c.l.b16 %v9995
        %v11027 = vunpack.c.l.b16 %v9996
        %v11028 = vunpack.c.l.b16 %v9997
        %v11029 = vunpack.c.l.b16 %v9998
        %v11030 = vunpack.c.l.b16 %v9999
        %v11031 = vunpack.c.l.b16 %v10000
        %v11032 = vunpack.c.l.b16 %v10001
        %v11033 = vunpack.c.l.b16 %v10002
        %v11034 = vunpack.c.l.b16 %v10003
        %v11035 = vunpack.c.l.b16 %v10004
        %v11036 = vunpack.c.l.b16 %v10005
        %v11037 = vunpack.c.l.b16 %v10006
        %v11038 = vunpack.c.l.b16 %v10007
        %v11039 = vunpack.c.l.b16 %v10008
        %v11040 = vunpack.c.l.b16 %v10009
        %v11041 = vunpack.c.l.b16 %v10010
        %v11042 = vunpack.c.l.b16 %v10011
        %v11043 = vunpack.c.l.b16 %v10012
        %v11044 = vunpack.c.l.b16 %v10013
        %v11045 = vunpack.c.l.b16 %v10014
        %v11046 = vunpack.c.l.b16 %v10015
        %v11047 = vunpack.c.l.b16 %v10016
        %v11048 = vunpack.c.l.b16 %v10017
        %v11049 = vunpack.c.l.b16 %v10018
        %v11050 = vunpack.c.l.b16 %v10019
        %v11051 = vunpack.c.l.b16 %v10020
        %v11052 = vunpack.c.l.b16 %v10021
        %v11053 = vunpack.c.l.b16 %v10022
        %v11054 = vunpack.c.l.b16 %v10023
        %v11055 = vunpack.c.l.b16 %v10024
        %v11056 = vunpack.c.l.b16 %v10025
        %v11057 = vunpack.c.l.b16 %v10026
        %v11058 = vunpack.c.l.b16 %v10027
        %v11059 = vunpack.c.l.b16 %v10028
        %v11060 = vunpack.c.l.b16 %v10029
        %v11061 = vunpack.c.l.b16 %v10030
        %v11062 = vunpack.c.l.b16 %v10031
        %v11063 = vunpack.c.l.b16 %v10032
        %v11064 = vunpack.c.l.b16 %v10033
        %v11065 = vunpack.c.l.b16 %v10034
        %v11066 = vunpack.c.l.b16 %v10035
        %v11067 = vunpack.c.l.b16 %v10036
        %v11068 = vunpack.c.l.b16 %v10037
        %v11069 = vunpack.c.l.b16 %v10038
        %v11070 = vunpack.c.l.b16 %v10039
        %v11071 = vunpack.c.l.b16 %v10040
        %v11072 = vunpack.c.l.b16 %v10041
        %v11073 = vunpack.c.l.b16 %v10042
        %v11074 = vunpack.c.l.b16 %v10043
        %v11075 = vunpack.c.l.b16 %v10044
        %v11076 = vunpack.c.l.b16 %v10045
        %v11077 = vunpack.c.l.b16 %v10046
        %v11078 = vunpack.c.l.b16 %v10047
        %v11079 = vunpack.c.l.b16 %v10048
        %v11080 = vunpack.c.l.b16 %v10049
        %v11081 = vunpack.c.l.b16 %v10050
        %v11082 = vunpack.c.l.b16 %v10051
        %v11083 = vunpack.c.l.b16 %v10052
        %v11084 = vunpack.c.l.b16 %v10053
        %v11085 = vunpack.c.l.b16 %v10054
        %v11086 = vunpack.c.l.b16 %v10055
        %v11087 = vunpack.c.l.b16 %v10056
        %v11088 = vunpack.c.l.b16 %v10057
        %v11089 = vunpack.c.l.b16 %v10058
        %v11090 = vunpack.c.l.b16 %v10059
        %v11091 = vunpack.c.l.b16 %v10060
        %v11092 = vunpack.c.l.b16 %v10061
        %v11093 = vunpack.c.l.b16 %v10062
        %v11094 = vunpack.c.l.b16 %v10063
        %v11095 = vunpack.c.l.b16 %v10064
        %v11096 = vunpack.c.l.b16 %v10065
        %v11097 = vunpack.c.l.b16 %v10066
        %v11098 = vunpack.c.l.b16 %v10067
        %v11099 = vunpack.c.l.b16 %v10068
        %v11100 = vunpack.c.l.b16 %v10069
        %v11101 = vunpack.c.l.b16 %v10070
        %v11102 = vunpack.c.l.b16 %v10071
        %v11103 = vunpack.c.l.b16 %v10072
        %v11104 = vunpack.c.l.b16 %v10073
        %v11105 = vunpack.c.l.b16 %v10074
        %v11106 = vunpack.c.l.b16 %v10075
        %v11107 = vunpack.c.l.b16 %v10076
        %v11108 = vunpack.c.l.b16 %v10077
        %v11109 = vunpack.c.l.b16 %v10078
        %v11110 = vunpack.c.l.b16 %v10079
        %v11111 = vunpack.c.l.b16 %v10080
        %v11112 = vunpack.c.l.b16 %v10081
        %v11113 = vunpack.c.l.b16 %v10082
        %v11114 = vunpack.c.l.b16 %v10083
        %v11115 = vunpack.c.l.b16 %v10084
        %v11116 = vunpack.c.l.b16 %v10085
        %v11117 = vunpack.c.l.b16 %v10086
        %v11118 = vunpack.c.l.b16 %v10087
        %v11119 = vunpack.c.l.b16 %v10088
        %v11120 = vunpack.c.l.b16 %v10089
        %v11121 = vunpack.c.l.b16 %v10090
        %v11122 = vunpack.c.l.b16 %v10091
        %v11123 = vunpack.c.l.b16 %v10092
        %v11124 = vunpack.c.l.b16 %v10093
        %v11125 = vunpack.c.l.b16 %v10094
        %v11126 = vunpack.c.l.b16 %v10095
        %v11127 = vunpack.c.l.b16 %v10096
        %v11128 = vunpack.c.l.b16 %v10097
        %v11129 = vunpack.c.l.b16 %v10098
        %v11130 = vunpack.c.l.b16 %v10099
        %v11131 = vunpack.c.l.b16 %v10100
        %v11132 = vpack.c.b16 %v10989, %v10988
        %v11133 = vpack.c.b16 %v10991, %v10990
        %v11134 = vpack.c.b16 %v10993, %v10992
        %v11135 = vpack.c.b16 %v10995, %v10994
        %v11136 = vpack.c.b16 %v10997, %v10996
        %v11137 = vpack.c.b16 %v10999, %v10998
        %v11138 = vpack.c.b16 %v11001, %v11000
        %v11139 = vpack.c.b16 %v11003, %v11002
        %v11140 = vpack.c.b16 %v11005, %v11004
        %v11141 = vpack.c.b16 %v11007, %v11006
        %v11142 = vpack.c.b16 %v11009, %v11008
        %v11143 = vpack.c.b16 %v11011, %v11010
        %v11144 = vpack.c.b16 %v11013, %v11012
        %v11145 = vpack.c.b16 %v11015, %v11014
        %v11146 = vpack.c.b16 %v11017, %v11016
        %v11147 = vpack.c.b16 %v11019, %v11018
        %v11148 = vpack.c.b16 %v11021, %v11020
        %v11149 = vpack.c.b16 %v11023, %v11022
        %v11150 = vpack.c.b16 %v11025, %v11024
        %v11151 = vpack.c.b16 %v11027, %v11026
        %v11152 = vpack.c.b16 %v11029, %v11028
        %v11153 = vpack.c.b16 %v11031, %v11030
        %v11154 = vpack.c.b16 %v11033, %v11032
        %v11155 = vpack.c.b16 %v11035, %v11034
        %v11156 = vpack.c.b16 %v11037, %v11036
        %v11157 = vpack.c.b16 %v11039, %v11038
        %v11158 = vpack.c.b16 %v11041, %v11040
        %v11159 = vpack.c.b16 %v11043, %v11042
        %v11160 = vpack.c.b16 %v11045, %v11044
        %v11161 = vpack.c.b16 %v11047, %v11046
        %v11162 = vpack.c.b16 %v11049, %v11048
        %v11163 = vpack.c.b16 %v11051, %v11050
        %v11164 = vpack.c.b16 %v11053, %v11052
        %v11165 = vpack.c.b16 %v11055, %v11054
        %v11166 = vpack.c.b16 %v11057, %v11056
        %v11167 = vpack.c.b16 %v11059, %v11058
        %v11168 = vpack.c.b16 %v11061, %v11060
        %v11169 = vpack.c.b16 %v11063, %v11062
        %v11170 = vpack.c.b16 %v11065, %v11064
        %v11171 = vpack.c.b16 %v11067, %v11066
        %v11172 = vpack.c.b16 %v11069, %v11068
        %v11173 = vpack.c.b16 %v11071, %v11070
        %v11174 = vpack.c.b16 %v11073, %v11072
        %v11175 = vpack.c.b16 %v11075, %v11074
        %v11176 = vpack.c.b16 %v11077, %v11076
        %v11177 = vpack.c.b16 %v11079, %v11078
        %v11178 = vpack.c.b16 %v11081, %v11080
        %v11179 = vpack.c.b16 %v11083, %v11082
        %v11180 = vpack.c.b16 %v11085, %v11084
        %v11181 = vpack.c.b16 %v11087, %v11086
        %v11182 = vpack.c.b16 %v11089, %v11088
        %v11183 = vpack.c.b16 %v11091, %v11090
        %v11184 = vpack.c.b16 %v11093, %v11092
        %v11185 = vpack.c.b16 %v11095, %v11094
        %v11186 = vpack.c.b16 %v11097, %v11096
        %v11187 = vpack.c.b16 %v11099, %v11098
        %v11188 = vpack.c.b16 %v11101, %v11100
        %v11189 = vpack.c.b16 %v11103, %v11102
        %v11190 = vpack.c.b16 %v11105, %v11104
        %v11191 = vpack.c.b16 %v11107, %v11106
        %v11192 = vpack.c.b16 %v11109, %v11108
        %v11193 = vpack.c.b16 %v11111, %v11110
        %v11194 = vpack.c.b16 %v11113, %v11112
        %v11195 = vpack.c.b16 %v11115, %v11114
        %v11196 = vpack.c.b16 %v11117, %v11116
        %v11197 = vpack.c.b16 %v11119, %v11118
        %v11198 = vpack.c.b16 %v11121, %v11120
        %v11199 = vpack.c.b16 %v11123, %v11122
        %v11200 = vpack.c.b16 %v11125, %v11124
        %v11201 = vpack.c.b16 %v11127, %v11126
        %v11202 = vpack.c.b16 %v11129, %v11128
        %v11203 = vpack.c.b16 %v11131, %v11130
        %11276 = vmatprep.subr.bf16.mxu0 0
        %11277 = vmatpush1.bf16.msra.mxu0 %v11139
        %11278 = vmatprep.subr.bf16.mxu0 0
        %11279 = vmatpush1.bf16.msra.mxu0 %v11138
        %11280 = vmatprep.subr.bf16.mxu0 0
        %11281 = vmatpush1.bf16.msra.mxu0 %v11137
        %11282 = vmatprep.subr.bf16.mxu0 0
        %11283 = vmatpush1.bf16.msra.mxu0 %v11136
        %11284 = vmatprep.subr.bf16.mxu0 0
        %11285 = vmatpush1.bf16.msra.mxu0 %v11135
        %11286 = vmatprep.subr.bf16.mxu0 0
        %11287 = vmatpush1.bf16.msra.mxu0 %v11134
        %11288 = vmatprep.subr.bf16.mxu0 0
        %11289 = vmatpush1.bf16.msra.mxu0 %v11133
        %11290 = vmatprep.subr.bf16.mxu0 0
        %11291 = vmatpush1.bf16.msra.mxu0 %v11132
        %11292 = vmatprep.subr.bf16.mxu0 0
        %11293 = vmatpush2.bf16.msra.mxu0 %v11147
        %11294 = vmatprep.subr.bf16.mxu0 0
        %11295 = vmatpush2.bf16.msra.mxu0 %v11146
        %11296 = vmatprep.subr.bf16.mxu0 0
        %11297 = vmatpush2.bf16.msra.mxu0 %v11145
        %11298 = vmatprep.subr.bf16.mxu0 0
        %11299 = vmatpush2.bf16.msra.mxu0 %v11144
        %11300 = vmatprep.subr.bf16.mxu0 0
        %11301 = vmatpush2.bf16.msra.mxu0 %v11143
        %11302 = vmatprep.subr.bf16.mxu0 0
        %11303 = vmatpush2.bf16.msra.mxu0 %v11142
        %11304 = vmatprep.subr.bf16.mxu0 0
        %11305 = vmatpush2.bf16.msra.mxu0 %v11141
        %11306 = vmatprep.subr.bf16.mxu0 0
        %11307 = vmatpush2.bf16.msra.mxu0 %v11140
        %11308 = vmatprep.mubr.bf16.mxu0 %v10557
        %11309 = vmatmul.mubr.bf16.gmra.mxu0 %v10556
        %v11310 = vpop.f32.mrf.mxu0
        %v11311 = vadd.f32 %v10106, %v11310
        %v11312 = vpop.f32.mrf.mxu0
        %v11313 = vpop.f32.mrf.mxu0
        %v11314 = vadd.f32 %v10106, %v11313
        %v11315 = vpop.f32.mrf.mxu0
        %11316 = vmatprep.mubr.bf16.mxu0 %v10566
        %11317 = vmatmul.mubr.bf16.gmra.mxu0 %v10565
        %v11318 = vpop.f32.mrf.mxu0
        %v11319 = vadd.f32 %v10106, %v11318
        %v11320 = vpop.f32.mrf.mxu0
        %v11321 = vpop.f32.mrf.mxu0
        %v11322 = vadd.f32 %v10106, %v11321
        %v11323 = vpop.f32.mrf.mxu0
        %11324 = vmatprep.mubr.bf16.mxu0 %v10575
        %11325 = vmatmul.mubr.bf16.gmra.mxu0 %v10574
        %v11326 = vpop.f32.mrf.mxu0
        %v11327 = vadd.f32 %v10106, %v11326
        %v11328 = vpop.f32.mrf.mxu0
        %v11329 = vpop.f32.mrf.mxu0
        %v11330 = vadd.f32 %v10106, %v11329
        %v11331 = vpop.f32.mrf.mxu0
        %11332 = vmatprep.mubr.bf16.mxu0 %v10584
        %11333 = vmatmul.mubr.bf16.gmra.mxu0 %v10583
        %v11334 = vpop.f32.mrf.mxu0
        %v11335 = vadd.f32 %v10106, %v11334
        %v11336 = vpop.f32.mrf.mxu0
        %v11337 = vpop.f32.mrf.mxu0
        %v11338 = vadd.f32 %v10106, %v11337
        %v11339 = vpop.f32.mrf.mxu0
        %11340 = vmatprep.mubr.bf16.mxu0 %v10593
        %11341 = vmatmul.mubr.bf16.gmra.mxu0 %v10592
        %v11342 = vpop.f32.mrf.mxu0
        %v11343 = vadd.f32 %v10106, %v11342
        %v11344 = vpop.f32.mrf.mxu0
        %v11345 = vpop.f32.mrf.mxu0
        %v11346 = vadd.f32 %v10106, %v11345
        %v11347 = vpop.f32.mrf.mxu0
        %11348 = vmatprep.mubr.bf16.mxu0 %v10602
        %11349 = vmatmul.mubr.bf16.gmra.mxu0 %v10601
        %v11350 = vpop.f32.mrf.mxu0
        %v11351 = vadd.f32 %v10106, %v11350
        %v11352 = vpop.f32.mrf.mxu0
        %v11353 = vpop.f32.mrf.mxu0
        %v11354 = vadd.f32 %v10106, %v11353
        %v11355 = vpop.f32.mrf.mxu0
        %11356 = vmatprep.mubr.bf16.mxu0 %v10611
        %11357 = vmatmul.mubr.bf16.gmra.mxu0 %v10610
        %v11358 = vpop.f32.mrf.mxu0
        %v11359 = vadd.f32 %v10106, %v11358
        %v11360 = vpop.f32.mrf.mxu0
        %v11361 = vpop.f32.mrf.mxu0
        %v11362 = vadd.f32 %v10106, %v11361
        %v11363 = vpop.f32.mrf.mxu0
        %11364 = vmatprep.mubr.bf16.mxu0 %v10620
        %11365 = vmatmul.mubr.bf16.gmra.mxu0 %v10619
        %v11366 = vpop.f32.mrf.mxu0
        %v11367 = vadd.f32 %v10106, %v11366
        %v11368 = vpop.f32.mrf.mxu0
        %v11369 = vpop.f32.mrf.mxu0
        %v11370 = vadd.f32 %v10106, %v11369
        %v11371 = vpop.f32.mrf.mxu0
        %11372 = vmatprep.mubr.bf16.mxu0 %v10629
        %11373 = vmatmul.mubr.bf16.gmra.mxu0 %v10628
        %v11374 = vpop.f32.mrf.mxu0
        %v11375 = vadd.f32 %v10106, %v11374
        %v11376 = vpop.f32.mrf.mxu0
        %v11377 = vpop.f32.mrf.mxu0
        %v11378 = vadd.f32 %v10106, %v11377
        %v11379 = vpop.f32.mrf.mxu0
        %11380 = vmatprep.mubr.bf16.mxu0 %v10638
        %11381 = vmatmul.mubr.bf16.gmra.mxu0 %v10637
        %v11382 = vpop.f32.mrf.mxu0
        %v11383 = vadd.f32 %v10106, %v11382
        %v11384 = vpop.f32.mrf.mxu0
        %v11385 = vpop.f32.mrf.mxu0
        %v11386 = vadd.f32 %v10106, %v11385
        %v11387 = vpop.f32.mrf.mxu0
        %11388 = vmatprep.mubr.bf16.mxu0 %v10647
        %11389 = vmatmul.mubr.bf16.gmra.mxu0 %v10646
        %v11390 = vpop.f32.mrf.mxu0
        %v11391 = vadd.f32 %v10106, %v11390
        %v11392 = vpop.f32.mrf.mxu0
        %v11393 = vpop.f32.mrf.mxu0
        %v11394 = vadd.f32 %v10106, %v11393
        %v11395 = vpop.f32.mrf.mxu0
        %11396 = vmatprep.mubr.bf16.mxu0 %v10656
        %11397 = vmatmul.mubr.bf16.gmra.mxu0 %v10655
        %v11398 = vpop.f32.mrf.mxu0
        %v11399 = vadd.f32 %v10106, %v11398
        %v11400 = vpop.f32.mrf.mxu0
        %v11401 = vpop.f32.mrf.mxu0
        %v11402 = vadd.f32 %v10106, %v11401
        %v11403 = vpop.f32.mrf.mxu0
        %11404 = vmatprep.mubr.bf16.mxu0 %v10665
        %11405 = vmatmul.mubr.bf16.gmra.mxu0 %v10664
        %v11406 = vpop.f32.mrf.mxu0
        %v11407 = vadd.f32 %v10106, %v11406
        %v11408 = vpop.f32.mrf.mxu0
        %v11409 = vpop.f32.mrf.mxu0
        %v11410 = vadd.f32 %v10106, %v11409
        %v11411 = vpop.f32.mrf.mxu0
        %11412 = vmatprep.mubr.bf16.mxu0 %v10674
        %11413 = vmatmul.mubr.bf16.gmra.mxu0 %v10673
        %v11414 = vpop.f32.mrf.mxu0
        %v11415 = vadd.f32 %v10106, %v11414
        %v11416 = vpop.f32.mrf.mxu0
        %v11417 = vpop.f32.mrf.mxu0
        %v11418 = vadd.f32 %v10106, %v11417
        %v11419 = vpop.f32.mrf.mxu0
        %11420 = vmatprep.mubr.bf16.mxu0 %v10683
        %11421 = vmatmul.mubr.bf16.gmra.mxu0 %v10682
        %v11422 = vpop.f32.mrf.mxu0
        %v11423 = vadd.f32 %v10106, %v11422
        %v11424 = vpop.f32.mrf.mxu0
        %v11425 = vpop.f32.mrf.mxu0
        %v11426 = vadd.f32 %v10106, %v11425
        %v11427 = vpop.f32.mrf.mxu0
        %11428 = vmatprep.mubr.bf16.mxu0 %v10692
        %11429 = vmatmul.mubr.bf16.gmra.mxu0 %v10691
        %v11430 = vpop.f32.mrf.mxu0
        %v11431 = vadd.f32 %v10106, %v11430
        %v11432 = vpop.f32.mrf.mxu0
        %v11433 = vpop.f32.mrf.mxu0
        %v11434 = vadd.f32 %v10106, %v11433
        %v11435 = vpop.f32.mrf.mxu0
        %11436 = vdwg.mxu0
        %11437 = vmatprep.subr.bf16.mxu0 0
        %11438 = vmatpush1.bf16.msra.mxu0 %v11155
        %11439 = vmatprep.subr.bf16.mxu0 0
        %11440 = vmatpush1.bf16.msra.mxu0 %v11154
        %11441 = vmatprep.subr.bf16.mxu0 0
        %11442 = vmatpush1.bf16.msra.mxu0 %v11153
        %11443 = vmatprep.subr.bf16.mxu0 0
        %11444 = vmatpush1.bf16.msra.mxu0 %v11152
        %11445 = vmatprep.subr.bf16.mxu0 0
        %11446 = vmatpush1.bf16.msra.mxu0 %v11151
        %11447 = vmatprep.subr.bf16.mxu0 0
        %11448 = vmatpush1.bf16.msra.mxu0 %v11150
        %11449 = vmatprep.subr.bf16.mxu0 0
        %11450 = vmatpush1.bf16.msra.mxu0 %v11149
        %11451 = vmatprep.subr.bf16.mxu0 0
        %11452 = vmatpush1.bf16.msra.mxu0 %v11148
        %11453 = vmatprep.subr.bf16.mxu0 0
        %11454 = vmatpush2.bf16.msra.mxu0 %v11163
        %11455 = vmatprep.subr.bf16.mxu0 0
        %11456 = vmatpush2.bf16.msra.mxu0 %v11162
        %11457 = vmatprep.subr.bf16.mxu0 0
        %11458 = vmatpush2.bf16.msra.mxu0 %v11161
        %11459 = vmatprep.subr.bf16.mxu0 0
        %11460 = vmatpush2.bf16.msra.mxu0 %v11160
        %11461 = vmatprep.subr.bf16.mxu0 0
        %11462 = vmatpush2.bf16.msra.mxu0 %v11159
        %11463 = vmatprep.subr.bf16.mxu0 0
        %11464 = vmatpush2.bf16.msra.mxu0 %v11158
        %11465 = vmatprep.subr.bf16.mxu0 0
        %11466 = vmatpush2.bf16.msra.mxu0 %v11157
        %11467 = vmatprep.subr.bf16.mxu0 0
        %11468 = vmatpush2.bf16.msra.mxu0 %v11156
        %11469 = vmatprep.mubr.bf16.mxu0 %v10559
        %11470 = vmatmul.mubr.bf16.gmra.mxu0 %v10558
        %v11471 = vpop.f32.mrf.mxu0
        %v11472 = vadd.f32 %v11311, %v11471
        %v11473 = vpop.f32.mrf.mxu0
        %v11474 = vpop.f32.mrf.mxu0
        %v11475 = vadd.f32 %v11314, %v11474
        %v11476 = vpop.f32.mrf.mxu0
        %11477 = vmatprep.mubr.bf16.mxu0 %v10568
        %11478 = vmatmul.mubr.bf16.gmra.mxu0 %v10567
        %v11479 = vpop.f32.mrf.mxu0
        %v11480 = vadd.f32 %v11319, %v11479
        %v11481 = vpop.f32.mrf.mxu0
        %v11482 = vpop.f32.mrf.mxu0
        %v11483 = vadd.f32 %v11322, %v11482
        %v11484 = vpop.f32.mrf.mxu0
        %11485 = vmatprep.mubr.bf16.mxu0 %v10577
        %11486 = vmatmul.mubr.bf16.gmra.mxu0 %v10576
        %v11487 = vpop.f32.mrf.mxu0
        %v11488 = vadd.f32 %v11327, %v11487
        %v11489 = vpop.f32.mrf.mxu0
        %v11490 = vpop.f32.mrf.mxu0
        %v11491 = vadd.f32 %v11330, %v11490
        %v11492 = vpop.f32.mrf.mxu0
        %11493 = vmatprep.mubr.bf16.mxu0 %v10586
        %11494 = vmatmul.mubr.bf16.gmra.mxu0 %v10585
        %v11495 = vpop.f32.mrf.mxu0
        %v11496 = vadd.f32 %v11335, %v11495
        %v11497 = vpop.f32.mrf.mxu0
        %v11498 = vpop.f32.mrf.mxu0
        %v11499 = vadd.f32 %v11338, %v11498
        %v11500 = vpop.f32.mrf.mxu0
        %11501 = vmatprep.mubr.bf16.mxu0 %v10595
        %11502 = vmatmul.mubr.bf16.gmra.mxu0 %v10594
        %v11503 = vpop.f32.mrf.mxu0
        %v11504 = vadd.f32 %v11343, %v11503
        %v11505 = vpop.f32.mrf.mxu0
        %v11506 = vpop.f32.mrf.mxu0
        %v11507 = vadd.f32 %v11346, %v11506
        %v11508 = vpop.f32.mrf.mxu0
        %11509 = vmatprep.mubr.bf16.mxu0 %v10604
        %11510 = vmatmul.mubr.bf16.gmra.mxu0 %v10603
        %v11511 = vpop.f32.mrf.mxu0
        %v11512 = vadd.f32 %v11351, %v11511
        %v11513 = vpop.f32.mrf.mxu0
        %v11514 = vpop.f32.mrf.mxu0
        %v11515 = vadd.f32 %v11354, %v11514
        %v11516 = vpop.f32.mrf.mxu0
        %11517 = vmatprep.mubr.bf16.mxu0 %v10613
        %11518 = vmatmul.mubr.bf16.gmra.mxu0 %v10612
        %v11519 = vpop.f32.mrf.mxu0
        %v11520 = vadd.f32 %v11359, %v11519
        %v11521 = vpop.f32.mrf.mxu0
        %v11522 = vpop.f32.mrf.mxu0
        %v11523 = vadd.f32 %v11362, %v11522
        %v11524 = vpop.f32.mrf.mxu0
        %11525 = vmatprep.mubr.bf16.mxu0 %v10622
        %11526 = vmatmul.mubr.bf16.gmra.mxu0 %v10621
        %v11527 = vpop.f32.mrf.mxu0
        %v11528 = vadd.f32 %v11367, %v11527
        %v11529 = vpop.f32.mrf.mxu0
        %v11530 = vpop.f32.mrf.mxu0
        %v11531 = vadd.f32 %v11370, %v11530
        %v11532 = vpop.f32.mrf.mxu0
        %11533 = vmatprep.mubr.bf16.mxu0 %v10631
        %11534 = vmatmul.mubr.bf16.gmra.mxu0 %v10630
        %v11535 = vpop.f32.mrf.mxu0
        %v11536 = vadd.f32 %v11375, %v11535
        %v11537 = vpop.f32.mrf.mxu0
        %v11538 = vpop.f32.mrf.mxu0
        %v11539 = vadd.f32 %v11378, %v11538
        %v11540 = vpop.f32.mrf.mxu0
        %11541 = vmatprep.mubr.bf16.mxu0 %v10640
        %11542 = vmatmul.mubr.bf16.gmra.mxu0 %v10639
        %v11543 = vpop.f32.mrf.mxu0
        %v11544 = vadd.f32 %v11383, %v11543
        %v11545 = vpop.f32.mrf.mxu0
        %v11546 = vpop.f32.mrf.mxu0
        %v11547 = vadd.f32 %v11386, %v11546
        %v11548 = vpop.f32.mrf.mxu0
        %11549 = vmatprep.mubr.bf16.mxu0 %v10649
        %11550 = vmatmul.mubr.bf16.gmra.mxu0 %v10648
        %v11551 = vpop.f32.mrf.mxu0
        %v11552 = vadd.f32 %v11391, %v11551
        %v11553 = vpop.f32.mrf.mxu0
        %v11554 = vpop.f32.mrf.mxu0
        %v11555 = vadd.f32 %v11394, %v11554
        %v11556 = vpop.f32.mrf.mxu0
        %11557 = vmatprep.mubr.bf16.mxu0 %v10658
        %11558 = vmatmul.mubr.bf16.gmra.mxu0 %v10657
        %v11559 = vpop.f32.mrf.mxu0
        %v11560 = vadd.f32 %v11399, %v11559
        %v11561 = vpop.f32.mrf.mxu0
        %v11562 = vpop.f32.mrf.mxu0
        %v11563 = vadd.f32 %v11402, %v11562
        %v11564 = vpop.f32.mrf.mxu0
        %11565 = vmatprep.mubr.bf16.mxu0 %v10667
        %11566 = vmatmul.mubr.bf16.gmra.mxu0 %v10666
        %v11567 = vpop.f32.mrf.mxu0
        %v11568 = vadd.f32 %v11407, %v11567
        %v11569 = vpop.f32.mrf.mxu0
        %v11570 = vpop.f32.mrf.mxu0
        %v11571 = vadd.f32 %v11410, %v11570
        %v11572 = vpop.f32.mrf.mxu0
        %11573 = vmatprep.mubr.bf16.mxu0 %v10676
        %11574 = vmatmul.mubr.bf16.gmra.mxu0 %v10675
        %v11575 = vpop.f32.mrf.mxu0
        %v11576 = vadd.f32 %v11415, %v11575
        %v11577 = vpop.f32.mrf.mxu0
        %v11578 = vpop.f32.mrf.mxu0
        %v11579 = vadd.f32 %v11418, %v11578
        %v11580 = vpop.f32.mrf.mxu0
        %11581 = vmatprep.mubr.bf16.mxu0 %v10685
        %11582 = vmatmul.mubr.bf16.gmra.mxu0 %v10684
        %v11583 = vpop.f32.mrf.mxu0
        %v11584 = vadd.f32 %v11423, %v11583
        %v11585 = vpop.f32.mrf.mxu0
        %v11586 = vpop.f32.mrf.mxu0
        %v11587 = vadd.f32 %v11426, %v11586
        %v11588 = vpop.f32.mrf.mxu0
        %11589 = vmatprep.mubr.bf16.mxu0 %v10694
        %11590 = vmatmul.mubr.bf16.gmra.mxu0 %v10693
        %v11591 = vpop.f32.mrf.mxu0
        %v11592 = vadd.f32 %v11431, %v11591
        %v11593 = vpop.f32.mrf.mxu0
        %v11594 = vpop.f32.mrf.mxu0
        %v11595 = vadd.f32 %v11434, %v11594
        %v11596 = vpop.f32.mrf.mxu0
        %11597 = vdwg.mxu0
        %11598 = vmatprep.subr.bf16.mxu0 0
        %11599 = vmatpush1.bf16.msra.mxu0 %v11171
        %11600 = vmatprep.subr.bf16.mxu0 0
        %11601 = vmatpush1.bf16.msra.mxu0 %v11170
        %11602 = vmatprep.subr.bf16.mxu0 0
        %11603 = vmatpush1.bf16.msra.mxu0 %v11169
        %11604 = vmatprep.subr.bf16.mxu0 0
        %11605 = vmatpush1.bf16.msra.mxu0 %v11168
        %11606 = vmatprep.subr.bf16.mxu0 0
        %11607 = vmatpush1.bf16.msra.mxu0 %v11167
        %11608 = vmatprep.subr.bf16.mxu0 0
        %11609 = vmatpush1.bf16.msra.mxu0 %v11166
        %11610 = vmatprep.subr.bf16.mxu0 0
        %11611 = vmatpush1.bf16.msra.mxu0 %v11165
        %11612 = vmatprep.subr.bf16.mxu0 0
        %11613 = vmatpush1.bf16.msra.mxu0 %v11164
        %11614 = vmatprep.subr.bf16.mxu0 0
        %11615 = vmatpush2.bf16.msra.mxu0 %v11179
        %11616 = vmatprep.subr.bf16.mxu0 0
        %11617 = vmatpush2.bf16.msra.mxu0 %v11178
        %11618 = vmatprep.subr.bf16.mxu0 0
        %11619 = vmatpush2.bf16.msra.mxu0 %v11177
        %11620 = vmatprep.subr.bf16.mxu0 0
        %11621 = vmatpush2.bf16.msra.mxu0 %v11176
        %11622 = vmatprep.subr.bf16.mxu0 0
        %11623 = vmatpush2.bf16.msra.mxu0 %v11175
        %11624 = vmatprep.subr.bf16.mxu0 0
        %11625 = vmatpush2.bf16.msra.mxu0 %v11174
        %11626 = vmatprep.subr.bf16.mxu0 0
        %11627 = vmatpush2.bf16.msra.mxu0 %v11173
        %11628 = vmatprep.subr.bf16.mxu0 0
        %11629 = vmatpush2.bf16.msra.mxu0 %v11172
        %11630 = vmatprep.mubr.bf16.mxu0 %v10561
        %11631 = vmatmul.mubr.bf16.gmra.mxu0 %v10560
        %v11632 = vpop.f32.mrf.mxu0
        %v11633 = vadd.f32 %v11472, %v11632
        %v11634 = vpop.f32.mrf.mxu0
        %v11635 = vpop.f32.mrf.mxu0
        %v11636 = vadd.f32 %v11475, %v11635
        %v11637 = vpop.f32.mrf.mxu0
        %11638 = vmatprep.mubr.bf16.mxu0 %v10570
        %11639 = vmatmul.mubr.bf16.gmra.mxu0 %v10569
        %v11640 = vpop.f32.mrf.mxu0
        %v11641 = vadd.f32 %v11480, %v11640
        %v11642 = vpop.f32.mrf.mxu0
        %v11643 = vpop.f32.mrf.mxu0
        %v11644 = vadd.f32 %v11483, %v11643
        %v11645 = vpop.f32.mrf.mxu0
        %11646 = vmatprep.mubr.bf16.mxu0 %v10579
        %11647 = vmatmul.mubr.bf16.gmra.mxu0 %v10578
        %v11648 = vpop.f32.mrf.mxu0
        %v11649 = vadd.f32 %v11488, %v11648
        %v11650 = vpop.f32.mrf.mxu0
        %v11651 = vpop.f32.mrf.mxu0
        %v11652 = vadd.f32 %v11491, %v11651
        %v11653 = vpop.f32.mrf.mxu0
        %11654 = vmatprep.mubr.bf16.mxu0 %v10588
        %11655 = vmatmul.mubr.bf16.gmra.mxu0 %v10587
        %v11656 = vpop.f32.mrf.mxu0
        %v11657 = vadd.f32 %v11496, %v11656
        %v11658 = vpop.f32.mrf.mxu0
        %v11659 = vpop.f32.mrf.mxu0
        %v11660 = vadd.f32 %v11499, %v11659
        %v11661 = vpop.f32.mrf.mxu0
        %11662 = vmatprep.mubr.bf16.mxu0 %v10597
        %11663 = vmatmul.mubr.bf16.gmra.mxu0 %v10596
        %v11664 = vpop.f32.mrf.mxu0
        %v11665 = vadd.f32 %v11504, %v11664
        %v11666 = vpop.f32.mrf.mxu0
        %v11667 = vpop.f32.mrf.mxu0
        %v11668 = vadd.f32 %v11507, %v11667
        %v11669 = vpop.f32.mrf.mxu0
        %11670 = vmatprep.mubr.bf16.mxu0 %v10606
        %11671 = vmatmul.mubr.bf16.gmra.mxu0 %v10605
        %v11672 = vpop.f32.mrf.mxu0
        %v11673 = vadd.f32 %v11512, %v11672
        %v11674 = vpop.f32.mrf.mxu0
        %v11675 = vpop.f32.mrf.mxu0
        %v11676 = vadd.f32 %v11515, %v11675
        %v11677 = vpop.f32.mrf.mxu0
        %11678 = vmatprep.mubr.bf16.mxu0 %v10615
        %11679 = vmatmul.mubr.bf16.gmra.mxu0 %v10614
        %v11680 = vpop.f32.mrf.mxu0
        %v11681 = vadd.f32 %v11520, %v11680
        %v11682 = vpop.f32.mrf.mxu0
        %v11683 = vpop.f32.mrf.mxu0
        %v11684 = vadd.f32 %v11523, %v11683
        %v11685 = vpop.f32.mrf.mxu0
        %11686 = vmatprep.mubr.bf16.mxu0 %v10624
        %11687 = vmatmul.mubr.bf16.gmra.mxu0 %v10623
        %v11688 = vpop.f32.mrf.mxu0
        %v11689 = vadd.f32 %v11528, %v11688
        %v11690 = vpop.f32.mrf.mxu0
        %v11691 = vpop.f32.mrf.mxu0
        %v11692 = vadd.f32 %v11531, %v11691
        %v11693 = vpop.f32.mrf.mxu0
        %11694 = vmatprep.mubr.bf16.mxu0 %v10633
        %11695 = vmatmul.mubr.bf16.gmra.mxu0 %v10632
        %v11696 = vpop.f32.mrf.mxu0
        %v11697 = vadd.f32 %v11536, %v11696
        %v11698 = vpop.f32.mrf.mxu0
        %v11699 = vpop.f32.mrf.mxu0
        %v11700 = vadd.f32 %v11539, %v11699
        %v11701 = vpop.f32.mrf.mxu0
        %11702 = vmatprep.mubr.bf16.mxu0 %v10642
        %11703 = vmatmul.mubr.bf16.gmra.mxu0 %v10641
        %v11704 = vpop.f32.mrf.mxu0
        %v11705 = vadd.f32 %v11544, %v11704
        %v11706 = vpop.f32.mrf.mxu0
        %v11707 = vpop.f32.mrf.mxu0
        %v11708 = vadd.f32 %v11547, %v11707
        %v11709 = vpop.f32.mrf.mxu0
        %11710 = vmatprep.mubr.bf16.mxu0 %v10651
        %11711 = vmatmul.mubr.bf16.gmra.mxu0 %v10650
        %v11712 = vpop.f32.mrf.mxu0
        %v11713 = vadd.f32 %v11552, %v11712
        %v11714 = vpop.f32.mrf.mxu0
        %v11715 = vpop.f32.mrf.mxu0
        %v11716 = vadd.f32 %v11555, %v11715
        %v11717 = vpop.f32.mrf.mxu0
        %11718 = vmatprep.mubr.bf16.mxu0 %v10660
        %11719 = vmatmul.mubr.bf16.gmra.mxu0 %v10659
        %v11720 = vpop.f32.mrf.mxu0
        %v11721 = vadd.f32 %v11560, %v11720
        %v11722 = vpop.f32.mrf.mxu0
        %v11723 = vpop.f32.mrf.mxu0
        %v11724 = vadd.f32 %v11563, %v11723
        %v11725 = vpop.f32.mrf.mxu0
        %11726 = vmatprep.mubr.bf16.mxu0 %v10669
        %11727 = vmatmul.mubr.bf16.gmra.mxu0 %v10668
        %v11728 = vpop.f32.mrf.mxu0
        %v11729 = vadd.f32 %v11568, %v11728
        %v11730 = vpop.f32.mrf.mxu0
        %v11731 = vpop.f32.mrf.mxu0
        %v11732 = vadd.f32 %v11571, %v11731
        %v11733 = vpop.f32.mrf.mxu0
        %11734 = vmatprep.mubr.bf16.mxu0 %v10678
        %11735 = vmatmul.mubr.bf16.gmra.mxu0 %v10677
        %v11736 = vpop.f32.mrf.mxu0
        %v11737 = vadd.f32 %v11576, %v11736
        %v11738 = vpop.f32.mrf.mxu0
        %v11739 = vpop.f32.mrf.mxu0
        %v11740 = vadd.f32 %v11579, %v11739
        %v11741 = vpop.f32.mrf.mxu0
        %11742 = vmatprep.mubr.bf16.mxu0 %v10687
        %11743 = vmatmul.mubr.bf16.gmra.mxu0 %v10686
        %v11744 = vpop.f32.mrf.mxu0
        %v11745 = vadd.f32 %v11584, %v11744
        %v11746 = vpop.f32.mrf.mxu0
        %v11747 = vpop.f32.mrf.mxu0
        %v11748 = vadd.f32 %v11587, %v11747
        %v11749 = vpop.f32.mrf.mxu0
        %11750 = vmatprep.mubr.bf16.mxu0 %v10696
        %11751 = vmatmul.mubr.bf16.gmra.mxu0 %v10695
        %v11752 = vpop.f32.mrf.mxu0
        %v11753 = vadd.f32 %v11592, %v11752
        %v11754 = vpop.f32.mrf.mxu0
        %v11755 = vpop.f32.mrf.mxu0
        %v11756 = vadd.f32 %v11595, %v11755
        %v11757 = vpop.f32.mrf.mxu0
        %11758 = vdwg.mxu0
        %11759 = vmatprep.subr.bf16.mxu0 0
        %11760 = vmatpush1.bf16.msra.mxu0 %v11187
        %11761 = vmatprep.subr.bf16.mxu0 0
        %11762 = vmatpush1.bf16.msra.mxu0 %v11186
        %11763 = vmatprep.subr.bf16.mxu0 0
        %11764 = vmatpush1.bf16.msra.mxu0 %v11185
        %11765 = vmatprep.subr.bf16.mxu0 0
        %11766 = vmatpush1.bf16.msra.mxu0 %v11184
        %11767 = vmatprep.subr.bf16.mxu0 0
        %11768 = vmatpush1.bf16.msra.mxu0 %v11183
        %11769 = vmatprep.subr.bf16.mxu0 0
        %11770 = vmatpush1.bf16.msra.mxu0 %v11182
        %11771 = vmatprep.subr.bf16.mxu0 0
        %11772 = vmatpush1.bf16.msra.mxu0 %v11181
        %11773 = vmatprep.subr.bf16.mxu0 0
        %11774 = vmatpush1.bf16.msra.mxu0 %v11180
        %11775 = vmatprep.subr.bf16.mxu0 0
        %11776 = vmatpush2.bf16.msra.mxu0 %v11195
        %11777 = vmatprep.subr.bf16.mxu0 0
        %11778 = vmatpush2.bf16.msra.mxu0 %v11194
        %11779 = vmatprep.subr.bf16.mxu0 0
        %11780 = vmatpush2.bf16.msra.mxu0 %v11193
        %11781 = vmatprep.subr.bf16.mxu0 0
        %11782 = vmatpush2.bf16.msra.mxu0 %v11192
        %11783 = vmatprep.subr.bf16.mxu0 0
        %11784 = vmatpush2.bf16.msra.mxu0 %v11191
        %11785 = vmatprep.subr.bf16.mxu0 0
        %11786 = vmatpush2.bf16.msra.mxu0 %v11190
        %11787 = vmatprep.subr.bf16.mxu0 0
        %11788 = vmatpush2.bf16.msra.mxu0 %v11189
        %11789 = vmatprep.subr.bf16.mxu0 0
        %11790 = vmatpush2.bf16.msra.mxu0 %v11188
        %11791 = vmatprep.mubr.bf16.mxu0 %v10563
        %11792 = vmatmul.mubr.bf16.gmra.mxu0 %v10562
        %v11793 = vpop.f32.mrf.mxu0
        %v11794 = vadd.f32 %v11633, %v11793
        %v11795 = vpop.f32.mrf.mxu0
        %v11796 = vpop.f32.mrf.mxu0
        %v11797 = vadd.f32 %v11636, %v11796
        %v11798 = vpop.f32.mrf.mxu0
        %11799 = vmatprep.mubr.bf16.mxu0 %v10572
        %11800 = vmatmul.mubr.bf16.gmra.mxu0 %v10571
        %v11801 = vpop.f32.mrf.mxu0
        %v11802 = vadd.f32 %v11641, %v11801
        %v11803 = vpop.f32.mrf.mxu0
        %v11804 = vpop.f32.mrf.mxu0
        %v11805 = vadd.f32 %v11644, %v11804
        %v11806 = vpop.f32.mrf.mxu0
        %11807 = vmatprep.mubr.bf16.mxu0 %v10581
        %11808 = vmatmul.mubr.bf16.gmra.mxu0 %v10580
        %v11809 = vpop.f32.mrf.mxu0
        %v11810 = vadd.f32 %v11649, %v11809
        %v11811 = vpop.f32.mrf.mxu0
        %v11812 = vpop.f32.mrf.mxu0
        %v11813 = vadd.f32 %v11652, %v11812
        %v11814 = vpop.f32.mrf.mxu0
        %11815 = vmatprep.mubr.bf16.mxu0 %v10590
        %11816 = vmatmul.mubr.bf16.gmra.mxu0 %v10589
        %v11817 = vpop.f32.mrf.mxu0
        %v11818 = vadd.f32 %v11657, %v11817
        %v11819 = vpop.f32.mrf.mxu0
        %v11820 = vpop.f32.mrf.mxu0
        %v11821 = vadd.f32 %v11660, %v11820
        %v11822 = vpop.f32.mrf.mxu0
        %11823 = vmatprep.mubr.bf16.mxu0 %v10599
        %11824 = vmatmul.mubr.bf16.gmra.mxu0 %v10598
        %v11825 = vpop.f32.mrf.mxu0
        %v11826 = vadd.f32 %v11665, %v11825
        %v11827 = vpop.f32.mrf.mxu0
        %v11828 = vpop.f32.mrf.mxu0
        %v11829 = vadd.f32 %v11668, %v11828
        %v11830 = vpop.f32.mrf.mxu0
        %11831 = vmatprep.mubr.bf16.mxu0 %v10608
        %11832 = vmatmul.mubr.bf16.gmra.mxu0 %v10607
        %v11833 = vpop.f32.mrf.mxu0
        %v11834 = vadd.f32 %v11673, %v11833
        %v11835 = vpop.f32.mrf.mxu0
        %v11836 = vpop.f32.mrf.mxu0
        %v11837 = vadd.f32 %v11676, %v11836
        %v11838 = vpop.f32.mrf.mxu0
        %11839 = vmatprep.mubr.bf16.mxu0 %v10617
        %11840 = vmatmul.mubr.bf16.gmra.mxu0 %v10616
        %v11841 = vpop.f32.mrf.mxu0
        %v11842 = vadd.f32 %v11681, %v11841
        %v11843 = vpop.f32.mrf.mxu0
        %v11844 = vpop.f32.mrf.mxu0
        %v11845 = vadd.f32 %v11684, %v11844
        %v11846 = vpop.f32.mrf.mxu0
        %11847 = vmatprep.mubr.bf16.mxu0 %v10626
        %11848 = vmatmul.mubr.bf16.gmra.mxu0 %v10625
        %v11849 = vpop.f32.mrf.mxu0
        %v11850 = vadd.f32 %v11689, %v11849
        %v11851 = vpop.f32.mrf.mxu0
        %v11852 = vpop.f32.mrf.mxu0
        %v11853 = vadd.f32 %v11692, %v11852
        %v11854 = vpop.f32.mrf.mxu0
        %11855 = vmatprep.mubr.bf16.mxu0 %v10635
        %11856 = vmatmul.mubr.bf16.gmra.mxu0 %v10634
        %v11857 = vpop.f32.mrf.mxu0
        %v11858 = vadd.f32 %v11697, %v11857
        %v11859 = vpop.f32.mrf.mxu0
        %v11860 = vpop.f32.mrf.mxu0
        %v11861 = vadd.f32 %v11700, %v11860
        %v11862 = vpop.f32.mrf.mxu0
        %11863 = vmatprep.mubr.bf16.mxu0 %v10644
        %11864 = vmatmul.mubr.bf16.gmra.mxu0 %v10643
        %v11865 = vpop.f32.mrf.mxu0
        %v11866 = vadd.f32 %v11705, %v11865
        %v11867 = vpop.f32.mrf.mxu0
        %v11868 = vpop.f32.mrf.mxu0
        %v11869 = vadd.f32 %v11708, %v11868
        %v11870 = vpop.f32.mrf.mxu0
        %11871 = vmatprep.mubr.bf16.mxu0 %v10653
        %11872 = vmatmul.mubr.bf16.gmra.mxu0 %v10652
        %v11873 = vpop.f32.mrf.mxu0
        %v11874 = vadd.f32 %v11713, %v11873
        %v11875 = vpop.f32.mrf.mxu0
        %v11876 = vpop.f32.mrf.mxu0
        %v11877 = vadd.f32 %v11716, %v11876
        %v11878 = vpop.f32.mrf.mxu0
        %11879 = vmatprep.mubr.bf16.mxu0 %v10662
        %11880 = vmatmul.mubr.bf16.gmra.mxu0 %v10661
        %v11881 = vpop.f32.mrf.mxu0
        %v11882 = vadd.f32 %v11721, %v11881
        %v11883 = vpop.f32.mrf.mxu0
        %v11884 = vpop.f32.mrf.mxu0
        %v11885 = vadd.f32 %v11724, %v11884
        %v11886 = vpop.f32.mrf.mxu0
        %11887 = vmatprep.mubr.bf16.mxu0 %v10671
        %11888 = vmatmul.mubr.bf16.gmra.mxu0 %v10670
        %v11889 = vpop.f32.mrf.mxu0
        %v11890 = vadd.f32 %v11729, %v11889
        %v11891 = vpop.f32.mrf.mxu0
        %v11892 = vpop.f32.mrf.mxu0
        %v11893 = vadd.f32 %v11732, %v11892
        %v11894 = vpop.f32.mrf.mxu0
        %11895 = vmatprep.mubr.bf16.mxu0 %v10680
        %11896 = vmatmul.mubr.bf16.gmra.mxu0 %v10679
        %v11897 = vpop.f32.mrf.mxu0
        %v11898 = vadd.f32 %v11737, %v11897
        %v11899 = vpop.f32.mrf.mxu0
        %v11900 = vpop.f32.mrf.mxu0
        %v11901 = vadd.f32 %v11740, %v11900
        %v11902 = vpop.f32.mrf.mxu0
        %11903 = vmatprep.mubr.bf16.mxu0 %v10689
        %11904 = vmatmul.mubr.bf16.gmra.mxu0 %v10688
        %v11905 = vpop.f32.mrf.mxu0
        %v11906 = vadd.f32 %v11745, %v11905
        %v11907 = vpop.f32.mrf.mxu0
        %v11908 = vpop.f32.mrf.mxu0
        %v11909 = vadd.f32 %v11748, %v11908
        %v11910 = vpop.f32.mrf.mxu0
        %11911 = vmatprep.mubr.bf16.mxu0 %v10698
        %11912 = vmatmul.mubr.bf16.gmra.mxu0 %v10697
        %v11913 = vpop.f32.mrf.mxu0
        %v11914 = vadd.f32 %v11753, %v11913
        %v11915 = vpop.f32.mrf.mxu0
        %v11916 = vpop.f32.mrf.mxu0
        %v11917 = vadd.f32 %v11756, %v11916
        %v11918 = vpop.f32.mrf.mxu0
        %11919 = vdwg.mxu0
        %11920 = vmatprep.subr.bf16.mxu0 0
        %11921 = vmatpush1.bf16.msra.mxu0 %v11203
        %11922 = vmatprep.subr.bf16.mxu0 0
        %11923 = vmatpush1.bf16.msra.mxu0 %v11202
        %11924 = vmatprep.subr.bf16.mxu0 0
        %11925 = vmatpush1.bf16.msra.mxu0 %v11201
        %11926 = vmatprep.subr.bf16.mxu0 0
        %11927 = vmatpush1.bf16.msra.mxu0 %v11200
        %11928 = vmatprep.subr.bf16.mxu0 0
        %11929 = vmatpush1.bf16.msra.mxu0 %v11199
        %11930 = vmatprep.subr.bf16.mxu0 0
        %11931 = vmatpush1.bf16.msra.mxu0 %v11198
        %11932 = vmatprep.subr.bf16.mxu0 0
        %11933 = vmatpush1.bf16.msra.mxu0 %v11197
        %11934 = vmatprep.subr.bf16.mxu0 0
        %11935 = vmatpush1.bf16.msra.mxu0 %v11196
        %11936 = vmatprep.subr.bf16.mxu0 0
        %11937 = vmatpush2.bf16.msra.mxu0 0
        %11938 = vmatprep.subr.bf16.mxu0 0
        %11939 = vmatpush2.bf16.msra.mxu0 0
        %11940 = vmatprep.subr.bf16.mxu0 0
        %11941 = vmatpush2.bf16.msra.mxu0 0
        %11942 = vmatprep.subr.bf16.mxu0 0
        %11943 = vmatpush2.bf16.msra.mxu0 0
        %11944 = vmatprep.subr.bf16.mxu0 0
        %11945 = vmatpush2.bf16.msra.mxu0 0
        %11946 = vmatprep.subr.bf16.mxu0 0
        %11947 = vmatpush2.bf16.msra.mxu0 0
        %11948 = vmatprep.subr.bf16.mxu0 0
        %11949 = vmatpush2.bf16.msra.mxu0 0
        %11950 = vmatprep.subr.bf16.mxu0 0
        %11951 = vmatpush2.bf16.msra.mxu0 0
        %11952 = vmatprep.mubr.bf16.mxu0 0
        %11953 = vmatmul.mubr.bf16.gmra.mxu0 %v10564
        %v11954 = vpop.f32.mrf.mxu0
        %v11955 = vadd.f32 %v11794, %v11954
        %v11956 = vpop.f32.mrf.mxu0
        %v11957 = vpop.f32.mrf.mxu0
        %v11958 = vadd.f32 %v11797, %v11957
        %v11959 = vpop.f32.mrf.mxu0
        %11960 = vmatprep.mubr.bf16.mxu0 0
        %11961 = vmatmul.mubr.bf16.gmra.mxu0 %v10573
        %v11962 = vpop.f32.mrf.mxu0
        %v11963 = vadd.f32 %v11802, %v11962
        %v11964 = vpop.f32.mrf.mxu0
        %v11965 = vpop.f32.mrf.mxu0
        %v11966 = vadd.f32 %v11805, %v11965
        %v11967 = vpop.f32.mrf.mxu0
        %11968 = vmatprep.mubr.bf16.mxu0 0
        %11969 = vmatmul.mubr.bf16.gmra.mxu0 %v10582
        %v11970 = vpop.f32.mrf.mxu0
        %v11971 = vadd.f32 %v11810, %v11970
        %v11972 = vpop.f32.mrf.mxu0
        %v11973 = vpop.f32.mrf.mxu0
        %v11974 = vadd.f32 %v11813, %v11973
        %v11975 = vpop.f32.mrf.mxu0
        %11976 = vmatprep.mubr.bf16.mxu0 0
        %11977 = vmatmul.mubr.bf16.gmra.mxu0 %v10591
        %v11978 = vpop.f32.mrf.mxu0
        %v11979 = vadd.f32 %v11818, %v11978
        %v11980 = vpop.f32.mrf.mxu0
        %v11981 = vpop.f32.mrf.mxu0
        %v11982 = vadd.f32 %v11821, %v11981
        %v11983 = vpop.f32.mrf.mxu0
        %11984 = vmatprep.mubr.bf16.mxu0 0
        %11985 = vmatmul.mubr.bf16.gmra.mxu0 %v10600
        %v11986 = vpop.f32.mrf.mxu0
        %v11987 = vadd.f32 %v11826, %v11986
        %v11988 = vpop.f32.mrf.mxu0
        %v11989 = vpop.f32.mrf.mxu0
        %v11990 = vadd.f32 %v11829, %v11989
        %v11991 = vpop.f32.mrf.mxu0
        %11992 = vmatprep.mubr.bf16.mxu0 0
        %11993 = vmatmul.mubr.bf16.gmra.mxu0 %v10609
        %v11994 = vpop.f32.mrf.mxu0
        %v11995 = vadd.f32 %v11834, %v11994
        %v11996 = vpop.f32.mrf.mxu0
        %v11997 = vpop.f32.mrf.mxu0
        %v11998 = vadd.f32 %v11837, %v11997
        %v11999 = vpop.f32.mrf.mxu0
        %12000 = vmatprep.mubr.bf16.mxu0 0
        %12001 = vmatmul.mubr.bf16.gmra.mxu0 %v10618
        %v12002 = vpop.f32.mrf.mxu0
        %v12003 = vadd.f32 %v11842, %v12002
        %v12004 = vpop.f32.mrf.mxu0
        %v12005 = vpop.f32.mrf.mxu0
        %v12006 = vadd.f32 %v11845, %v12005
        %v12007 = vpop.f32.mrf.mxu0
        %12008 = vmatprep.mubr.bf16.mxu0 0
        %12009 = vmatmul.mubr.bf16.gmra.mxu0 %v10627
        %v12010 = vpop.f32.mrf.mxu0
        %v12011 = vadd.f32 %v11850, %v12010
        %v12012 = vpop.f32.mrf.mxu0
        %v12013 = vpop.f32.mrf.mxu0
        %v12014 = vadd.f32 %v11853, %v12013
        %v12015 = vpop.f32.mrf.mxu0
        %12016 = vmatprep.mubr.bf16.mxu0 0
        %12017 = vmatmul.mubr.bf16.gmra.mxu0 %v10636
        %v12018 = vpop.f32.mrf.mxu0
        %v12019 = vadd.f32 %v11858, %v12018
        %v12020 = vpop.f32.mrf.mxu0
        %v12021 = vpop.f32.mrf.mxu0
        %v12022 = vadd.f32 %v11861, %v12021
        %v12023 = vpop.f32.mrf.mxu0
        %12024 = vmatprep.mubr.bf16.mxu0 0
        %12025 = vmatmul.mubr.bf16.gmra.mxu0 %v10645
        %v12026 = vpop.f32.mrf.mxu0
        %v12027 = vadd.f32 %v11866, %v12026
        %v12028 = vpop.f32.mrf.mxu0
        %v12029 = vpop.f32.mrf.mxu0
        %v12030 = vadd.f32 %v11869, %v12029
        %v12031 = vpop.f32.mrf.mxu0
        %12032 = vmatprep.mubr.bf16.mxu0 0
        %12033 = vmatmul.mubr.bf16.gmra.mxu0 %v10654
        %v12034 = vpop.f32.mrf.mxu0
        %v12035 = vadd.f32 %v11874, %v12034
        %v12036 = vpop.f32.mrf.mxu0
        %v12037 = vpop.f32.mrf.mxu0
        %v12038 = vadd.f32 %v11877, %v12037
        %v12039 = vpop.f32.mrf.mxu0
        %12040 = vmatprep.mubr.bf16.mxu0 0
        %12041 = vmatmul.mubr.bf16.gmra.mxu0 %v10663
        %v12042 = vpop.f32.mrf.mxu0
        %v12043 = vadd.f32 %v11882, %v12042
        %v12044 = vpop.f32.mrf.mxu0
        %v12045 = vpop.f32.mrf.mxu0
        %v12046 = vadd.f32 %v11885, %v12045
        %v12047 = vpop.f32.mrf.mxu0
        %12048 = vmatprep.mubr.bf16.mxu0 0
        %12049 = vmatmul.mubr.bf16.gmra.mxu0 %v10672
        %v12050 = vpop.f32.mrf.mxu0
        %v12051 = vadd.f32 %v11890, %v12050
        %v12052 = vpop.f32.mrf.mxu0
        %v12053 = vpop.f32.mrf.mxu0
        %v12054 = vadd.f32 %v11893, %v12053
        %v12055 = vpop.f32.mrf.mxu0
        %12056 = vmatprep.mubr.bf16.mxu0 0
        %12057 = vmatmul.mubr.bf16.gmra.mxu0 %v10681
        %v12058 = vpop.f32.mrf.mxu0
        %v12059 = vadd.f32 %v11898, %v12058
        %v12060 = vpop.f32.mrf.mxu0
        %v12061 = vpop.f32.mrf.mxu0
        %v12062 = vadd.f32 %v11901, %v12061
        %v12063 = vpop.f32.mrf.mxu0
        %12064 = vmatprep.mubr.bf16.mxu0 0
        %12065 = vmatmul.mubr.bf16.gmra.mxu0 %v10690
        %v12066 = vpop.f32.mrf.mxu0
        %v12067 = vadd.f32 %v11906, %v12066
        %v12068 = vpop.f32.mrf.mxu0
        %v12069 = vpop.f32.mrf.mxu0
        %v12070 = vadd.f32 %v11909, %v12069
        %v12071 = vpop.f32.mrf.mxu0
        %12072 = vmatprep.mubr.bf16.mxu0 0
        %12073 = vmatmul.mubr.bf16.gmra.mxu0 %v10699
        %v12074 = vpop.f32.mrf.mxu0
        %v12075 = vadd.f32 %v11914, %v12074
        %v12076 = vpop.f32.mrf.mxu0
        %v12077 = vpop.f32.mrf.mxu0
        %v12078 = vadd.f32 %v11917, %v12077
        %v12079 = vpop.f32.mrf.mxu0
        %12080 = vdwg.mxu0
        %12081 = vst [vmem:[#allocation6] sm:$0xff] %v11955
        %12082 = vst [vmem:[#allocation6 + $0x8] sm:$0xff] %v11958
        %12083 = vst [vmem:[#allocation6 + $0x10] sm:$0xff] %v11963
        %12084 = vst [vmem:[#allocation6 + $0x18] sm:$0xff] %v11966
        %12085 = vst [vmem:[#allocation6 + $0x20] sm:$0xff] %v11971
        %12086 = vst [vmem:[#allocation6 + $0x28] sm:$0xff] %v11974
        %12087 = vst [vmem:[#allocation6 + $0x30] sm:$0xff] %v11979
        %12088 = vst [vmem:[#allocation6 + $0x38] sm:$0xff] %v11982
        %12089 = vst [vmem:[#allocation6 + $0x40] sm:$0xff] %v11987
        %12090 = vst [vmem:[#allocation6 + $0x48] sm:$0xff] %v11990
        %12091 = vst [vmem:[#allocation6 + $0x50] sm:$0xff] %v11995
        %12092 = vst [vmem:[#allocation6 + $0x58] sm:$0xff] %v11998
        %12093 = vst [vmem:[#allocation6 + $0x60] sm:$0xff] %v12003
        %12094 = vst [vmem:[#allocation6 + $0x68] sm:$0xff] %v12006
        %12095 = vst [vmem:[#allocation6 + $0x70] sm:$0xff] %v12011
        %12096 = vst [vmem:[#allocation6 + $0x78] sm:$0xff] %v12014
        %12097 = vst [vmem:[#allocation6 + $0x80] sm:$0xff] %v12019
        %12098 = vst [vmem:[#allocation6 + $0x88] sm:$0xff] %v12022
        %12099 = vst [vmem:[#allocation6 + $0x90] sm:$0xff] %v12027
        %12100 = vst [vmem:[#allocation6 + $0x98] sm:$0xff] %v12030
        %12101 = vst [vmem:[#allocation6 + $0xa0] sm:$0xff] %v12035
        %12102 = vst [vmem:[#allocation6 + $0xa8] sm:$0xff] %v12038
        %12103 = vst [vmem:[#allocation6 + $0xb0] sm:$0xff] %v12043
        %12104 = vst [vmem:[#allocation6 + $0xb8] sm:$0xff] %v12046
        %12105 = vst [vmem:[#allocation6 + $0xc0] sm:$0xff] %v12051
        %12106 = vst [vmem:[#allocation6 + $0xc8] sm:$0xff] %v12054
        %12107 = vst [vmem:[#allocation6 + $0xd0] sm:$0xff] %v12059
        %12108 = vst [vmem:[#allocation6 + $0xd8] sm:$0xff] %v12062
        %12109 = vst [vmem:[#allocation6 + $0xe0] sm:$0xff] %v12067
        %12110 = vst [vmem:[#allocation6 + $0xe8] sm:$0xff] %v12070
        %12111 = vst [vmem:[#allocation6 + $0xf0] sm:$0xff] %v12075
        %12112 = vst [vmem:[#allocation6 + $0xf8] sm:$0xff] %v12078
        %v12113 = vld [vmem:[#allocation6] ss:$2 sm:$0xff]
        %s12114 = scalar_lea.vmem [#allocation6], 16
        %v12115 = vld [vmem:[%s12114] ss:$2 sm:$0xff]
        %s12116 = scalar_lea.vmem [#allocation6], 32
        %v12117 = vld [vmem:[%s12116] ss:$2 sm:$0xff]
        %s12118 = scalar_lea.vmem [#allocation6], 48
        %v12119 = vld [vmem:[%s12118] ss:$2 sm:$0xff]
        %s12120 = scalar_lea.vmem [#allocation6], 64
        %v12121 = vld [vmem:[%s12120] ss:$2 sm:$0xff]
        %s12122 = scalar_lea.vmem [#allocation6], 80
        %v12123 = vld [vmem:[%s12122] ss:$2 sm:$0xff]
        %s12124 = scalar_lea.vmem [#allocation6], 96
        %v12125 = vld [vmem:[%s12124] ss:$2 sm:$0xff]
        %s12126 = scalar_lea.vmem [#allocation6], 112
        %v12127 = vld [vmem:[%s12126] ss:$2 sm:$0xff]
        %s12128 = scalar_lea.vmem [#allocation6], 128
        %v12129 = vld [vmem:[%s12128] ss:$2 sm:$0xff]
        %s12130 = scalar_lea.vmem [#allocation6], 144
        %v12131 = vld [vmem:[%s12130] ss:$2 sm:$0xff]
        %s12132 = scalar_lea.vmem [#allocation6], 160
        %v12133 = vld [vmem:[%s12132] ss:$2 sm:$0xff]
        %s12134 = scalar_lea.vmem [#allocation6], 176
        %v12135 = vld [vmem:[%s12134] ss:$2 sm:$0xff]
        %s12136 = scalar_lea.vmem [#allocation6], 192
        %v12137 = vld [vmem:[%s12136] ss:$2 sm:$0xff]
        %s12138 = scalar_lea.vmem [#allocation6], 208
        %v12139 = vld [vmem:[%s12138] ss:$2 sm:$0xff]
        %s12140 = scalar_lea.vmem [#allocation6], 224
        %v12141 = vld [vmem:[%s12140] ss:$2 sm:$0xff]
        %s12142 = scalar_lea.vmem [#allocation6], 240
        %v12143 = vld [vmem:[%s12142] ss:$2 sm:$0xff]
        %s12144 = scalar_lea.vmem [#allocation6], 1
        %v12145 = vld [vmem:[%s12144] ss:$2 sm:$0xff]
        %s12146 = scalar_lea.vmem [#allocation6], 17
        %v12147 = vld [vmem:[%s12146] ss:$2 sm:$0xff]
        %s12148 = scalar_lea.vmem [#allocation6], 33
        %v12149 = vld [vmem:[%s12148] ss:$2 sm:$0xff]
        %s12150 = scalar_lea.vmem [#allocation6], 49
        %v12151 = vld [vmem:[%s12150] ss:$2 sm:$0xff]
        %s12152 = scalar_lea.vmem [#allocation6], 65
        %v12153 = vld [vmem:[%s12152] ss:$2 sm:$0xff]
        %s12154 = scalar_lea.vmem [#allocation6], 81
        %v12155 = vld [vmem:[%s12154] ss:$2 sm:$0xff]
        %s12156 = scalar_lea.vmem [#allocation6], 97
        %v12157 = vld [vmem:[%s12156] ss:$2 sm:$0xff]
        %s12158 = scalar_lea.vmem [#allocation6], 113
        %v12159 = vld [vmem:[%s12158] ss:$2 sm:$0xff]
        %s12160 = scalar_lea.vmem [#allocation6], 129
        %v12161 = vld [vmem:[%s12160] ss:$2 sm:$0xff]
        %s12162 = scalar_lea.vmem [#allocation6], 145
        %v12163 = vld [vmem:[%s12162] ss:$2 sm:$0xff]
        %s12164 = scalar_lea.vmem [#allocation6], 161
        %v12165 = vld [vmem:[%s12164] ss:$2 sm:$0xff]
        %s12166 = scalar_lea.vmem [#allocation6], 177
        %v12167 = vld [vmem:[%s12166] ss:$2 sm:$0xff]
        %s12168 = scalar_lea.vmem [#allocation6], 193
        %v12169 = vld [vmem:[%s12168] ss:$2 sm:$0xff]
        %s12170 = scalar_lea.vmem [#allocation6], 209
        %v12171 = vld [vmem:[%s12170] ss:$2 sm:$0xff]
        %s12172 = scalar_lea.vmem [#allocation6], 225
        %v12173 = vld [vmem:[%s12172] ss:$2 sm:$0xff]
        %s12174 = scalar_lea.vmem [#allocation6], 241
        %v12175 = vld [vmem:[%s12174] ss:$2 sm:$0xff]
        %v12176 = vadd.f32 %v12113, %v12145
        %v12177 = vadd.f32 %v12115, %v12147
        %v12178 = vadd.f32 %v12117, %v12149
        %v12179 = vadd.f32 %v12119, %v12151
        %v12180 = vadd.f32 %v12121, %v12153
        %v12181 = vadd.f32 %v12123, %v12155
        %v12182 = vadd.f32 %v12125, %v12157
        %v12183 = vadd.f32 %v12127, %v12159
        %v12184 = vadd.f32 %v12129, %v12161
        %v12185 = vadd.f32 %v12131, %v12163
        %v12186 = vadd.f32 %v12133, %v12165
        %v12187 = vadd.f32 %v12135, %v12167
        %v12188 = vadd.f32 %v12137, %v12169
        %v12189 = vadd.f32 %v12139, %v12171
        %v12190 = vadd.f32 %v12141, %v12173
        %v12191 = vadd.f32 %v12143, %v12175
        %v12192 = vadd.f32 %v12176, %v12177
        %v12193 = vadd.f32 %v12178, %v12179
        %v12194 = vadd.f32 %v12180, %v12181
        %v12195 = vadd.f32 %v12182, %v12183
        %v12196 = vadd.f32 %v12184, %v12185
        %v12197 = vadd.f32 %v12186, %v12187
        %v12198 = vadd.f32 %v12188, %v12189
        %v12199 = vadd.f32 %v12190, %v12191
        %v12200 = vld [vmem:[%s347] sm:$0xf]
        %v12201 = vld [vmem:[%s347 + $0x4] sm:$0xf]
        %v12202 = vld [vmem:[%s347 + $0x8] sm:$0xf]
        %v12203 = vld [vmem:[%s347 + $0xc] sm:$0xf]
        %v12204 = vld [vmem:[%s347 + $0x10] sm:$0xf]
        %v12205 = vld [vmem:[%s347 + $0x14] sm:$0xf]
        %v12206 = vld [vmem:[%s347 + $0x18] sm:$0xf]
        %v12207 = vld [vmem:[%s347 + $0x1c] sm:$0xf]
        %v12208 = vld [vmem:[%s347 + $0x20] sm:$0xf]
        %v12209 = vld [vmem:[%s347 + $0x24] sm:$0xf]
        %v12210 = vld [vmem:[%s347 + $0x28] sm:$0xf]
        %v12211 = vld [vmem:[%s347 + $0x2c] sm:$0xf]
        %v12212 = vld [vmem:[%s347 + $0x30] sm:$0xf]
        %v12213 = vld [vmem:[%s347 + $0x34] sm:$0xf]
        %v12214 = vld [vmem:[%s347 + $0x38] sm:$0xf]
        %v12215 = vld [vmem:[%s347 + $0x3c] sm:$0xf]
        %v12216 = vld [vmem:[%s347 + $0x40] sm:$0xf]
        %v12217 = vld [vmem:[%s347 + $0x44] sm:$0xf]
        %v12218 = vld [vmem:[%s347 + $0x48] sm:$0xf]
        %v12219 = vld [vmem:[%s347 + $0x4c] sm:$0xf]
        %v12220 = vld [vmem:[%s347 + $0x50] sm:$0xf]
        %v12221 = vld [vmem:[%s347 + $0x54] sm:$0xf]
        %v12222 = vld [vmem:[%s347 + $0x58] sm:$0xf]
        %v12223 = vld [vmem:[%s347 + $0x5c] sm:$0xf]
        %v12224 = vld [vmem:[%s347 + $0x60] sm:$0xf]
        %v12225 = vld [vmem:[%s347 + $0x64] sm:$0xf]
        %v12226 = vld [vmem:[%s347 + $0x68] sm:$0xf]
        %v12227 = vld [vmem:[%s347 + $0x6c] sm:$0xf]
        %v12228 = vld [vmem:[%s347 + $0x70] sm:$0xf]
        %v12229 = vld [vmem:[%s347 + $0x74] sm:$0xf]
        %v12230 = vld [vmem:[%s347 + $0x78] sm:$0xf]
        %v12231 = vld [vmem:[%s347 + $0x7c] sm:$0xf]
        %v12232 = vunpack.c.l.bf16 %v12200
        %v12233 = vunpack.c.l.bf16 %v12201
        %v12234 = vunpack.c.l.bf16 %v12202
        %v12235 = vunpack.c.l.bf16 %v12203
        %v12236 = vunpack.c.l.bf16 %v12204
        %v12237 = vunpack.c.l.bf16 %v12205
        %v12238 = vunpack.c.l.bf16 %v12206
        %v12239 = vunpack.c.l.bf16 %v12207
        %v12240 = vunpack.c.l.bf16 %v12208
        %v12241 = vunpack.c.l.bf16 %v12209
        %v12242 = vunpack.c.l.bf16 %v12210
        %v12243 = vunpack.c.l.bf16 %v12211
        %v12244 = vunpack.c.l.bf16 %v12212
        %v12245 = vunpack.c.l.bf16 %v12213
        %v12246 = vunpack.c.l.bf16 %v12214
        %v12247 = vunpack.c.l.bf16 %v12215
        %v12248 = vunpack.c.l.bf16 %v12216
        %v12249 = vunpack.c.l.bf16 %v12217
        %v12250 = vunpack.c.l.bf16 %v12218
        %v12251 = vunpack.c.l.bf16 %v12219
        %v12252 = vunpack.c.l.bf16 %v12220
        %v12253 = vunpack.c.l.bf16 %v12221
        %v12254 = vunpack.c.l.bf16 %v12222
        %v12255 = vunpack.c.l.bf16 %v12223
        %v12256 = vunpack.c.l.bf16 %v12224
        %v12257 = vunpack.c.l.bf16 %v12225
        %v12258 = vunpack.c.l.bf16 %v12226
        %v12259 = vunpack.c.l.bf16 %v12227
        %v12260 = vunpack.c.l.bf16 %v12228
        %v12261 = vunpack.c.l.bf16 %v12229
        %v12262 = vunpack.c.l.bf16 %v12230
        %v12263 = vunpack.c.l.bf16 %v12231
        %12264 = vst [vmem:[#allocation7] sm:$0xff] %v12232
        %12265 = vst [vmem:[#allocation7 + $0x8] sm:$0xff] %v12233
        %12266 = vst [vmem:[#allocation7 + $0x10] sm:$0xff] %v12234
        %12267 = vst [vmem:[#allocation7 + $0x18] sm:$0xff] %v12235
        %12268 = vst [vmem:[#allocation7 + $0x20] sm:$0xff] %v12236
        %12269 = vst [vmem:[#allocation7 + $0x28] sm:$0xff] %v12237
        %12270 = vst [vmem:[#allocation7 + $0x30] sm:$0xff] %v12238
        %12271 = vst [vmem:[#allocation7 + $0x38] sm:$0xff] %v12239
        %12272 = vst [vmem:[#allocation7 + $0x40] sm:$0xff] %v12240
        %12273 = vst [vmem:[#allocation7 + $0x48] sm:$0xff] %v12241
        %12274 = vst [vmem:[#allocation7 + $0x50] sm:$0xff] %v12242
        %12275 = vst [vmem:[#allocation7 + $0x58] sm:$0xff] %v12243
        %12276 = vst [vmem:[#allocation7 + $0x60] sm:$0xff] %v12244
        %12277 = vst [vmem:[#allocation7 + $0x68] sm:$0xff] %v12245
        %12278 = vst [vmem:[#allocation7 + $0x70] sm:$0xff] %v12246
        %12279 = vst [vmem:[#allocation7 + $0x78] sm:$0xff] %v12247
        %12280 = vst [vmem:[#allocation7 + $0x80] sm:$0xff] %v12248
        %12281 = vst [vmem:[#allocation7 + $0x88] sm:$0xff] %v12249
        %12282 = vst [vmem:[#allocation7 + $0x90] sm:$0xff] %v12250
        %12283 = vst [vmem:[#allocation7 + $0x98] sm:$0xff] %v12251
        %12284 = vst [vmem:[#allocation7 + $0xa0] sm:$0xff] %v12252
        %12285 = vst [vmem:[#allocation7 + $0xa8] sm:$0xff] %v12253
        %12286 = vst [vmem:[#allocation7 + $0xb0] sm:$0xff] %v12254
        %12287 = vst [vmem:[#allocation7 + $0xb8] sm:$0xff] %v12255
        %12288 = vst [vmem:[#allocation7 + $0xc0] sm:$0xff] %v12256
        %12289 = vst [vmem:[#allocation7 + $0xc8] sm:$0xff] %v12257
        %12290 = vst [vmem:[#allocation7 + $0xd0] sm:$0xff] %v12258
        %12291 = vst [vmem:[#allocation7 + $0xd8] sm:$0xff] %v12259
        %12292 = vst [vmem:[#allocation7 + $0xe0] sm:$0xff] %v12260
        %12293 = vst [vmem:[#allocation7 + $0xe8] sm:$0xff] %v12261
        %12294 = vst [vmem:[#allocation7 + $0xf0] sm:$0xff] %v12262
        %12295 = vst [vmem:[#allocation7 + $0xf8] sm:$0xff] %v12263
        %v12296 = vld [vmem:[#allocation7] ss:$2 sm:$0xff]
        %s12297 = scalar_lea.vmem [#allocation7], 16
        %v12298 = vld [vmem:[%s12297] ss:$2 sm:$0xff]
        %s12299 = scalar_lea.vmem [#allocation7], 32
        %v12300 = vld [vmem:[%s12299] ss:$2 sm:$0xff]
        %s12301 = scalar_lea.vmem [#allocation7], 48
        %v12302 = vld [vmem:[%s12301] ss:$2 sm:$0xff]
        %s12303 = scalar_lea.vmem [#allocation7], 64
        %v12304 = vld [vmem:[%s12303] ss:$2 sm:$0xff]
        %s12305 = scalar_lea.vmem [#allocation7], 80
        %v12306 = vld [vmem:[%s12305] ss:$2 sm:$0xff]
        %s12307 = scalar_lea.vmem [#allocation7], 96
        %v12308 = vld [vmem:[%s12307] ss:$2 sm:$0xff]
        %s12309 = scalar_lea.vmem [#allocation7], 112
        %v12310 = vld [vmem:[%s12309] ss:$2 sm:$0xff]
        %s12311 = scalar_lea.vmem [#allocation7], 128
        %v12312 = vld [vmem:[%s12311] ss:$2 sm:$0xff]
        %s12313 = scalar_lea.vmem [#allocation7], 144
        %v12314 = vld [vmem:[%s12313] ss:$2 sm:$0xff]
        %s12315 = scalar_lea.vmem [#allocation7], 160
        %v12316 = vld [vmem:[%s12315] ss:$2 sm:$0xff]
        %s12317 = scalar_lea.vmem [#allocation7], 176
        %v12318 = vld [vmem:[%s12317] ss:$2 sm:$0xff]
        %s12319 = scalar_lea.vmem [#allocation7], 192
        %v12320 = vld [vmem:[%s12319] ss:$2 sm:$0xff]
        %s12321 = scalar_lea.vmem [#allocation7], 208
        %v12322 = vld [vmem:[%s12321] ss:$2 sm:$0xff]
        %s12323 = scalar_lea.vmem [#allocation7], 224
        %v12324 = vld [vmem:[%s12323] ss:$2 sm:$0xff]
        %s12325 = scalar_lea.vmem [#allocation7], 240
        %v12326 = vld [vmem:[%s12325] ss:$2 sm:$0xff]
        %s12327 = scalar_lea.vmem [#allocation7], 1
        %v12328 = vld [vmem:[%s12327] ss:$2 sm:$0xff]
        %s12329 = scalar_lea.vmem [#allocation7], 17
        %v12330 = vld [vmem:[%s12329] ss:$2 sm:$0xff]
        %s12331 = scalar_lea.vmem [#allocation7], 33
        %v12332 = vld [vmem:[%s12331] ss:$2 sm:$0xff]
        %s12333 = scalar_lea.vmem [#allocation7], 49
        %v12334 = vld [vmem:[%s12333] ss:$2 sm:$0xff]
        %s12335 = scalar_lea.vmem [#allocation7], 65
        %v12336 = vld [vmem:[%s12335] ss:$2 sm:$0xff]
        %s12337 = scalar_lea.vmem [#allocation7], 81
        %v12338 = vld [vmem:[%s12337] ss:$2 sm:$0xff]
        %s12339 = scalar_lea.vmem [#allocation7], 97
        %v12340 = vld [vmem:[%s12339] ss:$2 sm:$0xff]
        %s12341 = scalar_lea.vmem [#allocation7], 113
        %v12342 = vld [vmem:[%s12341] ss:$2 sm:$0xff]
        %s12343 = scalar_lea.vmem [#allocation7], 129
        %v12344 = vld [vmem:[%s12343] ss:$2 sm:$0xff]
        %s12345 = scalar_lea.vmem [#allocation7], 145
        %v12346 = vld [vmem:[%s12345] ss:$2 sm:$0xff]
        %s12347 = scalar_lea.vmem [#allocation7], 161
        %v12348 = vld [vmem:[%s12347] ss:$2 sm:$0xff]
        %s12349 = scalar_lea.vmem [#allocation7], 177
        %v12350 = vld [vmem:[%s12349] ss:$2 sm:$0xff]
        %s12351 = scalar_lea.vmem [#allocation7], 193
        %v12352 = vld [vmem:[%s12351] ss:$2 sm:$0xff]
        %s12353 = scalar_lea.vmem [#allocation7], 209
        %v12354 = vld [vmem:[%s12353] ss:$2 sm:$0xff]
        %s12355 = scalar_lea.vmem [#allocation7], 225
        %v12356 = vld [vmem:[%s12355] ss:$2 sm:$0xff]
        %s12357 = scalar_lea.vmem [#allocation7], 241
        %v12358 = vld [vmem:[%s12357] ss:$2 sm:$0xff]
        %v12359 = vadd.f32 %v12296, %v12328
        %v12360 = vadd.f32 %v12298, %v12330
        %v12361 = vadd.f32 %v12300, %v12332
        %v12362 = vadd.f32 %v12302, %v12334
        %v12363 = vadd.f32 %v12304, %v12336
        %v12364 = vadd.f32 %v12306, %v12338
        %v12365 = vadd.f32 %v12308, %v12340
        %v12366 = vadd.f32 %v12310, %v12342
        %v12367 = vadd.f32 %v12312, %v12344
        %v12368 = vadd.f32 %v12314, %v12346
        %v12369 = vadd.f32 %v12316, %v12348
        %v12370 = vadd.f32 %v12318, %v12350
        %v12371 = vadd.f32 %v12320, %v12352
        %v12372 = vadd.f32 %v12322, %v12354
        %v12373 = vadd.f32 %v12324, %v12356
        %v12374 = vadd.f32 %v12326, %v12358
        %v12375 = vadd.f32 %v12359, %v12360
        %v12376 = vadd.f32 %v12361, %v12362
        %v12377 = vadd.f32 %v12363, %v12364
        %v12378 = vadd.f32 %v12365, %v12366
        %v12379 = vadd.f32 %v12367, %v12368
        %v12380 = vadd.f32 %v12369, %v12370
        %v12381 = vadd.f32 %v12371, %v12372
        %v12382 = vadd.f32 %v12373, %v12374
        %v12383 = vpack.c.bf16 %v12376, %v12375
        %v12384 = vpack.c.bf16 %v12378, %v12377
        %v12385 = vpack.c.bf16 %v12380, %v12379
        %v12386 = vpack.c.bf16 %v12382, %v12381
        %v12387 = vld [vmem:[#allocation13] sm:$0xf]
        %v12388 = vld [vmem:[#allocation13 + $0x4] sm:$0xf]
        %v12389 = vld [vmem:[#allocation13 + $0x8] sm:$0xf]
        %v12390 = vld [vmem:[#allocation13 + $0xc] sm:$0xf]
        %v12391 = vld [vmem:[#allocation13 + $0x10] sm:$0xf]
        %v12392 = vld [vmem:[#allocation13 + $0x14] sm:$0xf]
        %v12393 = vld [vmem:[#allocation13 + $0x18] sm:$0xf]
        %v12394 = vld [vmem:[#allocation13 + $0x1c] sm:$0xf]
        %v12395 = vld [vmem:[#allocation13 + $0x20] sm:$0xf]
        %v12396 = vld [vmem:[#allocation13 + $0x24] sm:$0xf]
        %v12397 = vld [vmem:[#allocation13 + $0x28] sm:$0xf]
        %v12398 = vld [vmem:[#allocation13 + $0x2c] sm:$0xf]
        %v12399 = vld [vmem:[#allocation13 + $0x30] sm:$0xf]
        %v12400 = vld [vmem:[#allocation13 + $0x34] sm:$0xf]
        %v12401 = vld [vmem:[#allocation13 + $0x38] sm:$0xf]
        %v12402 = vld [vmem:[#allocation13 + $0x3c] sm:$0xf]
        %v12403 = vld [vmem:[%s7] sm:$0x1]
        %v12405 = vlaneseq
        %v12406 = vshrl.u32 %v12405, 7
        %v12407 = vsub.s32 0, %v12406
        %v12408 = vrot.slane %v12403, %v12407
        %v12426 = vunpack.c.l.b16 %v12387
        %v12427 = vunpack.c.l.b16 %v12388
        %v12428 = vunpack.c.l.b16 %v12389
        %v12429 = vunpack.c.l.b16 %v12390
        %v12430 = vunpack.c.l.b16 %v12391
        %v12431 = vunpack.c.l.b16 %v12392
        %v12432 = vunpack.c.l.b16 %v12393
        %v12433 = vunpack.c.l.b16 %v12394
        %v12434 = vunpack.c.l.b16 %v12395
        %v12435 = vunpack.c.l.b16 %v12396
        %v12436 = vunpack.c.l.b16 %v12397
        %v12437 = vunpack.c.l.b16 %v12398
        %v12438 = vunpack.c.l.b16 %v12399
        %v12439 = vunpack.c.l.b16 %v12400
        %v12440 = vunpack.c.l.b16 %v12401
        %v12441 = vunpack.c.l.b16 %v12402
        %v12442 = vpack.c.b16 %v12427, %v12426
        %v12443 = vpack.c.b16 %v12429, %v12428
        %v12444 = vpack.c.b16 %v12431, %v12430
        %v12445 = vpack.c.b16 %v12433, %v12432
        %v12446 = vpack.c.b16 %v12435, %v12434
        %v12447 = vpack.c.b16 %v12437, %v12436
        %v12448 = vpack.c.b16 %v12439, %v12438
        %v12449 = vpack.c.b16 %v12441, %v12440
        %12458 = vmatprep.subr.bf16.mxu0 0
        %12459 = vmatpush1.bf16.msra.mxu0 %v12449
        %12460 = vmatprep.subr.bf16.mxu0 0
        %12461 = vmatpush1.bf16.msra.mxu0 %v12448
        %12462 = vmatprep.subr.bf16.mxu0 0
        %12463 = vmatpush1.bf16.msra.mxu0 %v12447
        %12464 = vmatprep.subr.bf16.mxu0 0
        %12465 = vmatpush1.bf16.msra.mxu0 %v12446
        %12466 = vmatprep.subr.bf16.mxu0 0
        %12467 = vmatpush1.bf16.msra.mxu0 %v12445
        %12468 = vmatprep.subr.bf16.mxu0 0
        %12469 = vmatpush1.bf16.msra.mxu0 %v12444
        %12470 = vmatprep.subr.bf16.mxu0 0
        %12471 = vmatpush1.bf16.msra.mxu0 %v12443
        %12472 = vmatprep.subr.bf16.mxu0 0
        %12473 = vmatpush1.bf16.msra.mxu0 %v12442
        %12474 = vmatprep.subr.bf16.mxu0 0
        %12475 = vmatpush2.bf16.msra.mxu0 0
        %12476 = vmatprep.subr.bf16.mxu0 0
        %12477 = vmatpush2.bf16.msra.mxu0 0
        %12478 = vmatprep.subr.bf16.mxu0 0
        %12479 = vmatpush2.bf16.msra.mxu0 0
        %12480 = vmatprep.subr.bf16.mxu0 0
        %12481 = vmatpush2.bf16.msra.mxu0 0
        %12482 = vmatprep.subr.bf16.mxu0 0
        %12483 = vmatpush2.bf16.msra.mxu0 0
        %12484 = vmatprep.subr.bf16.mxu0 0
        %12485 = vmatpush2.bf16.msra.mxu0 0
        %12486 = vmatprep.subr.bf16.mxu0 0
        %12487 = vmatpush2.bf16.msra.mxu0 0
        %12488 = vmatprep.subr.bf16.mxu0 0
        %12489 = vmatpush2.bf16.msra.mxu0 0
        %12490 = vmatprep.mubr.bf16.mxu0 0
        %12491 = vmatmul.mubr.bf16.gmra.mxu0 %v12383
        %v12492 = vpop.f32.mrf.mxu0
        %v12493 = vadd.f32 %v12408, %v12492
        %v12494 = vpop.f32.mrf.mxu0
        %v12495 = vpop.f32.mrf.mxu0
        %v12496 = vadd.f32 %v12408, %v12495
        %v12497 = vpop.f32.mrf.mxu0
        %12498 = vmatprep.mubr.bf16.mxu0 0
        %12499 = vmatmul.mubr.bf16.gmra.mxu0 %v12384
        %v12500 = vpop.f32.mrf.mxu0
        %v12501 = vadd.f32 %v12408, %v12500
        %v12502 = vpop.f32.mrf.mxu0
        %v12503 = vpop.f32.mrf.mxu0
        %v12504 = vadd.f32 %v12408, %v12503
        %v12505 = vpop.f32.mrf.mxu0
        %12506 = vmatprep.mubr.bf16.mxu0 0
        %12507 = vmatmul.mubr.bf16.gmra.mxu0 %v12385
        %v12508 = vpop.f32.mrf.mxu0
        %v12509 = vadd.f32 %v12408, %v12508
        %v12510 = vpop.f32.mrf.mxu0
        %v12511 = vpop.f32.mrf.mxu0
        %v12512 = vadd.f32 %v12408, %v12511
        %v12513 = vpop.f32.mrf.mxu0
        %12514 = vmatprep.mubr.bf16.mxu0 0
        %12515 = vmatmul.mubr.bf16.gmra.mxu0 %v12386
        %v12516 = vpop.f32.mrf.mxu0
        %v12517 = vadd.f32 %v12408, %v12516
        %v12518 = vpop.f32.mrf.mxu0
        %v12519 = vpop.f32.mrf.mxu0
        %v12520 = vadd.f32 %v12408, %v12519
        %v12521 = vpop.f32.mrf.mxu0
        %12522 = vdwg.mxu0
        %v12523 = vadd.f32 %v12192, %v12493
        %v12524 = vadd.f32 %v12193, %v12496
        %v12525 = vadd.f32 %v12194, %v12501
        %v12526 = vadd.f32 %v12195, %v12504
        %v12527 = vadd.f32 %v12196, %v12509
        %v12528 = vadd.f32 %v12197, %v12512
        %v12529 = vadd.f32 %v12198, %v12517
        %v12530 = vadd.f32 %v12199, %v12520
        %v12531 = vpack.c.bf16 %v12524, %v12523
        %v12532 = vpack.c.bf16 %v12526, %v12525
        %v12533 = vpack.c.bf16 %v12528, %v12527
        %v12534 = vpack.c.bf16 %v12530, %v12529
        %v12539 = vunpack.c.l.b16 %v12531
        %v12540 = vunpack.c.h.b16 %v12531
        %v12541 = vunpack.c.l.b16 %v12532
        %v12542 = vunpack.c.h.b16 %v12532
        %v12543 = vunpack.c.l.b16 %v12533
        %v12544 = vunpack.c.h.b16 %v12533
        %v12545 = vunpack.c.l.b16 %v12534
        %v12546 = vunpack.c.h.b16 %v12534
        %v12547 = vpack.c.b16 %v12539, %v12539
        %v12548 = vpack.c.b16 %v12540, %v12540
        %v12549 = vpack.c.b16 %v12541, %v12541
        %v12550 = vpack.c.b16 %v12542, %v12542
        %v12551 = vpack.c.b16 %v12543, %v12543
        %v12552 = vpack.c.b16 %v12544, %v12544
        %v12553 = vpack.c.b16 %v12545, %v12545
        %v12554 = vpack.c.b16 %v12546, %v12546
        %12563 = vst [vmem:[%s342] sm:$0xf] %v12547
        %12564 = vst [vmem:[%s342 + $0x4] sm:$0xf] %v12548
        %12565 = vst [vmem:[%s342 + $0x8] sm:$0xf] %v12549
        %12566 = vst [vmem:[%s342 + $0xc] sm:$0xf] %v12550
        %12567 = vst [vmem:[%s342 + $0x10] sm:$0xf] %v12551
        %12568 = vst [vmem:[%s342 + $0x14] sm:$0xf] %v12552
        %12569 = vst [vmem:[%s342 + $0x18] sm:$0xf] %v12553
        %12570 = vst [vmem:[%s342 + $0x1c] sm:$0xf] %v12554
        %s12571 = sand.u32 %s205, 1
        %s12572 = scalar_lea.sflag [#allocation10], %s12571
        %s12573 = sand.u32 %s205, 1
        %s12574 = smul.addr %s12573, 32
        %s12575 = scalar_lea.vmem [#allocation14], %s12574
        // Predicated region
        $region65: #{tpu_custom_call.1} parent=51 // pred_check
          %p12576 = pneg %p215
        $region66: #{tpu_custom_call.1} parent=51 // pred_check_branch
          %12578 = sbr.rel (%p12576) target = $region68
        $region67: #{tpu_custom_call.1} parent=51 // pred_region
          %s12580 = ssub.s32 512, 512
          %12581 = vsyncadd %s12572, %s12580
          %s12582 = smul.addr %s24, 8
          %s12583 = smul.addr %s12582, 64
          %s12584 = scalar_lea.hbm %s8, %s12583
          %s12585 = sshll.u32 %s12575, 4
          %s12586 = int_to_ptr.vmem [resolvable:$true] %s12585
          %12591 = dma.vmem_to_hbm [thread:$0]  %s12586, 512, %s12584, %s12572, 64, 64, 4
        $region68: #{tpu_custom_call.1} parent=51 // pred_fallthru
          _
      $region52: #{tpu_custom_call.1} parent=5 // pred_fallthru
        _
      %p12592 = scmp.le.s32.totalorder 2, %s19
      // Predicated region
      $region69: #{tpu_custom_call.1} parent=5 // pred_check
        %p12593 = pneg %p12592
      $region70: #{tpu_custom_call.1} parent=5 // pred_check_branch
        %12595 = sbr.rel (%p12593) target = $region72
      $region71: #{tpu_custom_call.1} parent=5 // pred_region
        %s12596 = ssub.s32 %s19, 2
        // Predicated region
        $region73: #{tpu_custom_call.1} parent=71 // pred_check
          %p12597 = pneg %p221
        $region74: #{tpu_custom_call.1} parent=71 // pred_check_branch
          %12599 = sbr.rel (%p12597) target = $region76
        $region75: #{tpu_custom_call.1} parent=71 // pred_region
          %s12600 = sand.u32 %s206, 1
          %s12601 = scalar_lea.sflag [#allocation10], %s12600
          %s12602 = sand.u32 %s206, 1
          %s12603 = smul.addr %s12602, 32
          %s12604 = scalar_lea.vmem [#allocation14], %s12603
          %12605 = dma.done %s12601, 512
        $region76: #{tpu_custom_call.1} parent=71 // pred_fallthru
          _
      $region72: #{tpu_custom_call.1} parent=5 // pred_fallthru
        _
    $region6: #{tpu_custom_call.1} parent=1 // loop_footer
      %s23 = sadd.s32 1, %s19
    $region7: #{tpu_custom_call.1} parent=1 // loop_footer_branch
      %18 = sbr.rel target = $region3
    $region8: #{tpu_custom_call.1} parent=1 // loop_exit
      _
    %12606 = vsyncpa [#allocation9], 1
    %s12607 = scalar_lea.sflag [#allocation9], 1
    %12608 = vsyncpa %s12607, 1
    %12609 = vsyncpa [#allocation12], 1
    %12610 = vsyncpa [#allocation10], 1
    %s12611 = scalar_lea.sflag [#allocation10], 1
    %12612 = vsyncpa %s12611, 1

</llo_original>
